<compile_context>
chip_gen: v7x
topology: tpu7x:2x2x1
jax: 0.10.0
libtpu: 0.0.40
codegen_flags: <defaults>
</compile_context>

<pallas_src>
import jax
import jax.numpy as jnp
from jax import lax
from jax.experimental import pallas as pl
from jax.experimental.pallas import tpu as pltpu


# --------------------------------------------------------------------------
# Kernel
# --------------------------------------------------------------------------
def gcn_kernel(feats_ref, g_ref, bm_ref, k1_ref, k2_ref, att_ref, fc_ref,
               e_out_ref, f_out_ref, cat_ref):
    """One grid step = one block of Bt batch elements (node-on-lanes layout).

    feats_ref : (Bt, 6*D, N)   rows = [e ; f ; G_diag ; B_diag ; Pd ; Qd]^T
    g_ref     : (Bt, N, N)     G_ndiag        (natural layout)
    bm_ref    : (Bt, N, N)     B_ndiag
    k1_ref    : (Bt, N, N)     k1
    k2_ref    : (Bt, N, N)     k2
    att_ref   : (8*D + 1, 8)   block-diagonal attention weights + bias row
    fc_ref    : (2*OUT, 10*D + 1) block fc weights (both heads) + bias column
    e_out_ref : (Bt, OUT, N)   e_new^T   (lane-dense store)
    f_out_ref : (Bt, OUT, N)   f_new^T
    cat_ref   : VMEM scratch (Bt, 10*D, N) for the concatenated features
    """
    bt, six_d, n = feats_ref.shape
    d = six_d // 6
    out_dim = e_out_ref.shape[1]

    feats = feats_ref[...]                                    # (Bt, 6D, N)
    e = feats[:, 0 * d:1 * d, :]
    f = feats[:, 1 * d:2 * d, :]
    gd = feats[:, 2 * d:3 * d, :]
    bd = feats[:, 3 * d:4 * d, :]
    pd = feats[:, 4 * d:5 * d, :]
    qd = feats[:, 5 * d:6 * d, :]

    # ---- graph products, computed directly in the transposed layout --------
    # (op @ x)^T[d, k] = sum_n x^T[d, n] * op[k, n]  ->  q.k^T contraction form.
    ef_lhs = feats[:, :2 * d, :].astype(g_ref.dtype)          # (Bt, 2D, N)

    def gprod(op_ref):
        p = jnp.einsum("bdn,bkn->bdk", ef_lhs, op_ref[...],
                       preferred_element_type=jnp.float32)    # (Bt, 2D, N)
        return p[:, :d, :], p[:, d:, :]

    ge, gf = gprod(g_ref)
    be, bf = gprod(bm_ref)
    e1, f1 = gprod(k1_ref)
    e2, f2 = gprod(k2_ref)

    # ---- elementwise power-flow algebra (divides -> exact reciprocals) -----
    inv_base = pl.reciprocal(e * e + f * f + 0.1)
    alpha = (pd * e + qd * f) * inv_base - ge - bf
    # NOTE: reproduces the original source exactly: bmm(B_ndiag, f) appears twice.
    beta = (qd * e - pd * f) * inv_base + gf + bf

    # NOTE: like the original, base_gb has no epsilon; callers must keep the
    # diagonal entries away from zero.
    inv_gb = pl.reciprocal(gd * gd + bd * bd)
    e3 = (alpha * gd + beta * bd) * inv_gb
    f3 = (beta * gd - alpha * bd) * inv_gb

    base1 = ge - bf
    base2 = gf + be
    ef2 = e * e + f * f
    tp = pd - ef2 * gd
    tq = qd + ef2 * bd
    new_e = (tp * base1 + tq * base2) * inv_gb
    new_f = (tp * base2 - tq * base1) * inv_gb

    # ---- assemble [e3|new_e|e1|e2|f3|new_f|f1|f2|e|f] (unscaled) in scratch --
    pieces = (e3, new_e, e1, e2, f3, new_f, f1, f2, e, f)
    for i, x in enumerate(pieces):
        cat_ref[:, i * d:(i + 1) * d, :] = x

    # ---- attention: one lane reduction + one small matmul -------------------
    pooled = jnp.mean(cat_ref[:, :8 * d, :], axis=-1)         # (Bt, 8D)
    att_w = att_ref[:8 * d, :]                                # (8D, 8) block diag
    att_b = att_ref[8 * d:, :]                                # (1, 8)
    logits = jnp.dot(pooled, att_w,
                     preferred_element_type=jnp.float32) + att_b
    sig = jax.nn.sigmoid(logits)                              # (Bt, 8)
    a_inv = pl.reciprocal(jnp.sum(sig[:, :4], axis=-1, keepdims=True) + 1e-4)
    c_inv = pl.reciprocal(jnp.sum(sig[:, 4:], axis=-1, keepdims=True) + 1e-4)
    lane8 = lax.broadcasted_iota(jnp.int32, (1, 8), 1)
    coeffs = sig * jnp.where(lane8 < 4, a_inv, c_inv)         # (Bt, 8)

    # ---- apply attention coefficients in place (scalar-per-batch broadcast) --
    for i in range(8):
        blk = cat_ref[:, i * d:(i + 1) * d, :]
        cat_ref[:, i * d:(i + 1) * d, :] = blk * coeffs[:, i:i + 1, None]

    # ---- fused fc_v1 / fc_v2 + ReLU: standard 2-D MXU dots, lane-dense store --
    w2d = fc_ref[:, :10 * d]                                  # (2*OUT, 10D)
    bias = fc_ref[:, 10 * d:]                                 # (2*OUT, 1)
    for b in range(bt):
        lin = jnp.dot(w2d, cat_ref[b],
                      preferred_element_type=jnp.float32) + bias
        lin = jnp.maximum(lin, 0.0)                           # (2*OUT, N)
        e_out_ref[b] = lin[:out_dim, :]
        f_out_ref[b] = lin[out_dim:, :]


# --------------------------------------------------------------------------
# Tiling helpers (per-generation VMEM / TensorCore handling)
# --------------------------------------------------------------------------
def _vmem_capacity_bytes():
    try:
        return int(pltpu.get_tpu_info().vmem_capacity_bytes)
    except Exception:
        return 64 * 1024 * 1024       # conservative fallback (v7x physical)


def _num_tensorcores_per_chip():
    try:
        kind = jax.devices()[0].device_kind.lower()
        return 2 if ("v7" in kind or "7x" in kind) else 1
    except Exception:
        return 1


def _per_elem_vmem_bytes(N, D, OUT, ops_bytes):
    feats = 6 * D * N * 4
    ops = 4 * N * N * ops_bytes
    outs = 2 * OUT * N * 4
    cat = 10 * D * N * 4
    # pipelined blocks are double-buffered; cat scratch is single-buffered.
    return 2 * (feats + ops + outs) + cat


def _pick_block_b(B, N, D, OUT, ops_bytes):
    cap = _vmem_capacity_bytes()
    budget = int(cap * 0.4)                       # headroom for temps / spills
    per = _per_elem_vmem_bytes(N, D, OUT, ops_bytes) + (64 << 10)
    max_bb = max(1, min(B, budget // per))
    # On 2-TensorCore chips (v7x) keep >= 2 grid steps so both cores get work.
    if _num_tensorcores_per_chip() >= 2 and B >= 2:
        max_bb = min(max_bb, max(1, B // 2))
    for bb in range(max_bb, 0, -1):
        if B % bb == 0:
            return bb
    return 1


def _vmem_limit_bytes(block_b, N, D, OUT, ops_bytes):
    cap = _vmem_capacity_bytes()
    needed = _per_elem_vmem_bytes(N, D, OUT, ops_bytes) * block_b + (8 << 20)
    return int(min(cap * 0.9, max(needed, 32 << 20)))


# --------------------------------------------------------------------------
# Wrapper
# --------------------------------------------------------------------------
def gcn_layer_pallas(e, f, k1, k2, gnd, bnd, gd, bd, pd_, qd, params,
                     block_b=None, ops_dtype=jnp.float32):
    B, N, D = e.shape
    OUT = params["fc_v1_w"].shape[0]
    ops_bytes = jnp.dtype(ops_dtype).itemsize
    if block_b is None:
        block_b = _pick_block_b(B, N, D, OUT, ops_bytes)
    assert B % block_b == 0, "block_b must divide the batch size"

    # -- node features: one small transposed slab (B, 6D, N) ------------------
    feats_t = jnp.concatenate([e, f, gd, bd, pd_, qd], axis=-1)
    feats_t = feats_t.swapaxes(1, 2).astype(jnp.float32)            # (B, 6D, N)

    # -- operators passed separately in natural layout (no wrapper concat) ----
    g_in = gnd.astype(ops_dtype)
    b_in = bnd.astype(ops_dtype)
    k1_in = k1.astype(ops_dtype)
    k2_in = k2.astype(ops_dtype)

    # -- attention params: block-diagonal (8D, 8) weight + bias row -----------
    w_e = params["atten_e_w"].reshape(D).astype(jnp.float32)
    w_f = params["atten_f_w"].reshape(D).astype(jnp.float32)
    att_w = jnp.zeros((8 * D, 8), jnp.float32)
    for i in range(4):
        att_w = att_w.at[i * D:(i + 1) * D, i].set(w_e)
        att_w = att_w.at[(4 + i) * D:(5 + i) * D, 4 + i].set(w_f)
    att_b = jnp.concatenate(
        [jnp.broadcast_to(params["atten_e_b"].reshape(1), (4,)),
         jnp.broadcast_to(params["atten_f_b"].reshape(1), (4,))]).astype(jnp.float32)
    att_packed = jnp.concatenate([att_w, att_b.reshape(1, 8)], axis=0)  # (8D+1, 8)

    # -- fc params: both heads in one block (2*OUT, 10D) weight + bias column --
    # cat row order in-kernel: [e3, new_e, e1, e2, f3, new_f, f1, f2, e, f]
    w1 = params["fc_v1_w"].astype(jnp.float32)                      # (OUT, 5D)
    w2 = params["fc_v2_w"].astype(jnp.float32)
    w2d = jnp.zeros((2 * OUT, 10 * D), jnp.float32)
    w2d = w2d.at[:OUT, 0:4 * D].set(w1[:, 0:4 * D])                 # a*{e3,new_e,e1,e2}
    w2d = w2d.at[:OUT, 8 * D:9 * D].set(w1[:, 4 * D:5 * D])         # e
    w2d = w2d.at[OUT:, 4 * D:8 * D].set(w2[:, 0:4 * D])             # c*{f3,new_f,f1,f2}
    w2d = w2d.at[OUT:, 9 * D:10 * D].set(w2[:, 4 * D:5 * D])        # f
    fc_b = jnp.concatenate([params["fc_v1_b"],
                            params["fc_v2_b"]]).astype(jnp.float32).reshape(2 * OUT, 1)
    fc_packed = jnp.concatenate([w2d, fc_b], axis=1)                # (2*OUT, 10D+1)

    grid_spec = pltpu.PrefetchScalarGridSpec(
        num_scalar_prefetch=0,
        grid=(B // block_b,),
        in_specs=[
            pl.BlockSpec((block_b, 6 * D, N), lambda i: (i, 0, 0)),   # feats^T
            pl.BlockSpec((block_b, N, N), lambda i: (i, 0, 0)),       # G_ndiag
            pl.BlockSpec((block_b, N, N), lambda i: (i, 0, 0)),       # B_ndiag
            pl.BlockSpec((block_b, N, N), lambda i: (i, 0, 0)),       # k1
            pl.BlockSpec((block_b, N, N), lambda i: (i, 0, 0)),       # k2
            pl.BlockSpec((8 * D + 1, 8), lambda i: (0, 0)),           # attention
            pl.BlockSpec((2 * OUT, 10 * D + 1), lambda i: (0, 0)),    # fc weights
        ],
        out_specs=[
            pl.BlockSpec((block_b, OUT, N), lambda i: (i, 0, 0)),     # e_new^T
            pl.BlockSpec((block_b, OUT, N), lambda i: (i, 0, 0)),     # f_new^T
        ],
        scratch_shapes=[pltpu.VMEM((block_b, 10 * D, N), jnp.float32)],
    )
    e_out_t, f_out_t = pl.pallas_call(
        gcn_kernel,
        grid_spec=grid_spec,
        out_shape=(jax.ShapeDtypeStruct((B, OUT, N), jnp.float32),
                   jax.ShapeDtypeStruct((B, OUT, N), jnp.float32)),
        compiler_params=pltpu.CompilerParams(
            dimension_semantics=("parallel",),
            vmem_limit_bytes=_vmem_limit_bytes(block_b, N, D, OUT, ops_bytes)),
    )(feats_t, g_in, b_in, k1_in, k2_in, att_packed, fc_packed)

    # Layout plumbing back to the PyTorch (B, N, OUT) convention.
    return e_out_t.swapaxes(1, 2), f_out_t.swapaxes(1, 2)


# --------------------------------------------------------------------------
# Pure-JAX reference mirroring the PyTorch forward (for verification)
# --------------------------------------------------------------------------
def gcn_layer_ref(e, f, k1, k2, gnd, bnd, gd, bd, pd_, qd, params):
    bmm = lambda a, b: jnp.einsum("bij,bjd->bid", a, b)
    base = e * e + f * f + 0.1
    alpha = pd_ * e / base + qd * f / base - bmm(gnd, e) - bmm(bnd, f)
    beta = qd * e / base - pd_ * f / base + bmm(gnd, f) + bmm(bnd, f)
    base_gb = gd * gd + bd * bd
    e3 = alpha * gd / base_gb + beta * bd / base_gb
    f3 = beta * gd / base_gb - alpha * bd / base_gb
    base1 = bmm(gnd, e) - bmm(bnd, f)
    base2 = bmm(gnd, f) + bmm(bnd, e)
    new_e = ((pd_ - (e * e + f * f) * gd) * base1 + (qd + (e * e + f * f) * bd) * base2) / base_gb
    new_f = ((pd_ - (e * e + f * f) * gd) * base2 - (qd + (e * e + f * f) * bd) * base1) / base_gb
    e1, f1 = bmm(k1, e), bmm(k1, f)
    e2, f2 = bmm(k2, e), bmm(k2, f)

    def atten(x, w, b):
        pooled = jnp.mean(x, axis=-2, keepdims=True)
        return jax.nn.sigmoid(pooled @ w.T + b)

    a = [atten(t, params["atten_e_w"], params["atten_e_b"]) for t in (e3, new_e, e1, e2)]
    a_base = a[0] + a[1] + a[2] + a[3] + 0.0001
    a = [x / a_base for x in a]
    c = [atten(t, params["atten_f_w"], params["atten_f_b"]) for t in (f3, new_f, f1, f2)]
    c_base = c[0] + c[1] + c[2] + c[3] + 0.0001
    c = [x / c_base for x in c]
    e_new = jnp.concatenate((a[0] * e3, a[1] * new_e, a[2] * e1, a[3] * e2, e), axis=2)
    f_new = jnp.concatenate((c[0] * f3, c[1] * new_f, c[2] * f1, c[3] * f2, f), axis=2)
    e_new = jax.nn.relu(e_new @ params["fc_v1_w"].T + params["fc_v1_b"])
    f_new = jax.nn.relu(f_new @ params["fc_v2_w"].T + params["fc_v2_b"])
    return e_new, f_new


if __name__ == "__main__":
    B, N, D, OUT = 8, 16, 8, 16
    key = jax.random.PRNGKey(0)
    ks = jax.random.split(key, 20)

    e = jax.random.normal(ks[0], (B, N, D), jnp.float32)
    f = jax.random.normal(ks[1], (B, N, D), jnp.float32)
    k1 = jax.random.normal(ks[2], (B, N, N), jnp.float32) * 0.1
    k2 = jax.random.normal(ks[3], (B, N, N), jnp.float32) * 0.1
    gnd = jax.random.normal(ks[4], (B, N, N), jnp.float32) * 0.1
    bnd = jax.random.normal(ks[5], (B, N, N), jnp.float32) * 0.1
    # keep |diag| bounded away from 0 so base_gb is well conditioned
    gd = 0.5 + jax.random.uniform(ks[6], (B, N, D), jnp.float32)
    bd = 0.5 + jax.random.uniform(ks[7], (B, N, D), jnp.float32)
    pd_ = jax.random.normal(ks[8], (B, N, D), jnp.float32)
    qd = jax.random.normal(ks[9], (B, N, D), jnp.float32)

    params = {
        "fc_v1_w": jax.random.normal(ks[10], (OUT, D * 5), jnp.float32) * 0.1,
        "fc_v1_b": jax.random.normal(ks[11], (OUT,), jnp.float32) * 0.1,
        "fc_v2_w": jax.random.normal(ks[12], (OUT, D * 5), jnp.float32) * 0.1,
        "fc_v2_b": jax.random.normal(ks[13], (OUT,), jnp.float32) * 0.1,
        "atten_e_w": jax.random.normal(ks[14], (1, D), jnp.float32) * 0.1,
        "atten_e_b": jax.random.normal(ks[15], (1,), jnp.float32) * 0.1,
        "atten_f_w": jax.random.normal(ks[16], (1, D), jnp.float32) * 0.1,
        "atten_f_b": jax.random.normal(ks[17], (1,), jnp.float32) * 0.1,
    }

    e_out, f_out = gcn_layer_pallas(e, f, k1, k2, gnd, bnd, gd, bd, pd_, qd, params)
    jax.block_until_ready((e_out, f_out))

    e_ref, f_ref = gcn_layer_ref(e, f, k1, k2, gnd, bnd, gd, bd, pd_, qd, params)
    assert e_out.shape == (B, N, OUT) and f_out.shape == (B, N, OUT)
    assert jnp.allclose(e_out, e_ref, rtol=1e-4, atol=1e-3), "e_new mismatch"
    assert jnp.allclose(f_out, f_ref, rtol=1e-4, atol=1e-3), "f_new mismatch"
    print("KERNEL_OK")
</pallas_src>

<mosaic_0001>
module attributes {stable_mosaic.version = 11 : i64} {
  func.func @gcn_kernel(%arg0: i32, %arg1: memref<8x48x16xf32, #tpu.memory_space<vmem>>, %arg2: memref<8x16x16xf32, #tpu.memory_space<vmem>>, %arg3: memref<8x16x16xf32, #tpu.memory_space<vmem>>, %arg4: memref<8x16x16xf32, #tpu.memory_space<vmem>>, %arg5: memref<8x16x16xf32, #tpu.memory_space<vmem>>, %arg6: memref<65x8xf32, #tpu.memory_space<vmem>>, %arg7: memref<32x81xf32, #tpu.memory_space<vmem>>, %arg8: memref<8x16x16xf32, #tpu.memory_space<vmem>>, %arg9: memref<8x16x16xf32, #tpu.memory_space<vmem>>, %arg10: memref<8x80x16xf32, #tpu.memory_space<vmem>>) attributes {dimension_semantics = [#tpu.dimension_semantics<parallel>], iteration_bounds = array<i64: 1>, scalar_prefetch = 0 : i64, scratch_operands = 1 : i64, tpu.core_type = #tpu.core_type<tc>, window_params = [{transform_indices = @transform_0, window_bounds = array<i64: 8, 48, 16>}, {transform_indices = @transform_1, window_bounds = array<i64: 8, 16, 16>}, {transform_indices = @transform_2, window_bounds = array<i64: 8, 16, 16>}, {transform_indices = @transform_3, window_bounds = array<i64: 8, 16, 16>}, {transform_indices = @transform_4, window_bounds = array<i64: 8, 16, 16>}, {pipeline_mode = #tpu.pipeline_mode<synchronous>, transform_indices = @transform_5, window_bounds = array<i64: 65, 8>}, {pipeline_mode = #tpu.pipeline_mode<synchronous>, transform_indices = @transform_6, window_bounds = array<i64: 32, 81>}, {transform_indices = @transform_7, window_bounds = array<i64: 8, 16, 16>}, {transform_indices = @transform_8, window_bounds = array<i64: 8, 16, 16>}]} {
    %c0 = arith.constant 0 : index
    %c0_0 = arith.constant 0 : index
    %c0_1 = arith.constant 0 : index
    %0 = vector.load %arg1[%c0, %c0_0, %c0_1] : memref<8x48x16xf32, #tpu.memory_space<vmem>>, vector<8x48x16xf32>
    %1 = vector.extract_strided_slice %0 {offsets = [0, 0, 0], sizes = [8, 8, 16], strides = [1, 1, 1]} : vector<8x48x16xf32> to vector<8x8x16xf32>
    %2 = vector.extract_strided_slice %0 {offsets = [0, 8, 0], sizes = [8, 8, 16], strides = [1, 1, 1]} : vector<8x48x16xf32> to vector<8x8x16xf32>
    %3 = vector.extract_strided_slice %0 {offsets = [0, 16, 0], sizes = [8, 8, 16], strides = [1, 1, 1]} : vector<8x48x16xf32> to vector<8x8x16xf32>
    %4 = vector.extract_strided_slice %0 {offsets = [0, 24, 0], sizes = [8, 8, 16], strides = [1, 1, 1]} : vector<8x48x16xf32> to vector<8x8x16xf32>
    %5 = vector.extract_strided_slice %0 {offsets = [0, 32, 0], sizes = [8, 8, 16], strides = [1, 1, 1]} : vector<8x48x16xf32> to vector<8x8x16xf32>
    %6 = vector.extract_strided_slice %0 {offsets = [0, 40, 0], sizes = [8, 8, 16], strides = [1, 1, 1]} : vector<8x48x16xf32> to vector<8x8x16xf32>
    %7 = vector.extract_strided_slice %0 {offsets = [0, 0, 0], sizes = [8, 16, 16], strides = [1, 1, 1]} : vector<8x48x16xf32> to vector<8x16x16xf32>
    %c0_2 = arith.constant 0 : index
    %c0_3 = arith.constant 0 : index
    %c0_4 = arith.constant 0 : index
    %8 = vector.load %arg2[%c0_2, %c0_3, %c0_4] : memref<8x16x16xf32, #tpu.memory_space<vmem>>, vector<8x16x16xf32>
    "tpu.trace_start"() <{level = 10 : i32, message = "bdn,bkn->bdk"}> : () -> ()
    %cst = arith.constant dense<0.000000e+00> : vector<8x16x16xf32>
    %9 = tpu.matmul %7, %8, %cst {dimension_numbers = #tpu.dot_dimension_numbers<[2], [2], [1], [1], [0, 0, 0, 1, 1, 1], [0], [0]>} : vector<8x16x16xf32>, vector<8x16x16xf32>, vector<8x16x16xf32> -> vector<8x16x16xf32>
    "tpu.trace_stop"() : () -> ()
    %10 = vector.extract_strided_slice %9 {offsets = [0, 0, 0], sizes = [8, 8, 16], strides = [1, 1, 1]} : vector<8x16x16xf32> to vector<8x8x16xf32>
    %11 = vector.extract_strided_slice %9 {offsets = [0, 8, 0], sizes = [8, 8, 16], strides = [1, 1, 1]} : vector<8x16x16xf32> to vector<8x8x16xf32>
    %c0_5 = arith.constant 0 : index
    %c0_6 = arith.constant 0 : index
    %c0_7 = arith.constant 0 : index
    %12 = vector.load %arg3[%c0_5, %c0_6, %c0_7] : memref<8x16x16xf32, #tpu.memory_space<vmem>>, vector<8x16x16xf32>
    "tpu.trace_start"() <{level = 10 : i32, message = "bdn,bkn->bdk"}> : () -> ()
    %cst_8 = arith.constant dense<0.000000e+00> : vector<8x16x16xf32>
    %13 = tpu.matmul %7, %12, %cst_8 {dimension_numbers = #tpu.dot_dimension_numbers<[2], [2], [1], [1], [0, 0, 0, 1, 1, 1], [0], [0]>} : vector<8x16x16xf32>, vector<8x16x16xf32>, vector<8x16x16xf32> -> vector<8x16x16xf32>
    "tpu.trace_stop"() : () -> ()
    %14 = vector.extract_strided_slice %13 {offsets = [0, 0, 0], sizes = [8, 8, 16], strides = [1, 1, 1]} : vector<8x16x16xf32> to vector<8x8x16xf32>
    %15 = vector.extract_strided_slice %13 {offsets = [0, 8, 0], sizes = [8, 8, 16], strides = [1, 1, 1]} : vector<8x16x16xf32> to vector<8x8x16xf32>
    %c0_9 = arith.constant 0 : index
    %c0_10 = arith.constant 0 : index
    %c0_11 = arith.constant 0 : index
    %16 = vector.load %arg4[%c0_9, %c0_10, %c0_11] : memref<8x16x16xf32, #tpu.memory_space<vmem>>, vector<8x16x16xf32>
    "tpu.trace_start"() <{level = 10 : i32, message = "bdn,bkn->bdk"}> : () -> ()
    %cst_12 = arith.constant dense<0.000000e+00> : vector<8x16x16xf32>
    %17 = tpu.matmul %7, %16, %cst_12 {dimension_numbers = #tpu.dot_dimension_numbers<[2], [2], [1], [1], [0, 0, 0, 1, 1, 1], [0], [0]>} : vector<8x16x16xf32>, vector<8x16x16xf32>, vector<8x16x16xf32> -> vector<8x16x16xf32>
    "tpu.trace_stop"() : () -> ()
    %18 = vector.extract_strided_slice %17 {offsets = [0, 0, 0], sizes = [8, 8, 16], strides = [1, 1, 1]} : vector<8x16x16xf32> to vector<8x8x16xf32>
    %19 = vector.extract_strided_slice %17 {offsets = [0, 8, 0], sizes = [8, 8, 16], strides = [1, 1, 1]} : vector<8x16x16xf32> to vector<8x8x16xf32>
    %c0_13 = arith.constant 0 : index
    %c0_14 = arith.constant 0 : index
    %c0_15 = arith.constant 0 : index
    %20 = vector.load %arg5[%c0_13, %c0_14, %c0_15] : memref<8x16x16xf32, #tpu.memory_space<vmem>>, vector<8x16x16xf32>
    "tpu.trace_start"() <{level = 10 : i32, message = "bdn,bkn->bdk"}> : () -> ()
    %cst_16 = arith.constant dense<0.000000e+00> : vector<8x16x16xf32>
    %21 = tpu.matmul %7, %20, %cst_16 {dimension_numbers = #tpu.dot_dimension_numbers<[2], [2], [1], [1], [0, 0, 0, 1, 1, 1], [0], [0]>} : vector<8x16x16xf32>, vector<8x16x16xf32>, vector<8x16x16xf32> -> vector<8x16x16xf32>
    "tpu.trace_stop"() : () -> ()
    %22 = vector.extract_strided_slice %21 {offsets = [0, 0, 0], sizes = [8, 8, 16], strides = [1, 1, 1]} : vector<8x16x16xf32> to vector<8x8x16xf32>
    %23 = vector.extract_strided_slice %21 {offsets = [0, 8, 0], sizes = [8, 8, 16], strides = [1, 1, 1]} : vector<8x16x16xf32> to vector<8x8x16xf32>
    %24 = arith.mulf %1, %1 : vector<8x8x16xf32>
    %25 = arith.mulf %2, %2 : vector<8x8x16xf32>
    %26 = arith.addf %24, %25 : vector<8x8x16xf32>
    %cst_17 = arith.constant 1.000000e-01 : f32
    %27 = vector.broadcast %cst_17 : f32 to vector<8x8x16xf32>
    %28 = arith.addf %26, %27 : vector<8x8x16xf32>
    %29 = tpu.reciprocal %28 : vector<8x8x16xf32> -> vector<8x8x16xf32>
    %30 = arith.mulf %5, %1 : vector<8x8x16xf32>
    %31 = arith.mulf %6, %2 : vector<8x8x16xf32>
    %32 = arith.addf %30, %31 : vector<8x8x16xf32>
    %33 = arith.mulf %32, %29 : vector<8x8x16xf32>
    %34 = arith.subf %33, %10 : vector<8x8x16xf32>
    %35 = arith.subf %34, %15 : vector<8x8x16xf32>
    %36 = arith.mulf %6, %1 : vector<8x8x16xf32>
    %37 = arith.mulf %5, %2 : vector<8x8x16xf32>
    %38 = arith.subf %36, %37 : vector<8x8x16xf32>
    %39 = arith.mulf %38, %29 : vector<8x8x16xf32>
    %40 = arith.addf %39, %11 : vector<8x8x16xf32>
    %41 = arith.addf %40, %15 : vector<8x8x16xf32>
    %42 = arith.mulf %3, %3 : vector<8x8x16xf32>
    %43 = arith.mulf %4, %4 : vector<8x8x16xf32>
    %44 = arith.addf %42, %43 : vector<8x8x16xf32>
    %45 = tpu.reciprocal %44 : vector<8x8x16xf32> -> vector<8x8x16xf32>
    %46 = arith.mulf %35, %3 : vector<8x8x16xf32>
    %47 = arith.mulf %41, %4 : vector<8x8x16xf32>
    %48 = arith.addf %46, %47 : vector<8x8x16xf32>
    %49 = arith.mulf %48, %45 : vector<8x8x16xf32>
    %50 = arith.mulf %41, %3 : vector<8x8x16xf32>
    %51 = arith.mulf %35, %4 : vector<8x8x16xf32>
    %52 = arith.subf %50, %51 : vector<8x8x16xf32>
    %53 = arith.mulf %52, %45 : vector<8x8x16xf32>
    %54 = arith.subf %10, %15 : vector<8x8x16xf32>
    %55 = arith.addf %11, %14 : vector<8x8x16xf32>
    %56 = arith.mulf %1, %1 : vector<8x8x16xf32>
    %57 = arith.mulf %2, %2 : vector<8x8x16xf32>
    %58 = arith.addf %56, %57 : vector<8x8x16xf32>
    %59 = arith.mulf %58, %3 : vector<8x8x16xf32>
    %60 = arith.subf %5, %59 : vector<8x8x16xf32>
    %61 = arith.mulf %58, %4 : vector<8x8x16xf32>
    %62 = arith.addf %6, %61 : vector<8x8x16xf32>
    %63 = arith.mulf %60, %54 : vector<8x8x16xf32>
    %64 = arith.mulf %62, %55 : vector<8x8x16xf32>
    %65 = arith.addf %63, %64 : vector<8x8x16xf32>
    %66 = arith.mulf %65, %45 : vector<8x8x16xf32>
    %67 = arith.mulf %60, %55 : vector<8x8x16xf32>
    %68 = arith.mulf %62, %54 : vector<8x8x16xf32>
    %69 = arith.subf %67, %68 : vector<8x8x16xf32>
    %70 = arith.mulf %69, %45 : vector<8x8x16xf32>
    %c0_18 = arith.constant 0 : index
    %c0_19 = arith.constant 0 : index
    %c0_20 = arith.constant 0 : index
    %71 = vector.load %arg10[%c0_18, %c0_19, %c0_20] : memref<8x80x16xf32, #tpu.memory_space<vmem>>, vector<8x8x16xf32>
    tpu.vector_store %arg10[%c0_18, %c0_19, %c0_20], %49 {strides = array<i32>} : memref<8x80x16xf32, #tpu.memory_space<vmem>>, vector<8x8x16xf32>,
    %c0_21 = arith.constant 0 : index
    %c8 = arith.constant 8 : index
    %c0_22 = arith.constant 0 : index
    %72 = vector.load %arg10[%c0_21, %c8, %c0_22] : memref<8x80x16xf32, #tpu.memory_space<vmem>>, vector<8x8x16xf32>
    tpu.vector_store %arg10[%c0_21, %c8, %c0_22], %66 {strides = array<i32>} : memref<8x80x16xf32, #tpu.memory_space<vmem>>, vector<8x8x16xf32>,
    %c0_23 = arith.constant 0 : index
    %c16 = arith.constant 16 : index
    %c0_24 = arith.constant 0 : index
    %73 = vector.load %arg10[%c0_23, %c16, %c0_24] : memref<8x80x16xf32, #tpu.memory_space<vmem>>, vector<8x8x16xf32>
    tpu.vector_store %arg10[%c0_23, %c16, %c0_24], %18 {strides = array<i32>} : memref<8x80x16xf32, #tpu.memory_space<vmem>>, vector<8x8x16xf32>,
    %c0_25 = arith.constant 0 : index
    %c24 = arith.constant 24 : index
    %c0_26 = arith.constant 0 : index
    %74 = vector.load %arg10[%c0_25, %c24, %c0_26] : memref<8x80x16xf32, #tpu.memory_space<vmem>>, vector<8x8x16xf32>
    tpu.vector_store %arg10[%c0_25, %c24, %c0_26], %22 {strides = array<i32>} : memref<8x80x16xf32, #tpu.memory_space<vmem>>, vector<8x8x16xf32>,
    %c0_27 = arith.constant 0 : index
    %c32 = arith.constant 32 : index
    %c0_28 = arith.constant 0 : index
    %75 = vector.load %arg10[%c0_27, %c32, %c0_28] : memref<8x80x16xf32, #tpu.memory_space<vmem>>, vector<8x8x16xf32>
    tpu.vector_store %arg10[%c0_27, %c32, %c0_28], %53 {strides = array<i32>} : memref<8x80x16xf32, #tpu.memory_space<vmem>>, vector<8x8x16xf32>,
    %c0_29 = arith.constant 0 : index
    %c40 = arith.constant 40 : index
    %c0_30 = arith.constant 0 : index
    %76 = vector.load %arg10[%c0_29, %c40, %c0_30] : memref<8x80x16xf32, #tpu.memory_space<vmem>>, vector<8x8x16xf32>
    tpu.vector_store %arg10[%c0_29, %c40, %c0_30], %70 {strides = array<i32>} : memref<8x80x16xf32, #tpu.memory_space<vmem>>, vector<8x8x16xf32>,
    %c0_31 = arith.constant 0 : index
    %c48 = arith.constant 48 : index
    %c0_32 = arith.constant 0 : index
    %77 = vector.load %arg10[%c0_31, %c48, %c0_32] : memref<8x80x16xf32, #tpu.memory_space<vmem>>, vector<8x8x16xf32>
    tpu.vector_store %arg10[%c0_31, %c48, %c0_32], %19 {strides = array<i32>} : memref<8x80x16xf32, #tpu.memory_space<vmem>>, vector<8x8x16xf32>,
    %c0_33 = arith.constant 0 : index
    %c56 = arith.constant 56 : index
    %c0_34 = arith.constant 0 : index
    %78 = vector.load %arg10[%c0_33, %c56, %c0_34] : memref<8x80x16xf32, #tpu.memory_space<vmem>>, vector<8x8x16xf32>
    tpu.vector_store %arg10[%c0_33, %c56, %c0_34], %23 {strides = array<i32>} : memref<8x80x16xf32, #tpu.memory_space<vmem>>, vector<8x8x16xf32>,
    %c0_35 = arith.constant 0 : index
    %c64 = arith.constant 64 : index
    %c0_36 = arith.constant 0 : index
    %79 = vector.load %arg10[%c0_35, %c64, %c0_36] : memref<8x80x16xf32, #tpu.memory_space<vmem>>, vector<8x8x16xf32>
    tpu.vector_store %arg10[%c0_35, %c64, %c0_36], %1 {strides = array<i32>} : memref<8x80x16xf32, #tpu.memory_space<vmem>>, vector<8x8x16xf32>,
    %c0_37 = arith.constant 0 : index
    %c72 = arith.constant 72 : index
    %c0_38 = arith.constant 0 : index
    %80 = vector.load %arg10[%c0_37, %c72, %c0_38] : memref<8x80x16xf32, #tpu.memory_space<vmem>>, vector<8x8x16xf32>
    tpu.vector_store %arg10[%c0_37, %c72, %c0_38], %2 {strides = array<i32>} : memref<8x80x16xf32, #tpu.memory_space<vmem>>, vector<8x8x16xf32>,
    %c0_39 = arith.constant 0 : index
    %c0_40 = arith.constant 0 : index
    %c0_41 = arith.constant 0 : index
    %81 = vector.load %arg10[%c0_39, %c0_40, %c0_41] : memref<8x80x16xf32, #tpu.memory_space<vmem>>, vector<8x64x16xf32>
    %cst_42 = arith.constant dense<0.000000e+00> : vector<8x64xf32>
    %82 = vector.multi_reduction <add>, %81, %cst_42 [2] : vector<8x64x16xf32> to vector<8x64xf32>
    %cst_43 = arith.constant 1.600000e+01 : f32
    %83 = vector.broadcast %cst_43 : f32 to vector<8x64xf32>
    %84 = arith.divf %82, %83 : vector<8x64xf32>
    %c0_44 = arith.constant 0 : index
    %c0_45 = arith.constant 0 : index
    %85 = vector.load %arg6[%c0_44, %c0_45] : memref<65x8xf32, #tpu.memory_space<vmem>>, vector<64x8xf32>
    %c64_46 = arith.constant 64 : index
    %c0_47 = arith.constant 0 : index
    %86 = vector.load %arg6[%c64_46, %c0_47] : memref<65x8xf32, #tpu.memory_space<vmem>>, vector<1x8xf32>
    %cst_48 = arith.constant dense<0.000000e+00> : vector<8x8xf32>
    %87 = tpu.matmul %84, %85, %cst_48 {dimension_numbers = #tpu.dot_dimension_numbers<[1], [0], [0], [1], [0, 0, 1, 1], [], []>} : vector<8x64xf32>, vector<64x8xf32>, vector<8x8xf32> -> vector<8x8xf32>
    %88 = vector.broadcast %86 : vector<1x8xf32> to vector<8x8xf32>
    %89 = arith.addf %87, %88 : vector<8x8xf32>
    %90 = arith.negf %89 : vector<8x8xf32>
    %91 = math.exp %90 : vector<8x8xf32>
    %cst_49 = arith.constant 1.000000e+00 : f32
    %92 = vector.broadcast %cst_49 : f32 to vector<8x8xf32>
    %93 = arith.addf %92, %91 : vector<8x8xf32>
    %94 = arith.divf %92, %93 : vector<8x8xf32>
    %95 = vector.extract_strided_slice %94 {offsets = [0, 0], sizes = [8, 4], strides = [1, 1]} : vector<8x8xf32> to vector<8x4xf32>
    %cst_50 = arith.constant dense<0.000000e+00> : vector<8xf32>
    %96 = vector.multi_reduction <add>, %95, %cst_50 [1] : vector<8x4xf32> to vector<8xf32>
    %97 = vector.shape_cast %96 : vector<8xf32> to vector<8x1xf32>
    %cst_51 = arith.constant 9.99999974E-5 : f32
    %98 = vector.broadcast %cst_51 : f32 to vector<8x1xf32>
    %99 = arith.addf %97, %98 : vector<8x1xf32>
    %100 = tpu.reciprocal %99 : vector<8x1xf32> -> vector<8x1xf32>
    %101 = vector.extract_strided_slice %94 {offsets = [0, 4], sizes = [8, 4], strides = [1, 1]} : vector<8x8xf32> to vector<8x4xf32>
    %cst_52 = arith.constant dense<0.000000e+00> : vector<8xf32>
    %102 = vector.multi_reduction <add>, %101, %cst_52 [1] : vector<8x4xf32> to vector<8xf32>
    %103 = vector.shape_cast %102 : vector<8xf32> to vector<8x1xf32>
    %cst_53 = arith.constant 9.99999974E-5 : f32
    %104 = vector.broadcast %cst_53 : f32 to vector<8x1xf32>
    %105 = arith.addf %103, %104 : vector<8x1xf32>
    %106 = tpu.reciprocal %105 : vector<8x1xf32> -> vector<8x1xf32>
    %107 = tpu.iota {dimensions = array<i32: 1>} : vector<1x8xi32>
    %c4_i32 = arith.constant 4 : i32
    %108 = vector.broadcast %c4_i32 : i32 to vector<1x8xi32>
    %109 = arith.cmpi slt, %107, %108 : vector<1x8xi32>
    %110 = vector.shape_cast %109 : vector<1x8xi1> to vector<1x8xi1>
    %111 = vector.broadcast %110 : vector<1x8xi1> to vector<8x8xi1>
    %112 = vector.shape_cast %100 : vector<8x1xf32> to vector<8x1xf32>
    %113 = vector.broadcast %112 : vector<8x1xf32> to vector<8x8xf32>
    %114 = vector.shape_cast %106 : vector<8x1xf32> to vector<8x1xf32>
    %115 = vector.broadcast %114 : vector<8x1xf32> to vector<8x8xf32>
    %116 = arith.select %111, %113, %115 : vector<8x8xi1>, vector<8x8xf32>
    %117 = arith.mulf %94, %116 : vector<8x8xf32>
    %c0_54 = arith.constant 0 : index
    %c0_55 = arith.constant 0 : index
    %c0_56 = arith.constant 0 : index
    %118 = vector.load %arg10[%c0_54, %c0_55, %c0_56] : memref<8x80x16xf32, #tpu.memory_space<vmem>>, vector<8x8x16xf32>
    %119 = vector.extract_strided_slice %117 {offsets = [0, 0], sizes = [8, 1], strides = [1, 1]} : vector<8x8xf32> to vector<8x1xf32>
    %120 = vector.shape_cast %119 : vector<8x1xf32> to vector<8x1x1xf32>
    %121 = vector.broadcast %120 : vector<8x1x1xf32> to vector<8x8x16xf32>
    %122 = arith.mulf %118, %121 : vector<8x8x16xf32>
    %c0_57 = arith.constant 0 : index
    %c0_58 = arith.constant 0 : index
    %c0_59 = arith.constant 0 : index
    %123 = vector.load %arg10[%c0_57, %c0_58, %c0_59] : memref<8x80x16xf32, #tpu.memory_space<vmem>>, vector<8x8x16xf32>
    tpu.vector_store %arg10[%c0_57, %c0_58, %c0_59], %122 {strides = array<i32>} : memref<8x80x16xf32, #tpu.memory_space<vmem>>, vector<8x8x16xf32>,
    %c0_60 = arith.constant 0 : index
    %c8_61 = arith.constant 8 : index
    %c0_62 = arith.constant 0 : index
    %124 = vector.load %arg10[%c0_60, %c8_61, %c0_62] : memref<8x80x16xf32, #tpu.memory_space<vmem>>, vector<8x8x16xf32>
    %125 = vector.extract_strided_slice %117 {offsets = [0, 1], sizes = [8, 1], strides = [1, 1]} : vector<8x8xf32> to vector<8x1xf32>
    %126 = vector.shape_cast %125 : vector<8x1xf32> to vector<8x1x1xf32>
    %127 = vector.broadcast %126 : vector<8x1x1xf32> to vector<8x8x16xf32>
    %128 = arith.mulf %124, %127 : vector<8x8x16xf32>
    %c0_63 = arith.constant 0 : index
    %c8_64 = arith.constant 8 : index
    %c0_65 = arith.constant 0 : index
    %129 = vector.load %arg10[%c0_63, %c8_64, %c0_65] : memref<8x80x16xf32, #tpu.memory_space<vmem>>, vector<8x8x16xf32>
    tpu.vector_store %arg10[%c0_63, %c8_64, %c0_65], %128 {strides = array<i32>} : memref<8x80x16xf32, #tpu.memory_space<vmem>>, vector<8x8x16xf32>,
    %c0_66 = arith.constant 0 : index
    %c16_67 = arith.constant 16 : index
    %c0_68 = arith.constant 0 : index
    %130 = vector.load %arg10[%c0_66, %c16_67, %c0_68] : memref<8x80x16xf32, #tpu.memory_space<vmem>>, vector<8x8x16xf32>
    %131 = vector.extract_strided_slice %117 {offsets = [0, 2], sizes = [8, 1], strides = [1, 1]} : vector<8x8xf32> to vector<8x1xf32>
    %132 = vector.shape_cast %131 : vector<8x1xf32> to vector<8x1x1xf32>
    %133 = vector.broadcast %132 : vector<8x1x1xf32> to vector<8x8x16xf32>
    %134 = arith.mulf %130, %133 : vector<8x8x16xf32>
    %c0_69 = arith.constant 0 : index
    %c16_70 = arith.constant 16 : index
    %c0_71 = arith.constant 0 : index
    %135 = vector.load %arg10[%c0_69, %c16_70, %c0_71] : memref<8x80x16xf32, #tpu.memory_space<vmem>>, vector<8x8x16xf32>
    tpu.vector_store %arg10[%c0_69, %c16_70, %c0_71], %134 {strides = array<i32>} : memref<8x80x16xf32, #tpu.memory_space<vmem>>, vector<8x8x16xf32>,
    %c0_72 = arith.constant 0 : index
    %c24_73 = arith.constant 24 : index
    %c0_74 = arith.constant 0 : index
    %136 = vector.load %arg10[%c0_72, %c24_73, %c0_74] : memref<8x80x16xf32, #tpu.memory_space<vmem>>, vector<8x8x16xf32>
    %137 = vector.extract_strided_slice %117 {offsets = [0, 3], sizes = [8, 1], strides = [1, 1]} : vector<8x8xf32> to vector<8x1xf32>
    %138 = vector.shape_cast %137 : vector<8x1xf32> to vector<8x1x1xf32>
    %139 = vector.broadcast %138 : vector<8x1x1xf32> to vector<8x8x16xf32>
    %140 = arith.mulf %136, %139 : vector<8x8x16xf32>
    %c0_75 = arith.constant 0 : index
    %c24_76 = arith.constant 24 : index
    %c0_77 = arith.constant 0 : index
    %141 = vector.load %arg10[%c0_75, %c24_76, %c0_77] : memref<8x80x16xf32, #tpu.memory_space<vmem>>, vector<8x8x16xf32>
    tpu.vector_store %arg10[%c0_75, %c24_76, %c0_77], %140 {strides = array<i32>} : memref<8x80x16xf32, #tpu.memory_space<vmem>>, vector<8x8x16xf32>,
    %c0_78 = arith.constant 0 : index
    %c32_79 = arith.constant 32 : index
    %c0_80 = arith.constant 0 : index
    %142 = vector.load %arg10[%c0_78, %c32_79, %c0_80] : memref<8x80x16xf32, #tpu.memory_space<vmem>>, vector<8x8x16xf32>
    %143 = vector.extract_strided_slice %117 {offsets = [0, 4], sizes = [8, 1], strides = [1, 1]} : vector<8x8xf32> to vector<8x1xf32>
    %144 = vector.shape_cast %143 : vector<8x1xf32> to vector<8x1x1xf32>
    %145 = vector.broadcast %144 : vector<8x1x1xf32> to vector<8x8x16xf32>
    %146 = arith.mulf %142, %145 : vector<8x8x16xf32>
    %c0_81 = arith.constant 0 : index
    %c32_82 = arith.constant 32 : index
    %c0_83 = arith.constant 0 : index
    %147 = vector.load %arg10[%c0_81, %c32_82, %c0_83] : memref<8x80x16xf32, #tpu.memory_space<vmem>>, vector<8x8x16xf32>
    tpu.vector_store %arg10[%c0_81, %c32_82, %c0_83], %146 {strides = array<i32>} : memref<8x80x16xf32, #tpu.memory_space<vmem>>, vector<8x8x16xf32>,
    %c0_84 = arith.constant 0 : index
    %c40_85 = arith.constant 40 : index
    %c0_86 = arith.constant 0 : index
    %148 = vector.load %arg10[%c0_84, %c40_85, %c0_86] : memref<8x80x16xf32, #tpu.memory_space<vmem>>, vector<8x8x16xf32>
    %149 = vector.extract_strided_slice %117 {offsets = [0, 5], sizes = [8, 1], strides = [1, 1]} : vector<8x8xf32> to vector<8x1xf32>
    %150 = vector.shape_cast %149 : vector<8x1xf32> to vector<8x1x1xf32>
    %151 = vector.broadcast %150 : vector<8x1x1xf32> to vector<8x8x16xf32>
    %152 = arith.mulf %148, %151 : vector<8x8x16xf32>
    %c0_87 = arith.constant 0 : index
    %c40_88 = arith.constant 40 : index
    %c0_89 = arith.constant 0 : index
    %153 = vector.load %arg10[%c0_87, %c40_88, %c0_89] : memref<8x80x16xf32, #tpu.memory_space<vmem>>, vector<8x8x16xf32>
    tpu.vector_store %arg10[%c0_87, %c40_88, %c0_89], %152 {strides = array<i32>} : memref<8x80x16xf32, #tpu.memory_space<vmem>>, vector<8x8x16xf32>,
    %c0_90 = arith.constant 0 : index
    %c48_91 = arith.constant 48 : index
    %c0_92 = arith.constant 0 : index
    %154 = vector.load %arg10[%c0_90, %c48_91, %c0_92] : memref<8x80x16xf32, #tpu.memory_space<vmem>>, vector<8x8x16xf32>
    %155 = vector.extract_strided_slice %117 {offsets = [0, 6], sizes = [8, 1], strides = [1, 1]} : vector<8x8xf32> to vector<8x1xf32>
    %156 = vector.shape_cast %155 : vector<8x1xf32> to vector<8x1x1xf32>
    %157 = vector.broadcast %156 : vector<8x1x1xf32> to vector<8x8x16xf32>
    %158 = arith.mulf %154, %157 : vector<8x8x16xf32>
    %c0_93 = arith.constant 0 : index
    %c48_94 = arith.constant 48 : index
    %c0_95 = arith.constant 0 : index
    %159 = vector.load %arg10[%c0_93, %c48_94, %c0_95] : memref<8x80x16xf32, #tpu.memory_space<vmem>>, vector<8x8x16xf32>
    tpu.vector_store %arg10[%c0_93, %c48_94, %c0_95], %158 {strides = array<i32>} : memref<8x80x16xf32, #tpu.memory_space<vmem>>, vector<8x8x16xf32>,
    %c0_96 = arith.constant 0 : index
    %c56_97 = arith.constant 56 : index
    %c0_98 = arith.constant 0 : index
    %160 = vector.load %arg10[%c0_96, %c56_97, %c0_98] : memref<8x80x16xf32, #tpu.memory_space<vmem>>, vector<8x8x16xf32>
    %161 = vector.extract_strided_slice %117 {offsets = [0, 7], sizes = [8, 1], strides = [1, 1]} : vector<8x8xf32> to vector<8x1xf32>
    %162 = vector.shape_cast %161 : vector<8x1xf32> to vector<8x1x1xf32>
    %163 = vector.broadcast %162 : vector<8x1x1xf32> to vector<8x8x16xf32>
    %164 = arith.mulf %160, %163 : vector<8x8x16xf32>
    %c0_99 = arith.constant 0 : index
    %c56_100 = arith.constant 56 : index
    %c0_101 = arith.constant 0 : index
    %165 = vector.load %arg10[%c0_99, %c56_100, %c0_101] : memref<8x80x16xf32, #tpu.memory_space<vmem>>, vector<8x8x16xf32>
    tpu.vector_store %arg10[%c0_99, %c56_100, %c0_101], %164 {strides = array<i32>} : memref<8x80x16xf32, #tpu.memory_space<vmem>>, vector<8x8x16xf32>,
    %c0_102 = arith.constant 0 : index
    %c0_103 = arith.constant 0 : index
    %166 = vector.load %arg7[%c0_102, %c0_103] : memref<32x81xf32, #tpu.memory_space<vmem>>, vector<32x80xf32>
    %c0_104 = arith.constant 0 : index
    %c80 = arith.constant 80 : index
    %167 = vector.load %arg7[%c0_104, %c80] : memref<32x81xf32, #tpu.memory_space<vmem>>, vector<32x1xf32>
    %c0_105 = arith.constant 0 : index
    %c0_106 = arith.constant 0 : index
    %c0_107 = arith.constant 0 : index
    %168 = vector.load %arg10[%c0_105, %c0_106, %c0_107] : memref<8x80x16xf32, #tpu.memory_space<vmem>>, vector<1x80x16xf32>
    %169 = vector.shape_cast %168 : vector<1x80x16xf32> to vector<80x16xf32>
    %cst_108 = arith.constant dense<0.000000e+00> : vector<32x16xf32>
    %170 = tpu.matmul %166, %169, %cst_108 {dimension_numbers = #tpu.dot_dimension_numbers<[1], [0], [0], [1], [0, 0, 1, 1], [], []>} : vector<32x80xf32>, vector<80x16xf32>, vector<32x16xf32> -> vector<32x16xf32>
    %171 = vector.broadcast %167 : vector<32x1xf32> to vector<32x16xf32>
    %172 = arith.addf %170, %171 : vector<32x16xf32>
    %cst_109 = arith.constant 0.000000e+00 : f32
    %173 = vector.broadcast %cst_109 : f32 to vector<32x16xf32>
    %174 = arith.maximumf %172, %173 : vector<32x16xf32>
    %175 = vector.extract_strided_slice %174 {offsets = [0, 0], sizes = [16, 16], strides = [1, 1]} : vector<32x16xf32> to vector<16x16xf32>
    %c0_110 = arith.constant 0 : index
    %c0_111 = arith.constant 0 : index
    %c0_112 = arith.constant 0 : index
    %176 = vector.load %arg8[%c0_110, %c0_111, %c0_112] : memref<8x16x16xf32, #tpu.memory_space<vmem>>, vector<1x16x16xf32>
    %177 = vector.shape_cast %176 : vector<1x16x16xf32> to vector<16x16xf32>
    %178 = vector.shape_cast %175 : vector<16x16xf32> to vector<1x16x16xf32>
    tpu.vector_store %arg8[%c0_110, %c0_111, %c0_112], %178 {strides = array<i32>} : memref<8x16x16xf32, #tpu.memory_space<vmem>>, vector<1x16x16xf32>,
    %179 = vector.extract_strided_slice %174 {offsets = [16, 0], sizes = [16, 16], strides = [1, 1]} : vector<32x16xf32> to vector<16x16xf32>
    %c0_113 = arith.constant 0 : index
    %c0_114 = arith.constant 0 : index
    %c0_115 = arith.constant 0 : index
    %180 = vector.load %arg9[%c0_113, %c0_114, %c0_115] : memref<8x16x16xf32, #tpu.memory_space<vmem>>, vector<1x16x16xf32>
    %181 = vector.shape_cast %180 : vector<1x16x16xf32> to vector<16x16xf32>
    %182 = vector.shape_cast %179 : vector<16x16xf32> to vector<1x16x16xf32>
    tpu.vector_store %arg9[%c0_113, %c0_114, %c0_115], %182 {strides = array<i32>} : memref<8x16x16xf32, #tpu.memory_space<vmem>>, vector<1x16x16xf32>,
    %c1 = arith.constant 1 : index
    %c0_116 = arith.constant 0 : index
    %c0_117 = arith.constant 0 : index
    %183 = vector.load %arg10[%c1, %c0_116, %c0_117] : memref<8x80x16xf32, #tpu.memory_space<vmem>>, vector<1x80x16xf32>
    %184 = vector.shape_cast %183 : vector<1x80x16xf32> to vector<80x16xf32>
    %cst_118 = arith.constant dense<0.000000e+00> : vector<32x16xf32>
    %185 = tpu.matmul %166, %184, %cst_118 {dimension_numbers = #tpu.dot_dimension_numbers<[1], [0], [0], [1], [0, 0, 1, 1], [], []>} : vector<32x80xf32>, vector<80x16xf32>, vector<32x16xf32> -> vector<32x16xf32>
    %186 = vector.broadcast %167 : vector<32x1xf32> to vector<32x16xf32>
    %187 = arith.addf %185, %186 : vector<32x16xf32>
    %cst_119 = arith.constant 0.000000e+00 : f32
    %188 = vector.broadcast %cst_119 : f32 to vector<32x16xf32>
    %189 = arith.maximumf %187, %188 : vector<32x16xf32>
    %190 = vector.extract_strided_slice %189 {offsets = [0, 0], sizes = [16, 16], strides = [1, 1]} : vector<32x16xf32> to vector<16x16xf32>
    %c1_120 = arith.constant 1 : index
    %c0_121 = arith.constant 0 : index
    %c0_122 = arith.constant 0 : index
    %191 = vector.load %arg8[%c1_120, %c0_121, %c0_122] : memref<8x16x16xf32, #tpu.memory_space<vmem>>, vector<1x16x16xf32>
    %192 = vector.shape_cast %191 : vector<1x16x16xf32> to vector<16x16xf32>
    %193 = vector.shape_cast %190 : vector<16x16xf32> to vector<1x16x16xf32>
    tpu.vector_store %arg8[%c1_120, %c0_121, %c0_122], %193 {strides = array<i32>} : memref<8x16x16xf32, #tpu.memory_space<vmem>>, vector<1x16x16xf32>,
    %194 = vector.extract_strided_slice %189 {offsets = [16, 0], sizes = [16, 16], strides = [1, 1]} : vector<32x16xf32> to vector<16x16xf32>
    %c1_123 = arith.constant 1 : index
    %c0_124 = arith.constant 0 : index
    %c0_125 = arith.constant 0 : index
    %195 = vector.load %arg9[%c1_123, %c0_124, %c0_125] : memref<8x16x16xf32, #tpu.memory_space<vmem>>, vector<1x16x16xf32>
    %196 = vector.shape_cast %195 : vector<1x16x16xf32> to vector<16x16xf32>
    %197 = vector.shape_cast %194 : vector<16x16xf32> to vector<1x16x16xf32>
    tpu.vector_store %arg9[%c1_123, %c0_124, %c0_125], %197 {strides = array<i32>} : memref<8x16x16xf32, #tpu.memory_space<vmem>>, vector<1x16x16xf32>,
    %c2 = arith.constant 2 : index
    %c0_126 = arith.constant 0 : index
    %c0_127 = arith.constant 0 : index
    %198 = vector.load %arg10[%c2, %c0_126, %c0_127] : memref<8x80x16xf32, #tpu.memory_space<vmem>>, vector<1x80x16xf32>
    %199 = vector.shape_cast %198 : vector<1x80x16xf32> to vector<80x16xf32>
    %cst_128 = arith.constant dense<0.000000e+00> : vector<32x16xf32>
    %200 = tpu.matmul %166, %199, %cst_128 {dimension_numbers = #tpu.dot_dimension_numbers<[1], [0], [0], [1], [0, 0, 1, 1], [], []>} : vector<32x80xf32>, vector<80x16xf32>, vector<32x16xf32> -> vector<32x16xf32>
    %201 = vector.broadcast %167 : vector<32x1xf32> to vector<32x16xf32>
    %202 = arith.addf %200, %201 : vector<32x16xf32>
    %cst_129 = arith.constant 0.000000e+00 : f32
    %203 = vector.broadcast %cst_129 : f32 to vector<32x16xf32>
    %204 = arith.maximumf %202, %203 : vector<32x16xf32>
    %205 = vector.extract_strided_slice %204 {offsets = [0, 0], sizes = [16, 16], strides = [1, 1]} : vector<32x16xf32> to vector<16x16xf32>
    %c2_130 = arith.constant 2 : index
    %c0_131 = arith.constant 0 : index
    %c0_132 = arith.constant 0 : index
    %206 = vector.load %arg8[%c2_130, %c0_131, %c0_132] : memref<8x16x16xf32, #tpu.memory_space<vmem>>, vector<1x16x16xf32>
    %207 = vector.shape_cast %206 : vector<1x16x16xf32> to vector<16x16xf32>
    %208 = vector.shape_cast %205 : vector<16x16xf32> to vector<1x16x16xf32>
    tpu.vector_store %arg8[%c2_130, %c0_131, %c0_132], %208 {strides = array<i32>} : memref<8x16x16xf32, #tpu.memory_space<vmem>>, vector<1x16x16xf32>,
    %209 = vector.extract_strided_slice %204 {offsets = [16, 0], sizes = [16, 16], strides = [1, 1]} : vector<32x16xf32> to vector<16x16xf32>
    %c2_133 = arith.constant 2 : index
    %c0_134 = arith.constant 0 : index
    %c0_135 = arith.constant 0 : index
    %210 = vector.load %arg9[%c2_133, %c0_134, %c0_135] : memref<8x16x16xf32, #tpu.memory_space<vmem>>, vector<1x16x16xf32>
    %211 = vector.shape_cast %210 : vector<1x16x16xf32> to vector<16x16xf32>
    %212 = vector.shape_cast %209 : vector<16x16xf32> to vector<1x16x16xf32>
    tpu.vector_store %arg9[%c2_133, %c0_134, %c0_135], %212 {strides = array<i32>} : memref<8x16x16xf32, #tpu.memory_space<vmem>>, vector<1x16x16xf32>,
    %c3 = arith.constant 3 : index
    %c0_136 = arith.constant 0 : index
    %c0_137 = arith.constant 0 : index
    %213 = vector.load %arg10[%c3, %c0_136, %c0_137] : memref<8x80x16xf32, #tpu.memory_space<vmem>>, vector<1x80x16xf32>
    %214 = vector.shape_cast %213 : vector<1x80x16xf32> to vector<80x16xf32>
    %cst_138 = arith.constant dense<0.000000e+00> : vector<32x16xf32>
    %215 = tpu.matmul %166, %214, %cst_138 {dimension_numbers = #tpu.dot_dimension_numbers<[1], [0], [0], [1], [0, 0, 1, 1], [], []>} : vector<32x80xf32>, vector<80x16xf32>, vector<32x16xf32> -> vector<32x16xf32>
    %216 = vector.broadcast %167 : vector<32x1xf32> to vector<32x16xf32>
    %217 = arith.addf %215, %216 : vector<32x16xf32>
    %cst_139 = arith.constant 0.000000e+00 : f32
    %218 = vector.broadcast %cst_139 : f32 to vector<32x16xf32>
    %219 = arith.maximumf %217, %218 : vector<32x16xf32>
    %220 = vector.extract_strided_slice %219 {offsets = [0, 0], sizes = [16, 16], strides = [1, 1]} : vector<32x16xf32> to vector<16x16xf32>
    %c3_140 = arith.constant 3 : index
    %c0_141 = arith.constant 0 : index
    %c0_142 = arith.constant 0 : index
    %221 = vector.load %arg8[%c3_140, %c0_141, %c0_142] : memref<8x16x16xf32, #tpu.memory_space<vmem>>, vector<1x16x16xf32>
    %222 = vector.shape_cast %221 : vector<1x16x16xf32> to vector<16x16xf32>
    %223 = vector.shape_cast %220 : vector<16x16xf32> to vector<1x16x16xf32>
    tpu.vector_store %arg8[%c3_140, %c0_141, %c0_142], %223 {strides = array<i32>} : memref<8x16x16xf32, #tpu.memory_space<vmem>>, vector<1x16x16xf32>,
    %224 = vector.extract_strided_slice %219 {offsets = [16, 0], sizes = [16, 16], strides = [1, 1]} : vector<32x16xf32> to vector<16x16xf32>
    %c3_143 = arith.constant 3 : index
    %c0_144 = arith.constant 0 : index
    %c0_145 = arith.constant 0 : index
    %225 = vector.load %arg9[%c3_143, %c0_144, %c0_145] : memref<8x16x16xf32, #tpu.memory_space<vmem>>, vector<1x16x16xf32>
    %226 = vector.shape_cast %225 : vector<1x16x16xf32> to vector<16x16xf32>
    %227 = vector.shape_cast %224 : vector<16x16xf32> to vector<1x16x16xf32>
    tpu.vector_store %arg9[%c3_143, %c0_144, %c0_145], %227 {strides = array<i32>} : memref<8x16x16xf32, #tpu.memory_space<vmem>>, vector<1x16x16xf32>,
    %c4 = arith.constant 4 : index
    %c0_146 = arith.constant 0 : index
    %c0_147 = arith.constant 0 : index
    %228 = vector.load %arg10[%c4, %c0_146, %c0_147] : memref<8x80x16xf32, #tpu.memory_space<vmem>>, vector<1x80x16xf32>
    %229 = vector.shape_cast %228 : vector<1x80x16xf32> to vector<80x16xf32>
    %cst_148 = arith.constant dense<0.000000e+00> : vector<32x16xf32>
    %230 = tpu.matmul %166, %229, %cst_148 {dimension_numbers = #tpu.dot_dimension_numbers<[1], [0], [0], [1], [0, 0, 1, 1], [], []>} : vector<32x80xf32>, vector<80x16xf32>, vector<32x16xf32> -> vector<32x16xf32>
    %231 = vector.broadcast %167 : vector<32x1xf32> to vector<32x16xf32>
    %232 = arith.addf %230, %231 : vector<32x16xf32>
    %cst_149 = arith.constant 0.000000e+00 : f32
    %233 = vector.broadcast %cst_149 : f32 to vector<32x16xf32>
    %234 = arith.maximumf %232, %233 : vector<32x16xf32>
    %235 = vector.extract_strided_slice %234 {offsets = [0, 0], sizes = [16, 16], strides = [1, 1]} : vector<32x16xf32> to vector<16x16xf32>
    %c4_150 = arith.constant 4 : index
    %c0_151 = arith.constant 0 : index
    %c0_152 = arith.constant 0 : index
    %236 = vector.load %arg8[%c4_150, %c0_151, %c0_152] : memref<8x16x16xf32, #tpu.memory_space<vmem>>, vector<1x16x16xf32>
    %237 = vector.shape_cast %236 : vector<1x16x16xf32> to vector<16x16xf32>
    %238 = vector.shape_cast %235 : vector<16x16xf32> to vector<1x16x16xf32>
    tpu.vector_store %arg8[%c4_150, %c0_151, %c0_152], %238 {strides = array<i32>} : memref<8x16x16xf32, #tpu.memory_space<vmem>>, vector<1x16x16xf32>,
    %239 = vector.extract_strided_slice %234 {offsets = [16, 0], sizes = [16, 16], strides = [1, 1]} : vector<32x16xf32> to vector<16x16xf32>
    %c4_153 = arith.constant 4 : index
    %c0_154 = arith.constant 0 : index
    %c0_155 = arith.constant 0 : index
    %240 = vector.load %arg9[%c4_153, %c0_154, %c0_155] : memref<8x16x16xf32, #tpu.memory_space<vmem>>, vector<1x16x16xf32>
    %241 = vector.shape_cast %240 : vector<1x16x16xf32> to vector<16x16xf32>
    %242 = vector.shape_cast %239 : vector<16x16xf32> to vector<1x16x16xf32>
    tpu.vector_store %arg9[%c4_153, %c0_154, %c0_155], %242 {strides = array<i32>} : memref<8x16x16xf32, #tpu.memory_space<vmem>>, vector<1x16x16xf32>,
    %c5 = arith.constant 5 : index
    %c0_156 = arith.constant 0 : index
    %c0_157 = arith.constant 0 : index
    %243 = vector.load %arg10[%c5, %c0_156, %c0_157] : memref<8x80x16xf32, #tpu.memory_space<vmem>>, vector<1x80x16xf32>
    %244 = vector.shape_cast %243 : vector<1x80x16xf32> to vector<80x16xf32>
    %cst_158 = arith.constant dense<0.000000e+00> : vector<32x16xf32>
    %245 = tpu.matmul %166, %244, %cst_158 {dimension_numbers = #tpu.dot_dimension_numbers<[1], [0], [0], [1], [0, 0, 1, 1], [], []>} : vector<32x80xf32>, vector<80x16xf32>, vector<32x16xf32> -> vector<32x16xf32>
    %246 = vector.broadcast %167 : vector<32x1xf32> to vector<32x16xf32>
    %247 = arith.addf %245, %246 : vector<32x16xf32>
    %cst_159 = arith.constant 0.000000e+00 : f32
    %248 = vector.broadcast %cst_159 : f32 to vector<32x16xf32>
    %249 = arith.maximumf %247, %248 : vector<32x16xf32>
    %250 = vector.extract_strided_slice %249 {offsets = [0, 0], sizes = [16, 16], strides = [1, 1]} : vector<32x16xf32> to vector<16x16xf32>
    %c5_160 = arith.constant 5 : index
    %c0_161 = arith.constant 0 : index
    %c0_162 = arith.constant 0 : index
    %251 = vector.load %arg8[%c5_160, %c0_161, %c0_162] : memref<8x16x16xf32, #tpu.memory_space<vmem>>, vector<1x16x16xf32>
    %252 = vector.shape_cast %251 : vector<1x16x16xf32> to vector<16x16xf32>
    %253 = vector.shape_cast %250 : vector<16x16xf32> to vector<1x16x16xf32>
    tpu.vector_store %arg8[%c5_160, %c0_161, %c0_162], %253 {strides = array<i32>} : memref<8x16x16xf32, #tpu.memory_space<vmem>>, vector<1x16x16xf32>,
    %254 = vector.extract_strided_slice %249 {offsets = [16, 0], sizes = [16, 16], strides = [1, 1]} : vector<32x16xf32> to vector<16x16xf32>
    %c5_163 = arith.constant 5 : index
    %c0_164 = arith.constant 0 : index
    %c0_165 = arith.constant 0 : index
    %255 = vector.load %arg9[%c5_163, %c0_164, %c0_165] : memref<8x16x16xf32, #tpu.memory_space<vmem>>, vector<1x16x16xf32>
    %256 = vector.shape_cast %255 : vector<1x16x16xf32> to vector<16x16xf32>
    %257 = vector.shape_cast %254 : vector<16x16xf32> to vector<1x16x16xf32>
    tpu.vector_store %arg9[%c5_163, %c0_164, %c0_165], %257 {strides = array<i32>} : memref<8x16x16xf32, #tpu.memory_space<vmem>>, vector<1x16x16xf32>,
    %c6 = arith.constant 6 : index
    %c0_166 = arith.constant 0 : index
    %c0_167 = arith.constant 0 : index
    %258 = vector.load %arg10[%c6, %c0_166, %c0_167] : memref<8x80x16xf32, #tpu.memory_space<vmem>>, vector<1x80x16xf32>
    %259 = vector.shape_cast %258 : vector<1x80x16xf32> to vector<80x16xf32>
    %cst_168 = arith.constant dense<0.000000e+00> : vector<32x16xf32>
    %260 = tpu.matmul %166, %259, %cst_168 {dimension_numbers = #tpu.dot_dimension_numbers<[1], [0], [0], [1], [0, 0, 1, 1], [], []>} : vector<32x80xf32>, vector<80x16xf32>, vector<32x16xf32> -> vector<32x16xf32>
    %261 = vector.broadcast %167 : vector<32x1xf32> to vector<32x16xf32>
    %262 = arith.addf %260, %261 : vector<32x16xf32>
    %cst_169 = arith.constant 0.000000e+00 : f32
    %263 = vector.broadcast %cst_169 : f32 to vector<32x16xf32>
    %264 = arith.maximumf %262, %263 : vector<32x16xf32>
    %265 = vector.extract_strided_slice %264 {offsets = [0, 0], sizes = [16, 16], strides = [1, 1]} : vector<32x16xf32> to vector<16x16xf32>
    %c6_170 = arith.constant 6 : index
    %c0_171 = arith.constant 0 : index
    %c0_172 = arith.constant 0 : index
    %266 = vector.load %arg8[%c6_170, %c0_171, %c0_172] : memref<8x16x16xf32, #tpu.memory_space<vmem>>, vector<1x16x16xf32>
    %267 = vector.shape_cast %266 : vector<1x16x16xf32> to vector<16x16xf32>
    %268 = vector.shape_cast %265 : vector<16x16xf32> to vector<1x16x16xf32>
    tpu.vector_store %arg8[%c6_170, %c0_171, %c0_172], %268 {strides = array<i32>} : memref<8x16x16xf32, #tpu.memory_space<vmem>>, vector<1x16x16xf32>,
    %269 = vector.extract_strided_slice %264 {offsets = [16, 0], sizes = [16, 16], strides = [1, 1]} : vector<32x16xf32> to vector<16x16xf32>
    %c6_173 = arith.constant 6 : index
    %c0_174 = arith.constant 0 : index
    %c0_175 = arith.constant 0 : index
    %270 = vector.load %arg9[%c6_173, %c0_174, %c0_175] : memref<8x16x16xf32, #tpu.memory_space<vmem>>, vector<1x16x16xf32>
    %271 = vector.shape_cast %270 : vector<1x16x16xf32> to vector<16x16xf32>
    %272 = vector.shape_cast %269 : vector<16x16xf32> to vector<1x16x16xf32>
    tpu.vector_store %arg9[%c6_173, %c0_174, %c0_175], %272 {strides = array<i32>} : memref<8x16x16xf32, #tpu.memory_space<vmem>>, vector<1x16x16xf32>,
    %c7 = arith.constant 7 : index
    %c0_176 = arith.constant 0 : index
    %c0_177 = arith.constant 0 : index
    %273 = vector.load %arg10[%c7, %c0_176, %c0_177] : memref<8x80x16xf32, #tpu.memory_space<vmem>>, vector<1x80x16xf32>
    %274 = vector.shape_cast %273 : vector<1x80x16xf32> to vector<80x16xf32>
    %cst_178 = arith.constant dense<0.000000e+00> : vector<32x16xf32>
    %275 = tpu.matmul %166, %274, %cst_178 {dimension_numbers = #tpu.dot_dimension_numbers<[1], [0], [0], [1], [0, 0, 1, 1], [], []>} : vector<32x80xf32>, vector<80x16xf32>, vector<32x16xf32> -> vector<32x16xf32>
    %276 = vector.broadcast %167 : vector<32x1xf32> to vector<32x16xf32>
    %277 = arith.addf %275, %276 : vector<32x16xf32>
    %cst_179 = arith.constant 0.000000e+00 : f32
    %278 = vector.broadcast %cst_179 : f32 to vector<32x16xf32>
    %279 = arith.maximumf %277, %278 : vector<32x16xf32>
    %280 = vector.extract_strided_slice %279 {offsets = [0, 0], sizes = [16, 16], strides = [1, 1]} : vector<32x16xf32> to vector<16x16xf32>
    %c7_180 = arith.constant 7 : index
    %c0_181 = arith.constant 0 : index
    %c0_182 = arith.constant 0 : index
    %281 = vector.load %arg8[%c7_180, %c0_181, %c0_182] : memref<8x16x16xf32, #tpu.memory_space<vmem>>, vector<1x16x16xf32>
    %282 = vector.shape_cast %281 : vector<1x16x16xf32> to vector<16x16xf32>
    %283 = vector.shape_cast %280 : vector<16x16xf32> to vector<1x16x16xf32>
    tpu.vector_store %arg8[%c7_180, %c0_181, %c0_182], %283 {strides = array<i32>} : memref<8x16x16xf32, #tpu.memory_space<vmem>>, vector<1x16x16xf32>,
    %284 = vector.extract_strided_slice %279 {offsets = [16, 0], sizes = [16, 16], strides = [1, 1]} : vector<32x16xf32> to vector<16x16xf32>
    %c7_183 = arith.constant 7 : index
    %c0_184 = arith.constant 0 : index
    %c0_185 = arith.constant 0 : index
    %285 = vector.load %arg9[%c7_183, %c0_184, %c0_185] : memref<8x16x16xf32, #tpu.memory_space<vmem>>, vector<1x16x16xf32>
    %286 = vector.shape_cast %285 : vector<1x16x16xf32> to vector<16x16xf32>
    %287 = vector.shape_cast %284 : vector<16x16xf32> to vector<1x16x16xf32>
    tpu.vector_store %arg9[%c7_183, %c0_184, %c0_185], %287 {strides = array<i32>} : memref<8x16x16xf32, #tpu.memory_space<vmem>>, vector<1x16x16xf32>,
    return
  }
  func.func @transform_0(%arg0: i32) -> (i32, i32, i32) {
    %c0_i32 = arith.constant 0 : i32
    %c0_i32_0 = arith.constant 0 : i32
    %c0_i32_1 = arith.constant 0 : i32
    return %arg0, %c0_i32, %c0_i32_0 : i32, i32, i32
  }
  func.func @transform_1(%arg0: i32) -> (i32, i32, i32) {
    %c0_i32 = arith.constant 0 : i32
    %c0_i32_0 = arith.constant 0 : i32
    %c0_i32_1 = arith.constant 0 : i32
    return %arg0, %c0_i32, %c0_i32_0 : i32, i32, i32
  }
  func.func @transform_2(%arg0: i32) -> (i32, i32, i32) {
    %c0_i32 = arith.constant 0 : i32
    %c0_i32_0 = arith.constant 0 : i32
    %c0_i32_1 = arith.constant 0 : i32
    return %arg0, %c0_i32, %c0_i32_0 : i32, i32, i32
  }
  func.func @transform_3(%arg0: i32) -> (i32, i32, i32) {
    %c0_i32 = arith.constant 0 : i32
    %c0_i32_0 = arith.constant 0 : i32
    %c0_i32_1 = arith.constant 0 : i32
    return %arg0, %c0_i32, %c0_i32_0 : i32, i32, i32
  }
  func.func @transform_4(%arg0: i32) -> (i32, i32, i32) {
    %c0_i32 = arith.constant 0 : i32
    %c0_i32_0 = arith.constant 0 : i32
    %c0_i32_1 = arith.constant 0 : i32
    return %arg0, %c0_i32, %c0_i32_0 : i32, i32, i32
  }
  func.func @transform_5(%arg0: i32) -> (i32, i32) {
    %c0_i32 = arith.constant 0 : i32
    %c0_i32_0 = arith.constant 0 : i32
    %c0_i32_1 = arith.constant 0 : i32
    return %c0_i32, %c0_i32_0 : i32, i32
  }
  func.func @transform_6(%arg0: i32) -> (i32, i32) {
    %c0_i32 = arith.constant 0 : i32
    %c0_i32_0 = arith.constant 0 : i32
    %c0_i32_1 = arith.constant 0 : i32
    return %c0_i32, %c0_i32_0 : i32, i32
  }
  func.func @transform_7(%arg0: i32) -> (i32, i32, i32) {
    %c0_i32 = arith.constant 0 : i32
    %c0_i32_0 = arith.constant 0 : i32
    %c0_i32_1 = arith.constant 0 : i32
    return %arg0, %c0_i32, %c0_i32_0 : i32, i32, i32
  }
  func.func @transform_8(%arg0: i32) -> (i32, i32, i32) {
    %c0_i32 = arith.constant 0 : i32
    %c0_i32_0 = arith.constant 0 : i32
    %c0_i32_1 = arith.constant 0 : i32
    return %arg0, %c0_i32, %c0_i32_0 : i32, i32, i32
  }
}

</mosaic_0001>

<llo_original>
// kernel: tpu_custom_call.1
$region0: #{tpu_custom_call.1}
  #allocation0 [shape = 'u32[]', space=smem, size = 0x4, offset = 0x4, fixed_abs, tag = 'smem constant byte address 0x4 - core index']
  #allocation1 [shape = 'u32[144,128]{1,0:T(1,128)}', space=vmem, size = 0x12000, scoped, tag = 'internal scratch']
  #allocation2 [shape = 'f32[8,80,16]{2,1,0:T(8,128)}', space=vmem, size = 0x50000, scoped, tag = 'scratch operand']
  %s0 = inlined_call_operand.vmem [shape: f32[8,48,16], index: 0, kind: input, shape index: {}]
  %s1 = inlined_call_operand.vmem [shape: f32[8,16,16], index: 1, kind: input, shape index: {}]
  %s2 = inlined_call_operand.vmem [shape: f32[8,16,16], index: 2, kind: input, shape index: {}]
  %s3 = inlined_call_operand.vmem [shape: f32[8,16,16], index: 3, kind: input, shape index: {}]
  %s4 = inlined_call_operand.vmem [shape: f32[8,16,16], index: 4, kind: input, shape index: {}]
  %s5 = inlined_call_operand.vmem [shape: f32[65,8], index: 5, kind: input, shape index: {}]
  %s6 = inlined_call_operand.vmem [shape: f32[32,81], index: 6, kind: input, shape index: {}]
  %s7 = inlined_call_operand.hbm [shape: f32[8,16,16], index: 7, kind: output, shape index: {0}]
  %s8 = inlined_call_operand.hbm [shape: f32[8,16,16], index: 8, kind: output, shape index: {1}]
  %9 = xla_tuple %s7, %s8
  %s10 = sld [smem:[#allocation0]]
  $region46: #{tpu_custom_call.1} parent=0
    _
  %s12 = ssub.s32 1, %s10
  %s13 = scalar_select 0, %s12, %s10
  $region1: #{tpu_custom_call.1} parent=0
    #allocation3 [shape = 'u8[65536]{0}', space=vmem, size = 0x10000, scoped, tag = 'output window, operand 0, single buffered']
    #allocation4 [shape = 's32[1]{0}', space=sflag, size = 0x4, scoped, tag = 'scoped memory for tpu_custom_call.1']
    #allocation5 [shape = 'u8[65536]{0}', space=vmem, size = 0x10000, scoped, tag = 'output window, operand 1, single buffered']
    #allocation6 [shape = 's32[1]{0}', space=sflag, size = 0x4, scoped, tag = 'scoped memory for tpu_custom_call.1']
    %14 = vsyncpa [#allocation4], 0
    %15 = vsyncpa [#allocation6], 0
    // Predicated region
    $region2: #{tpu_custom_call.1} parent=1 // pred_check
      _
    $region3: #{tpu_custom_call.1} parent=1 // pred_check_branch
      %17 = sbr.rel (0) target = $region5
    $region4: #{tpu_custom_call.1} parent=1 // pred_region
      _
    $region5: #{tpu_custom_call.1} parent=1 // pred_fallthru
      _
    // Predicated region
    $region6: #{tpu_custom_call.1} parent=1 // pred_check
      _
    $region7: #{tpu_custom_call.1} parent=1 // pred_check_branch
      %19 = sbr.rel (0) target = $region9
    $region8: #{tpu_custom_call.1} parent=1 // pred_region
      _
    $region9: #{tpu_custom_call.1} parent=1 // pred_fallthru
      _
    // Predicated region
    $region10: #{tpu_custom_call.1} parent=1 // pred_check
      _
    $region11: #{tpu_custom_call.1} parent=1 // pred_check_branch
      %21 = sbr.rel (0) target = $region13
    $region12: #{tpu_custom_call.1} parent=1 // pred_region
      _
    $region13: #{tpu_custom_call.1} parent=1 // pred_fallthru
      _
    // Predicated region
    $region14: #{tpu_custom_call.1} parent=1 // pred_check
      _
    $region15: #{tpu_custom_call.1} parent=1 // pred_check_branch
      %23 = sbr.rel (0) target = $region17
    $region16: #{tpu_custom_call.1} parent=1 // pred_region
      _
    $region17: #{tpu_custom_call.1} parent=1 // pred_fallthru
      _
    // Predicated region
    $region18: #{tpu_custom_call.1} parent=1 // pred_check
      _
    $region19: #{tpu_custom_call.1} parent=1 // pred_check_branch
      %25 = sbr.rel (0) target = $region21
    $region20: #{tpu_custom_call.1} parent=1 // pred_region
      _
    $region21: #{tpu_custom_call.1} parent=1 // pred_fallthru
      _
    // Predicated region
    $region22: #{tpu_custom_call.1} parent=1 // pred_check
      _
    $region23: #{tpu_custom_call.1} parent=1 // pred_check_branch
      %27 = sbr.rel (0) target = $region25
    $region24: #{tpu_custom_call.1} parent=1 // pred_region
      _
    $region25: #{tpu_custom_call.1} parent=1 // pred_fallthru
      _
    // Predicated region
    $region26: #{tpu_custom_call.1} parent=1 // pred_check
      _
    $region27: #{tpu_custom_call.1} parent=1 // pred_check_branch
      %29 = sbr.rel (0) target = $region29
    $region28: #{tpu_custom_call.1} parent=1 // pred_region
      _
    $region29: #{tpu_custom_call.1} parent=1 // pred_fallthru
      _
    %v30 = vld [vmem:[%s0] sm:$0xff]
    %v31 = vld [vmem:[%s0 + $0x8] sm:$0xff]
    %v32 = vld [vmem:[%s0 + $0x10] sm:$0xff]
    %v33 = vld [vmem:[%s0 + $0x18] sm:$0xff]
    %v34 = vld [vmem:[%s0 + $0x20] sm:$0xff]
    %v35 = vld [vmem:[%s0 + $0x28] sm:$0xff]
    %v36 = vld [vmem:[%s0 + $0x30] sm:$0xff]
    %v37 = vld [vmem:[%s0 + $0x38] sm:$0xff]
    %v38 = vld [vmem:[%s0 + $0x40] sm:$0xff]
    %v39 = vld [vmem:[%s0 + $0x48] sm:$0xff]
    %v40 = vld [vmem:[%s0 + $0x50] sm:$0xff]
    %v41 = vld [vmem:[%s0 + $0x58] sm:$0xff]
    %v42 = vld [vmem:[%s0 + $0x60] sm:$0xff]
    %v43 = vld [vmem:[%s0 + $0x68] sm:$0xff]
    %v44 = vld [vmem:[%s0 + $0x70] sm:$0xff]
    %v45 = vld [vmem:[%s0 + $0x78] sm:$0xff]
    %v46 = vld [vmem:[%s0 + $0x80] sm:$0xff]
    %v47 = vld [vmem:[%s0 + $0x88] sm:$0xff]
    %v48 = vld [vmem:[%s0 + $0x90] sm:$0xff]
    %v49 = vld [vmem:[%s0 + $0x98] sm:$0xff]
    %v50 = vld [vmem:[%s0 + $0xa0] sm:$0xff]
    %v51 = vld [vmem:[%s0 + $0xa8] sm:$0xff]
    %v52 = vld [vmem:[%s0 + $0xb0] sm:$0xff]
    %v53 = vld [vmem:[%s0 + $0xb8] sm:$0xff]
    %v54 = vld [vmem:[%s0 + $0xc0] sm:$0xff]
    %v55 = vld [vmem:[%s0 + $0xc8] sm:$0xff]
    %v56 = vld [vmem:[%s0 + $0xd0] sm:$0xff]
    %v57 = vld [vmem:[%s0 + $0xd8] sm:$0xff]
    %v58 = vld [vmem:[%s0 + $0xe0] sm:$0xff]
    %v59 = vld [vmem:[%s0 + $0xe8] sm:$0xff]
    %v60 = vld [vmem:[%s0 + $0xf0] sm:$0xff]
    %v61 = vld [vmem:[%s0 + $0xf8] sm:$0xff]
    %v62 = vld [vmem:[%s0 + $0x100] sm:$0xff]
    %v63 = vld [vmem:[%s0 + $0x108] sm:$0xff]
    %v64 = vld [vmem:[%s0 + $0x110] sm:$0xff]
    %v65 = vld [vmem:[%s0 + $0x118] sm:$0xff]
    %v66 = vld [vmem:[%s0 + $0x120] sm:$0xff]
    %v67 = vld [vmem:[%s0 + $0x128] sm:$0xff]
    %v68 = vld [vmem:[%s0 + $0x130] sm:$0xff]
    %v69 = vld [vmem:[%s0 + $0x138] sm:$0xff]
    %v70 = vld [vmem:[%s0 + $0x140] sm:$0xff]
    %v71 = vld [vmem:[%s0 + $0x148] sm:$0xff]
    %v72 = vld [vmem:[%s0 + $0x150] sm:$0xff]
    %v73 = vld [vmem:[%s0 + $0x158] sm:$0xff]
    %v74 = vld [vmem:[%s0 + $0x160] sm:$0xff]
    %v75 = vld [vmem:[%s0 + $0x168] sm:$0xff]
    %v76 = vld [vmem:[%s0 + $0x170] sm:$0xff]
    %v77 = vld [vmem:[%s0 + $0x178] sm:$0xff]
    %v78 = vld [vmem:[%s1] sm:$0xff]
    %v79 = vld [vmem:[%s1 + $0x8] sm:$0xff]
    %v80 = vld [vmem:[%s1 + $0x10] sm:$0xff]
    %v81 = vld [vmem:[%s1 + $0x18] sm:$0xff]
    %v82 = vld [vmem:[%s1 + $0x20] sm:$0xff]
    %v83 = vld [vmem:[%s1 + $0x28] sm:$0xff]
    %v84 = vld [vmem:[%s1 + $0x30] sm:$0xff]
    %v85 = vld [vmem:[%s1 + $0x38] sm:$0xff]
    %v86 = vld [vmem:[%s1 + $0x40] sm:$0xff]
    %v87 = vld [vmem:[%s1 + $0x48] sm:$0xff]
    %v88 = vld [vmem:[%s1 + $0x50] sm:$0xff]
    %v89 = vld [vmem:[%s1 + $0x58] sm:$0xff]
    %v90 = vld [vmem:[%s1 + $0x60] sm:$0xff]
    %v91 = vld [vmem:[%s1 + $0x68] sm:$0xff]
    %v92 = vld [vmem:[%s1 + $0x70] sm:$0xff]
    %v93 = vld [vmem:[%s1 + $0x78] sm:$0xff]
    %vm94 = vcmask 130048
    %v96 = vsel %vm94, %v30, 0
    %v99 = vsel %vm94, %v31, 0
    %v102 = vsel %vm94, %v78, 0
    %v105 = vsel %vm94, %v79, 0
    %107 = vmatprep.subr.mxu0 0.0
    %108 = vmatpush1.xpose.msra.mxu0 %v102
    %109 = vmatprep.subr.mxu0 0.0
    %110 = vmatpush1.xpose.msra.mxu0 %v105
    %111 = vmatprep.subr.mxu0 0.0
    %112 = vmatpush1.xpose.msra.mxu0 0.0
    %113 = vmatprep.subr.mxu0 0.0
    %114 = vmatpush1.xpose.msra.mxu0 0.0
    %115 = vmatprep.subr.mxu0 0.0
    %116 = vmatpush1.xpose.msra.mxu0 0.0
    %117 = vmatprep.subr.mxu0 0.0
    %118 = vmatpush1.xpose.msra.mxu0 0.0
    %119 = vmatprep.subr.mxu0 0.0
    %120 = vmatpush1.xpose.msra.mxu0 0.0
    %121 = vmatprep.subr.mxu0 0.0
    %122 = vmatpush1.xpose.msra.mxu0 0.0
    %123 = vmatprep.subr.mxu0 0.0
    %124 = vmatpush1.xpose.msra.mxu0 0.0
    %125 = vmatprep.subr.mxu0 0.0
    %126 = vmatpush1.xpose.msra.mxu0 0.0
    %127 = vmatprep.subr.mxu0 0.0
    %128 = vmatpush1.xpose.msra.mxu0 0.0
    %129 = vmatprep.subr.mxu0 0.0
    %130 = vmatpush1.xpose.msra.mxu0 0.0
    %131 = vmatprep.subr.mxu0 0.0
    %132 = vmatpush1.xpose.msra.mxu0 0.0
    %133 = vmatprep.subr.mxu0 0.0
    %134 = vmatpush1.xpose.msra.mxu0 0.0
    %135 = vmatprep.subr.mxu0 0.0
    %136 = vmatpush1.xpose.msra.mxu0 0.0
    %137 = vmatprep.subr.mxu0 0.0
    %138 = vmatpush1.xpose.msra.mxu0 0.0
    %139 = vmatprep.subr.mxu0 0.0
    %140 = vmatpush1.xpose.msra.mxu0 0.0
    %141 = vmatprep.subr.mxu0 0.0
    %142 = vmatpush1.xpose.msra.mxu0 0.0
    %143 = vmatprep.subr.mxu0 0.0
    %144 = vmatpush1.xpose.msra.mxu0 0.0
    %145 = vmatprep.subr.mxu0 0.0
    %146 = vmatpush1.xpose.msra.mxu0 0.0
    %147 = vmatprep.subr.mxu0 0.0
    %148 = vmatpush1.xpose.msra.mxu0 0.0
    %149 = vmatprep.subr.mxu0 0.0
    %150 = vmatpush1.xpose.msra.mxu0 0.0
    %151 = vmatprep.subr.mxu0 0.0
    %152 = vmatpush1.xpose.msra.mxu0 0.0
    %153 = vmatprep.subr.mxu0 0.0
    %154 = vmatpush1.xpose.msra.mxu0 0.0
    %155 = vmatprep.subr.mxu0 0.0
    %156 = vmatpush1.xpose.msra.mxu0 0.0
    %157 = vmatprep.subr.mxu0 0.0
    %158 = vmatpush1.xpose.msra.mxu0 0.0
    %159 = vmatprep.subr.mxu0 0.0
    %160 = vmatpush1.xpose.msra.mxu0 0.0
    %161 = vmatprep.subr.mxu0 0.0
    %162 = vmatpush1.xpose.msra.mxu0 0.0
    %163 = vmatprep.subr.mxu0 0.0
    %164 = vmatpush1.xpose.msra.mxu0 0.0
    %165 = vmatprep.subr.mxu0 0.0
    %166 = vmatpush1.xpose.msra.mxu0 0.0
    %167 = vmatprep.subr.mxu0 0.0
    %168 = vmatpush1.xpose.msra.mxu0 0.0
    %169 = vmatprep.subr.mxu0 0.0
    %170 = vmatpush1.xpose.msra.mxu0 0.0
    %171 = vmatprep.mubr.f32.mxu0 0.0
    %172 = vmatmul.mubr.f32.gmra.mrb[0].mxu0 %v96
    %v173 = vpop.f32.mrb[0].mxu0
    %v174 = vadd.f32 0.0, %v173
    %v175 = vpop.f32.mrb[0].mxu0
    %176 = vmatprep.mubr.f32.mxu0 0.0
    %177 = vmatmul.mubr.f32.gmra.mrb[0].mxu0 %v99
    %v178 = vpop.f32.mrb[0].mxu0
    %v179 = vadd.f32 0.0, %v178
    %v180 = vpop.f32.mrb[0].mxu0
    %181 = vdwg.mxu0
    %v183 = vsel %vm94, %v36, 0
    %v186 = vsel %vm94, %v37, 0
    %v189 = vsel %vm94, %v80, 0
    %v192 = vsel %vm94, %v81, 0
    %194 = vmatprep.subr.mxu0 0.0
    %195 = vmatpush1.xpose.msra.mxu0 %v189
    %196 = vmatprep.subr.mxu0 0.0
    %197 = vmatpush1.xpose.msra.mxu0 %v192
    %198 = vmatprep.subr.mxu0 0.0
    %199 = vmatpush1.xpose.msra.mxu0 0.0
    %200 = vmatprep.subr.mxu0 0.0
    %201 = vmatpush1.xpose.msra.mxu0 0.0
    %202 = vmatprep.subr.mxu0 0.0
    %203 = vmatpush1.xpose.msra.mxu0 0.0
    %204 = vmatprep.subr.mxu0 0.0
    %205 = vmatpush1.xpose.msra.mxu0 0.0
    %206 = vmatprep.subr.mxu0 0.0
    %207 = vmatpush1.xpose.msra.mxu0 0.0
    %208 = vmatprep.subr.mxu0 0.0
    %209 = vmatpush1.xpose.msra.mxu0 0.0
    %210 = vmatprep.subr.mxu0 0.0
    %211 = vmatpush1.xpose.msra.mxu0 0.0
    %212 = vmatprep.subr.mxu0 0.0
    %213 = vmatpush1.xpose.msra.mxu0 0.0
    %214 = vmatprep.subr.mxu0 0.0
    %215 = vmatpush1.xpose.msra.mxu0 0.0
    %216 = vmatprep.subr.mxu0 0.0
    %217 = vmatpush1.xpose.msra.mxu0 0.0
    %218 = vmatprep.subr.mxu0 0.0
    %219 = vmatpush1.xpose.msra.mxu0 0.0
    %220 = vmatprep.subr.mxu0 0.0
    %221 = vmatpush1.xpose.msra.mxu0 0.0
    %222 = vmatprep.subr.mxu0 0.0
    %223 = vmatpush1.xpose.msra.mxu0 0.0
    %224 = vmatprep.subr.mxu0 0.0
    %225 = vmatpush1.xpose.msra.mxu0 0.0
    %226 = vmatprep.subr.mxu0 0.0
    %227 = vmatpush1.xpose.msra.mxu0 0.0
    %228 = vmatprep.subr.mxu0 0.0
    %229 = vmatpush1.xpose.msra.mxu0 0.0
    %230 = vmatprep.subr.mxu0 0.0
    %231 = vmatpush1.xpose.msra.mxu0 0.0
    %232 = vmatprep.subr.mxu0 0.0
    %233 = vmatpush1.xpose.msra.mxu0 0.0
    %234 = vmatprep.subr.mxu0 0.0
    %235 = vmatpush1.xpose.msra.mxu0 0.0
    %236 = vmatprep.subr.mxu0 0.0
    %237 = vmatpush1.xpose.msra.mxu0 0.0
    %238 = vmatprep.subr.mxu0 0.0
    %239 = vmatpush1.xpose.msra.mxu0 0.0
    %240 = vmatprep.subr.mxu0 0.0
    %241 = vmatpush1.xpose.msra.mxu0 0.0
    %242 = vmatprep.subr.mxu0 0.0
    %243 = vmatpush1.xpose.msra.mxu0 0.0
    %244 = vmatprep.subr.mxu0 0.0
    %245 = vmatpush1.xpose.msra.mxu0 0.0
    %246 = vmatprep.subr.mxu0 0.0
    %247 = vmatpush1.xpose.msra.mxu0 0.0
    %248 = vmatprep.subr.mxu0 0.0
    %249 = vmatpush1.xpose.msra.mxu0 0.0
    %250 = vmatprep.subr.mxu0 0.0
    %251 = vmatpush1.xpose.msra.mxu0 0.0
    %252 = vmatprep.subr.mxu0 0.0
    %253 = vmatpush1.xpose.msra.mxu0 0.0
    %254 = vmatprep.subr.mxu0 0.0
    %255 = vmatpush1.xpose.msra.mxu0 0.0
    %256 = vmatprep.subr.mxu0 0.0
    %257 = vmatpush1.xpose.msra.mxu0 0.0
    %258 = vmatprep.mubr.f32.mxu0 0.0
    %259 = vmatmul.mubr.f32.gmra.mrb[0].mxu0 %v183
    %v260 = vpop.f32.mrb[0].mxu0
    %v261 = vadd.f32 0.0, %v260
    %v262 = vpop.f32.mrb[0].mxu0
    %263 = vmatprep.mubr.f32.mxu0 0.0
    %264 = vmatmul.mubr.f32.gmra.mrb[0].mxu0 %v186
    %v265 = vpop.f32.mrb[0].mxu0
    %v266 = vadd.f32 0.0, %v265
    %v267 = vpop.f32.mrb[0].mxu0
    %268 = vdwg.mxu0
    %v270 = vsel %vm94, %v42, 0
    %v273 = vsel %vm94, %v43, 0
    %v276 = vsel %vm94, %v82, 0
    %v279 = vsel %vm94, %v83, 0
    %281 = vmatprep.subr.mxu0 0.0
    %282 = vmatpush1.xpose.msra.mxu0 %v276
    %283 = vmatprep.subr.mxu0 0.0
    %284 = vmatpush1.xpose.msra.mxu0 %v279
    %285 = vmatprep.subr.mxu0 0.0
    %286 = vmatpush1.xpose.msra.mxu0 0.0
    %287 = vmatprep.subr.mxu0 0.0
    %288 = vmatpush1.xpose.msra.mxu0 0.0
    %289 = vmatprep.subr.mxu0 0.0
    %290 = vmatpush1.xpose.msra.mxu0 0.0
    %291 = vmatprep.subr.mxu0 0.0
    %292 = vmatpush1.xpose.msra.mxu0 0.0
    %293 = vmatprep.subr.mxu0 0.0
    %294 = vmatpush1.xpose.msra.mxu0 0.0
    %295 = vmatprep.subr.mxu0 0.0
    %296 = vmatpush1.xpose.msra.mxu0 0.0
    %297 = vmatprep.subr.mxu0 0.0
    %298 = vmatpush1.xpose.msra.mxu0 0.0
    %299 = vmatprep.subr.mxu0 0.0
    %300 = vmatpush1.xpose.msra.mxu0 0.0
    %301 = vmatprep.subr.mxu0 0.0
    %302 = vmatpush1.xpose.msra.mxu0 0.0
    %303 = vmatprep.subr.mxu0 0.0
    %304 = vmatpush1.xpose.msra.mxu0 0.0
    %305 = vmatprep.subr.mxu0 0.0
    %306 = vmatpush1.xpose.msra.mxu0 0.0
    %307 = vmatprep.subr.mxu0 0.0
    %308 = vmatpush1.xpose.msra.mxu0 0.0
    %309 = vmatprep.subr.mxu0 0.0
    %310 = vmatpush1.xpose.msra.mxu0 0.0
    %311 = vmatprep.subr.mxu0 0.0
    %312 = vmatpush1.xpose.msra.mxu0 0.0
    %313 = vmatprep.subr.mxu0 0.0
    %314 = vmatpush1.xpose.msra.mxu0 0.0
    %315 = vmatprep.subr.mxu0 0.0
    %316 = vmatpush1.xpose.msra.mxu0 0.0
    %317 = vmatprep.subr.mxu0 0.0
    %318 = vmatpush1.xpose.msra.mxu0 0.0
    %319 = vmatprep.subr.mxu0 0.0
    %320 = vmatpush1.xpose.msra.mxu0 0.0
    %321 = vmatprep.subr.mxu0 0.0
    %322 = vmatpush1.xpose.msra.mxu0 0.0
    %323 = vmatprep.subr.mxu0 0.0
    %324 = vmatpush1.xpose.msra.mxu0 0.0
    %325 = vmatprep.subr.mxu0 0.0
    %326 = vmatpush1.xpose.msra.mxu0 0.0
    %327 = vmatprep.subr.mxu0 0.0
    %328 = vmatpush1.xpose.msra.mxu0 0.0
    %329 = vmatprep.subr.mxu0 0.0
    %330 = vmatpush1.xpose.msra.mxu0 0.0
    %331 = vmatprep.subr.mxu0 0.0
    %332 = vmatpush1.xpose.msra.mxu0 0.0
    %333 = vmatprep.subr.mxu0 0.0
    %334 = vmatpush1.xpose.msra.mxu0 0.0
    %335 = vmatprep.subr.mxu0 0.0
    %336 = vmatpush1.xpose.msra.mxu0 0.0
    %337 = vmatprep.subr.mxu0 0.0
    %338 = vmatpush1.xpose.msra.mxu0 0.0
    %339 = vmatprep.subr.mxu0 0.0
    %340 = vmatpush1.xpose.msra.mxu0 0.0
    %341 = vmatprep.subr.mxu0 0.0
    %342 = vmatpush1.xpose.msra.mxu0 0.0
    %343 = vmatprep.subr.mxu0 0.0
    %344 = vmatpush1.xpose.msra.mxu0 0.0
    %345 = vmatprep.mubr.f32.mxu0 0.0
    %346 = vmatmul.mubr.f32.gmra.mrb[0].mxu0 %v270
    %v347 = vpop.f32.mrb[0].mxu0
    %v348 = vadd.f32 0.0, %v347
    %v349 = vpop.f32.mrb[0].mxu0
    %350 = vmatprep.mubr.f32.mxu0 0.0
    %351 = vmatmul.mubr.f32.gmra.mrb[0].mxu0 %v273
    %v352 = vpop.f32.mrb[0].mxu0
    %v353 = vadd.f32 0.0, %v352
    %v354 = vpop.f32.mrb[0].mxu0
    %355 = vdwg.mxu0
    %v357 = vsel %vm94, %v48, 0
    %v360 = vsel %vm94, %v49, 0
    %v363 = vsel %vm94, %v84, 0
    %v366 = vsel %vm94, %v85, 0
    %368 = vmatprep.subr.mxu0 0.0
    %369 = vmatpush1.xpose.msra.mxu0 %v363
    %370 = vmatprep.subr.mxu0 0.0
    %371 = vmatpush1.xpose.msra.mxu0 %v366
    %372 = vmatprep.subr.mxu0 0.0
    %373 = vmatpush1.xpose.msra.mxu0 0.0
    %374 = vmatprep.subr.mxu0 0.0
    %375 = vmatpush1.xpose.msra.mxu0 0.0
    %376 = vmatprep.subr.mxu0 0.0
    %377 = vmatpush1.xpose.msra.mxu0 0.0
    %378 = vmatprep.subr.mxu0 0.0
    %379 = vmatpush1.xpose.msra.mxu0 0.0
    %380 = vmatprep.subr.mxu0 0.0
    %381 = vmatpush1.xpose.msra.mxu0 0.0
    %382 = vmatprep.subr.mxu0 0.0
    %383 = vmatpush1.xpose.msra.mxu0 0.0
    %384 = vmatprep.subr.mxu0 0.0
    %385 = vmatpush1.xpose.msra.mxu0 0.0
    %386 = vmatprep.subr.mxu0 0.0
    %387 = vmatpush1.xpose.msra.mxu0 0.0
    %388 = vmatprep.subr.mxu0 0.0
    %389 = vmatpush1.xpose.msra.mxu0 0.0
    %390 = vmatprep.subr.mxu0 0.0
    %391 = vmatpush1.xpose.msra.mxu0 0.0
    %392 = vmatprep.subr.mxu0 0.0
    %393 = vmatpush1.xpose.msra.mxu0 0.0
    %394 = vmatprep.subr.mxu0 0.0
    %395 = vmatpush1.xpose.msra.mxu0 0.0
    %396 = vmatprep.subr.mxu0 0.0
    %397 = vmatpush1.xpose.msra.mxu0 0.0
    %398 = vmatprep.subr.mxu0 0.0
    %399 = vmatpush1.xpose.msra.mxu0 0.0
    %400 = vmatprep.subr.mxu0 0.0
    %401 = vmatpush1.xpose.msra.mxu0 0.0
    %402 = vmatprep.subr.mxu0 0.0
    %403 = vmatpush1.xpose.msra.mxu0 0.0
    %404 = vmatprep.subr.mxu0 0.0
    %405 = vmatpush1.xpose.msra.mxu0 0.0
    %406 = vmatprep.subr.mxu0 0.0
    %407 = vmatpush1.xpose.msra.mxu0 0.0
    %408 = vmatprep.subr.mxu0 0.0
    %409 = vmatpush1.xpose.msra.mxu0 0.0
    %410 = vmatprep.subr.mxu0 0.0
    %411 = vmatpush1.xpose.msra.mxu0 0.0
    %412 = vmatprep.subr.mxu0 0.0
    %413 = vmatpush1.xpose.msra.mxu0 0.0
    %414 = vmatprep.subr.mxu0 0.0
    %415 = vmatpush1.xpose.msra.mxu0 0.0
    %416 = vmatprep.subr.mxu0 0.0
    %417 = vmatpush1.xpose.msra.mxu0 0.0
    %418 = vmatprep.subr.mxu0 0.0
    %419 = vmatpush1.xpose.msra.mxu0 0.0
    %420 = vmatprep.subr.mxu0 0.0
    %421 = vmatpush1.xpose.msra.mxu0 0.0
    %422 = vmatprep.subr.mxu0 0.0
    %423 = vmatpush1.xpose.msra.mxu0 0.0
    %424 = vmatprep.subr.mxu0 0.0
    %425 = vmatpush1.xpose.msra.mxu0 0.0
    %426 = vmatprep.subr.mxu0 0.0
    %427 = vmatpush1.xpose.msra.mxu0 0.0
    %428 = vmatprep.subr.mxu0 0.0
    %429 = vmatpush1.xpose.msra.mxu0 0.0
    %430 = vmatprep.subr.mxu0 0.0
    %431 = vmatpush1.xpose.msra.mxu0 0.0
    %432 = vmatprep.mubr.f32.mxu0 0.0
    %433 = vmatmul.mubr.f32.gmra.mrb[0].mxu0 %v357
    %v434 = vpop.f32.mrb[0].mxu0
    %v435 = vadd.f32 0.0, %v434
    %v436 = vpop.f32.mrb[0].mxu0
    %437 = vmatprep.mubr.f32.mxu0 0.0
    %438 = vmatmul.mubr.f32.gmra.mrb[0].mxu0 %v360
    %v439 = vpop.f32.mrb[0].mxu0
    %v440 = vadd.f32 0.0, %v439
    %v441 = vpop.f32.mrb[0].mxu0
    %442 = vdwg.mxu0
    %v444 = vsel %vm94, %v54, 0
    %v447 = vsel %vm94, %v55, 0
    %v450 = vsel %vm94, %v86, 0
    %v453 = vsel %vm94, %v87, 0
    %455 = vmatprep.subr.mxu0 0.0
    %456 = vmatpush1.xpose.msra.mxu0 %v450
    %457 = vmatprep.subr.mxu0 0.0
    %458 = vmatpush1.xpose.msra.mxu0 %v453
    %459 = vmatprep.subr.mxu0 0.0
    %460 = vmatpush1.xpose.msra.mxu0 0.0
    %461 = vmatprep.subr.mxu0 0.0
    %462 = vmatpush1.xpose.msra.mxu0 0.0
    %463 = vmatprep.subr.mxu0 0.0
    %464 = vmatpush1.xpose.msra.mxu0 0.0
    %465 = vmatprep.subr.mxu0 0.0
    %466 = vmatpush1.xpose.msra.mxu0 0.0
    %467 = vmatprep.subr.mxu0 0.0
    %468 = vmatpush1.xpose.msra.mxu0 0.0
    %469 = vmatprep.subr.mxu0 0.0
    %470 = vmatpush1.xpose.msra.mxu0 0.0
    %471 = vmatprep.subr.mxu0 0.0
    %472 = vmatpush1.xpose.msra.mxu0 0.0
    %473 = vmatprep.subr.mxu0 0.0
    %474 = vmatpush1.xpose.msra.mxu0 0.0
    %475 = vmatprep.subr.mxu0 0.0
    %476 = vmatpush1.xpose.msra.mxu0 0.0
    %477 = vmatprep.subr.mxu0 0.0
    %478 = vmatpush1.xpose.msra.mxu0 0.0
    %479 = vmatprep.subr.mxu0 0.0
    %480 = vmatpush1.xpose.msra.mxu0 0.0
    %481 = vmatprep.subr.mxu0 0.0
    %482 = vmatpush1.xpose.msra.mxu0 0.0
    %483 = vmatprep.subr.mxu0 0.0
    %484 = vmatpush1.xpose.msra.mxu0 0.0
    %485 = vmatprep.subr.mxu0 0.0
    %486 = vmatpush1.xpose.msra.mxu0 0.0
    %487 = vmatprep.subr.mxu0 0.0
    %488 = vmatpush1.xpose.msra.mxu0 0.0
    %489 = vmatprep.subr.mxu0 0.0
    %490 = vmatpush1.xpose.msra.mxu0 0.0
    %491 = vmatprep.subr.mxu0 0.0
    %492 = vmatpush1.xpose.msra.mxu0 0.0
    %493 = vmatprep.subr.mxu0 0.0
    %494 = vmatpush1.xpose.msra.mxu0 0.0
    %495 = vmatprep.subr.mxu0 0.0
    %496 = vmatpush1.xpose.msra.mxu0 0.0
    %497 = vmatprep.subr.mxu0 0.0
    %498 = vmatpush1.xpose.msra.mxu0 0.0
    %499 = vmatprep.subr.mxu0 0.0
    %500 = vmatpush1.xpose.msra.mxu0 0.0
    %501 = vmatprep.subr.mxu0 0.0
    %502 = vmatpush1.xpose.msra.mxu0 0.0
    %503 = vmatprep.subr.mxu0 0.0
    %504 = vmatpush1.xpose.msra.mxu0 0.0
    %505 = vmatprep.subr.mxu0 0.0
    %506 = vmatpush1.xpose.msra.mxu0 0.0
    %507 = vmatprep.subr.mxu0 0.0
    %508 = vmatpush1.xpose.msra.mxu0 0.0
    %509 = vmatprep.subr.mxu0 0.0
    %510 = vmatpush1.xpose.msra.mxu0 0.0
    %511 = vmatprep.subr.mxu0 0.0
    %512 = vmatpush1.xpose.msra.mxu0 0.0
    %513 = vmatprep.subr.mxu0 0.0
    %514 = vmatpush1.xpose.msra.mxu0 0.0
    %515 = vmatprep.subr.mxu0 0.0
    %516 = vmatpush1.xpose.msra.mxu0 0.0
    %517 = vmatprep.subr.mxu0 0.0
    %518 = vmatpush1.xpose.msra.mxu0 0.0
    %519 = vmatprep.mubr.f32.mxu0 0.0
    %520 = vmatmul.mubr.f32.gmra.mrb[0].mxu0 %v444
    %v521 = vpop.f32.mrb[0].mxu0
    %v522 = vadd.f32 0.0, %v521
    %v523 = vpop.f32.mrb[0].mxu0
    %524 = vmatprep.mubr.f32.mxu0 0.0
    %525 = vmatmul.mubr.f32.gmra.mrb[0].mxu0 %v447
    %v526 = vpop.f32.mrb[0].mxu0
    %v527 = vadd.f32 0.0, %v526
    %v528 = vpop.f32.mrb[0].mxu0
    %529 = vdwg.mxu0
    %v531 = vsel %vm94, %v60, 0
    %v534 = vsel %vm94, %v61, 0
    %v537 = vsel %vm94, %v88, 0
    %v540 = vsel %vm94, %v89, 0
    %542 = vmatprep.subr.mxu0 0.0
    %543 = vmatpush1.xpose.msra.mxu0 %v537
    %544 = vmatprep.subr.mxu0 0.0
    %545 = vmatpush1.xpose.msra.mxu0 %v540
    %546 = vmatprep.subr.mxu0 0.0
    %547 = vmatpush1.xpose.msra.mxu0 0.0
    %548 = vmatprep.subr.mxu0 0.0
    %549 = vmatpush1.xpose.msra.mxu0 0.0
    %550 = vmatprep.subr.mxu0 0.0
    %551 = vmatpush1.xpose.msra.mxu0 0.0
    %552 = vmatprep.subr.mxu0 0.0
    %553 = vmatpush1.xpose.msra.mxu0 0.0
    %554 = vmatprep.subr.mxu0 0.0
    %555 = vmatpush1.xpose.msra.mxu0 0.0
    %556 = vmatprep.subr.mxu0 0.0
    %557 = vmatpush1.xpose.msra.mxu0 0.0
    %558 = vmatprep.subr.mxu0 0.0
    %559 = vmatpush1.xpose.msra.mxu0 0.0
    %560 = vmatprep.subr.mxu0 0.0
    %561 = vmatpush1.xpose.msra.mxu0 0.0
    %562 = vmatprep.subr.mxu0 0.0
    %563 = vmatpush1.xpose.msra.mxu0 0.0
    %564 = vmatprep.subr.mxu0 0.0
    %565 = vmatpush1.xpose.msra.mxu0 0.0
    %566 = vmatprep.subr.mxu0 0.0
    %567 = vmatpush1.xpose.msra.mxu0 0.0
    %568 = vmatprep.subr.mxu0 0.0
    %569 = vmatpush1.xpose.msra.mxu0 0.0
    %570 = vmatprep.subr.mxu0 0.0
    %571 = vmatpush1.xpose.msra.mxu0 0.0
    %572 = vmatprep.subr.mxu0 0.0
    %573 = vmatpush1.xpose.msra.mxu0 0.0
    %574 = vmatprep.subr.mxu0 0.0
    %575 = vmatpush1.xpose.msra.mxu0 0.0
    %576 = vmatprep.subr.mxu0 0.0
    %577 = vmatpush1.xpose.msra.mxu0 0.0
    %578 = vmatprep.subr.mxu0 0.0
    %579 = vmatpush1.xpose.msra.mxu0 0.0
    %580 = vmatprep.subr.mxu0 0.0
    %581 = vmatpush1.xpose.msra.mxu0 0.0
    %582 = vmatprep.subr.mxu0 0.0
    %583 = vmatpush1.xpose.msra.mxu0 0.0
    %584 = vmatprep.subr.mxu0 0.0
    %585 = vmatpush1.xpose.msra.mxu0 0.0
    %586 = vmatprep.subr.mxu0 0.0
    %587 = vmatpush1.xpose.msra.mxu0 0.0
    %588 = vmatprep.subr.mxu0 0.0
    %589 = vmatpush1.xpose.msra.mxu0 0.0
    %590 = vmatprep.subr.mxu0 0.0
    %591 = vmatpush1.xpose.msra.mxu0 0.0
    %592 = vmatprep.subr.mxu0 0.0
    %593 = vmatpush1.xpose.msra.mxu0 0.0
    %594 = vmatprep.subr.mxu0 0.0
    %595 = vmatpush1.xpose.msra.mxu0 0.0
    %596 = vmatprep.subr.mxu0 0.0
    %597 = vmatpush1.xpose.msra.mxu0 0.0
    %598 = vmatprep.subr.mxu0 0.0
    %599 = vmatpush1.xpose.msra.mxu0 0.0
    %600 = vmatprep.subr.mxu0 0.0
    %601 = vmatpush1.xpose.msra.mxu0 0.0
    %602 = vmatprep.subr.mxu0 0.0
    %603 = vmatpush1.xpose.msra.mxu0 0.0
    %604 = vmatprep.subr.mxu0 0.0
    %605 = vmatpush1.xpose.msra.mxu0 0.0
    %606 = vmatprep.mubr.f32.mxu0 0.0
    %607 = vmatmul.mubr.f32.gmra.mrb[0].mxu0 %v531
    %v608 = vpop.f32.mrb[0].mxu0
    %v609 = vadd.f32 0.0, %v608
    %v610 = vpop.f32.mrb[0].mxu0
    %611 = vmatprep.mubr.f32.mxu0 0.0
    %612 = vmatmul.mubr.f32.gmra.mrb[0].mxu0 %v534
    %v613 = vpop.f32.mrb[0].mxu0
    %v614 = vadd.f32 0.0, %v613
    %v615 = vpop.f32.mrb[0].mxu0
    %616 = vdwg.mxu0
    %v618 = vsel %vm94, %v66, 0
    %v621 = vsel %vm94, %v67, 0
    %v624 = vsel %vm94, %v90, 0
    %v627 = vsel %vm94, %v91, 0
    %629 = vmatprep.subr.mxu0 0.0
    %630 = vmatpush1.xpose.msra.mxu0 %v624
    %631 = vmatprep.subr.mxu0 0.0
    %632 = vmatpush1.xpose.msra.mxu0 %v627
    %633 = vmatprep.subr.mxu0 0.0
    %634 = vmatpush1.xpose.msra.mxu0 0.0
    %635 = vmatprep.subr.mxu0 0.0
    %636 = vmatpush1.xpose.msra.mxu0 0.0
    %637 = vmatprep.subr.mxu0 0.0
    %638 = vmatpush1.xpose.msra.mxu0 0.0
    %639 = vmatprep.subr.mxu0 0.0
    %640 = vmatpush1.xpose.msra.mxu0 0.0
    %641 = vmatprep.subr.mxu0 0.0
    %642 = vmatpush1.xpose.msra.mxu0 0.0
    %643 = vmatprep.subr.mxu0 0.0
    %644 = vmatpush1.xpose.msra.mxu0 0.0
    %645 = vmatprep.subr.mxu0 0.0
    %646 = vmatpush1.xpose.msra.mxu0 0.0
    %647 = vmatprep.subr.mxu0 0.0
    %648 = vmatpush1.xpose.msra.mxu0 0.0
    %649 = vmatprep.subr.mxu0 0.0
    %650 = vmatpush1.xpose.msra.mxu0 0.0
    %651 = vmatprep.subr.mxu0 0.0
    %652 = vmatpush1.xpose.msra.mxu0 0.0
    %653 = vmatprep.subr.mxu0 0.0
    %654 = vmatpush1.xpose.msra.mxu0 0.0
    %655 = vmatprep.subr.mxu0 0.0
    %656 = vmatpush1.xpose.msra.mxu0 0.0
    %657 = vmatprep.subr.mxu0 0.0
    %658 = vmatpush1.xpose.msra.mxu0 0.0
    %659 = vmatprep.subr.mxu0 0.0
    %660 = vmatpush1.xpose.msra.mxu0 0.0
    %661 = vmatprep.subr.mxu0 0.0
    %662 = vmatpush1.xpose.msra.mxu0 0.0
    %663 = vmatprep.subr.mxu0 0.0
    %664 = vmatpush1.xpose.msra.mxu0 0.0
    %665 = vmatprep.subr.mxu0 0.0
    %666 = vmatpush1.xpose.msra.mxu0 0.0
    %667 = vmatprep.subr.mxu0 0.0
    %668 = vmatpush1.xpose.msra.mxu0 0.0
    %669 = vmatprep.subr.mxu0 0.0
    %670 = vmatpush1.xpose.msra.mxu0 0.0
    %671 = vmatprep.subr.mxu0 0.0
    %672 = vmatpush1.xpose.msra.mxu0 0.0
    %673 = vmatprep.subr.mxu0 0.0
    %674 = vmatpush1.xpose.msra.mxu0 0.0
    %675 = vmatprep.subr.mxu0 0.0
    %676 = vmatpush1.xpose.msra.mxu0 0.0
    %677 = vmatprep.subr.mxu0 0.0
    %678 = vmatpush1.xpose.msra.mxu0 0.0
    %679 = vmatprep.subr.mxu0 0.0
    %680 = vmatpush1.xpose.msra.mxu0 0.0
    %681 = vmatprep.subr.mxu0 0.0
    %682 = vmatpush1.xpose.msra.mxu0 0.0
    %683 = vmatprep.subr.mxu0 0.0
    %684 = vmatpush1.xpose.msra.mxu0 0.0
    %685 = vmatprep.subr.mxu0 0.0
    %686 = vmatpush1.xpose.msra.mxu0 0.0
    %687 = vmatprep.subr.mxu0 0.0
    %688 = vmatpush1.xpose.msra.mxu0 0.0
    %689 = vmatprep.subr.mxu0 0.0
    %690 = vmatpush1.xpose.msra.mxu0 0.0
    %691 = vmatprep.subr.mxu0 0.0
    %692 = vmatpush1.xpose.msra.mxu0 0.0
    %693 = vmatprep.mubr.f32.mxu0 0.0
    %694 = vmatmul.mubr.f32.gmra.mrb[0].mxu0 %v618
    %v695 = vpop.f32.mrb[0].mxu0
    %v696 = vadd.f32 0.0, %v695
    %v697 = vpop.f32.mrb[0].mxu0
    %698 = vmatprep.mubr.f32.mxu0 0.0
    %699 = vmatmul.mubr.f32.gmra.mrb[0].mxu0 %v621
    %v700 = vpop.f32.mrb[0].mxu0
    %v701 = vadd.f32 0.0, %v700
    %v702 = vpop.f32.mrb[0].mxu0
    %703 = vdwg.mxu0
    %v705 = vsel %vm94, %v72, 0
    %v708 = vsel %vm94, %v73, 0
    %v711 = vsel %vm94, %v92, 0
    %v714 = vsel %vm94, %v93, 0
    %716 = vmatprep.subr.mxu0 0.0
    %717 = vmatpush1.xpose.msra.mxu0 %v711
    %718 = vmatprep.subr.mxu0 0.0
    %719 = vmatpush1.xpose.msra.mxu0 %v714
    %720 = vmatprep.subr.mxu0 0.0
    %721 = vmatpush1.xpose.msra.mxu0 0.0
    %722 = vmatprep.subr.mxu0 0.0
    %723 = vmatpush1.xpose.msra.mxu0 0.0
    %724 = vmatprep.subr.mxu0 0.0
    %725 = vmatpush1.xpose.msra.mxu0 0.0
    %726 = vmatprep.subr.mxu0 0.0
    %727 = vmatpush1.xpose.msra.mxu0 0.0
    %728 = vmatprep.subr.mxu0 0.0
    %729 = vmatpush1.xpose.msra.mxu0 0.0
    %730 = vmatprep.subr.mxu0 0.0
    %731 = vmatpush1.xpose.msra.mxu0 0.0
    %732 = vmatprep.subr.mxu0 0.0
    %733 = vmatpush1.xpose.msra.mxu0 0.0
    %734 = vmatprep.subr.mxu0 0.0
    %735 = vmatpush1.xpose.msra.mxu0 0.0
    %736 = vmatprep.subr.mxu0 0.0
    %737 = vmatpush1.xpose.msra.mxu0 0.0
    %738 = vmatprep.subr.mxu0 0.0
    %739 = vmatpush1.xpose.msra.mxu0 0.0
    %740 = vmatprep.subr.mxu0 0.0
    %741 = vmatpush1.xpose.msra.mxu0 0.0
    %742 = vmatprep.subr.mxu0 0.0
    %743 = vmatpush1.xpose.msra.mxu0 0.0
    %744 = vmatprep.subr.mxu0 0.0
    %745 = vmatpush1.xpose.msra.mxu0 0.0
    %746 = vmatprep.subr.mxu0 0.0
    %747 = vmatpush1.xpose.msra.mxu0 0.0
    %748 = vmatprep.subr.mxu0 0.0
    %749 = vmatpush1.xpose.msra.mxu0 0.0
    %750 = vmatprep.subr.mxu0 0.0
    %751 = vmatpush1.xpose.msra.mxu0 0.0
    %752 = vmatprep.subr.mxu0 0.0
    %753 = vmatpush1.xpose.msra.mxu0 0.0
    %754 = vmatprep.subr.mxu0 0.0
    %755 = vmatpush1.xpose.msra.mxu0 0.0
    %756 = vmatprep.subr.mxu0 0.0
    %757 = vmatpush1.xpose.msra.mxu0 0.0
    %758 = vmatprep.subr.mxu0 0.0
    %759 = vmatpush1.xpose.msra.mxu0 0.0
    %760 = vmatprep.subr.mxu0 0.0
    %761 = vmatpush1.xpose.msra.mxu0 0.0
    %762 = vmatprep.subr.mxu0 0.0
    %763 = vmatpush1.xpose.msra.mxu0 0.0
    %764 = vmatprep.subr.mxu0 0.0
    %765 = vmatpush1.xpose.msra.mxu0 0.0
    %766 = vmatprep.subr.mxu0 0.0
    %767 = vmatpush1.xpose.msra.mxu0 0.0
    %768 = vmatprep.subr.mxu0 0.0
    %769 = vmatpush1.xpose.msra.mxu0 0.0
    %770 = vmatprep.subr.mxu0 0.0
    %771 = vmatpush1.xpose.msra.mxu0 0.0
    %772 = vmatprep.subr.mxu0 0.0
    %773 = vmatpush1.xpose.msra.mxu0 0.0
    %774 = vmatprep.subr.mxu0 0.0
    %775 = vmatpush1.xpose.msra.mxu0 0.0
    %776 = vmatprep.subr.mxu0 0.0
    %777 = vmatpush1.xpose.msra.mxu0 0.0
    %778 = vmatprep.subr.mxu0 0.0
    %779 = vmatpush1.xpose.msra.mxu0 0.0
    %780 = vmatprep.mubr.f32.mxu0 0.0
    %781 = vmatmul.mubr.f32.gmra.mrb[0].mxu0 %v705
    %v782 = vpop.f32.mrb[0].mxu0
    %v783 = vadd.f32 0.0, %v782
    %v784 = vpop.f32.mrb[0].mxu0
    %785 = vmatprep.mubr.f32.mxu0 0.0
    %786 = vmatmul.mubr.f32.gmra.mrb[0].mxu0 %v708
    %v787 = vpop.f32.mrb[0].mxu0
    %v788 = vadd.f32 0.0, %v787
    %v789 = vpop.f32.mrb[0].mxu0
    %790 = vdwg.mxu0
    %v791 = vld [vmem:[%s2] sm:$0xff]
    %v792 = vld [vmem:[%s2 + $0x8] sm:$0xff]
    %v793 = vld [vmem:[%s2 + $0x10] sm:$0xff]
    %v794 = vld [vmem:[%s2 + $0x18] sm:$0xff]
    %v795 = vld [vmem:[%s2 + $0x20] sm:$0xff]
    %v796 = vld [vmem:[%s2 + $0x28] sm:$0xff]
    %v797 = vld [vmem:[%s2 + $0x30] sm:$0xff]
    %v798 = vld [vmem:[%s2 + $0x38] sm:$0xff]
    %v799 = vld [vmem:[%s2 + $0x40] sm:$0xff]
    %v800 = vld [vmem:[%s2 + $0x48] sm:$0xff]
    %v801 = vld [vmem:[%s2 + $0x50] sm:$0xff]
    %v802 = vld [vmem:[%s2 + $0x58] sm:$0xff]
    %v803 = vld [vmem:[%s2 + $0x60] sm:$0xff]
    %v804 = vld [vmem:[%s2 + $0x68] sm:$0xff]
    %v805 = vld [vmem:[%s2 + $0x70] sm:$0xff]
    %v806 = vld [vmem:[%s2 + $0x78] sm:$0xff]
    %v808 = vsel %vm94, %v791, 0
    %v811 = vsel %vm94, %v792, 0
    %813 = vmatprep.subr.mxu0 0.0
    %814 = vmatpush1.xpose.msra.mxu0 %v808
    %815 = vmatprep.subr.mxu0 0.0
    %816 = vmatpush1.xpose.msra.mxu0 %v811
    %817 = vmatprep.subr.mxu0 0.0
    %818 = vmatpush1.xpose.msra.mxu0 0.0
    %819 = vmatprep.subr.mxu0 0.0
    %820 = vmatpush1.xpose.msra.mxu0 0.0
    %821 = vmatprep.subr.mxu0 0.0
    %822 = vmatpush1.xpose.msra.mxu0 0.0
    %823 = vmatprep.subr.mxu0 0.0
    %824 = vmatpush1.xpose.msra.mxu0 0.0
    %825 = vmatprep.subr.mxu0 0.0
    %826 = vmatpush1.xpose.msra.mxu0 0.0
    %827 = vmatprep.subr.mxu0 0.0
    %828 = vmatpush1.xpose.msra.mxu0 0.0
    %829 = vmatprep.subr.mxu0 0.0
    %830 = vmatpush1.xpose.msra.mxu0 0.0
    %831 = vmatprep.subr.mxu0 0.0
    %832 = vmatpush1.xpose.msra.mxu0 0.0
    %833 = vmatprep.subr.mxu0 0.0
    %834 = vmatpush1.xpose.msra.mxu0 0.0
    %835 = vmatprep.subr.mxu0 0.0
    %836 = vmatpush1.xpose.msra.mxu0 0.0
    %837 = vmatprep.subr.mxu0 0.0
    %838 = vmatpush1.xpose.msra.mxu0 0.0
    %839 = vmatprep.subr.mxu0 0.0
    %840 = vmatpush1.xpose.msra.mxu0 0.0
    %841 = vmatprep.subr.mxu0 0.0
    %842 = vmatpush1.xpose.msra.mxu0 0.0
    %843 = vmatprep.subr.mxu0 0.0
    %844 = vmatpush1.xpose.msra.mxu0 0.0
    %845 = vmatprep.subr.mxu0 0.0
    %846 = vmatpush1.xpose.msra.mxu0 0.0
    %847 = vmatprep.subr.mxu0 0.0
    %848 = vmatpush1.xpose.msra.mxu0 0.0
    %849 = vmatprep.subr.mxu0 0.0
    %850 = vmatpush1.xpose.msra.mxu0 0.0
    %851 = vmatprep.subr.mxu0 0.0
    %852 = vmatpush1.xpose.msra.mxu0 0.0
    %853 = vmatprep.subr.mxu0 0.0
    %854 = vmatpush1.xpose.msra.mxu0 0.0
    %855 = vmatprep.subr.mxu0 0.0
    %856 = vmatpush1.xpose.msra.mxu0 0.0
    %857 = vmatprep.subr.mxu0 0.0
    %858 = vmatpush1.xpose.msra.mxu0 0.0
    %859 = vmatprep.subr.mxu0 0.0
    %860 = vmatpush1.xpose.msra.mxu0 0.0
    %861 = vmatprep.subr.mxu0 0.0
    %862 = vmatpush1.xpose.msra.mxu0 0.0
    %863 = vmatprep.subr.mxu0 0.0
    %864 = vmatpush1.xpose.msra.mxu0 0.0
    %865 = vmatprep.subr.mxu0 0.0
    %866 = vmatpush1.xpose.msra.mxu0 0.0
    %867 = vmatprep.subr.mxu0 0.0
    %868 = vmatpush1.xpose.msra.mxu0 0.0
    %869 = vmatprep.subr.mxu0 0.0
    %870 = vmatpush1.xpose.msra.mxu0 0.0
    %871 = vmatprep.subr.mxu0 0.0
    %872 = vmatpush1.xpose.msra.mxu0 0.0
    %873 = vmatprep.subr.mxu0 0.0
    %874 = vmatpush1.xpose.msra.mxu0 0.0
    %875 = vmatprep.subr.mxu0 0.0
    %876 = vmatpush1.xpose.msra.mxu0 0.0
    %877 = vmatprep.mubr.f32.mxu0 0.0
    %878 = vmatmul.mubr.f32.gmra.mrb[0].mxu0 %v96
    %v879 = vpop.f32.mrb[0].mxu0
    %v880 = vadd.f32 0.0, %v879
    %v881 = vpop.f32.mrb[0].mxu0
    %882 = vmatprep.mubr.f32.mxu0 0.0
    %883 = vmatmul.mubr.f32.gmra.mrb[0].mxu0 %v99
    %v884 = vpop.f32.mrb[0].mxu0
    %v885 = vadd.f32 0.0, %v884
    %v886 = vpop.f32.mrb[0].mxu0
    %887 = vdwg.mxu0
    %v889 = vsel %vm94, %v793, 0
    %v892 = vsel %vm94, %v794, 0
    %894 = vmatprep.subr.mxu0 0.0
    %895 = vmatpush1.xpose.msra.mxu0 %v889
    %896 = vmatprep.subr.mxu0 0.0
    %897 = vmatpush1.xpose.msra.mxu0 %v892
    %898 = vmatprep.subr.mxu0 0.0
    %899 = vmatpush1.xpose.msra.mxu0 0.0
    %900 = vmatprep.subr.mxu0 0.0
    %901 = vmatpush1.xpose.msra.mxu0 0.0
    %902 = vmatprep.subr.mxu0 0.0
    %903 = vmatpush1.xpose.msra.mxu0 0.0
    %904 = vmatprep.subr.mxu0 0.0
    %905 = vmatpush1.xpose.msra.mxu0 0.0
    %906 = vmatprep.subr.mxu0 0.0
    %907 = vmatpush1.xpose.msra.mxu0 0.0
    %908 = vmatprep.subr.mxu0 0.0
    %909 = vmatpush1.xpose.msra.mxu0 0.0
    %910 = vmatprep.subr.mxu0 0.0
    %911 = vmatpush1.xpose.msra.mxu0 0.0
    %912 = vmatprep.subr.mxu0 0.0
    %913 = vmatpush1.xpose.msra.mxu0 0.0
    %914 = vmatprep.subr.mxu0 0.0
    %915 = vmatpush1.xpose.msra.mxu0 0.0
    %916 = vmatprep.subr.mxu0 0.0
    %917 = vmatpush1.xpose.msra.mxu0 0.0
    %918 = vmatprep.subr.mxu0 0.0
    %919 = vmatpush1.xpose.msra.mxu0 0.0
    %920 = vmatprep.subr.mxu0 0.0
    %921 = vmatpush1.xpose.msra.mxu0 0.0
    %922 = vmatprep.subr.mxu0 0.0
    %923 = vmatpush1.xpose.msra.mxu0 0.0
    %924 = vmatprep.subr.mxu0 0.0
    %925 = vmatpush1.xpose.msra.mxu0 0.0
    %926 = vmatprep.subr.mxu0 0.0
    %927 = vmatpush1.xpose.msra.mxu0 0.0
    %928 = vmatprep.subr.mxu0 0.0
    %929 = vmatpush1.xpose.msra.mxu0 0.0
    %930 = vmatprep.subr.mxu0 0.0
    %931 = vmatpush1.xpose.msra.mxu0 0.0
    %932 = vmatprep.subr.mxu0 0.0
    %933 = vmatpush1.xpose.msra.mxu0 0.0
    %934 = vmatprep.subr.mxu0 0.0
    %935 = vmatpush1.xpose.msra.mxu0 0.0
    %936 = vmatprep.subr.mxu0 0.0
    %937 = vmatpush1.xpose.msra.mxu0 0.0
    %938 = vmatprep.subr.mxu0 0.0
    %939 = vmatpush1.xpose.msra.mxu0 0.0
    %940 = vmatprep.subr.mxu0 0.0
    %941 = vmatpush1.xpose.msra.mxu0 0.0
    %942 = vmatprep.subr.mxu0 0.0
    %943 = vmatpush1.xpose.msra.mxu0 0.0
    %944 = vmatprep.subr.mxu0 0.0
    %945 = vmatpush1.xpose.msra.mxu0 0.0
    %946 = vmatprep.subr.mxu0 0.0
    %947 = vmatpush1.xpose.msra.mxu0 0.0
    %948 = vmatprep.subr.mxu0 0.0
    %949 = vmatpush1.xpose.msra.mxu0 0.0
    %950 = vmatprep.subr.mxu0 0.0
    %951 = vmatpush1.xpose.msra.mxu0 0.0
    %952 = vmatprep.subr.mxu0 0.0
    %953 = vmatpush1.xpose.msra.mxu0 0.0
    %954 = vmatprep.subr.mxu0 0.0
    %955 = vmatpush1.xpose.msra.mxu0 0.0
    %956 = vmatprep.subr.mxu0 0.0
    %957 = vmatpush1.xpose.msra.mxu0 0.0
    %958 = vmatprep.mubr.f32.mxu0 0.0
    %959 = vmatmul.mubr.f32.gmra.mrb[0].mxu0 %v183
    %v960 = vpop.f32.mrb[0].mxu0
    %v961 = vadd.f32 0.0, %v960
    %v962 = vpop.f32.mrb[0].mxu0
    %963 = vmatprep.mubr.f32.mxu0 0.0
    %964 = vmatmul.mubr.f32.gmra.mrb[0].mxu0 %v186
    %v965 = vpop.f32.mrb[0].mxu0
    %v966 = vadd.f32 0.0, %v965
    %v967 = vpop.f32.mrb[0].mxu0
    %968 = vdwg.mxu0
    %v970 = vsel %vm94, %v795, 0
    %v973 = vsel %vm94, %v796, 0
    %975 = vmatprep.subr.mxu0 0.0
    %976 = vmatpush1.xpose.msra.mxu0 %v970
    %977 = vmatprep.subr.mxu0 0.0
    %978 = vmatpush1.xpose.msra.mxu0 %v973
    %979 = vmatprep.subr.mxu0 0.0
    %980 = vmatpush1.xpose.msra.mxu0 0.0
    %981 = vmatprep.subr.mxu0 0.0
    %982 = vmatpush1.xpose.msra.mxu0 0.0
    %983 = vmatprep.subr.mxu0 0.0
    %984 = vmatpush1.xpose.msra.mxu0 0.0
    %985 = vmatprep.subr.mxu0 0.0
    %986 = vmatpush1.xpose.msra.mxu0 0.0
    %987 = vmatprep.subr.mxu0 0.0
    %988 = vmatpush1.xpose.msra.mxu0 0.0
    %989 = vmatprep.subr.mxu0 0.0
    %990 = vmatpush1.xpose.msra.mxu0 0.0
    %991 = vmatprep.subr.mxu0 0.0
    %992 = vmatpush1.xpose.msra.mxu0 0.0
    %993 = vmatprep.subr.mxu0 0.0
    %994 = vmatpush1.xpose.msra.mxu0 0.0
    %995 = vmatprep.subr.mxu0 0.0
    %996 = vmatpush1.xpose.msra.mxu0 0.0
    %997 = vmatprep.subr.mxu0 0.0
    %998 = vmatpush1.xpose.msra.mxu0 0.0
    %999 = vmatprep.subr.mxu0 0.0
    %1000 = vmatpush1.xpose.msra.mxu0 0.0
    %1001 = vmatprep.subr.mxu0 0.0
    %1002 = vmatpush1.xpose.msra.mxu0 0.0
    %1003 = vmatprep.subr.mxu0 0.0
    %1004 = vmatpush1.xpose.msra.mxu0 0.0
    %1005 = vmatprep.subr.mxu0 0.0
    %1006 = vmatpush1.xpose.msra.mxu0 0.0
    %1007 = vmatprep.subr.mxu0 0.0
    %1008 = vmatpush1.xpose.msra.mxu0 0.0
    %1009 = vmatprep.subr.mxu0 0.0
    %1010 = vmatpush1.xpose.msra.mxu0 0.0
    %1011 = vmatprep.subr.mxu0 0.0
    %1012 = vmatpush1.xpose.msra.mxu0 0.0
    %1013 = vmatprep.subr.mxu0 0.0
    %1014 = vmatpush1.xpose.msra.mxu0 0.0
    %1015 = vmatprep.subr.mxu0 0.0
    %1016 = vmatpush1.xpose.msra.mxu0 0.0
    %1017 = vmatprep.subr.mxu0 0.0
    %1018 = vmatpush1.xpose.msra.mxu0 0.0
    %1019 = vmatprep.subr.mxu0 0.0
    %1020 = vmatpush1.xpose.msra.mxu0 0.0
    %1021 = vmatprep.subr.mxu0 0.0
    %1022 = vmatpush1.xpose.msra.mxu0 0.0
    %1023 = vmatprep.subr.mxu0 0.0
    %1024 = vmatpush1.xpose.msra.mxu0 0.0
    %1025 = vmatprep.subr.mxu0 0.0
    %1026 = vmatpush1.xpose.msra.mxu0 0.0
    %1027 = vmatprep.subr.mxu0 0.0
    %1028 = vmatpush1.xpose.msra.mxu0 0.0
    %1029 = vmatprep.subr.mxu0 0.0
    %1030 = vmatpush1.xpose.msra.mxu0 0.0
    %1031 = vmatprep.subr.mxu0 0.0
    %1032 = vmatpush1.xpose.msra.mxu0 0.0
    %1033 = vmatprep.subr.mxu0 0.0
    %1034 = vmatpush1.xpose.msra.mxu0 0.0
    %1035 = vmatprep.subr.mxu0 0.0
    %1036 = vmatpush1.xpose.msra.mxu0 0.0
    %1037 = vmatprep.subr.mxu0 0.0
    %1038 = vmatpush1.xpose.msra.mxu0 0.0
    %1039 = vmatprep.mubr.f32.mxu0 0.0
    %1040 = vmatmul.mubr.f32.gmra.mrb[0].mxu0 %v270
    %v1041 = vpop.f32.mrb[0].mxu0
    %v1042 = vadd.f32 0.0, %v1041
    %v1043 = vpop.f32.mrb[0].mxu0
    %1044 = vmatprep.mubr.f32.mxu0 0.0
    %1045 = vmatmul.mubr.f32.gmra.mrb[0].mxu0 %v273
    %v1046 = vpop.f32.mrb[0].mxu0
    %v1047 = vadd.f32 0.0, %v1046
    %v1048 = vpop.f32.mrb[0].mxu0
    %1049 = vdwg.mxu0
    %v1051 = vsel %vm94, %v797, 0
    %v1054 = vsel %vm94, %v798, 0
    %1056 = vmatprep.subr.mxu0 0.0
    %1057 = vmatpush1.xpose.msra.mxu0 %v1051
    %1058 = vmatprep.subr.mxu0 0.0
    %1059 = vmatpush1.xpose.msra.mxu0 %v1054
    %1060 = vmatprep.subr.mxu0 0.0
    %1061 = vmatpush1.xpose.msra.mxu0 0.0
    %1062 = vmatprep.subr.mxu0 0.0
    %1063 = vmatpush1.xpose.msra.mxu0 0.0
    %1064 = vmatprep.subr.mxu0 0.0
    %1065 = vmatpush1.xpose.msra.mxu0 0.0
    %1066 = vmatprep.subr.mxu0 0.0
    %1067 = vmatpush1.xpose.msra.mxu0 0.0
    %1068 = vmatprep.subr.mxu0 0.0
    %1069 = vmatpush1.xpose.msra.mxu0 0.0
    %1070 = vmatprep.subr.mxu0 0.0
    %1071 = vmatpush1.xpose.msra.mxu0 0.0
    %1072 = vmatprep.subr.mxu0 0.0
    %1073 = vmatpush1.xpose.msra.mxu0 0.0
    %1074 = vmatprep.subr.mxu0 0.0
    %1075 = vmatpush1.xpose.msra.mxu0 0.0
    %1076 = vmatprep.subr.mxu0 0.0
    %1077 = vmatpush1.xpose.msra.mxu0 0.0
    %1078 = vmatprep.subr.mxu0 0.0
    %1079 = vmatpush1.xpose.msra.mxu0 0.0
    %1080 = vmatprep.subr.mxu0 0.0
    %1081 = vmatpush1.xpose.msra.mxu0 0.0
    %1082 = vmatprep.subr.mxu0 0.0
    %1083 = vmatpush1.xpose.msra.mxu0 0.0
    %1084 = vmatprep.subr.mxu0 0.0
    %1085 = vmatpush1.xpose.msra.mxu0 0.0
    %1086 = vmatprep.subr.mxu0 0.0
    %1087 = vmatpush1.xpose.msra.mxu0 0.0
    %1088 = vmatprep.subr.mxu0 0.0
    %1089 = vmatpush1.xpose.msra.mxu0 0.0
    %1090 = vmatprep.subr.mxu0 0.0
    %1091 = vmatpush1.xpose.msra.mxu0 0.0
    %1092 = vmatprep.subr.mxu0 0.0
    %1093 = vmatpush1.xpose.msra.mxu0 0.0
    %1094 = vmatprep.subr.mxu0 0.0
    %1095 = vmatpush1.xpose.msra.mxu0 0.0
    %1096 = vmatprep.subr.mxu0 0.0
    %1097 = vmatpush1.xpose.msra.mxu0 0.0
    %1098 = vmatprep.subr.mxu0 0.0
    %1099 = vmatpush1.xpose.msra.mxu0 0.0
    %1100 = vmatprep.subr.mxu0 0.0
    %1101 = vmatpush1.xpose.msra.mxu0 0.0
    %1102 = vmatprep.subr.mxu0 0.0
    %1103 = vmatpush1.xpose.msra.mxu0 0.0
    %1104 = vmatprep.subr.mxu0 0.0
    %1105 = vmatpush1.xpose.msra.mxu0 0.0
    %1106 = vmatprep.subr.mxu0 0.0
    %1107 = vmatpush1.xpose.msra.mxu0 0.0
    %1108 = vmatprep.subr.mxu0 0.0
    %1109 = vmatpush1.xpose.msra.mxu0 0.0
    %1110 = vmatprep.subr.mxu0 0.0
    %1111 = vmatpush1.xpose.msra.mxu0 0.0
    %1112 = vmatprep.subr.mxu0 0.0
    %1113 = vmatpush1.xpose.msra.mxu0 0.0
    %1114 = vmatprep.subr.mxu0 0.0
    %1115 = vmatpush1.xpose.msra.mxu0 0.0
    %1116 = vmatprep.subr.mxu0 0.0
    %1117 = vmatpush1.xpose.msra.mxu0 0.0
    %1118 = vmatprep.subr.mxu0 0.0
    %1119 = vmatpush1.xpose.msra.mxu0 0.0
    %1120 = vmatprep.mubr.f32.mxu0 0.0
    %1121 = vmatmul.mubr.f32.gmra.mrb[0].mxu0 %v357
    %v1122 = vpop.f32.mrb[0].mxu0
    %v1123 = vadd.f32 0.0, %v1122
    %v1124 = vpop.f32.mrb[0].mxu0
    %1125 = vmatprep.mubr.f32.mxu0 0.0
    %1126 = vmatmul.mubr.f32.gmra.mrb[0].mxu0 %v360
    %v1127 = vpop.f32.mrb[0].mxu0
    %v1128 = vadd.f32 0.0, %v1127
    %v1129 = vpop.f32.mrb[0].mxu0
    %1130 = vdwg.mxu0
    %v1132 = vsel %vm94, %v799, 0
    %v1135 = vsel %vm94, %v800, 0
    %1137 = vmatprep.subr.mxu0 0.0
    %1138 = vmatpush1.xpose.msra.mxu0 %v1132
    %1139 = vmatprep.subr.mxu0 0.0
    %1140 = vmatpush1.xpose.msra.mxu0 %v1135
    %1141 = vmatprep.subr.mxu0 0.0
    %1142 = vmatpush1.xpose.msra.mxu0 0.0
    %1143 = vmatprep.subr.mxu0 0.0
    %1144 = vmatpush1.xpose.msra.mxu0 0.0
    %1145 = vmatprep.subr.mxu0 0.0
    %1146 = vmatpush1.xpose.msra.mxu0 0.0
    %1147 = vmatprep.subr.mxu0 0.0
    %1148 = vmatpush1.xpose.msra.mxu0 0.0
    %1149 = vmatprep.subr.mxu0 0.0
    %1150 = vmatpush1.xpose.msra.mxu0 0.0
    %1151 = vmatprep.subr.mxu0 0.0
    %1152 = vmatpush1.xpose.msra.mxu0 0.0
    %1153 = vmatprep.subr.mxu0 0.0
    %1154 = vmatpush1.xpose.msra.mxu0 0.0
    %1155 = vmatprep.subr.mxu0 0.0
    %1156 = vmatpush1.xpose.msra.mxu0 0.0
    %1157 = vmatprep.subr.mxu0 0.0
    %1158 = vmatpush1.xpose.msra.mxu0 0.0
    %1159 = vmatprep.subr.mxu0 0.0
    %1160 = vmatpush1.xpose.msra.mxu0 0.0
    %1161 = vmatprep.subr.mxu0 0.0
    %1162 = vmatpush1.xpose.msra.mxu0 0.0
    %1163 = vmatprep.subr.mxu0 0.0
    %1164 = vmatpush1.xpose.msra.mxu0 0.0
    %1165 = vmatprep.subr.mxu0 0.0
    %1166 = vmatpush1.xpose.msra.mxu0 0.0
    %1167 = vmatprep.subr.mxu0 0.0
    %1168 = vmatpush1.xpose.msra.mxu0 0.0
    %1169 = vmatprep.subr.mxu0 0.0
    %1170 = vmatpush1.xpose.msra.mxu0 0.0
    %1171 = vmatprep.subr.mxu0 0.0
    %1172 = vmatpush1.xpose.msra.mxu0 0.0
    %1173 = vmatprep.subr.mxu0 0.0
    %1174 = vmatpush1.xpose.msra.mxu0 0.0
    %1175 = vmatprep.subr.mxu0 0.0
    %1176 = vmatpush1.xpose.msra.mxu0 0.0
    %1177 = vmatprep.subr.mxu0 0.0
    %1178 = vmatpush1.xpose.msra.mxu0 0.0
    %1179 = vmatprep.subr.mxu0 0.0
    %1180 = vmatpush1.xpose.msra.mxu0 0.0
    %1181 = vmatprep.subr.mxu0 0.0
    %1182 = vmatpush1.xpose.msra.mxu0 0.0
    %1183 = vmatprep.subr.mxu0 0.0
    %1184 = vmatpush1.xpose.msra.mxu0 0.0
    %1185 = vmatprep.subr.mxu0 0.0
    %1186 = vmatpush1.xpose.msra.mxu0 0.0
    %1187 = vmatprep.subr.mxu0 0.0
    %1188 = vmatpush1.xpose.msra.mxu0 0.0
    %1189 = vmatprep.subr.mxu0 0.0
    %1190 = vmatpush1.xpose.msra.mxu0 0.0
    %1191 = vmatprep.subr.mxu0 0.0
    %1192 = vmatpush1.xpose.msra.mxu0 0.0
    %1193 = vmatprep.subr.mxu0 0.0
    %1194 = vmatpush1.xpose.msra.mxu0 0.0
    %1195 = vmatprep.subr.mxu0 0.0
    %1196 = vmatpush1.xpose.msra.mxu0 0.0
    %1197 = vmatprep.subr.mxu0 0.0
    %1198 = vmatpush1.xpose.msra.mxu0 0.0
    %1199 = vmatprep.subr.mxu0 0.0
    %1200 = vmatpush1.xpose.msra.mxu0 0.0
    %1201 = vmatprep.mubr.f32.mxu0 0.0
    %1202 = vmatmul.mubr.f32.gmra.mrb[0].mxu0 %v444
    %v1203 = vpop.f32.mrb[0].mxu0
    %v1204 = vadd.f32 0.0, %v1203
    %v1205 = vpop.f32.mrb[0].mxu0
    %1206 = vmatprep.mubr.f32.mxu0 0.0
    %1207 = vmatmul.mubr.f32.gmra.mrb[0].mxu0 %v447
    %v1208 = vpop.f32.mrb[0].mxu0
    %v1209 = vadd.f32 0.0, %v1208
    %v1210 = vpop.f32.mrb[0].mxu0
    %1211 = vdwg.mxu0
    %v1213 = vsel %vm94, %v801, 0
    %v1216 = vsel %vm94, %v802, 0
    %1218 = vmatprep.subr.mxu0 0.0
    %1219 = vmatpush1.xpose.msra.mxu0 %v1213
    %1220 = vmatprep.subr.mxu0 0.0
    %1221 = vmatpush1.xpose.msra.mxu0 %v1216
    %1222 = vmatprep.subr.mxu0 0.0
    %1223 = vmatpush1.xpose.msra.mxu0 0.0
    %1224 = vmatprep.subr.mxu0 0.0
    %1225 = vmatpush1.xpose.msra.mxu0 0.0
    %1226 = vmatprep.subr.mxu0 0.0
    %1227 = vmatpush1.xpose.msra.mxu0 0.0
    %1228 = vmatprep.subr.mxu0 0.0
    %1229 = vmatpush1.xpose.msra.mxu0 0.0
    %1230 = vmatprep.subr.mxu0 0.0
    %1231 = vmatpush1.xpose.msra.mxu0 0.0
    %1232 = vmatprep.subr.mxu0 0.0
    %1233 = vmatpush1.xpose.msra.mxu0 0.0
    %1234 = vmatprep.subr.mxu0 0.0
    %1235 = vmatpush1.xpose.msra.mxu0 0.0
    %1236 = vmatprep.subr.mxu0 0.0
    %1237 = vmatpush1.xpose.msra.mxu0 0.0
    %1238 = vmatprep.subr.mxu0 0.0
    %1239 = vmatpush1.xpose.msra.mxu0 0.0
    %1240 = vmatprep.subr.mxu0 0.0
    %1241 = vmatpush1.xpose.msra.mxu0 0.0
    %1242 = vmatprep.subr.mxu0 0.0
    %1243 = vmatpush1.xpose.msra.mxu0 0.0
    %1244 = vmatprep.subr.mxu0 0.0
    %1245 = vmatpush1.xpose.msra.mxu0 0.0
    %1246 = vmatprep.subr.mxu0 0.0
    %1247 = vmatpush1.xpose.msra.mxu0 0.0
    %1248 = vmatprep.subr.mxu0 0.0
    %1249 = vmatpush1.xpose.msra.mxu0 0.0
    %1250 = vmatprep.subr.mxu0 0.0
    %1251 = vmatpush1.xpose.msra.mxu0 0.0
    %1252 = vmatprep.subr.mxu0 0.0
    %1253 = vmatpush1.xpose.msra.mxu0 0.0
    %1254 = vmatprep.subr.mxu0 0.0
    %1255 = vmatpush1.xpose.msra.mxu0 0.0
    %1256 = vmatprep.subr.mxu0 0.0
    %1257 = vmatpush1.xpose.msra.mxu0 0.0
    %1258 = vmatprep.subr.mxu0 0.0
    %1259 = vmatpush1.xpose.msra.mxu0 0.0
    %1260 = vmatprep.subr.mxu0 0.0
    %1261 = vmatpush1.xpose.msra.mxu0 0.0
    %1262 = vmatprep.subr.mxu0 0.0
    %1263 = vmatpush1.xpose.msra.mxu0 0.0
    %1264 = vmatprep.subr.mxu0 0.0
    %1265 = vmatpush1.xpose.msra.mxu0 0.0
    %1266 = vmatprep.subr.mxu0 0.0
    %1267 = vmatpush1.xpose.msra.mxu0 0.0
    %1268 = vmatprep.subr.mxu0 0.0
    %1269 = vmatpush1.xpose.msra.mxu0 0.0
    %1270 = vmatprep.subr.mxu0 0.0
    %1271 = vmatpush1.xpose.msra.mxu0 0.0
    %1272 = vmatprep.subr.mxu0 0.0
    %1273 = vmatpush1.xpose.msra.mxu0 0.0
    %1274 = vmatprep.subr.mxu0 0.0
    %1275 = vmatpush1.xpose.msra.mxu0 0.0
    %1276 = vmatprep.subr.mxu0 0.0
    %1277 = vmatpush1.xpose.msra.mxu0 0.0
    %1278 = vmatprep.subr.mxu0 0.0
    %1279 = vmatpush1.xpose.msra.mxu0 0.0
    %1280 = vmatprep.subr.mxu0 0.0
    %1281 = vmatpush1.xpose.msra.mxu0 0.0
    %1282 = vmatprep.mubr.f32.mxu0 0.0
    %1283 = vmatmul.mubr.f32.gmra.mrb[0].mxu0 %v531
    %v1284 = vpop.f32.mrb[0].mxu0
    %v1285 = vadd.f32 0.0, %v1284
    %v1286 = vpop.f32.mrb[0].mxu0
    %1287 = vmatprep.mubr.f32.mxu0 0.0
    %1288 = vmatmul.mubr.f32.gmra.mrb[0].mxu0 %v534
    %v1289 = vpop.f32.mrb[0].mxu0
    %v1290 = vadd.f32 0.0, %v1289
    %v1291 = vpop.f32.mrb[0].mxu0
    %1292 = vdwg.mxu0
    %v1294 = vsel %vm94, %v803, 0
    %v1297 = vsel %vm94, %v804, 0
    %1299 = vmatprep.subr.mxu0 0.0
    %1300 = vmatpush1.xpose.msra.mxu0 %v1294
    %1301 = vmatprep.subr.mxu0 0.0
    %1302 = vmatpush1.xpose.msra.mxu0 %v1297
    %1303 = vmatprep.subr.mxu0 0.0
    %1304 = vmatpush1.xpose.msra.mxu0 0.0
    %1305 = vmatprep.subr.mxu0 0.0
    %1306 = vmatpush1.xpose.msra.mxu0 0.0
    %1307 = vmatprep.subr.mxu0 0.0
    %1308 = vmatpush1.xpose.msra.mxu0 0.0
    %1309 = vmatprep.subr.mxu0 0.0
    %1310 = vmatpush1.xpose.msra.mxu0 0.0
    %1311 = vmatprep.subr.mxu0 0.0
    %1312 = vmatpush1.xpose.msra.mxu0 0.0
    %1313 = vmatprep.subr.mxu0 0.0
    %1314 = vmatpush1.xpose.msra.mxu0 0.0
    %1315 = vmatprep.subr.mxu0 0.0
    %1316 = vmatpush1.xpose.msra.mxu0 0.0
    %1317 = vmatprep.subr.mxu0 0.0
    %1318 = vmatpush1.xpose.msra.mxu0 0.0
    %1319 = vmatprep.subr.mxu0 0.0
    %1320 = vmatpush1.xpose.msra.mxu0 0.0
    %1321 = vmatprep.subr.mxu0 0.0
    %1322 = vmatpush1.xpose.msra.mxu0 0.0
    %1323 = vmatprep.subr.mxu0 0.0
    %1324 = vmatpush1.xpose.msra.mxu0 0.0
    %1325 = vmatprep.subr.mxu0 0.0
    %1326 = vmatpush1.xpose.msra.mxu0 0.0
    %1327 = vmatprep.subr.mxu0 0.0
    %1328 = vmatpush1.xpose.msra.mxu0 0.0
    %1329 = vmatprep.subr.mxu0 0.0
    %1330 = vmatpush1.xpose.msra.mxu0 0.0
    %1331 = vmatprep.subr.mxu0 0.0
    %1332 = vmatpush1.xpose.msra.mxu0 0.0
    %1333 = vmatprep.subr.mxu0 0.0
    %1334 = vmatpush1.xpose.msra.mxu0 0.0
    %1335 = vmatprep.subr.mxu0 0.0
    %1336 = vmatpush1.xpose.msra.mxu0 0.0
    %1337 = vmatprep.subr.mxu0 0.0
    %1338 = vmatpush1.xpose.msra.mxu0 0.0
    %1339 = vmatprep.subr.mxu0 0.0
    %1340 = vmatpush1.xpose.msra.mxu0 0.0
    %1341 = vmatprep.subr.mxu0 0.0
    %1342 = vmatpush1.xpose.msra.mxu0 0.0
    %1343 = vmatprep.subr.mxu0 0.0
    %1344 = vmatpush1.xpose.msra.mxu0 0.0
    %1345 = vmatprep.subr.mxu0 0.0
    %1346 = vmatpush1.xpose.msra.mxu0 0.0
    %1347 = vmatprep.subr.mxu0 0.0
    %1348 = vmatpush1.xpose.msra.mxu0 0.0
    %1349 = vmatprep.subr.mxu0 0.0
    %1350 = vmatpush1.xpose.msra.mxu0 0.0
    %1351 = vmatprep.subr.mxu0 0.0
    %1352 = vmatpush1.xpose.msra.mxu0 0.0
    %1353 = vmatprep.subr.mxu0 0.0
    %1354 = vmatpush1.xpose.msra.mxu0 0.0
    %1355 = vmatprep.subr.mxu0 0.0
    %1356 = vmatpush1.xpose.msra.mxu0 0.0
    %1357 = vmatprep.subr.mxu0 0.0
    %1358 = vmatpush1.xpose.msra.mxu0 0.0
    %1359 = vmatprep.subr.mxu0 0.0
    %1360 = vmatpush1.xpose.msra.mxu0 0.0
    %1361 = vmatprep.subr.mxu0 0.0
    %1362 = vmatpush1.xpose.msra.mxu0 0.0
    %1363 = vmatprep.mubr.f32.mxu0 0.0
    %1364 = vmatmul.mubr.f32.gmra.mrb[0].mxu0 %v618
    %v1365 = vpop.f32.mrb[0].mxu0
    %v1366 = vadd.f32 0.0, %v1365
    %v1367 = vpop.f32.mrb[0].mxu0
    %1368 = vmatprep.mubr.f32.mxu0 0.0
    %1369 = vmatmul.mubr.f32.gmra.mrb[0].mxu0 %v621
    %v1370 = vpop.f32.mrb[0].mxu0
    %v1371 = vadd.f32 0.0, %v1370
    %v1372 = vpop.f32.mrb[0].mxu0
    %1373 = vdwg.mxu0
    %v1375 = vsel %vm94, %v805, 0
    %v1378 = vsel %vm94, %v806, 0
    %1380 = vmatprep.subr.mxu0 0.0
    %1381 = vmatpush1.xpose.msra.mxu0 %v1375
    %1382 = vmatprep.subr.mxu0 0.0
    %1383 = vmatpush1.xpose.msra.mxu0 %v1378
    %1384 = vmatprep.subr.mxu0 0.0
    %1385 = vmatpush1.xpose.msra.mxu0 0.0
    %1386 = vmatprep.subr.mxu0 0.0
    %1387 = vmatpush1.xpose.msra.mxu0 0.0
    %1388 = vmatprep.subr.mxu0 0.0
    %1389 = vmatpush1.xpose.msra.mxu0 0.0
    %1390 = vmatprep.subr.mxu0 0.0
    %1391 = vmatpush1.xpose.msra.mxu0 0.0
    %1392 = vmatprep.subr.mxu0 0.0
    %1393 = vmatpush1.xpose.msra.mxu0 0.0
    %1394 = vmatprep.subr.mxu0 0.0
    %1395 = vmatpush1.xpose.msra.mxu0 0.0
    %1396 = vmatprep.subr.mxu0 0.0
    %1397 = vmatpush1.xpose.msra.mxu0 0.0
    %1398 = vmatprep.subr.mxu0 0.0
    %1399 = vmatpush1.xpose.msra.mxu0 0.0
    %1400 = vmatprep.subr.mxu0 0.0
    %1401 = vmatpush1.xpose.msra.mxu0 0.0
    %1402 = vmatprep.subr.mxu0 0.0
    %1403 = vmatpush1.xpose.msra.mxu0 0.0
    %1404 = vmatprep.subr.mxu0 0.0
    %1405 = vmatpush1.xpose.msra.mxu0 0.0
    %1406 = vmatprep.subr.mxu0 0.0
    %1407 = vmatpush1.xpose.msra.mxu0 0.0
    %1408 = vmatprep.subr.mxu0 0.0
    %1409 = vmatpush1.xpose.msra.mxu0 0.0
    %1410 = vmatprep.subr.mxu0 0.0
    %1411 = vmatpush1.xpose.msra.mxu0 0.0
    %1412 = vmatprep.subr.mxu0 0.0
    %1413 = vmatpush1.xpose.msra.mxu0 0.0
    %1414 = vmatprep.subr.mxu0 0.0
    %1415 = vmatpush1.xpose.msra.mxu0 0.0
    %1416 = vmatprep.subr.mxu0 0.0
    %1417 = vmatpush1.xpose.msra.mxu0 0.0
    %1418 = vmatprep.subr.mxu0 0.0
    %1419 = vmatpush1.xpose.msra.mxu0 0.0
    %1420 = vmatprep.subr.mxu0 0.0
    %1421 = vmatpush1.xpose.msra.mxu0 0.0
    %1422 = vmatprep.subr.mxu0 0.0
    %1423 = vmatpush1.xpose.msra.mxu0 0.0
    %1424 = vmatprep.subr.mxu0 0.0
    %1425 = vmatpush1.xpose.msra.mxu0 0.0
    %1426 = vmatprep.subr.mxu0 0.0
    %1427 = vmatpush1.xpose.msra.mxu0 0.0
    %1428 = vmatprep.subr.mxu0 0.0
    %1429 = vmatpush1.xpose.msra.mxu0 0.0
    %1430 = vmatprep.subr.mxu0 0.0
    %1431 = vmatpush1.xpose.msra.mxu0 0.0
    %1432 = vmatprep.subr.mxu0 0.0
    %1433 = vmatpush1.xpose.msra.mxu0 0.0
    %1434 = vmatprep.subr.mxu0 0.0
    %1435 = vmatpush1.xpose.msra.mxu0 0.0
    %1436 = vmatprep.subr.mxu0 0.0
    %1437 = vmatpush1.xpose.msra.mxu0 0.0
    %1438 = vmatprep.subr.mxu0 0.0
    %1439 = vmatpush1.xpose.msra.mxu0 0.0
    %1440 = vmatprep.subr.mxu0 0.0
    %1441 = vmatpush1.xpose.msra.mxu0 0.0
    %1442 = vmatprep.subr.mxu0 0.0
    %1443 = vmatpush1.xpose.msra.mxu0 0.0
    %1444 = vmatprep.mubr.f32.mxu0 0.0
    %1445 = vmatmul.mubr.f32.gmra.mrb[0].mxu0 %v705
    %v1446 = vpop.f32.mrb[0].mxu0
    %v1447 = vadd.f32 0.0, %v1446
    %v1448 = vpop.f32.mrb[0].mxu0
    %1449 = vmatprep.mubr.f32.mxu0 0.0
    %1450 = vmatmul.mubr.f32.gmra.mrb[0].mxu0 %v708
    %v1451 = vpop.f32.mrb[0].mxu0
    %v1452 = vadd.f32 0.0, %v1451
    %v1453 = vpop.f32.mrb[0].mxu0
    %1454 = vdwg.mxu0
    %v1455 = vld [vmem:[%s3] sm:$0xff]
    %v1456 = vld [vmem:[%s3 + $0x8] sm:$0xff]
    %v1457 = vld [vmem:[%s3 + $0x10] sm:$0xff]
    %v1458 = vld [vmem:[%s3 + $0x18] sm:$0xff]
    %v1459 = vld [vmem:[%s3 + $0x20] sm:$0xff]
    %v1460 = vld [vmem:[%s3 + $0x28] sm:$0xff]
    %v1461 = vld [vmem:[%s3 + $0x30] sm:$0xff]
    %v1462 = vld [vmem:[%s3 + $0x38] sm:$0xff]
    %v1463 = vld [vmem:[%s3 + $0x40] sm:$0xff]
    %v1464 = vld [vmem:[%s3 + $0x48] sm:$0xff]
    %v1465 = vld [vmem:[%s3 + $0x50] sm:$0xff]
    %v1466 = vld [vmem:[%s3 + $0x58] sm:$0xff]
    %v1467 = vld [vmem:[%s3 + $0x60] sm:$0xff]
    %v1468 = vld [vmem:[%s3 + $0x68] sm:$0xff]
    %v1469 = vld [vmem:[%s3 + $0x70] sm:$0xff]
    %v1470 = vld [vmem:[%s3 + $0x78] sm:$0xff]
    %v1472 = vsel %vm94, %v1455, 0
    %v1475 = vsel %vm94, %v1456, 0
    %1477 = vmatprep.subr.mxu0 0.0
    %1478 = vmatpush1.xpose.msra.mxu0 %v1472
    %1479 = vmatprep.subr.mxu0 0.0
    %1480 = vmatpush1.xpose.msra.mxu0 %v1475
    %1481 = vmatprep.subr.mxu0 0.0
    %1482 = vmatpush1.xpose.msra.mxu0 0.0
    %1483 = vmatprep.subr.mxu0 0.0
    %1484 = vmatpush1.xpose.msra.mxu0 0.0
    %1485 = vmatprep.subr.mxu0 0.0
    %1486 = vmatpush1.xpose.msra.mxu0 0.0
    %1487 = vmatprep.subr.mxu0 0.0
    %1488 = vmatpush1.xpose.msra.mxu0 0.0
    %1489 = vmatprep.subr.mxu0 0.0
    %1490 = vmatpush1.xpose.msra.mxu0 0.0
    %1491 = vmatprep.subr.mxu0 0.0
    %1492 = vmatpush1.xpose.msra.mxu0 0.0
    %1493 = vmatprep.subr.mxu0 0.0
    %1494 = vmatpush1.xpose.msra.mxu0 0.0
    %1495 = vmatprep.subr.mxu0 0.0
    %1496 = vmatpush1.xpose.msra.mxu0 0.0
    %1497 = vmatprep.subr.mxu0 0.0
    %1498 = vmatpush1.xpose.msra.mxu0 0.0
    %1499 = vmatprep.subr.mxu0 0.0
    %1500 = vmatpush1.xpose.msra.mxu0 0.0
    %1501 = vmatprep.subr.mxu0 0.0
    %1502 = vmatpush1.xpose.msra.mxu0 0.0
    %1503 = vmatprep.subr.mxu0 0.0
    %1504 = vmatpush1.xpose.msra.mxu0 0.0
    %1505 = vmatprep.subr.mxu0 0.0
    %1506 = vmatpush1.xpose.msra.mxu0 0.0
    %1507 = vmatprep.subr.mxu0 0.0
    %1508 = vmatpush1.xpose.msra.mxu0 0.0
    %1509 = vmatprep.subr.mxu0 0.0
    %1510 = vmatpush1.xpose.msra.mxu0 0.0
    %1511 = vmatprep.subr.mxu0 0.0
    %1512 = vmatpush1.xpose.msra.mxu0 0.0
    %1513 = vmatprep.subr.mxu0 0.0
    %1514 = vmatpush1.xpose.msra.mxu0 0.0
    %1515 = vmatprep.subr.mxu0 0.0
    %1516 = vmatpush1.xpose.msra.mxu0 0.0
    %1517 = vmatprep.subr.mxu0 0.0
    %1518 = vmatpush1.xpose.msra.mxu0 0.0
    %1519 = vmatprep.subr.mxu0 0.0
    %1520 = vmatpush1.xpose.msra.mxu0 0.0
    %1521 = vmatprep.subr.mxu0 0.0
    %1522 = vmatpush1.xpose.msra.mxu0 0.0
    %1523 = vmatprep.subr.mxu0 0.0
    %1524 = vmatpush1.xpose.msra.mxu0 0.0
    %1525 = vmatprep.subr.mxu0 0.0
    %1526 = vmatpush1.xpose.msra.mxu0 0.0
    %1527 = vmatprep.subr.mxu0 0.0
    %1528 = vmatpush1.xpose.msra.mxu0 0.0
    %1529 = vmatprep.subr.mxu0 0.0
    %1530 = vmatpush1.xpose.msra.mxu0 0.0
    %1531 = vmatprep.subr.mxu0 0.0
    %1532 = vmatpush1.xpose.msra.mxu0 0.0
    %1533 = vmatprep.subr.mxu0 0.0
    %1534 = vmatpush1.xpose.msra.mxu0 0.0
    %1535 = vmatprep.subr.mxu0 0.0
    %1536 = vmatpush1.xpose.msra.mxu0 0.0
    %1537 = vmatprep.subr.mxu0 0.0
    %1538 = vmatpush1.xpose.msra.mxu0 0.0
    %1539 = vmatprep.subr.mxu0 0.0
    %1540 = vmatpush1.xpose.msra.mxu0 0.0
    %1541 = vmatprep.mubr.f32.mxu0 0.0
    %1542 = vmatmul.mubr.f32.gmra.mrb[0].mxu0 %v96
    %v1543 = vpop.f32.mrb[0].mxu0
    %v1544 = vadd.f32 0.0, %v1543
    %v1545 = vpop.f32.mrb[0].mxu0
    %1546 = vmatprep.mubr.f32.mxu0 0.0
    %1547 = vmatmul.mubr.f32.gmra.mrb[0].mxu0 %v99
    %v1548 = vpop.f32.mrb[0].mxu0
    %v1549 = vadd.f32 0.0, %v1548
    %v1550 = vpop.f32.mrb[0].mxu0
    %1551 = vdwg.mxu0
    %v1553 = vsel %vm94, %v1457, 0
    %v1556 = vsel %vm94, %v1458, 0
    %1558 = vmatprep.subr.mxu0 0.0
    %1559 = vmatpush1.xpose.msra.mxu0 %v1553
    %1560 = vmatprep.subr.mxu0 0.0
    %1561 = vmatpush1.xpose.msra.mxu0 %v1556
    %1562 = vmatprep.subr.mxu0 0.0
    %1563 = vmatpush1.xpose.msra.mxu0 0.0
    %1564 = vmatprep.subr.mxu0 0.0
    %1565 = vmatpush1.xpose.msra.mxu0 0.0
    %1566 = vmatprep.subr.mxu0 0.0
    %1567 = vmatpush1.xpose.msra.mxu0 0.0
    %1568 = vmatprep.subr.mxu0 0.0
    %1569 = vmatpush1.xpose.msra.mxu0 0.0
    %1570 = vmatprep.subr.mxu0 0.0
    %1571 = vmatpush1.xpose.msra.mxu0 0.0
    %1572 = vmatprep.subr.mxu0 0.0
    %1573 = vmatpush1.xpose.msra.mxu0 0.0
    %1574 = vmatprep.subr.mxu0 0.0
    %1575 = vmatpush1.xpose.msra.mxu0 0.0
    %1576 = vmatprep.subr.mxu0 0.0
    %1577 = vmatpush1.xpose.msra.mxu0 0.0
    %1578 = vmatprep.subr.mxu0 0.0
    %1579 = vmatpush1.xpose.msra.mxu0 0.0
    %1580 = vmatprep.subr.mxu0 0.0
    %1581 = vmatpush1.xpose.msra.mxu0 0.0
    %1582 = vmatprep.subr.mxu0 0.0
    %1583 = vmatpush1.xpose.msra.mxu0 0.0
    %1584 = vmatprep.subr.mxu0 0.0
    %1585 = vmatpush1.xpose.msra.mxu0 0.0
    %1586 = vmatprep.subr.mxu0 0.0
    %1587 = vmatpush1.xpose.msra.mxu0 0.0
    %1588 = vmatprep.subr.mxu0 0.0
    %1589 = vmatpush1.xpose.msra.mxu0 0.0
    %1590 = vmatprep.subr.mxu0 0.0
    %1591 = vmatpush1.xpose.msra.mxu0 0.0
    %1592 = vmatprep.subr.mxu0 0.0
    %1593 = vmatpush1.xpose.msra.mxu0 0.0
    %1594 = vmatprep.subr.mxu0 0.0
    %1595 = vmatpush1.xpose.msra.mxu0 0.0
    %1596 = vmatprep.subr.mxu0 0.0
    %1597 = vmatpush1.xpose.msra.mxu0 0.0
    %1598 = vmatprep.subr.mxu0 0.0
    %1599 = vmatpush1.xpose.msra.mxu0 0.0
    %1600 = vmatprep.subr.mxu0 0.0
    %1601 = vmatpush1.xpose.msra.mxu0 0.0
    %1602 = vmatprep.subr.mxu0 0.0
    %1603 = vmatpush1.xpose.msra.mxu0 0.0
    %1604 = vmatprep.subr.mxu0 0.0
    %1605 = vmatpush1.xpose.msra.mxu0 0.0
    %1606 = vmatprep.subr.mxu0 0.0
    %1607 = vmatpush1.xpose.msra.mxu0 0.0
    %1608 = vmatprep.subr.mxu0 0.0
    %1609 = vmatpush1.xpose.msra.mxu0 0.0
    %1610 = vmatprep.subr.mxu0 0.0
    %1611 = vmatpush1.xpose.msra.mxu0 0.0
    %1612 = vmatprep.subr.mxu0 0.0
    %1613 = vmatpush1.xpose.msra.mxu0 0.0
    %1614 = vmatprep.subr.mxu0 0.0
    %1615 = vmatpush1.xpose.msra.mxu0 0.0
    %1616 = vmatprep.subr.mxu0 0.0
    %1617 = vmatpush1.xpose.msra.mxu0 0.0
    %1618 = vmatprep.subr.mxu0 0.0
    %1619 = vmatpush1.xpose.msra.mxu0 0.0
    %1620 = vmatprep.subr.mxu0 0.0
    %1621 = vmatpush1.xpose.msra.mxu0 0.0
    %1622 = vmatprep.mubr.f32.mxu0 0.0
    %1623 = vmatmul.mubr.f32.gmra.mrb[0].mxu0 %v183
    %v1624 = vpop.f32.mrb[0].mxu0
    %v1625 = vadd.f32 0.0, %v1624
    %v1626 = vpop.f32.mrb[0].mxu0
    %1627 = vmatprep.mubr.f32.mxu0 0.0
    %1628 = vmatmul.mubr.f32.gmra.mrb[0].mxu0 %v186
    %v1629 = vpop.f32.mrb[0].mxu0
    %v1630 = vadd.f32 0.0, %v1629
    %v1631 = vpop.f32.mrb[0].mxu0
    %1632 = vdwg.mxu0
    %v1634 = vsel %vm94, %v1459, 0
    %v1637 = vsel %vm94, %v1460, 0
    %1639 = vmatprep.subr.mxu0 0.0
    %1640 = vmatpush1.xpose.msra.mxu0 %v1634
    %1641 = vmatprep.subr.mxu0 0.0
    %1642 = vmatpush1.xpose.msra.mxu0 %v1637
    %1643 = vmatprep.subr.mxu0 0.0
    %1644 = vmatpush1.xpose.msra.mxu0 0.0
    %1645 = vmatprep.subr.mxu0 0.0
    %1646 = vmatpush1.xpose.msra.mxu0 0.0
    %1647 = vmatprep.subr.mxu0 0.0
    %1648 = vmatpush1.xpose.msra.mxu0 0.0
    %1649 = vmatprep.subr.mxu0 0.0
    %1650 = vmatpush1.xpose.msra.mxu0 0.0
    %1651 = vmatprep.subr.mxu0 0.0
    %1652 = vmatpush1.xpose.msra.mxu0 0.0
    %1653 = vmatprep.subr.mxu0 0.0
    %1654 = vmatpush1.xpose.msra.mxu0 0.0
    %1655 = vmatprep.subr.mxu0 0.0
    %1656 = vmatpush1.xpose.msra.mxu0 0.0
    %1657 = vmatprep.subr.mxu0 0.0
    %1658 = vmatpush1.xpose.msra.mxu0 0.0
    %1659 = vmatprep.subr.mxu0 0.0
    %1660 = vmatpush1.xpose.msra.mxu0 0.0
    %1661 = vmatprep.subr.mxu0 0.0
    %1662 = vmatpush1.xpose.msra.mxu0 0.0
    %1663 = vmatprep.subr.mxu0 0.0
    %1664 = vmatpush1.xpose.msra.mxu0 0.0
    %1665 = vmatprep.subr.mxu0 0.0
    %1666 = vmatpush1.xpose.msra.mxu0 0.0
    %1667 = vmatprep.subr.mxu0 0.0
    %1668 = vmatpush1.xpose.msra.mxu0 0.0
    %1669 = vmatprep.subr.mxu0 0.0
    %1670 = vmatpush1.xpose.msra.mxu0 0.0
    %1671 = vmatprep.subr.mxu0 0.0
    %1672 = vmatpush1.xpose.msra.mxu0 0.0
    %1673 = vmatprep.subr.mxu0 0.0
    %1674 = vmatpush1.xpose.msra.mxu0 0.0
    %1675 = vmatprep.subr.mxu0 0.0
    %1676 = vmatpush1.xpose.msra.mxu0 0.0
    %1677 = vmatprep.subr.mxu0 0.0
    %1678 = vmatpush1.xpose.msra.mxu0 0.0
    %1679 = vmatprep.subr.mxu0 0.0
    %1680 = vmatpush1.xpose.msra.mxu0 0.0
    %1681 = vmatprep.subr.mxu0 0.0
    %1682 = vmatpush1.xpose.msra.mxu0 0.0
    %1683 = vmatprep.subr.mxu0 0.0
    %1684 = vmatpush1.xpose.msra.mxu0 0.0
    %1685 = vmatprep.subr.mxu0 0.0
    %1686 = vmatpush1.xpose.msra.mxu0 0.0
    %1687 = vmatprep.subr.mxu0 0.0
    %1688 = vmatpush1.xpose.msra.mxu0 0.0
    %1689 = vmatprep.subr.mxu0 0.0
    %1690 = vmatpush1.xpose.msra.mxu0 0.0
    %1691 = vmatprep.subr.mxu0 0.0
    %1692 = vmatpush1.xpose.msra.mxu0 0.0
    %1693 = vmatprep.subr.mxu0 0.0
    %1694 = vmatpush1.xpose.msra.mxu0 0.0
    %1695 = vmatprep.subr.mxu0 0.0
    %1696 = vmatpush1.xpose.msra.mxu0 0.0
    %1697 = vmatprep.subr.mxu0 0.0
    %1698 = vmatpush1.xpose.msra.mxu0 0.0
    %1699 = vmatprep.subr.mxu0 0.0
    %1700 = vmatpush1.xpose.msra.mxu0 0.0
    %1701 = vmatprep.subr.mxu0 0.0
    %1702 = vmatpush1.xpose.msra.mxu0 0.0
    %1703 = vmatprep.mubr.f32.mxu0 0.0
    %1704 = vmatmul.mubr.f32.gmra.mrb[0].mxu0 %v270
    %v1705 = vpop.f32.mrb[0].mxu0
    %v1706 = vadd.f32 0.0, %v1705
    %v1707 = vpop.f32.mrb[0].mxu0
    %1708 = vmatprep.mubr.f32.mxu0 0.0
    %1709 = vmatmul.mubr.f32.gmra.mrb[0].mxu0 %v273
    %v1710 = vpop.f32.mrb[0].mxu0
    %v1711 = vadd.f32 0.0, %v1710
    %v1712 = vpop.f32.mrb[0].mxu0
    %1713 = vdwg.mxu0
    %v1715 = vsel %vm94, %v1461, 0
    %v1718 = vsel %vm94, %v1462, 0
    %1720 = vmatprep.subr.mxu0 0.0
    %1721 = vmatpush1.xpose.msra.mxu0 %v1715
    %1722 = vmatprep.subr.mxu0 0.0
    %1723 = vmatpush1.xpose.msra.mxu0 %v1718
    %1724 = vmatprep.subr.mxu0 0.0
    %1725 = vmatpush1.xpose.msra.mxu0 0.0
    %1726 = vmatprep.subr.mxu0 0.0
    %1727 = vmatpush1.xpose.msra.mxu0 0.0
    %1728 = vmatprep.subr.mxu0 0.0
    %1729 = vmatpush1.xpose.msra.mxu0 0.0
    %1730 = vmatprep.subr.mxu0 0.0
    %1731 = vmatpush1.xpose.msra.mxu0 0.0
    %1732 = vmatprep.subr.mxu0 0.0
    %1733 = vmatpush1.xpose.msra.mxu0 0.0
    %1734 = vmatprep.subr.mxu0 0.0
    %1735 = vmatpush1.xpose.msra.mxu0 0.0
    %1736 = vmatprep.subr.mxu0 0.0
    %1737 = vmatpush1.xpose.msra.mxu0 0.0
    %1738 = vmatprep.subr.mxu0 0.0
    %1739 = vmatpush1.xpose.msra.mxu0 0.0
    %1740 = vmatprep.subr.mxu0 0.0
    %1741 = vmatpush1.xpose.msra.mxu0 0.0
    %1742 = vmatprep.subr.mxu0 0.0
    %1743 = vmatpush1.xpose.msra.mxu0 0.0
    %1744 = vmatprep.subr.mxu0 0.0
    %1745 = vmatpush1.xpose.msra.mxu0 0.0
    %1746 = vmatprep.subr.mxu0 0.0
    %1747 = vmatpush1.xpose.msra.mxu0 0.0
    %1748 = vmatprep.subr.mxu0 0.0
    %1749 = vmatpush1.xpose.msra.mxu0 0.0
    %1750 = vmatprep.subr.mxu0 0.0
    %1751 = vmatpush1.xpose.msra.mxu0 0.0
    %1752 = vmatprep.subr.mxu0 0.0
    %1753 = vmatpush1.xpose.msra.mxu0 0.0
    %1754 = vmatprep.subr.mxu0 0.0
    %1755 = vmatpush1.xpose.msra.mxu0 0.0
    %1756 = vmatprep.subr.mxu0 0.0
    %1757 = vmatpush1.xpose.msra.mxu0 0.0
    %1758 = vmatprep.subr.mxu0 0.0
    %1759 = vmatpush1.xpose.msra.mxu0 0.0
    %1760 = vmatprep.subr.mxu0 0.0
    %1761 = vmatpush1.xpose.msra.mxu0 0.0
    %1762 = vmatprep.subr.mxu0 0.0
    %1763 = vmatpush1.xpose.msra.mxu0 0.0
    %1764 = vmatprep.subr.mxu0 0.0
    %1765 = vmatpush1.xpose.msra.mxu0 0.0
    %1766 = vmatprep.subr.mxu0 0.0
    %1767 = vmatpush1.xpose.msra.mxu0 0.0
    %1768 = vmatprep.subr.mxu0 0.0
    %1769 = vmatpush1.xpose.msra.mxu0 0.0
    %1770 = vmatprep.subr.mxu0 0.0
    %1771 = vmatpush1.xpose.msra.mxu0 0.0
    %1772 = vmatprep.subr.mxu0 0.0
    %1773 = vmatpush1.xpose.msra.mxu0 0.0
    %1774 = vmatprep.subr.mxu0 0.0
    %1775 = vmatpush1.xpose.msra.mxu0 0.0
    %1776 = vmatprep.subr.mxu0 0.0
    %1777 = vmatpush1.xpose.msra.mxu0 0.0
    %1778 = vmatprep.subr.mxu0 0.0
    %1779 = vmatpush1.xpose.msra.mxu0 0.0
    %1780 = vmatprep.subr.mxu0 0.0
    %1781 = vmatpush1.xpose.msra.mxu0 0.0
    %1782 = vmatprep.subr.mxu0 0.0
    %1783 = vmatpush1.xpose.msra.mxu0 0.0
    %1784 = vmatprep.mubr.f32.mxu0 0.0
    %1785 = vmatmul.mubr.f32.gmra.mrb[0].mxu0 %v357
    %v1786 = vpop.f32.mrb[0].mxu0
    %v1787 = vadd.f32 0.0, %v1786
    %v1788 = vpop.f32.mrb[0].mxu0
    %1789 = vmatprep.mubr.f32.mxu0 0.0
    %1790 = vmatmul.mubr.f32.gmra.mrb[0].mxu0 %v360
    %v1791 = vpop.f32.mrb[0].mxu0
    %v1792 = vadd.f32 0.0, %v1791
    %v1793 = vpop.f32.mrb[0].mxu0
    %1794 = vdwg.mxu0
    %v1796 = vsel %vm94, %v1463, 0
    %v1799 = vsel %vm94, %v1464, 0
    %1801 = vmatprep.subr.mxu0 0.0
    %1802 = vmatpush1.xpose.msra.mxu0 %v1796
    %1803 = vmatprep.subr.mxu0 0.0
    %1804 = vmatpush1.xpose.msra.mxu0 %v1799
    %1805 = vmatprep.subr.mxu0 0.0
    %1806 = vmatpush1.xpose.msra.mxu0 0.0
    %1807 = vmatprep.subr.mxu0 0.0
    %1808 = vmatpush1.xpose.msra.mxu0 0.0
    %1809 = vmatprep.subr.mxu0 0.0
    %1810 = vmatpush1.xpose.msra.mxu0 0.0
    %1811 = vmatprep.subr.mxu0 0.0
    %1812 = vmatpush1.xpose.msra.mxu0 0.0
    %1813 = vmatprep.subr.mxu0 0.0
    %1814 = vmatpush1.xpose.msra.mxu0 0.0
    %1815 = vmatprep.subr.mxu0 0.0
    %1816 = vmatpush1.xpose.msra.mxu0 0.0
    %1817 = vmatprep.subr.mxu0 0.0
    %1818 = vmatpush1.xpose.msra.mxu0 0.0
    %1819 = vmatprep.subr.mxu0 0.0
    %1820 = vmatpush1.xpose.msra.mxu0 0.0
    %1821 = vmatprep.subr.mxu0 0.0
    %1822 = vmatpush1.xpose.msra.mxu0 0.0
    %1823 = vmatprep.subr.mxu0 0.0
    %1824 = vmatpush1.xpose.msra.mxu0 0.0
    %1825 = vmatprep.subr.mxu0 0.0
    %1826 = vmatpush1.xpose.msra.mxu0 0.0
    %1827 = vmatprep.subr.mxu0 0.0
    %1828 = vmatpush1.xpose.msra.mxu0 0.0
    %1829 = vmatprep.subr.mxu0 0.0
    %1830 = vmatpush1.xpose.msra.mxu0 0.0
    %1831 = vmatprep.subr.mxu0 0.0
    %1832 = vmatpush1.xpose.msra.mxu0 0.0
    %1833 = vmatprep.subr.mxu0 0.0
    %1834 = vmatpush1.xpose.msra.mxu0 0.0
    %1835 = vmatprep.subr.mxu0 0.0
    %1836 = vmatpush1.xpose.msra.mxu0 0.0
    %1837 = vmatprep.subr.mxu0 0.0
    %1838 = vmatpush1.xpose.msra.mxu0 0.0
    %1839 = vmatprep.subr.mxu0 0.0
    %1840 = vmatpush1.xpose.msra.mxu0 0.0
    %1841 = vmatprep.subr.mxu0 0.0
    %1842 = vmatpush1.xpose.msra.mxu0 0.0
    %1843 = vmatprep.subr.mxu0 0.0
    %1844 = vmatpush1.xpose.msra.mxu0 0.0
    %1845 = vmatprep.subr.mxu0 0.0
    %1846 = vmatpush1.xpose.msra.mxu0 0.0
    %1847 = vmatprep.subr.mxu0 0.0
    %1848 = vmatpush1.xpose.msra.mxu0 0.0
    %1849 = vmatprep.subr.mxu0 0.0
    %1850 = vmatpush1.xpose.msra.mxu0 0.0
    %1851 = vmatprep.subr.mxu0 0.0
    %1852 = vmatpush1.xpose.msra.mxu0 0.0
    %1853 = vmatprep.subr.mxu0 0.0
    %1854 = vmatpush1.xpose.msra.mxu0 0.0
    %1855 = vmatprep.subr.mxu0 0.0
    %1856 = vmatpush1.xpose.msra.mxu0 0.0
    %1857 = vmatprep.subr.mxu0 0.0
    %1858 = vmatpush1.xpose.msra.mxu0 0.0
    %1859 = vmatprep.subr.mxu0 0.0
    %1860 = vmatpush1.xpose.msra.mxu0 0.0
    %1861 = vmatprep.subr.mxu0 0.0
    %1862 = vmatpush1.xpose.msra.mxu0 0.0
    %1863 = vmatprep.subr.mxu0 0.0
    %1864 = vmatpush1.xpose.msra.mxu0 0.0
    %1865 = vmatprep.mubr.f32.mxu0 0.0
    %1866 = vmatmul.mubr.f32.gmra.mrb[0].mxu0 %v444
    %v1867 = vpop.f32.mrb[0].mxu0
    %v1868 = vadd.f32 0.0, %v1867
    %v1869 = vpop.f32.mrb[0].mxu0
    %1870 = vmatprep.mubr.f32.mxu0 0.0
    %1871 = vmatmul.mubr.f32.gmra.mrb[0].mxu0 %v447
    %v1872 = vpop.f32.mrb[0].mxu0
    %v1873 = vadd.f32 0.0, %v1872
    %v1874 = vpop.f32.mrb[0].mxu0
    %1875 = vdwg.mxu0
    %v1877 = vsel %vm94, %v1465, 0
    %v1880 = vsel %vm94, %v1466, 0
    %1882 = vmatprep.subr.mxu0 0.0
    %1883 = vmatpush1.xpose.msra.mxu0 %v1877
    %1884 = vmatprep.subr.mxu0 0.0
    %1885 = vmatpush1.xpose.msra.mxu0 %v1880
    %1886 = vmatprep.subr.mxu0 0.0
    %1887 = vmatpush1.xpose.msra.mxu0 0.0
    %1888 = vmatprep.subr.mxu0 0.0
    %1889 = vmatpush1.xpose.msra.mxu0 0.0
    %1890 = vmatprep.subr.mxu0 0.0
    %1891 = vmatpush1.xpose.msra.mxu0 0.0
    %1892 = vmatprep.subr.mxu0 0.0
    %1893 = vmatpush1.xpose.msra.mxu0 0.0
    %1894 = vmatprep.subr.mxu0 0.0
    %1895 = vmatpush1.xpose.msra.mxu0 0.0
    %1896 = vmatprep.subr.mxu0 0.0
    %1897 = vmatpush1.xpose.msra.mxu0 0.0
    %1898 = vmatprep.subr.mxu0 0.0
    %1899 = vmatpush1.xpose.msra.mxu0 0.0
    %1900 = vmatprep.subr.mxu0 0.0
    %1901 = vmatpush1.xpose.msra.mxu0 0.0
    %1902 = vmatprep.subr.mxu0 0.0
    %1903 = vmatpush1.xpose.msra.mxu0 0.0
    %1904 = vmatprep.subr.mxu0 0.0
    %1905 = vmatpush1.xpose.msra.mxu0 0.0
    %1906 = vmatprep.subr.mxu0 0.0
    %1907 = vmatpush1.xpose.msra.mxu0 0.0
    %1908 = vmatprep.subr.mxu0 0.0
    %1909 = vmatpush1.xpose.msra.mxu0 0.0
    %1910 = vmatprep.subr.mxu0 0.0
    %1911 = vmatpush1.xpose.msra.mxu0 0.0
    %1912 = vmatprep.subr.mxu0 0.0
    %1913 = vmatpush1.xpose.msra.mxu0 0.0
    %1914 = vmatprep.subr.mxu0 0.0
    %1915 = vmatpush1.xpose.msra.mxu0 0.0
    %1916 = vmatprep.subr.mxu0 0.0
    %1917 = vmatpush1.xpose.msra.mxu0 0.0
    %1918 = vmatprep.subr.mxu0 0.0
    %1919 = vmatpush1.xpose.msra.mxu0 0.0
    %1920 = vmatprep.subr.mxu0 0.0
    %1921 = vmatpush1.xpose.msra.mxu0 0.0
    %1922 = vmatprep.subr.mxu0 0.0
    %1923 = vmatpush1.xpose.msra.mxu0 0.0
    %1924 = vmatprep.subr.mxu0 0.0
    %1925 = vmatpush1.xpose.msra.mxu0 0.0
    %1926 = vmatprep.subr.mxu0 0.0
    %1927 = vmatpush1.xpose.msra.mxu0 0.0
    %1928 = vmatprep.subr.mxu0 0.0
    %1929 = vmatpush1.xpose.msra.mxu0 0.0
    %1930 = vmatprep.subr.mxu0 0.0
    %1931 = vmatpush1.xpose.msra.mxu0 0.0
    %1932 = vmatprep.subr.mxu0 0.0
    %1933 = vmatpush1.xpose.msra.mxu0 0.0
    %1934 = vmatprep.subr.mxu0 0.0
    %1935 = vmatpush1.xpose.msra.mxu0 0.0
    %1936 = vmatprep.subr.mxu0 0.0
    %1937 = vmatpush1.xpose.msra.mxu0 0.0
    %1938 = vmatprep.subr.mxu0 0.0
    %1939 = vmatpush1.xpose.msra.mxu0 0.0
    %1940 = vmatprep.subr.mxu0 0.0
    %1941 = vmatpush1.xpose.msra.mxu0 0.0
    %1942 = vmatprep.subr.mxu0 0.0
    %1943 = vmatpush1.xpose.msra.mxu0 0.0
    %1944 = vmatprep.subr.mxu0 0.0
    %1945 = vmatpush1.xpose.msra.mxu0 0.0
    %1946 = vmatprep.mubr.f32.mxu0 0.0
    %1947 = vmatmul.mubr.f32.gmra.mrb[0].mxu0 %v531
    %v1948 = vpop.f32.mrb[0].mxu0
    %v1949 = vadd.f32 0.0, %v1948
    %v1950 = vpop.f32.mrb[0].mxu0
    %1951 = vmatprep.mubr.f32.mxu0 0.0
    %1952 = vmatmul.mubr.f32.gmra.mrb[0].mxu0 %v534
    %v1953 = vpop.f32.mrb[0].mxu0
    %v1954 = vadd.f32 0.0, %v1953
    %v1955 = vpop.f32.mrb[0].mxu0
    %1956 = vdwg.mxu0
    %v1958 = vsel %vm94, %v1467, 0
    %v1961 = vsel %vm94, %v1468, 0
    %1963 = vmatprep.subr.mxu0 0.0
    %1964 = vmatpush1.xpose.msra.mxu0 %v1958
    %1965 = vmatprep.subr.mxu0 0.0
    %1966 = vmatpush1.xpose.msra.mxu0 %v1961
    %1967 = vmatprep.subr.mxu0 0.0
    %1968 = vmatpush1.xpose.msra.mxu0 0.0
    %1969 = vmatprep.subr.mxu0 0.0
    %1970 = vmatpush1.xpose.msra.mxu0 0.0
    %1971 = vmatprep.subr.mxu0 0.0
    %1972 = vmatpush1.xpose.msra.mxu0 0.0
    %1973 = vmatprep.subr.mxu0 0.0
    %1974 = vmatpush1.xpose.msra.mxu0 0.0
    %1975 = vmatprep.subr.mxu0 0.0
    %1976 = vmatpush1.xpose.msra.mxu0 0.0
    %1977 = vmatprep.subr.mxu0 0.0
    %1978 = vmatpush1.xpose.msra.mxu0 0.0
    %1979 = vmatprep.subr.mxu0 0.0
    %1980 = vmatpush1.xpose.msra.mxu0 0.0
    %1981 = vmatprep.subr.mxu0 0.0
    %1982 = vmatpush1.xpose.msra.mxu0 0.0
    %1983 = vmatprep.subr.mxu0 0.0
    %1984 = vmatpush1.xpose.msra.mxu0 0.0
    %1985 = vmatprep.subr.mxu0 0.0
    %1986 = vmatpush1.xpose.msra.mxu0 0.0
    %1987 = vmatprep.subr.mxu0 0.0
    %1988 = vmatpush1.xpose.msra.mxu0 0.0
    %1989 = vmatprep.subr.mxu0 0.0
    %1990 = vmatpush1.xpose.msra.mxu0 0.0
    %1991 = vmatprep.subr.mxu0 0.0
    %1992 = vmatpush1.xpose.msra.mxu0 0.0
    %1993 = vmatprep.subr.mxu0 0.0
    %1994 = vmatpush1.xpose.msra.mxu0 0.0
    %1995 = vmatprep.subr.mxu0 0.0
    %1996 = vmatpush1.xpose.msra.mxu0 0.0
    %1997 = vmatprep.subr.mxu0 0.0
    %1998 = vmatpush1.xpose.msra.mxu0 0.0
    %1999 = vmatprep.subr.mxu0 0.0
    %2000 = vmatpush1.xpose.msra.mxu0 0.0
    %2001 = vmatprep.subr.mxu0 0.0
    %2002 = vmatpush1.xpose.msra.mxu0 0.0
    %2003 = vmatprep.subr.mxu0 0.0
    %2004 = vmatpush1.xpose.msra.mxu0 0.0
    %2005 = vmatprep.subr.mxu0 0.0
    %2006 = vmatpush1.xpose.msra.mxu0 0.0
    %2007 = vmatprep.subr.mxu0 0.0
    %2008 = vmatpush1.xpose.msra.mxu0 0.0
    %2009 = vmatprep.subr.mxu0 0.0
    %2010 = vmatpush1.xpose.msra.mxu0 0.0
    %2011 = vmatprep.subr.mxu0 0.0
    %2012 = vmatpush1.xpose.msra.mxu0 0.0
    %2013 = vmatprep.subr.mxu0 0.0
    %2014 = vmatpush1.xpose.msra.mxu0 0.0
    %2015 = vmatprep.subr.mxu0 0.0
    %2016 = vmatpush1.xpose.msra.mxu0 0.0
    %2017 = vmatprep.subr.mxu0 0.0
    %2018 = vmatpush1.xpose.msra.mxu0 0.0
    %2019 = vmatprep.subr.mxu0 0.0
    %2020 = vmatpush1.xpose.msra.mxu0 0.0
    %2021 = vmatprep.subr.mxu0 0.0
    %2022 = vmatpush1.xpose.msra.mxu0 0.0
    %2023 = vmatprep.subr.mxu0 0.0
    %2024 = vmatpush1.xpose.msra.mxu0 0.0
    %2025 = vmatprep.subr.mxu0 0.0
    %2026 = vmatpush1.xpose.msra.mxu0 0.0
    %2027 = vmatprep.mubr.f32.mxu0 0.0
    %2028 = vmatmul.mubr.f32.gmra.mrb[0].mxu0 %v618
    %v2029 = vpop.f32.mrb[0].mxu0
    %v2030 = vadd.f32 0.0, %v2029
    %v2031 = vpop.f32.mrb[0].mxu0
    %2032 = vmatprep.mubr.f32.mxu0 0.0
    %2033 = vmatmul.mubr.f32.gmra.mrb[0].mxu0 %v621
    %v2034 = vpop.f32.mrb[0].mxu0
    %v2035 = vadd.f32 0.0, %v2034
    %v2036 = vpop.f32.mrb[0].mxu0
    %2037 = vdwg.mxu0
    %v2039 = vsel %vm94, %v1469, 0
    %v2042 = vsel %vm94, %v1470, 0
    %2044 = vmatprep.subr.mxu0 0.0
    %2045 = vmatpush1.xpose.msra.mxu0 %v2039
    %2046 = vmatprep.subr.mxu0 0.0
    %2047 = vmatpush1.xpose.msra.mxu0 %v2042
    %2048 = vmatprep.subr.mxu0 0.0
    %2049 = vmatpush1.xpose.msra.mxu0 0.0
    %2050 = vmatprep.subr.mxu0 0.0
    %2051 = vmatpush1.xpose.msra.mxu0 0.0
    %2052 = vmatprep.subr.mxu0 0.0
    %2053 = vmatpush1.xpose.msra.mxu0 0.0
    %2054 = vmatprep.subr.mxu0 0.0
    %2055 = vmatpush1.xpose.msra.mxu0 0.0
    %2056 = vmatprep.subr.mxu0 0.0
    %2057 = vmatpush1.xpose.msra.mxu0 0.0
    %2058 = vmatprep.subr.mxu0 0.0
    %2059 = vmatpush1.xpose.msra.mxu0 0.0
    %2060 = vmatprep.subr.mxu0 0.0
    %2061 = vmatpush1.xpose.msra.mxu0 0.0
    %2062 = vmatprep.subr.mxu0 0.0
    %2063 = vmatpush1.xpose.msra.mxu0 0.0
    %2064 = vmatprep.subr.mxu0 0.0
    %2065 = vmatpush1.xpose.msra.mxu0 0.0
    %2066 = vmatprep.subr.mxu0 0.0
    %2067 = vmatpush1.xpose.msra.mxu0 0.0
    %2068 = vmatprep.subr.mxu0 0.0
    %2069 = vmatpush1.xpose.msra.mxu0 0.0
    %2070 = vmatprep.subr.mxu0 0.0
    %2071 = vmatpush1.xpose.msra.mxu0 0.0
    %2072 = vmatprep.subr.mxu0 0.0
    %2073 = vmatpush1.xpose.msra.mxu0 0.0
    %2074 = vmatprep.subr.mxu0 0.0
    %2075 = vmatpush1.xpose.msra.mxu0 0.0
    %2076 = vmatprep.subr.mxu0 0.0
    %2077 = vmatpush1.xpose.msra.mxu0 0.0
    %2078 = vmatprep.subr.mxu0 0.0
    %2079 = vmatpush1.xpose.msra.mxu0 0.0
    %2080 = vmatprep.subr.mxu0 0.0
    %2081 = vmatpush1.xpose.msra.mxu0 0.0
    %2082 = vmatprep.subr.mxu0 0.0
    %2083 = vmatpush1.xpose.msra.mxu0 0.0
    %2084 = vmatprep.subr.mxu0 0.0
    %2085 = vmatpush1.xpose.msra.mxu0 0.0
    %2086 = vmatprep.subr.mxu0 0.0
    %2087 = vmatpush1.xpose.msra.mxu0 0.0
    %2088 = vmatprep.subr.mxu0 0.0
    %2089 = vmatpush1.xpose.msra.mxu0 0.0
    %2090 = vmatprep.subr.mxu0 0.0
    %2091 = vmatpush1.xpose.msra.mxu0 0.0
    %2092 = vmatprep.subr.mxu0 0.0
    %2093 = vmatpush1.xpose.msra.mxu0 0.0
    %2094 = vmatprep.subr.mxu0 0.0
    %2095 = vmatpush1.xpose.msra.mxu0 0.0
    %2096 = vmatprep.subr.mxu0 0.0
    %2097 = vmatpush1.xpose.msra.mxu0 0.0
    %2098 = vmatprep.subr.mxu0 0.0
    %2099 = vmatpush1.xpose.msra.mxu0 0.0
    %2100 = vmatprep.subr.mxu0 0.0
    %2101 = vmatpush1.xpose.msra.mxu0 0.0
    %2102 = vmatprep.subr.mxu0 0.0
    %2103 = vmatpush1.xpose.msra.mxu0 0.0
    %2104 = vmatprep.subr.mxu0 0.0
    %2105 = vmatpush1.xpose.msra.mxu0 0.0
    %2106 = vmatprep.subr.mxu0 0.0
    %2107 = vmatpush1.xpose.msra.mxu0 0.0
    %2108 = vmatprep.mubr.f32.mxu0 0.0
    %2109 = vmatmul.mubr.f32.gmra.mrb[0].mxu0 %v705
    %v2110 = vpop.f32.mrb[0].mxu0
    %v2111 = vadd.f32 0.0, %v2110
    %v2112 = vpop.f32.mrb[0].mxu0
    %2113 = vmatprep.mubr.f32.mxu0 0.0
    %2114 = vmatmul.mubr.f32.gmra.mrb[0].mxu0 %v708
    %v2115 = vpop.f32.mrb[0].mxu0
    %v2116 = vadd.f32 0.0, %v2115
    %v2117 = vpop.f32.mrb[0].mxu0
    %2118 = vdwg.mxu0
    %v2119 = vld [vmem:[%s4] sm:$0xff]
    %v2120 = vld [vmem:[%s4 + $0x8] sm:$0xff]
    %v2121 = vld [vmem:[%s4 + $0x10] sm:$0xff]
    %v2122 = vld [vmem:[%s4 + $0x18] sm:$0xff]
    %v2123 = vld [vmem:[%s4 + $0x20] sm:$0xff]
    %v2124 = vld [vmem:[%s4 + $0x28] sm:$0xff]
    %v2125 = vld [vmem:[%s4 + $0x30] sm:$0xff]
    %v2126 = vld [vmem:[%s4 + $0x38] sm:$0xff]
    %v2127 = vld [vmem:[%s4 + $0x40] sm:$0xff]
    %v2128 = vld [vmem:[%s4 + $0x48] sm:$0xff]
    %v2129 = vld [vmem:[%s4 + $0x50] sm:$0xff]
    %v2130 = vld [vmem:[%s4 + $0x58] sm:$0xff]
    %v2131 = vld [vmem:[%s4 + $0x60] sm:$0xff]
    %v2132 = vld [vmem:[%s4 + $0x68] sm:$0xff]
    %v2133 = vld [vmem:[%s4 + $0x70] sm:$0xff]
    %v2134 = vld [vmem:[%s4 + $0x78] sm:$0xff]
    %v2136 = vsel %vm94, %v2119, 0
    %v2139 = vsel %vm94, %v2120, 0
    %2141 = vmatprep.subr.mxu0 0.0
    %2142 = vmatpush1.xpose.msra.mxu0 %v2136
    %2143 = vmatprep.subr.mxu0 0.0
    %2144 = vmatpush1.xpose.msra.mxu0 %v2139
    %2145 = vmatprep.subr.mxu0 0.0
    %2146 = vmatpush1.xpose.msra.mxu0 0.0
    %2147 = vmatprep.subr.mxu0 0.0
    %2148 = vmatpush1.xpose.msra.mxu0 0.0
    %2149 = vmatprep.subr.mxu0 0.0
    %2150 = vmatpush1.xpose.msra.mxu0 0.0
    %2151 = vmatprep.subr.mxu0 0.0
    %2152 = vmatpush1.xpose.msra.mxu0 0.0
    %2153 = vmatprep.subr.mxu0 0.0
    %2154 = vmatpush1.xpose.msra.mxu0 0.0
    %2155 = vmatprep.subr.mxu0 0.0
    %2156 = vmatpush1.xpose.msra.mxu0 0.0
    %2157 = vmatprep.subr.mxu0 0.0
    %2158 = vmatpush1.xpose.msra.mxu0 0.0
    %2159 = vmatprep.subr.mxu0 0.0
    %2160 = vmatpush1.xpose.msra.mxu0 0.0
    %2161 = vmatprep.subr.mxu0 0.0
    %2162 = vmatpush1.xpose.msra.mxu0 0.0
    %2163 = vmatprep.subr.mxu0 0.0
    %2164 = vmatpush1.xpose.msra.mxu0 0.0
    %2165 = vmatprep.subr.mxu0 0.0
    %2166 = vmatpush1.xpose.msra.mxu0 0.0
    %2167 = vmatprep.subr.mxu0 0.0
    %2168 = vmatpush1.xpose.msra.mxu0 0.0
    %2169 = vmatprep.subr.mxu0 0.0
    %2170 = vmatpush1.xpose.msra.mxu0 0.0
    %2171 = vmatprep.subr.mxu0 0.0
    %2172 = vmatpush1.xpose.msra.mxu0 0.0
    %2173 = vmatprep.subr.mxu0 0.0
    %2174 = vmatpush1.xpose.msra.mxu0 0.0
    %2175 = vmatprep.subr.mxu0 0.0
    %2176 = vmatpush1.xpose.msra.mxu0 0.0
    %2177 = vmatprep.subr.mxu0 0.0
    %2178 = vmatpush1.xpose.msra.mxu0 0.0
    %2179 = vmatprep.subr.mxu0 0.0
    %2180 = vmatpush1.xpose.msra.mxu0 0.0
    %2181 = vmatprep.subr.mxu0 0.0
    %2182 = vmatpush1.xpose.msra.mxu0 0.0
    %2183 = vmatprep.subr.mxu0 0.0
    %2184 = vmatpush1.xpose.msra.mxu0 0.0
    %2185 = vmatprep.subr.mxu0 0.0
    %2186 = vmatpush1.xpose.msra.mxu0 0.0
    %2187 = vmatprep.subr.mxu0 0.0
    %2188 = vmatpush1.xpose.msra.mxu0 0.0
    %2189 = vmatprep.subr.mxu0 0.0
    %2190 = vmatpush1.xpose.msra.mxu0 0.0
    %2191 = vmatprep.subr.mxu0 0.0
    %2192 = vmatpush1.xpose.msra.mxu0 0.0
    %2193 = vmatprep.subr.mxu0 0.0
    %2194 = vmatpush1.xpose.msra.mxu0 0.0
    %2195 = vmatprep.subr.mxu0 0.0
    %2196 = vmatpush1.xpose.msra.mxu0 0.0
    %2197 = vmatprep.subr.mxu0 0.0
    %2198 = vmatpush1.xpose.msra.mxu0 0.0
    %2199 = vmatprep.subr.mxu0 0.0
    %2200 = vmatpush1.xpose.msra.mxu0 0.0
    %2201 = vmatprep.subr.mxu0 0.0
    %2202 = vmatpush1.xpose.msra.mxu0 0.0
    %2203 = vmatprep.subr.mxu0 0.0
    %2204 = vmatpush1.xpose.msra.mxu0 0.0
    %2205 = vmatprep.mubr.f32.mxu0 0.0
    %2206 = vmatmul.mubr.f32.gmra.mrb[0].mxu0 %v96
    %v2207 = vpop.f32.mrb[0].mxu0
    %v2208 = vadd.f32 0.0, %v2207
    %v2209 = vpop.f32.mrb[0].mxu0
    %2210 = vmatprep.mubr.f32.mxu0 0.0
    %2211 = vmatmul.mubr.f32.gmra.mrb[0].mxu0 %v99
    %v2212 = vpop.f32.mrb[0].mxu0
    %v2213 = vadd.f32 0.0, %v2212
    %v2214 = vpop.f32.mrb[0].mxu0
    %2215 = vdwg.mxu0
    %v2217 = vsel %vm94, %v2121, 0
    %v2220 = vsel %vm94, %v2122, 0
    %2222 = vmatprep.subr.mxu0 0.0
    %2223 = vmatpush1.xpose.msra.mxu0 %v2217
    %2224 = vmatprep.subr.mxu0 0.0
    %2225 = vmatpush1.xpose.msra.mxu0 %v2220
    %2226 = vmatprep.subr.mxu0 0.0
    %2227 = vmatpush1.xpose.msra.mxu0 0.0
    %2228 = vmatprep.subr.mxu0 0.0
    %2229 = vmatpush1.xpose.msra.mxu0 0.0
    %2230 = vmatprep.subr.mxu0 0.0
    %2231 = vmatpush1.xpose.msra.mxu0 0.0
    %2232 = vmatprep.subr.mxu0 0.0
    %2233 = vmatpush1.xpose.msra.mxu0 0.0
    %2234 = vmatprep.subr.mxu0 0.0
    %2235 = vmatpush1.xpose.msra.mxu0 0.0
    %2236 = vmatprep.subr.mxu0 0.0
    %2237 = vmatpush1.xpose.msra.mxu0 0.0
    %2238 = vmatprep.subr.mxu0 0.0
    %2239 = vmatpush1.xpose.msra.mxu0 0.0
    %2240 = vmatprep.subr.mxu0 0.0
    %2241 = vmatpush1.xpose.msra.mxu0 0.0
    %2242 = vmatprep.subr.mxu0 0.0
    %2243 = vmatpush1.xpose.msra.mxu0 0.0
    %2244 = vmatprep.subr.mxu0 0.0
    %2245 = vmatpush1.xpose.msra.mxu0 0.0
    %2246 = vmatprep.subr.mxu0 0.0
    %2247 = vmatpush1.xpose.msra.mxu0 0.0
    %2248 = vmatprep.subr.mxu0 0.0
    %2249 = vmatpush1.xpose.msra.mxu0 0.0
    %2250 = vmatprep.subr.mxu0 0.0
    %2251 = vmatpush1.xpose.msra.mxu0 0.0
    %2252 = vmatprep.subr.mxu0 0.0
    %2253 = vmatpush1.xpose.msra.mxu0 0.0
    %2254 = vmatprep.subr.mxu0 0.0
    %2255 = vmatpush1.xpose.msra.mxu0 0.0
    %2256 = vmatprep.subr.mxu0 0.0
    %2257 = vmatpush1.xpose.msra.mxu0 0.0
    %2258 = vmatprep.subr.mxu0 0.0
    %2259 = vmatpush1.xpose.msra.mxu0 0.0
    %2260 = vmatprep.subr.mxu0 0.0
    %2261 = vmatpush1.xpose.msra.mxu0 0.0
    %2262 = vmatprep.subr.mxu0 0.0
    %2263 = vmatpush1.xpose.msra.mxu0 0.0
    %2264 = vmatprep.subr.mxu0 0.0
    %2265 = vmatpush1.xpose.msra.mxu0 0.0
    %2266 = vmatprep.subr.mxu0 0.0
    %2267 = vmatpush1.xpose.msra.mxu0 0.0
    %2268 = vmatprep.subr.mxu0 0.0
    %2269 = vmatpush1.xpose.msra.mxu0 0.0
    %2270 = vmatprep.subr.mxu0 0.0
    %2271 = vmatpush1.xpose.msra.mxu0 0.0
    %2272 = vmatprep.subr.mxu0 0.0
    %2273 = vmatpush1.xpose.msra.mxu0 0.0
    %2274 = vmatprep.subr.mxu0 0.0
    %2275 = vmatpush1.xpose.msra.mxu0 0.0
    %2276 = vmatprep.subr.mxu0 0.0
    %2277 = vmatpush1.xpose.msra.mxu0 0.0
    %2278 = vmatprep.subr.mxu0 0.0
    %2279 = vmatpush1.xpose.msra.mxu0 0.0
    %2280 = vmatprep.subr.mxu0 0.0
    %2281 = vmatpush1.xpose.msra.mxu0 0.0
    %2282 = vmatprep.subr.mxu0 0.0
    %2283 = vmatpush1.xpose.msra.mxu0 0.0
    %2284 = vmatprep.subr.mxu0 0.0
    %2285 = vmatpush1.xpose.msra.mxu0 0.0
    %2286 = vmatprep.mubr.f32.mxu0 0.0
    %2287 = vmatmul.mubr.f32.gmra.mrb[0].mxu0 %v183
    %v2288 = vpop.f32.mrb[0].mxu0
    %v2289 = vadd.f32 0.0, %v2288
    %v2290 = vpop.f32.mrb[0].mxu0
    %2291 = vmatprep.mubr.f32.mxu0 0.0
    %2292 = vmatmul.mubr.f32.gmra.mrb[0].mxu0 %v186
    %v2293 = vpop.f32.mrb[0].mxu0
    %v2294 = vadd.f32 0.0, %v2293
    %v2295 = vpop.f32.mrb[0].mxu0
    %2296 = vdwg.mxu0
    %v2298 = vsel %vm94, %v2123, 0
    %v2301 = vsel %vm94, %v2124, 0
    %2303 = vmatprep.subr.mxu0 0.0
    %2304 = vmatpush1.xpose.msra.mxu0 %v2298
    %2305 = vmatprep.subr.mxu0 0.0
    %2306 = vmatpush1.xpose.msra.mxu0 %v2301
    %2307 = vmatprep.subr.mxu0 0.0
    %2308 = vmatpush1.xpose.msra.mxu0 0.0
    %2309 = vmatprep.subr.mxu0 0.0
    %2310 = vmatpush1.xpose.msra.mxu0 0.0
    %2311 = vmatprep.subr.mxu0 0.0
    %2312 = vmatpush1.xpose.msra.mxu0 0.0
    %2313 = vmatprep.subr.mxu0 0.0
    %2314 = vmatpush1.xpose.msra.mxu0 0.0
    %2315 = vmatprep.subr.mxu0 0.0
    %2316 = vmatpush1.xpose.msra.mxu0 0.0
    %2317 = vmatprep.subr.mxu0 0.0
    %2318 = vmatpush1.xpose.msra.mxu0 0.0
    %2319 = vmatprep.subr.mxu0 0.0
    %2320 = vmatpush1.xpose.msra.mxu0 0.0
    %2321 = vmatprep.subr.mxu0 0.0
    %2322 = vmatpush1.xpose.msra.mxu0 0.0
    %2323 = vmatprep.subr.mxu0 0.0
    %2324 = vmatpush1.xpose.msra.mxu0 0.0
    %2325 = vmatprep.subr.mxu0 0.0
    %2326 = vmatpush1.xpose.msra.mxu0 0.0
    %2327 = vmatprep.subr.mxu0 0.0
    %2328 = vmatpush1.xpose.msra.mxu0 0.0
    %2329 = vmatprep.subr.mxu0 0.0
    %2330 = vmatpush1.xpose.msra.mxu0 0.0
    %2331 = vmatprep.subr.mxu0 0.0
    %2332 = vmatpush1.xpose.msra.mxu0 0.0
    %2333 = vmatprep.subr.mxu0 0.0
    %2334 = vmatpush1.xpose.msra.mxu0 0.0
    %2335 = vmatprep.subr.mxu0 0.0
    %2336 = vmatpush1.xpose.msra.mxu0 0.0
    %2337 = vmatprep.subr.mxu0 0.0
    %2338 = vmatpush1.xpose.msra.mxu0 0.0
    %2339 = vmatprep.subr.mxu0 0.0
    %2340 = vmatpush1.xpose.msra.mxu0 0.0
    %2341 = vmatprep.subr.mxu0 0.0
    %2342 = vmatpush1.xpose.msra.mxu0 0.0
    %2343 = vmatprep.subr.mxu0 0.0
    %2344 = vmatpush1.xpose.msra.mxu0 0.0
    %2345 = vmatprep.subr.mxu0 0.0
    %2346 = vmatpush1.xpose.msra.mxu0 0.0
    %2347 = vmatprep.subr.mxu0 0.0
    %2348 = vmatpush1.xpose.msra.mxu0 0.0
    %2349 = vmatprep.subr.mxu0 0.0
    %2350 = vmatpush1.xpose.msra.mxu0 0.0
    %2351 = vmatprep.subr.mxu0 0.0
    %2352 = vmatpush1.xpose.msra.mxu0 0.0
    %2353 = vmatprep.subr.mxu0 0.0
    %2354 = vmatpush1.xpose.msra.mxu0 0.0
    %2355 = vmatprep.subr.mxu0 0.0
    %2356 = vmatpush1.xpose.msra.mxu0 0.0
    %2357 = vmatprep.subr.mxu0 0.0
    %2358 = vmatpush1.xpose.msra.mxu0 0.0
    %2359 = vmatprep.subr.mxu0 0.0
    %2360 = vmatpush1.xpose.msra.mxu0 0.0
    %2361 = vmatprep.subr.mxu0 0.0
    %2362 = vmatpush1.xpose.msra.mxu0 0.0
    %2363 = vmatprep.subr.mxu0 0.0
    %2364 = vmatpush1.xpose.msra.mxu0 0.0
    %2365 = vmatprep.subr.mxu0 0.0
    %2366 = vmatpush1.xpose.msra.mxu0 0.0
    %2367 = vmatprep.mubr.f32.mxu0 0.0
    %2368 = vmatmul.mubr.f32.gmra.mrb[0].mxu0 %v270
    %v2369 = vpop.f32.mrb[0].mxu0
    %v2370 = vadd.f32 0.0, %v2369
    %v2371 = vpop.f32.mrb[0].mxu0
    %2372 = vmatprep.mubr.f32.mxu0 0.0
    %2373 = vmatmul.mubr.f32.gmra.mrb[0].mxu0 %v273
    %v2374 = vpop.f32.mrb[0].mxu0
    %v2375 = vadd.f32 0.0, %v2374
    %v2376 = vpop.f32.mrb[0].mxu0
    %2377 = vdwg.mxu0
    %v2379 = vsel %vm94, %v2125, 0
    %v2382 = vsel %vm94, %v2126, 0
    %2384 = vmatprep.subr.mxu0 0.0
    %2385 = vmatpush1.xpose.msra.mxu0 %v2379
    %2386 = vmatprep.subr.mxu0 0.0
    %2387 = vmatpush1.xpose.msra.mxu0 %v2382
    %2388 = vmatprep.subr.mxu0 0.0
    %2389 = vmatpush1.xpose.msra.mxu0 0.0
    %2390 = vmatprep.subr.mxu0 0.0
    %2391 = vmatpush1.xpose.msra.mxu0 0.0
    %2392 = vmatprep.subr.mxu0 0.0
    %2393 = vmatpush1.xpose.msra.mxu0 0.0
    %2394 = vmatprep.subr.mxu0 0.0
    %2395 = vmatpush1.xpose.msra.mxu0 0.0
    %2396 = vmatprep.subr.mxu0 0.0
    %2397 = vmatpush1.xpose.msra.mxu0 0.0
    %2398 = vmatprep.subr.mxu0 0.0
    %2399 = vmatpush1.xpose.msra.mxu0 0.0
    %2400 = vmatprep.subr.mxu0 0.0
    %2401 = vmatpush1.xpose.msra.mxu0 0.0
    %2402 = vmatprep.subr.mxu0 0.0
    %2403 = vmatpush1.xpose.msra.mxu0 0.0
    %2404 = vmatprep.subr.mxu0 0.0
    %2405 = vmatpush1.xpose.msra.mxu0 0.0
    %2406 = vmatprep.subr.mxu0 0.0
    %2407 = vmatpush1.xpose.msra.mxu0 0.0
    %2408 = vmatprep.subr.mxu0 0.0
    %2409 = vmatpush1.xpose.msra.mxu0 0.0
    %2410 = vmatprep.subr.mxu0 0.0
    %2411 = vmatpush1.xpose.msra.mxu0 0.0
    %2412 = vmatprep.subr.mxu0 0.0
    %2413 = vmatpush1.xpose.msra.mxu0 0.0
    %2414 = vmatprep.subr.mxu0 0.0
    %2415 = vmatpush1.xpose.msra.mxu0 0.0
    %2416 = vmatprep.subr.mxu0 0.0
    %2417 = vmatpush1.xpose.msra.mxu0 0.0
    %2418 = vmatprep.subr.mxu0 0.0
    %2419 = vmatpush1.xpose.msra.mxu0 0.0
    %2420 = vmatprep.subr.mxu0 0.0
    %2421 = vmatpush1.xpose.msra.mxu0 0.0
    %2422 = vmatprep.subr.mxu0 0.0
    %2423 = vmatpush1.xpose.msra.mxu0 0.0
    %2424 = vmatprep.subr.mxu0 0.0
    %2425 = vmatpush1.xpose.msra.mxu0 0.0
    %2426 = vmatprep.subr.mxu0 0.0
    %2427 = vmatpush1.xpose.msra.mxu0 0.0
    %2428 = vmatprep.subr.mxu0 0.0
    %2429 = vmatpush1.xpose.msra.mxu0 0.0
    %2430 = vmatprep.subr.mxu0 0.0
    %2431 = vmatpush1.xpose.msra.mxu0 0.0
    %2432 = vmatprep.subr.mxu0 0.0
    %2433 = vmatpush1.xpose.msra.mxu0 0.0
    %2434 = vmatprep.subr.mxu0 0.0
    %2435 = vmatpush1.xpose.msra.mxu0 0.0
    %2436 = vmatprep.subr.mxu0 0.0
    %2437 = vmatpush1.xpose.msra.mxu0 0.0
    %2438 = vmatprep.subr.mxu0 0.0
    %2439 = vmatpush1.xpose.msra.mxu0 0.0
    %2440 = vmatprep.subr.mxu0 0.0
    %2441 = vmatpush1.xpose.msra.mxu0 0.0
    %2442 = vmatprep.subr.mxu0 0.0
    %2443 = vmatpush1.xpose.msra.mxu0 0.0
    %2444 = vmatprep.subr.mxu0 0.0
    %2445 = vmatpush1.xpose.msra.mxu0 0.0
    %2446 = vmatprep.subr.mxu0 0.0
    %2447 = vmatpush1.xpose.msra.mxu0 0.0
    %2448 = vmatprep.mubr.f32.mxu0 0.0
    %2449 = vmatmul.mubr.f32.gmra.mrb[0].mxu0 %v357
    %v2450 = vpop.f32.mrb[0].mxu0
    %v2451 = vadd.f32 0.0, %v2450
    %v2452 = vpop.f32.mrb[0].mxu0
    %2453 = vmatprep.mubr.f32.mxu0 0.0
    %2454 = vmatmul.mubr.f32.gmra.mrb[0].mxu0 %v360
    %v2455 = vpop.f32.mrb[0].mxu0
    %v2456 = vadd.f32 0.0, %v2455
    %v2457 = vpop.f32.mrb[0].mxu0
    %2458 = vdwg.mxu0
    %v2460 = vsel %vm94, %v2127, 0
    %v2463 = vsel %vm94, %v2128, 0
    %2465 = vmatprep.subr.mxu0 0.0
    %2466 = vmatpush1.xpose.msra.mxu0 %v2460
    %2467 = vmatprep.subr.mxu0 0.0
    %2468 = vmatpush1.xpose.msra.mxu0 %v2463
    %2469 = vmatprep.subr.mxu0 0.0
    %2470 = vmatpush1.xpose.msra.mxu0 0.0
    %2471 = vmatprep.subr.mxu0 0.0
    %2472 = vmatpush1.xpose.msra.mxu0 0.0
    %2473 = vmatprep.subr.mxu0 0.0
    %2474 = vmatpush1.xpose.msra.mxu0 0.0
    %2475 = vmatprep.subr.mxu0 0.0
    %2476 = vmatpush1.xpose.msra.mxu0 0.0
    %2477 = vmatprep.subr.mxu0 0.0
    %2478 = vmatpush1.xpose.msra.mxu0 0.0
    %2479 = vmatprep.subr.mxu0 0.0
    %2480 = vmatpush1.xpose.msra.mxu0 0.0
    %2481 = vmatprep.subr.mxu0 0.0
    %2482 = vmatpush1.xpose.msra.mxu0 0.0
    %2483 = vmatprep.subr.mxu0 0.0
    %2484 = vmatpush1.xpose.msra.mxu0 0.0
    %2485 = vmatprep.subr.mxu0 0.0
    %2486 = vmatpush1.xpose.msra.mxu0 0.0
    %2487 = vmatprep.subr.mxu0 0.0
    %2488 = vmatpush1.xpose.msra.mxu0 0.0
    %2489 = vmatprep.subr.mxu0 0.0
    %2490 = vmatpush1.xpose.msra.mxu0 0.0
    %2491 = vmatprep.subr.mxu0 0.0
    %2492 = vmatpush1.xpose.msra.mxu0 0.0
    %2493 = vmatprep.subr.mxu0 0.0
    %2494 = vmatpush1.xpose.msra.mxu0 0.0
    %2495 = vmatprep.subr.mxu0 0.0
    %2496 = vmatpush1.xpose.msra.mxu0 0.0
    %2497 = vmatprep.subr.mxu0 0.0
    %2498 = vmatpush1.xpose.msra.mxu0 0.0
    %2499 = vmatprep.subr.mxu0 0.0
    %2500 = vmatpush1.xpose.msra.mxu0 0.0
    %2501 = vmatprep.subr.mxu0 0.0
    %2502 = vmatpush1.xpose.msra.mxu0 0.0
    %2503 = vmatprep.subr.mxu0 0.0
    %2504 = vmatpush1.xpose.msra.mxu0 0.0
    %2505 = vmatprep.subr.mxu0 0.0
    %2506 = vmatpush1.xpose.msra.mxu0 0.0
    %2507 = vmatprep.subr.mxu0 0.0
    %2508 = vmatpush1.xpose.msra.mxu0 0.0
    %2509 = vmatprep.subr.mxu0 0.0
    %2510 = vmatpush1.xpose.msra.mxu0 0.0
    %2511 = vmatprep.subr.mxu0 0.0
    %2512 = vmatpush1.xpose.msra.mxu0 0.0
    %2513 = vmatprep.subr.mxu0 0.0
    %2514 = vmatpush1.xpose.msra.mxu0 0.0
    %2515 = vmatprep.subr.mxu0 0.0
    %2516 = vmatpush1.xpose.msra.mxu0 0.0
    %2517 = vmatprep.subr.mxu0 0.0
    %2518 = vmatpush1.xpose.msra.mxu0 0.0
    %2519 = vmatprep.subr.mxu0 0.0
    %2520 = vmatpush1.xpose.msra.mxu0 0.0
    %2521 = vmatprep.subr.mxu0 0.0
    %2522 = vmatpush1.xpose.msra.mxu0 0.0
    %2523 = vmatprep.subr.mxu0 0.0
    %2524 = vmatpush1.xpose.msra.mxu0 0.0
    %2525 = vmatprep.subr.mxu0 0.0
    %2526 = vmatpush1.xpose.msra.mxu0 0.0
    %2527 = vmatprep.subr.mxu0 0.0
    %2528 = vmatpush1.xpose.msra.mxu0 0.0
    %2529 = vmatprep.mubr.f32.mxu0 0.0
    %2530 = vmatmul.mubr.f32.gmra.mrb[0].mxu0 %v444
    %v2531 = vpop.f32.mrb[0].mxu0
    %v2532 = vadd.f32 0.0, %v2531
    %v2533 = vpop.f32.mrb[0].mxu0
    %2534 = vmatprep.mubr.f32.mxu0 0.0
    %2535 = vmatmul.mubr.f32.gmra.mrb[0].mxu0 %v447
    %v2536 = vpop.f32.mrb[0].mxu0
    %v2537 = vadd.f32 0.0, %v2536
    %v2538 = vpop.f32.mrb[0].mxu0
    %2539 = vdwg.mxu0
    %v2541 = vsel %vm94, %v2129, 0
    %v2544 = vsel %vm94, %v2130, 0
    %2546 = vmatprep.subr.mxu0 0.0
    %2547 = vmatpush1.xpose.msra.mxu0 %v2541
    %2548 = vmatprep.subr.mxu0 0.0
    %2549 = vmatpush1.xpose.msra.mxu0 %v2544
    %2550 = vmatprep.subr.mxu0 0.0
    %2551 = vmatpush1.xpose.msra.mxu0 0.0
    %2552 = vmatprep.subr.mxu0 0.0
    %2553 = vmatpush1.xpose.msra.mxu0 0.0
    %2554 = vmatprep.subr.mxu0 0.0
    %2555 = vmatpush1.xpose.msra.mxu0 0.0
    %2556 = vmatprep.subr.mxu0 0.0
    %2557 = vmatpush1.xpose.msra.mxu0 0.0
    %2558 = vmatprep.subr.mxu0 0.0
    %2559 = vmatpush1.xpose.msra.mxu0 0.0
    %2560 = vmatprep.subr.mxu0 0.0
    %2561 = vmatpush1.xpose.msra.mxu0 0.0
    %2562 = vmatprep.subr.mxu0 0.0
    %2563 = vmatpush1.xpose.msra.mxu0 0.0
    %2564 = vmatprep.subr.mxu0 0.0
    %2565 = vmatpush1.xpose.msra.mxu0 0.0
    %2566 = vmatprep.subr.mxu0 0.0
    %2567 = vmatpush1.xpose.msra.mxu0 0.0
    %2568 = vmatprep.subr.mxu0 0.0
    %2569 = vmatpush1.xpose.msra.mxu0 0.0
    %2570 = vmatprep.subr.mxu0 0.0
    %2571 = vmatpush1.xpose.msra.mxu0 0.0
    %2572 = vmatprep.subr.mxu0 0.0
    %2573 = vmatpush1.xpose.msra.mxu0 0.0
    %2574 = vmatprep.subr.mxu0 0.0
    %2575 = vmatpush1.xpose.msra.mxu0 0.0
    %2576 = vmatprep.subr.mxu0 0.0
    %2577 = vmatpush1.xpose.msra.mxu0 0.0
    %2578 = vmatprep.subr.mxu0 0.0
    %2579 = vmatpush1.xpose.msra.mxu0 0.0
    %2580 = vmatprep.subr.mxu0 0.0
    %2581 = vmatpush1.xpose.msra.mxu0 0.0
    %2582 = vmatprep.subr.mxu0 0.0
    %2583 = vmatpush1.xpose.msra.mxu0 0.0
    %2584 = vmatprep.subr.mxu0 0.0
    %2585 = vmatpush1.xpose.msra.mxu0 0.0
    %2586 = vmatprep.subr.mxu0 0.0
    %2587 = vmatpush1.xpose.msra.mxu0 0.0
    %2588 = vmatprep.subr.mxu0 0.0
    %2589 = vmatpush1.xpose.msra.mxu0 0.0
    %2590 = vmatprep.subr.mxu0 0.0
    %2591 = vmatpush1.xpose.msra.mxu0 0.0
    %2592 = vmatprep.subr.mxu0 0.0
    %2593 = vmatpush1.xpose.msra.mxu0 0.0
    %2594 = vmatprep.subr.mxu0 0.0
    %2595 = vmatpush1.xpose.msra.mxu0 0.0
    %2596 = vmatprep.subr.mxu0 0.0
    %2597 = vmatpush1.xpose.msra.mxu0 0.0
    %2598 = vmatprep.subr.mxu0 0.0
    %2599 = vmatpush1.xpose.msra.mxu0 0.0
    %2600 = vmatprep.subr.mxu0 0.0
    %2601 = vmatpush1.xpose.msra.mxu0 0.0
    %2602 = vmatprep.subr.mxu0 0.0
    %2603 = vmatpush1.xpose.msra.mxu0 0.0
    %2604 = vmatprep.subr.mxu0 0.0
    %2605 = vmatpush1.xpose.msra.mxu0 0.0
    %2606 = vmatprep.subr.mxu0 0.0
    %2607 = vmatpush1.xpose.msra.mxu0 0.0
    %2608 = vmatprep.subr.mxu0 0.0
    %2609 = vmatpush1.xpose.msra.mxu0 0.0
    %2610 = vmatprep.mubr.f32.mxu0 0.0
    %2611 = vmatmul.mubr.f32.gmra.mrb[0].mxu0 %v531
    %v2612 = vpop.f32.mrb[0].mxu0
    %v2613 = vadd.f32 0.0, %v2612
    %v2614 = vpop.f32.mrb[0].mxu0
    %2615 = vmatprep.mubr.f32.mxu0 0.0
    %2616 = vmatmul.mubr.f32.gmra.mrb[0].mxu0 %v534
    %v2617 = vpop.f32.mrb[0].mxu0
    %v2618 = vadd.f32 0.0, %v2617
    %v2619 = vpop.f32.mrb[0].mxu0
    %2620 = vdwg.mxu0
    %v2622 = vsel %vm94, %v2131, 0
    %v2625 = vsel %vm94, %v2132, 0
    %2627 = vmatprep.subr.mxu0 0.0
    %2628 = vmatpush1.xpose.msra.mxu0 %v2622
    %2629 = vmatprep.subr.mxu0 0.0
    %2630 = vmatpush1.xpose.msra.mxu0 %v2625
    %2631 = vmatprep.subr.mxu0 0.0
    %2632 = vmatpush1.xpose.msra.mxu0 0.0
    %2633 = vmatprep.subr.mxu0 0.0
    %2634 = vmatpush1.xpose.msra.mxu0 0.0
    %2635 = vmatprep.subr.mxu0 0.0
    %2636 = vmatpush1.xpose.msra.mxu0 0.0
    %2637 = vmatprep.subr.mxu0 0.0
    %2638 = vmatpush1.xpose.msra.mxu0 0.0
    %2639 = vmatprep.subr.mxu0 0.0
    %2640 = vmatpush1.xpose.msra.mxu0 0.0
    %2641 = vmatprep.subr.mxu0 0.0
    %2642 = vmatpush1.xpose.msra.mxu0 0.0
    %2643 = vmatprep.subr.mxu0 0.0
    %2644 = vmatpush1.xpose.msra.mxu0 0.0
    %2645 = vmatprep.subr.mxu0 0.0
    %2646 = vmatpush1.xpose.msra.mxu0 0.0
    %2647 = vmatprep.subr.mxu0 0.0
    %2648 = vmatpush1.xpose.msra.mxu0 0.0
    %2649 = vmatprep.subr.mxu0 0.0
    %2650 = vmatpush1.xpose.msra.mxu0 0.0
    %2651 = vmatprep.subr.mxu0 0.0
    %2652 = vmatpush1.xpose.msra.mxu0 0.0
    %2653 = vmatprep.subr.mxu0 0.0
    %2654 = vmatpush1.xpose.msra.mxu0 0.0
    %2655 = vmatprep.subr.mxu0 0.0
    %2656 = vmatpush1.xpose.msra.mxu0 0.0
    %2657 = vmatprep.subr.mxu0 0.0
    %2658 = vmatpush1.xpose.msra.mxu0 0.0
    %2659 = vmatprep.subr.mxu0 0.0
    %2660 = vmatpush1.xpose.msra.mxu0 0.0
    %2661 = vmatprep.subr.mxu0 0.0
    %2662 = vmatpush1.xpose.msra.mxu0 0.0
    %2663 = vmatprep.subr.mxu0 0.0
    %2664 = vmatpush1.xpose.msra.mxu0 0.0
    %2665 = vmatprep.subr.mxu0 0.0
    %2666 = vmatpush1.xpose.msra.mxu0 0.0
    %2667 = vmatprep.subr.mxu0 0.0
    %2668 = vmatpush1.xpose.msra.mxu0 0.0
    %2669 = vmatprep.subr.mxu0 0.0
    %2670 = vmatpush1.xpose.msra.mxu0 0.0
    %2671 = vmatprep.subr.mxu0 0.0
    %2672 = vmatpush1.xpose.msra.mxu0 0.0
    %2673 = vmatprep.subr.mxu0 0.0
    %2674 = vmatpush1.xpose.msra.mxu0 0.0
    %2675 = vmatprep.subr.mxu0 0.0
    %2676 = vmatpush1.xpose.msra.mxu0 0.0
    %2677 = vmatprep.subr.mxu0 0.0
    %2678 = vmatpush1.xpose.msra.mxu0 0.0
    %2679 = vmatprep.subr.mxu0 0.0
    %2680 = vmatpush1.xpose.msra.mxu0 0.0
    %2681 = vmatprep.subr.mxu0 0.0
    %2682 = vmatpush1.xpose.msra.mxu0 0.0
    %2683 = vmatprep.subr.mxu0 0.0
    %2684 = vmatpush1.xpose.msra.mxu0 0.0
    %2685 = vmatprep.subr.mxu0 0.0
    %2686 = vmatpush1.xpose.msra.mxu0 0.0
    %2687 = vmatprep.subr.mxu0 0.0
    %2688 = vmatpush1.xpose.msra.mxu0 0.0
    %2689 = vmatprep.subr.mxu0 0.0
    %2690 = vmatpush1.xpose.msra.mxu0 0.0
    %2691 = vmatprep.mubr.f32.mxu0 0.0
    %2692 = vmatmul.mubr.f32.gmra.mrb[0].mxu0 %v618
    %v2693 = vpop.f32.mrb[0].mxu0
    %v2694 = vadd.f32 0.0, %v2693
    %v2695 = vpop.f32.mrb[0].mxu0
    %2696 = vmatprep.mubr.f32.mxu0 0.0
    %2697 = vmatmul.mubr.f32.gmra.mrb[0].mxu0 %v621
    %v2698 = vpop.f32.mrb[0].mxu0
    %v2699 = vadd.f32 0.0, %v2698
    %v2700 = vpop.f32.mrb[0].mxu0
    %2701 = vdwg.mxu0
    %v2703 = vsel %vm94, %v2133, 0
    %v2706 = vsel %vm94, %v2134, 0
    %2708 = vmatprep.subr.mxu0 0.0
    %2709 = vmatpush1.xpose.msra.mxu0 %v2703
    %2710 = vmatprep.subr.mxu0 0.0
    %2711 = vmatpush1.xpose.msra.mxu0 %v2706
    %2712 = vmatprep.subr.mxu0 0.0
    %2713 = vmatpush1.xpose.msra.mxu0 0.0
    %2714 = vmatprep.subr.mxu0 0.0
    %2715 = vmatpush1.xpose.msra.mxu0 0.0
    %2716 = vmatprep.subr.mxu0 0.0
    %2717 = vmatpush1.xpose.msra.mxu0 0.0
    %2718 = vmatprep.subr.mxu0 0.0
    %2719 = vmatpush1.xpose.msra.mxu0 0.0
    %2720 = vmatprep.subr.mxu0 0.0
    %2721 = vmatpush1.xpose.msra.mxu0 0.0
    %2722 = vmatprep.subr.mxu0 0.0
    %2723 = vmatpush1.xpose.msra.mxu0 0.0
    %2724 = vmatprep.subr.mxu0 0.0
    %2725 = vmatpush1.xpose.msra.mxu0 0.0
    %2726 = vmatprep.subr.mxu0 0.0
    %2727 = vmatpush1.xpose.msra.mxu0 0.0
    %2728 = vmatprep.subr.mxu0 0.0
    %2729 = vmatpush1.xpose.msra.mxu0 0.0
    %2730 = vmatprep.subr.mxu0 0.0
    %2731 = vmatpush1.xpose.msra.mxu0 0.0
    %2732 = vmatprep.subr.mxu0 0.0
    %2733 = vmatpush1.xpose.msra.mxu0 0.0
    %2734 = vmatprep.subr.mxu0 0.0
    %2735 = vmatpush1.xpose.msra.mxu0 0.0
    %2736 = vmatprep.subr.mxu0 0.0
    %2737 = vmatpush1.xpose.msra.mxu0 0.0
    %2738 = vmatprep.subr.mxu0 0.0
    %2739 = vmatpush1.xpose.msra.mxu0 0.0
    %2740 = vmatprep.subr.mxu0 0.0
    %2741 = vmatpush1.xpose.msra.mxu0 0.0
    %2742 = vmatprep.subr.mxu0 0.0
    %2743 = vmatpush1.xpose.msra.mxu0 0.0
    %2744 = vmatprep.subr.mxu0 0.0
    %2745 = vmatpush1.xpose.msra.mxu0 0.0
    %2746 = vmatprep.subr.mxu0 0.0
    %2747 = vmatpush1.xpose.msra.mxu0 0.0
    %2748 = vmatprep.subr.mxu0 0.0
    %2749 = vmatpush1.xpose.msra.mxu0 0.0
    %2750 = vmatprep.subr.mxu0 0.0
    %2751 = vmatpush1.xpose.msra.mxu0 0.0
    %2752 = vmatprep.subr.mxu0 0.0
    %2753 = vmatpush1.xpose.msra.mxu0 0.0
    %2754 = vmatprep.subr.mxu0 0.0
    %2755 = vmatpush1.xpose.msra.mxu0 0.0
    %2756 = vmatprep.subr.mxu0 0.0
    %2757 = vmatpush1.xpose.msra.mxu0 0.0
    %2758 = vmatprep.subr.mxu0 0.0
    %2759 = vmatpush1.xpose.msra.mxu0 0.0
    %2760 = vmatprep.subr.mxu0 0.0
    %2761 = vmatpush1.xpose.msra.mxu0 0.0
    %2762 = vmatprep.subr.mxu0 0.0
    %2763 = vmatpush1.xpose.msra.mxu0 0.0
    %2764 = vmatprep.subr.mxu0 0.0
    %2765 = vmatpush1.xpose.msra.mxu0 0.0
    %2766 = vmatprep.subr.mxu0 0.0
    %2767 = vmatpush1.xpose.msra.mxu0 0.0
    %2768 = vmatprep.subr.mxu0 0.0
    %2769 = vmatpush1.xpose.msra.mxu0 0.0
    %2770 = vmatprep.subr.mxu0 0.0
    %2771 = vmatpush1.xpose.msra.mxu0 0.0
    %2772 = vmatprep.mubr.f32.mxu0 0.0
    %2773 = vmatmul.mubr.f32.gmra.mrb[0].mxu0 %v705
    %v2774 = vpop.f32.mrb[0].mxu0
    %v2775 = vadd.f32 0.0, %v2774
    %v2776 = vpop.f32.mrb[0].mxu0
    %2777 = vmatprep.mubr.f32.mxu0 0.0
    %2778 = vmatmul.mubr.f32.gmra.mrb[0].mxu0 %v708
    %v2779 = vpop.f32.mrb[0].mxu0
    %v2780 = vadd.f32 0.0, %v2779
    %v2781 = vpop.f32.mrb[0].mxu0
    %2782 = vdwg.mxu0
    %v2783 = vmul.f32 %v30, %v30
    %v2784 = vmul.f32 %v36, %v36
    %v2785 = vmul.f32 %v42, %v42
    %v2786 = vmul.f32 %v48, %v48
    %v2787 = vmul.f32 %v54, %v54
    %v2788 = vmul.f32 %v60, %v60
    %v2789 = vmul.f32 %v66, %v66
    %v2790 = vmul.f32 %v72, %v72
    %v2791 = vmul.f32 %v31, %v31
    %v2792 = vmul.f32 %v37, %v37
    %v2793 = vmul.f32 %v43, %v43
    %v2794 = vmul.f32 %v49, %v49
    %v2795 = vmul.f32 %v55, %v55
    %v2796 = vmul.f32 %v61, %v61
    %v2797 = vmul.f32 %v67, %v67
    %v2798 = vmul.f32 %v73, %v73
    %v2799 = vadd.f32 %v2783, %v2791
    %v2800 = vadd.f32 %v2784, %v2792
    %v2801 = vadd.f32 %v2785, %v2793
    %v2802 = vadd.f32 %v2786, %v2794
    %v2803 = vadd.f32 %v2787, %v2795
    %v2804 = vadd.f32 %v2788, %v2796
    %v2805 = vadd.f32 %v2789, %v2797
    %v2806 = vadd.f32 %v2790, %v2798
    %v2807 = vadd.f32 %v2799, 0.1
    %v2808 = vadd.f32 %v2800, 0.1
    %v2809 = vadd.f32 %v2801, 0.1
    %v2810 = vadd.f32 %v2802, 0.1
    %v2811 = vadd.f32 %v2803, 0.1
    %v2812 = vadd.f32 %v2804, 0.1
    %v2813 = vadd.f32 %v2805, 0.1
    %v2814 = vadd.f32 %v2806, 0.1
    %v2815 = vrcp.pop %v2807
    %v2816 = vrcp.pop %v2808
    %v2817 = vrcp.pop %v2809
    %v2818 = vrcp.pop %v2810
    %v2819 = vrcp.pop %v2811
    %v2820 = vrcp.pop %v2812
    %v2821 = vrcp.pop %v2813
    %v2822 = vrcp.pop %v2814
    %v2823 = vmul.f32 %v34, %v30
    %v2824 = vmul.f32 %v40, %v36
    %v2825 = vmul.f32 %v46, %v42
    %v2826 = vmul.f32 %v52, %v48
    %v2827 = vmul.f32 %v58, %v54
    %v2828 = vmul.f32 %v64, %v60
    %v2829 = vmul.f32 %v70, %v66
    %v2830 = vmul.f32 %v76, %v72
    %v2831 = vmul.f32 %v35, %v31
    %v2832 = vmul.f32 %v41, %v37
    %v2833 = vmul.f32 %v47, %v43
    %v2834 = vmul.f32 %v53, %v49
    %v2835 = vmul.f32 %v59, %v55
    %v2836 = vmul.f32 %v65, %v61
    %v2837 = vmul.f32 %v71, %v67
    %v2838 = vmul.f32 %v77, %v73
    %v2839 = vadd.f32 %v2823, %v2831
    %v2840 = vadd.f32 %v2824, %v2832
    %v2841 = vadd.f32 %v2825, %v2833
    %v2842 = vadd.f32 %v2826, %v2834
    %v2843 = vadd.f32 %v2827, %v2835
    %v2844 = vadd.f32 %v2828, %v2836
    %v2845 = vadd.f32 %v2829, %v2837
    %v2846 = vadd.f32 %v2830, %v2838
    %v2847 = vmul.f32 %v2839, %v2815
    %v2848 = vmul.f32 %v2840, %v2816
    %v2849 = vmul.f32 %v2841, %v2817
    %v2850 = vmul.f32 %v2842, %v2818
    %v2851 = vmul.f32 %v2843, %v2819
    %v2852 = vmul.f32 %v2844, %v2820
    %v2853 = vmul.f32 %v2845, %v2821
    %v2854 = vmul.f32 %v2846, %v2822
    %v2855 = vsub.f32 %v2847, %v174
    %v2856 = vsub.f32 %v2848, %v261
    %v2857 = vsub.f32 %v2849, %v348
    %v2858 = vsub.f32 %v2850, %v435
    %v2859 = vsub.f32 %v2851, %v522
    %v2860 = vsub.f32 %v2852, %v609
    %v2861 = vsub.f32 %v2853, %v696
    %v2862 = vsub.f32 %v2854, %v783
    %v2863 = vsub.f32 %v2855, %v885
    %v2864 = vsub.f32 %v2856, %v966
    %v2865 = vsub.f32 %v2857, %v1047
    %v2866 = vsub.f32 %v2858, %v1128
    %v2867 = vsub.f32 %v2859, %v1209
    %v2868 = vsub.f32 %v2860, %v1290
    %v2869 = vsub.f32 %v2861, %v1371
    %v2870 = vsub.f32 %v2862, %v1452
    %v2871 = vmul.f32 %v35, %v30
    %v2872 = vmul.f32 %v41, %v36
    %v2873 = vmul.f32 %v47, %v42
    %v2874 = vmul.f32 %v53, %v48
    %v2875 = vmul.f32 %v59, %v54
    %v2876 = vmul.f32 %v65, %v60
    %v2877 = vmul.f32 %v71, %v66
    %v2878 = vmul.f32 %v77, %v72
    %v2879 = vmul.f32 %v34, %v31
    %v2880 = vmul.f32 %v40, %v37
    %v2881 = vmul.f32 %v46, %v43
    %v2882 = vmul.f32 %v52, %v49
    %v2883 = vmul.f32 %v58, %v55
    %v2884 = vmul.f32 %v64, %v61
    %v2885 = vmul.f32 %v70, %v67
    %v2886 = vmul.f32 %v76, %v73
    %v2887 = vsub.f32 %v2871, %v2879
    %v2888 = vsub.f32 %v2872, %v2880
    %v2889 = vsub.f32 %v2873, %v2881
    %v2890 = vsub.f32 %v2874, %v2882
    %v2891 = vsub.f32 %v2875, %v2883
    %v2892 = vsub.f32 %v2876, %v2884
    %v2893 = vsub.f32 %v2877, %v2885
    %v2894 = vsub.f32 %v2878, %v2886
    %v2895 = vmul.f32 %v2887, %v2815
    %v2896 = vmul.f32 %v2888, %v2816
    %v2897 = vmul.f32 %v2889, %v2817
    %v2898 = vmul.f32 %v2890, %v2818
    %v2899 = vmul.f32 %v2891, %v2819
    %v2900 = vmul.f32 %v2892, %v2820
    %v2901 = vmul.f32 %v2893, %v2821
    %v2902 = vmul.f32 %v2894, %v2822
    %v2903 = vadd.f32 %v2895, %v179
    %v2904 = vadd.f32 %v2896, %v266
    %v2905 = vadd.f32 %v2897, %v353
    %v2906 = vadd.f32 %v2898, %v440
    %v2907 = vadd.f32 %v2899, %v527
    %v2908 = vadd.f32 %v2900, %v614
    %v2909 = vadd.f32 %v2901, %v701
    %v2910 = vadd.f32 %v2902, %v788
    %v2911 = vadd.f32 %v2903, %v885
    %v2912 = vadd.f32 %v2904, %v966
    %v2913 = vadd.f32 %v2905, %v1047
    %v2914 = vadd.f32 %v2906, %v1128
    %v2915 = vadd.f32 %v2907, %v1209
    %v2916 = vadd.f32 %v2908, %v1290
    %v2917 = vadd.f32 %v2909, %v1371
    %v2918 = vadd.f32 %v2910, %v1452
    %v2919 = vmul.f32 %v32, %v32
    %v2920 = vmul.f32 %v38, %v38
    %v2921 = vmul.f32 %v44, %v44
    %v2922 = vmul.f32 %v50, %v50
    %v2923 = vmul.f32 %v56, %v56
    %v2924 = vmul.f32 %v62, %v62
    %v2925 = vmul.f32 %v68, %v68
    %v2926 = vmul.f32 %v74, %v74
    %v2927 = vmul.f32 %v33, %v33
    %v2928 = vmul.f32 %v39, %v39
    %v2929 = vmul.f32 %v45, %v45
    %v2930 = vmul.f32 %v51, %v51
    %v2931 = vmul.f32 %v57, %v57
    %v2932 = vmul.f32 %v63, %v63
    %v2933 = vmul.f32 %v69, %v69
    %v2934 = vmul.f32 %v75, %v75
    %v2935 = vadd.f32 %v2919, %v2927
    %v2936 = vadd.f32 %v2920, %v2928
    %v2937 = vadd.f32 %v2921, %v2929
    %v2938 = vadd.f32 %v2922, %v2930
    %v2939 = vadd.f32 %v2923, %v2931
    %v2940 = vadd.f32 %v2924, %v2932
    %v2941 = vadd.f32 %v2925, %v2933
    %v2942 = vadd.f32 %v2926, %v2934
    %v2943 = vrcp.pop %v2935
    %v2944 = vrcp.pop %v2936
    %v2945 = vrcp.pop %v2937
    %v2946 = vrcp.pop %v2938
    %v2947 = vrcp.pop %v2939
    %v2948 = vrcp.pop %v2940
    %v2949 = vrcp.pop %v2941
    %v2950 = vrcp.pop %v2942
    %v2951 = vmul.f32 %v2863, %v32
    %v2952 = vmul.f32 %v2864, %v38
    %v2953 = vmul.f32 %v2865, %v44
    %v2954 = vmul.f32 %v2866, %v50
    %v2955 = vmul.f32 %v2867, %v56
    %v2956 = vmul.f32 %v2868, %v62
    %v2957 = vmul.f32 %v2869, %v68
    %v2958 = vmul.f32 %v2870, %v74
    %v2959 = vmul.f32 %v2911, %v33
    %v2960 = vmul.f32 %v2912, %v39
    %v2961 = vmul.f32 %v2913, %v45
    %v2962 = vmul.f32 %v2914, %v51
    %v2963 = vmul.f32 %v2915, %v57
    %v2964 = vmul.f32 %v2916, %v63
    %v2965 = vmul.f32 %v2917, %v69
    %v2966 = vmul.f32 %v2918, %v75
    %v2967 = vadd.f32 %v2951, %v2959
    %v2968 = vadd.f32 %v2952, %v2960
    %v2969 = vadd.f32 %v2953, %v2961
    %v2970 = vadd.f32 %v2954, %v2962
    %v2971 = vadd.f32 %v2955, %v2963
    %v2972 = vadd.f32 %v2956, %v2964
    %v2973 = vadd.f32 %v2957, %v2965
    %v2974 = vadd.f32 %v2958, %v2966
    %v2975 = vmul.f32 %v2967, %v2943
    %v2976 = vmul.f32 %v2968, %v2944
    %v2977 = vmul.f32 %v2969, %v2945
    %v2978 = vmul.f32 %v2970, %v2946
    %v2979 = vmul.f32 %v2971, %v2947
    %v2980 = vmul.f32 %v2972, %v2948
    %v2981 = vmul.f32 %v2973, %v2949
    %v2982 = vmul.f32 %v2974, %v2950
    %v2983 = vmul.f32 %v2911, %v32
    %v2984 = vmul.f32 %v2912, %v38
    %v2985 = vmul.f32 %v2913, %v44
    %v2986 = vmul.f32 %v2914, %v50
    %v2987 = vmul.f32 %v2915, %v56
    %v2988 = vmul.f32 %v2916, %v62
    %v2989 = vmul.f32 %v2917, %v68
    %v2990 = vmul.f32 %v2918, %v74
    %v2991 = vmul.f32 %v2863, %v33
    %v2992 = vmul.f32 %v2864, %v39
    %v2993 = vmul.f32 %v2865, %v45
    %v2994 = vmul.f32 %v2866, %v51
    %v2995 = vmul.f32 %v2867, %v57
    %v2996 = vmul.f32 %v2868, %v63
    %v2997 = vmul.f32 %v2869, %v69
    %v2998 = vmul.f32 %v2870, %v75
    %v2999 = vsub.f32 %v2983, %v2991
    %v3000 = vsub.f32 %v2984, %v2992
    %v3001 = vsub.f32 %v2985, %v2993
    %v3002 = vsub.f32 %v2986, %v2994
    %v3003 = vsub.f32 %v2987, %v2995
    %v3004 = vsub.f32 %v2988, %v2996
    %v3005 = vsub.f32 %v2989, %v2997
    %v3006 = vsub.f32 %v2990, %v2998
    %v3007 = vmul.f32 %v2999, %v2943
    %v3008 = vmul.f32 %v3000, %v2944
    %v3009 = vmul.f32 %v3001, %v2945
    %v3010 = vmul.f32 %v3002, %v2946
    %v3011 = vmul.f32 %v3003, %v2947
    %v3012 = vmul.f32 %v3004, %v2948
    %v3013 = vmul.f32 %v3005, %v2949
    %v3014 = vmul.f32 %v3006, %v2950
    %v3015 = vsub.f32 %v174, %v885
    %v3016 = vsub.f32 %v261, %v966
    %v3017 = vsub.f32 %v348, %v1047
    %v3018 = vsub.f32 %v435, %v1128
    %v3019 = vsub.f32 %v522, %v1209
    %v3020 = vsub.f32 %v609, %v1290
    %v3021 = vsub.f32 %v696, %v1371
    %v3022 = vsub.f32 %v783, %v1452
    %v3023 = vadd.f32 %v179, %v880
    %v3024 = vadd.f32 %v266, %v961
    %v3025 = vadd.f32 %v353, %v1042
    %v3026 = vadd.f32 %v440, %v1123
    %v3027 = vadd.f32 %v527, %v1204
    %v3028 = vadd.f32 %v614, %v1285
    %v3029 = vadd.f32 %v701, %v1366
    %v3030 = vadd.f32 %v788, %v1447
    %v3031 = vmul.f32 %v2799, %v32
    %v3032 = vmul.f32 %v2800, %v38
    %v3033 = vmul.f32 %v2801, %v44
    %v3034 = vmul.f32 %v2802, %v50
    %v3035 = vmul.f32 %v2803, %v56
    %v3036 = vmul.f32 %v2804, %v62
    %v3037 = vmul.f32 %v2805, %v68
    %v3038 = vmul.f32 %v2806, %v74
    %v3039 = vsub.f32 %v34, %v3031
    %v3040 = vsub.f32 %v40, %v3032
    %v3041 = vsub.f32 %v46, %v3033
    %v3042 = vsub.f32 %v52, %v3034
    %v3043 = vsub.f32 %v58, %v3035
    %v3044 = vsub.f32 %v64, %v3036
    %v3045 = vsub.f32 %v70, %v3037
    %v3046 = vsub.f32 %v76, %v3038
    %v3047 = vmul.f32 %v2799, %v33
    %v3048 = vmul.f32 %v2800, %v39
    %v3049 = vmul.f32 %v2801, %v45
    %v3050 = vmul.f32 %v2802, %v51
    %v3051 = vmul.f32 %v2803, %v57
    %v3052 = vmul.f32 %v2804, %v63
    %v3053 = vmul.f32 %v2805, %v69
    %v3054 = vmul.f32 %v2806, %v75
    %v3055 = vadd.f32 %v35, %v3047
    %v3056 = vadd.f32 %v41, %v3048
    %v3057 = vadd.f32 %v47, %v3049
    %v3058 = vadd.f32 %v53, %v3050
    %v3059 = vadd.f32 %v59, %v3051
    %v3060 = vadd.f32 %v65, %v3052
    %v3061 = vadd.f32 %v71, %v3053
    %v3062 = vadd.f32 %v77, %v3054
    %v3063 = vmul.f32 %v3039, %v3015
    %v3064 = vmul.f32 %v3040, %v3016
    %v3065 = vmul.f32 %v3041, %v3017
    %v3066 = vmul.f32 %v3042, %v3018
    %v3067 = vmul.f32 %v3043, %v3019
    %v3068 = vmul.f32 %v3044, %v3020
    %v3069 = vmul.f32 %v3045, %v3021
    %v3070 = vmul.f32 %v3046, %v3022
    %v3071 = vmul.f32 %v3055, %v3023
    %v3072 = vmul.f32 %v3056, %v3024
    %v3073 = vmul.f32 %v3057, %v3025
    %v3074 = vmul.f32 %v3058, %v3026
    %v3075 = vmul.f32 %v3059, %v3027
    %v3076 = vmul.f32 %v3060, %v3028
    %v3077 = vmul.f32 %v3061, %v3029
    %v3078 = vmul.f32 %v3062, %v3030
    %v3079 = vadd.f32 %v3063, %v3071
    %v3080 = vadd.f32 %v3064, %v3072
    %v3081 = vadd.f32 %v3065, %v3073
    %v3082 = vadd.f32 %v3066, %v3074
    %v3083 = vadd.f32 %v3067, %v3075
    %v3084 = vadd.f32 %v3068, %v3076
    %v3085 = vadd.f32 %v3069, %v3077
    %v3086 = vadd.f32 %v3070, %v3078
    %v3087 = vmul.f32 %v3079, %v2943
    %v3088 = vmul.f32 %v3080, %v2944
    %v3089 = vmul.f32 %v3081, %v2945
    %v3090 = vmul.f32 %v3082, %v2946
    %v3091 = vmul.f32 %v3083, %v2947
    %v3092 = vmul.f32 %v3084, %v2948
    %v3093 = vmul.f32 %v3085, %v2949
    %v3094 = vmul.f32 %v3086, %v2950
    %v3095 = vmul.f32 %v3039, %v3023
    %v3096 = vmul.f32 %v3040, %v3024
    %v3097 = vmul.f32 %v3041, %v3025
    %v3098 = vmul.f32 %v3042, %v3026
    %v3099 = vmul.f32 %v3043, %v3027
    %v3100 = vmul.f32 %v3044, %v3028
    %v3101 = vmul.f32 %v3045, %v3029
    %v3102 = vmul.f32 %v3046, %v3030
    %v3103 = vmul.f32 %v3055, %v3015
    %v3104 = vmul.f32 %v3056, %v3016
    %v3105 = vmul.f32 %v3057, %v3017
    %v3106 = vmul.f32 %v3058, %v3018
    %v3107 = vmul.f32 %v3059, %v3019
    %v3108 = vmul.f32 %v3060, %v3020
    %v3109 = vmul.f32 %v3061, %v3021
    %v3110 = vmul.f32 %v3062, %v3022
    %v3111 = vsub.f32 %v3095, %v3103
    %v3112 = vsub.f32 %v3096, %v3104
    %v3113 = vsub.f32 %v3097, %v3105
    %v3114 = vsub.f32 %v3098, %v3106
    %v3115 = vsub.f32 %v3099, %v3107
    %v3116 = vsub.f32 %v3100, %v3108
    %v3117 = vsub.f32 %v3101, %v3109
    %v3118 = vsub.f32 %v3102, %v3110
    %v3119 = vmul.f32 %v3111, %v2943
    %v3120 = vmul.f32 %v3112, %v2944
    %v3121 = vmul.f32 %v3113, %v2945
    %v3122 = vmul.f32 %v3114, %v2946
    %v3123 = vmul.f32 %v3115, %v2947
    %v3124 = vmul.f32 %v3116, %v2948
    %v3125 = vmul.f32 %v3117, %v2949
    %v3126 = vmul.f32 %v3118, %v2950
    %3127 = vst.msk [vmem:[#allocation2] sm:$0xff] %vm94, %v2975
    %3128 = vst.msk [vmem:[#allocation2 + $0x50] sm:$0xff] %vm94, %v2976
    %3129 = vst.msk [vmem:[#allocation2 + $0xa0] sm:$0xff] %vm94, %v2977
    %3130 = vst.msk [vmem:[#allocation2 + $0xf0] sm:$0xff] %vm94, %v2978
    %3131 = vst.msk [vmem:[#allocation2 + $0x140] sm:$0xff] %vm94, %v2979
    %3132 = vst.msk [vmem:[#allocation2 + $0x190] sm:$0xff] %vm94, %v2980
    %3133 = vst.msk [vmem:[#allocation2 + $0x1e0] sm:$0xff] %vm94, %v2981
    %3134 = vst.msk [vmem:[#allocation2 + $0x230] sm:$0xff] %vm94, %v2982
    %3135 = vst.msk [vmem:[#allocation2 + $0x8] sm:$0xff] %vm94, %v3087
    %3136 = vst.msk [vmem:[#allocation2 + $0x58] sm:$0xff] %vm94, %v3088
    %3137 = vst.msk [vmem:[#allocation2 + $0xa8] sm:$0xff] %vm94, %v3089
    %3138 = vst.msk [vmem:[#allocation2 + $0xf8] sm:$0xff] %vm94, %v3090
    %3139 = vst.msk [vmem:[#allocation2 + $0x148] sm:$0xff] %vm94, %v3091
    %3140 = vst.msk [vmem:[#allocation2 + $0x198] sm:$0xff] %vm94, %v3092
    %3141 = vst.msk [vmem:[#allocation2 + $0x1e8] sm:$0xff] %vm94, %v3093
    %3142 = vst.msk [vmem:[#allocation2 + $0x238] sm:$0xff] %vm94, %v3094
    %3143 = vst.msk [vmem:[#allocation2 + $0x10] sm:$0xff] %vm94, %v1544
    %3144 = vst.msk [vmem:[#allocation2 + $0x60] sm:$0xff] %vm94, %v1625
    %3145 = vst.msk [vmem:[#allocation2 + $0xb0] sm:$0xff] %vm94, %v1706
    %3146 = vst.msk [vmem:[#allocation2 + $0x100] sm:$0xff] %vm94, %v1787
    %3147 = vst.msk [vmem:[#allocation2 + $0x150] sm:$0xff] %vm94, %v1868
    %3148 = vst.msk [vmem:[#allocation2 + $0x1a0] sm:$0xff] %vm94, %v1949
    %3149 = vst.msk [vmem:[#allocation2 + $0x1f0] sm:$0xff] %vm94, %v2030
    %3150 = vst.msk [vmem:[#allocation2 + $0x240] sm:$0xff] %vm94, %v2111
    %3151 = vst.msk [vmem:[#allocation2 + $0x18] sm:$0xff] %vm94, %v2208
    %3152 = vst.msk [vmem:[#allocation2 + $0x68] sm:$0xff] %vm94, %v2289
    %3153 = vst.msk [vmem:[#allocation2 + $0xb8] sm:$0xff] %vm94, %v2370
    %3154 = vst.msk [vmem:[#allocation2 + $0x108] sm:$0xff] %vm94, %v2451
    %3155 = vst.msk [vmem:[#allocation2 + $0x158] sm:$0xff] %vm94, %v2532
    %3156 = vst.msk [vmem:[#allocation2 + $0x1a8] sm:$0xff] %vm94, %v2613
    %3157 = vst.msk [vmem:[#allocation2 + $0x1f8] sm:$0xff] %vm94, %v2694
    %3158 = vst.msk [vmem:[#allocation2 + $0x248] sm:$0xff] %vm94, %v2775
    %3159 = vst.msk [vmem:[#allocation2 + $0x20] sm:$0xff] %vm94, %v3007
    %3160 = vst.msk [vmem:[#allocation2 + $0x70] sm:$0xff] %vm94, %v3008
    %3161 = vst.msk [vmem:[#allocation2 + $0xc0] sm:$0xff] %vm94, %v3009
    %3162 = vst.msk [vmem:[#allocation2 + $0x110] sm:$0xff] %vm94, %v3010
    %3163 = vst.msk [vmem:[#allocation2 + $0x160] sm:$0xff] %vm94, %v3011
    %3164 = vst.msk [vmem:[#allocation2 + $0x1b0] sm:$0xff] %vm94, %v3012
    %3165 = vst.msk [vmem:[#allocation2 + $0x200] sm:$0xff] %vm94, %v3013
    %3166 = vst.msk [vmem:[#allocation2 + $0x250] sm:$0xff] %vm94, %v3014
    %3167 = vst.msk [vmem:[#allocation2 + $0x28] sm:$0xff] %vm94, %v3119
    %3168 = vst.msk [vmem:[#allocation2 + $0x78] sm:$0xff] %vm94, %v3120
    %3169 = vst.msk [vmem:[#allocation2 + $0xc8] sm:$0xff] %vm94, %v3121
    %3170 = vst.msk [vmem:[#allocation2 + $0x118] sm:$0xff] %vm94, %v3122
    %3171 = vst.msk [vmem:[#allocation2 + $0x168] sm:$0xff] %vm94, %v3123
    %3172 = vst.msk [vmem:[#allocation2 + $0x1b8] sm:$0xff] %vm94, %v3124
    %3173 = vst.msk [vmem:[#allocation2 + $0x208] sm:$0xff] %vm94, %v3125
    %3174 = vst.msk [vmem:[#allocation2 + $0x258] sm:$0xff] %vm94, %v3126
    %3175 = vst.msk [vmem:[#allocation2 + $0x30] sm:$0xff] %vm94, %v1549
    %3176 = vst.msk [vmem:[#allocation2 + $0x80] sm:$0xff] %vm94, %v1630
    %3177 = vst.msk [vmem:[#allocation2 + $0xd0] sm:$0xff] %vm94, %v1711
    %3178 = vst.msk [vmem:[#allocation2 + $0x120] sm:$0xff] %vm94, %v1792
    %3179 = vst.msk [vmem:[#allocation2 + $0x170] sm:$0xff] %vm94, %v1873
    %3180 = vst.msk [vmem:[#allocation2 + $0x1c0] sm:$0xff] %vm94, %v1954
    %3181 = vst.msk [vmem:[#allocation2 + $0x210] sm:$0xff] %vm94, %v2035
    %3182 = vst.msk [vmem:[#allocation2 + $0x260] sm:$0xff] %vm94, %v2116
    %3183 = vst.msk [vmem:[#allocation2 + $0x38] sm:$0xff] %vm94, %v2213
    %3184 = vst.msk [vmem:[#allocation2 + $0x88] sm:$0xff] %vm94, %v2294
    %3185 = vst.msk [vmem:[#allocation2 + $0xd8] sm:$0xff] %vm94, %v2375
    %3186 = vst.msk [vmem:[#allocation2 + $0x128] sm:$0xff] %vm94, %v2456
    %3187 = vst.msk [vmem:[#allocation2 + $0x178] sm:$0xff] %vm94, %v2537
    %3188 = vst.msk [vmem:[#allocation2 + $0x1c8] sm:$0xff] %vm94, %v2618
    %3189 = vst.msk [vmem:[#allocation2 + $0x218] sm:$0xff] %vm94, %v2699
    %3190 = vst.msk [vmem:[#allocation2 + $0x268] sm:$0xff] %vm94, %v2780
    %3191 = vst.msk [vmem:[#allocation2 + $0x40] sm:$0xff] %vm94, %v30
    %3192 = vst.msk [vmem:[#allocation2 + $0x90] sm:$0xff] %vm94, %v36
    %3193 = vst.msk [vmem:[#allocation2 + $0xe0] sm:$0xff] %vm94, %v42
    %3194 = vst.msk [vmem:[#allocation2 + $0x130] sm:$0xff] %vm94, %v48
    %3195 = vst.msk [vmem:[#allocation2 + $0x180] sm:$0xff] %vm94, %v54
    %3196 = vst.msk [vmem:[#allocation2 + $0x1d0] sm:$0xff] %vm94, %v60
    %3197 = vst.msk [vmem:[#allocation2 + $0x220] sm:$0xff] %vm94, %v66
    %3198 = vst.msk [vmem:[#allocation2 + $0x270] sm:$0xff] %vm94, %v72
    %3199 = vst.msk [vmem:[#allocation2 + $0x48] sm:$0xff] %vm94, %v31
    %3200 = vst.msk [vmem:[#allocation2 + $0x98] sm:$0xff] %vm94, %v37
    %3201 = vst.msk [vmem:[#allocation2 + $0xe8] sm:$0xff] %vm94, %v43
    %3202 = vst.msk [vmem:[#allocation2 + $0x138] sm:$0xff] %vm94, %v49
    %3203 = vst.msk [vmem:[#allocation2 + $0x188] sm:$0xff] %vm94, %v55
    %3204 = vst.msk [vmem:[#allocation2 + $0x1d8] sm:$0xff] %vm94, %v61
    %3205 = vst.msk [vmem:[#allocation2 + $0x228] sm:$0xff] %vm94, %v67
    %3206 = vst.msk [vmem:[#allocation2 + $0x278] sm:$0xff] %vm94, %v73
    %v3207 = vld [vmem:[#allocation2] sm:$0xff]
    %v3208 = vld [vmem:[#allocation2 + $0x8] sm:$0xff]
    %v3209 = vld [vmem:[#allocation2 + $0x10] sm:$0xff]
    %v3210 = vld [vmem:[#allocation2 + $0x18] sm:$0xff]
    %v3211 = vld [vmem:[#allocation2 + $0x20] sm:$0xff]
    %v3212 = vld [vmem:[#allocation2 + $0x28] sm:$0xff]
    %v3213 = vld [vmem:[#allocation2 + $0x30] sm:$0xff]
    %v3214 = vld [vmem:[#allocation2 + $0x38] sm:$0xff]
    %v3215 = vld [vmem:[#allocation2 + $0x50] sm:$0xff]
    %v3216 = vld [vmem:[#allocation2 + $0x58] sm:$0xff]
    %v3217 = vld [vmem:[#allocation2 + $0x60] sm:$0xff]
    %v3218 = vld [vmem:[#allocation2 + $0x68] sm:$0xff]
    %v3219 = vld [vmem:[#allocation2 + $0x70] sm:$0xff]
    %v3220 = vld [vmem:[#allocation2 + $0x78] sm:$0xff]
    %v3221 = vld [vmem:[#allocation2 + $0x80] sm:$0xff]
    %v3222 = vld [vmem:[#allocation2 + $0x88] sm:$0xff]
    %v3223 = vld [vmem:[#allocation2 + $0xa0] sm:$0xff]
    %v3224 = vld [vmem:[#allocation2 + $0xa8] sm:$0xff]
    %v3225 = vld [vmem:[#allocation2 + $0xb0] sm:$0xff]
    %v3226 = vld [vmem:[#allocation2 + $0xb8] sm:$0xff]
    %v3227 = vld [vmem:[#allocation2 + $0xc0] sm:$0xff]
    %v3228 = vld [vmem:[#allocation2 + $0xc8] sm:$0xff]
    %v3229 = vld [vmem:[#allocation2 + $0xd0] sm:$0xff]
    %v3230 = vld [vmem:[#allocation2 + $0xd8] sm:$0xff]
    %v3231 = vld [vmem:[#allocation2 + $0xf0] sm:$0xff]
    %v3232 = vld [vmem:[#allocation2 + $0xf8] sm:$0xff]
    %v3233 = vld [vmem:[#allocation2 + $0x100] sm:$0xff]
    %v3234 = vld [vmem:[#allocation2 + $0x108] sm:$0xff]
    %v3235 = vld [vmem:[#allocation2 + $0x110] sm:$0xff]
    %v3236 = vld [vmem:[#allocation2 + $0x118] sm:$0xff]
    %v3237 = vld [vmem:[#allocation2 + $0x120] sm:$0xff]
    %v3238 = vld [vmem:[#allocation2 + $0x128] sm:$0xff]
    %v3239 = vld [vmem:[#allocation2 + $0x140] sm:$0xff]
    %v3240 = vld [vmem:[#allocation2 + $0x148] sm:$0xff]
    %v3241 = vld [vmem:[#allocation2 + $0x150] sm:$0xff]
    %v3242 = vld [vmem:[#allocation2 + $0x158] sm:$0xff]
    %v3243 = vld [vmem:[#allocation2 + $0x160] sm:$0xff]
    %v3244 = vld [vmem:[#allocation2 + $0x168] sm:$0xff]
    %v3245 = vld [vmem:[#allocation2 + $0x170] sm:$0xff]
    %v3246 = vld [vmem:[#allocation2 + $0x178] sm:$0xff]
    %v3247 = vld [vmem:[#allocation2 + $0x190] sm:$0xff]
    %v3248 = vld [vmem:[#allocation2 + $0x198] sm:$0xff]
    %v3249 = vld [vmem:[#allocation2 + $0x1a0] sm:$0xff]
    %v3250 = vld [vmem:[#allocation2 + $0x1a8] sm:$0xff]
    %v3251 = vld [vmem:[#allocation2 + $0x1b0] sm:$0xff]
    %v3252 = vld [vmem:[#allocation2 + $0x1b8] sm:$0xff]
    %v3253 = vld [vmem:[#allocation2 + $0x1c0] sm:$0xff]
    %v3254 = vld [vmem:[#allocation2 + $0x1c8] sm:$0xff]
    %v3255 = vld [vmem:[#allocation2 + $0x1e0] sm:$0xff]
    %v3256 = vld [vmem:[#allocation2 + $0x1e8] sm:$0xff]
    %v3257 = vld [vmem:[#allocation2 + $0x1f0] sm:$0xff]
    %v3258 = vld [vmem:[#allocation2 + $0x1f8] sm:$0xff]
    %v3259 = vld [vmem:[#allocation2 + $0x200] sm:$0xff]
    %v3260 = vld [vmem:[#allocation2 + $0x208] sm:$0xff]
    %v3261 = vld [vmem:[#allocation2 + $0x210] sm:$0xff]
    %v3262 = vld [vmem:[#allocation2 + $0x218] sm:$0xff]
    %v3263 = vld [vmem:[#allocation2 + $0x230] sm:$0xff]
    %v3264 = vld [vmem:[#allocation2 + $0x238] sm:$0xff]
    %v3265 = vld [vmem:[#allocation2 + $0x240] sm:$0xff]
    %v3266 = vld [vmem:[#allocation2 + $0x248] sm:$0xff]
    %v3267 = vld [vmem:[#allocation2 + $0x250] sm:$0xff]
    %v3268 = vld [vmem:[#allocation2 + $0x258] sm:$0xff]
    %v3269 = vld [vmem:[#allocation2 + $0x260] sm:$0xff]
    %v3270 = vld [vmem:[#allocation2 + $0x268] sm:$0xff]
    %v3271 = vsel %vm94, %v3207, 0.0
    %3272 = vadd.xlane.f32.xlu0 %v3271
    %v3273 = vpop.xlane.xlu0 %3272
    %v3274 = vsel %vm94, %v3208, 0.0
    %3275 = vadd.xlane.f32.xlu0 %v3274
    %v3276 = vpop.xlane.xlu0 %3275
    %v3277 = vsel %vm94, %v3209, 0.0
    %3278 = vadd.xlane.f32.xlu0 %v3277
    %v3279 = vpop.xlane.xlu0 %3278
    %v3280 = vsel %vm94, %v3210, 0.0
    %3281 = vadd.xlane.f32.xlu0 %v3280
    %v3282 = vpop.xlane.xlu0 %3281
    %v3283 = vsel %vm94, %v3211, 0.0
    %3284 = vadd.xlane.f32.xlu0 %v3283
    %v3285 = vpop.xlane.xlu0 %3284
    %v3286 = vsel %vm94, %v3212, 0.0
    %3287 = vadd.xlane.f32.xlu0 %v3286
    %v3288 = vpop.xlane.xlu0 %3287
    %v3289 = vsel %vm94, %v3213, 0.0
    %3290 = vadd.xlane.f32.xlu0 %v3289
    %v3291 = vpop.xlane.xlu0 %3290
    %v3292 = vsel %vm94, %v3214, 0.0
    %3293 = vadd.xlane.f32.xlu0 %v3292
    %v3294 = vpop.xlane.xlu0 %3293
    %v3295 = vsel %vm94, %v3215, 0.0
    %3296 = vadd.xlane.f32.xlu0 %v3295
    %v3297 = vpop.xlane.xlu0 %3296
    %v3298 = vsel %vm94, %v3216, 0.0
    %3299 = vadd.xlane.f32.xlu0 %v3298
    %v3300 = vpop.xlane.xlu0 %3299
    %v3301 = vsel %vm94, %v3217, 0.0
    %3302 = vadd.xlane.f32.xlu0 %v3301
    %v3303 = vpop.xlane.xlu0 %3302
    %v3304 = vsel %vm94, %v3218, 0.0
    %3305 = vadd.xlane.f32.xlu0 %v3304
    %v3306 = vpop.xlane.xlu0 %3305
    %v3307 = vsel %vm94, %v3219, 0.0
    %3308 = vadd.xlane.f32.xlu0 %v3307
    %v3309 = vpop.xlane.xlu0 %3308
    %v3310 = vsel %vm94, %v3220, 0.0
    %3311 = vadd.xlane.f32.xlu0 %v3310
    %v3312 = vpop.xlane.xlu0 %3311
    %v3313 = vsel %vm94, %v3221, 0.0
    %3314 = vadd.xlane.f32.xlu0 %v3313
    %v3315 = vpop.xlane.xlu0 %3314
    %v3316 = vsel %vm94, %v3222, 0.0
    %3317 = vadd.xlane.f32.xlu0 %v3316
    %v3318 = vpop.xlane.xlu0 %3317
    %v3319 = vsel %vm94, %v3223, 0.0
    %3320 = vadd.xlane.f32.xlu0 %v3319
    %v3321 = vpop.xlane.xlu0 %3320
    %v3322 = vsel %vm94, %v3224, 0.0
    %3323 = vadd.xlane.f32.xlu0 %v3322
    %v3324 = vpop.xlane.xlu0 %3323
    %v3325 = vsel %vm94, %v3225, 0.0
    %3326 = vadd.xlane.f32.xlu0 %v3325
    %v3327 = vpop.xlane.xlu0 %3326
    %v3328 = vsel %vm94, %v3226, 0.0
    %3329 = vadd.xlane.f32.xlu0 %v3328
    %v3330 = vpop.xlane.xlu0 %3329
    %v3331 = vsel %vm94, %v3227, 0.0
    %3332 = vadd.xlane.f32.xlu0 %v3331
    %v3333 = vpop.xlane.xlu0 %3332
    %v3334 = vsel %vm94, %v3228, 0.0
    %3335 = vadd.xlane.f32.xlu0 %v3334
    %v3336 = vpop.xlane.xlu0 %3335
    %v3337 = vsel %vm94, %v3229, 0.0
    %3338 = vadd.xlane.f32.xlu0 %v3337
    %v3339 = vpop.xlane.xlu0 %3338
    %v3340 = vsel %vm94, %v3230, 0.0
    %3341 = vadd.xlane.f32.xlu0 %v3340
    %v3342 = vpop.xlane.xlu0 %3341
    %v3343 = vsel %vm94, %v3231, 0.0
    %3344 = vadd.xlane.f32.xlu0 %v3343
    %v3345 = vpop.xlane.xlu0 %3344
    %v3346 = vsel %vm94, %v3232, 0.0
    %3347 = vadd.xlane.f32.xlu0 %v3346
    %v3348 = vpop.xlane.xlu0 %3347
    %v3349 = vsel %vm94, %v3233, 0.0
    %3350 = vadd.xlane.f32.xlu0 %v3349
    %v3351 = vpop.xlane.xlu0 %3350
    %v3352 = vsel %vm94, %v3234, 0.0
    %3353 = vadd.xlane.f32.xlu0 %v3352
    %v3354 = vpop.xlane.xlu0 %3353
    %v3355 = vsel %vm94, %v3235, 0.0
    %3356 = vadd.xlane.f32.xlu0 %v3355
    %v3357 = vpop.xlane.xlu0 %3356
    %v3358 = vsel %vm94, %v3236, 0.0
    %3359 = vadd.xlane.f32.xlu0 %v3358
    %v3360 = vpop.xlane.xlu0 %3359
    %v3361 = vsel %vm94, %v3237, 0.0
    %3362 = vadd.xlane.f32.xlu0 %v3361
    %v3363 = vpop.xlane.xlu0 %3362
    %v3364 = vsel %vm94, %v3238, 0.0
    %3365 = vadd.xlane.f32.xlu0 %v3364
    %v3366 = vpop.xlane.xlu0 %3365
    %v3367 = vsel %vm94, %v3239, 0.0
    %3368 = vadd.xlane.f32.xlu0 %v3367
    %v3369 = vpop.xlane.xlu0 %3368
    %v3370 = vsel %vm94, %v3240, 0.0
    %3371 = vadd.xlane.f32.xlu0 %v3370
    %v3372 = vpop.xlane.xlu0 %3371
    %v3373 = vsel %vm94, %v3241, 0.0
    %3374 = vadd.xlane.f32.xlu0 %v3373
    %v3375 = vpop.xlane.xlu0 %3374
    %v3376 = vsel %vm94, %v3242, 0.0
    %3377 = vadd.xlane.f32.xlu0 %v3376
    %v3378 = vpop.xlane.xlu0 %3377
    %v3379 = vsel %vm94, %v3243, 0.0
    %3380 = vadd.xlane.f32.xlu0 %v3379
    %v3381 = vpop.xlane.xlu0 %3380
    %v3382 = vsel %vm94, %v3244, 0.0
    %3383 = vadd.xlane.f32.xlu0 %v3382
    %v3384 = vpop.xlane.xlu0 %3383
    %v3385 = vsel %vm94, %v3245, 0.0
    %3386 = vadd.xlane.f32.xlu0 %v3385
    %v3387 = vpop.xlane.xlu0 %3386
    %v3388 = vsel %vm94, %v3246, 0.0
    %3389 = vadd.xlane.f32.xlu0 %v3388
    %v3390 = vpop.xlane.xlu0 %3389
    %v3391 = vsel %vm94, %v3247, 0.0
    %3392 = vadd.xlane.f32.xlu0 %v3391
    %v3393 = vpop.xlane.xlu0 %3392
    %v3394 = vsel %vm94, %v3248, 0.0
    %3395 = vadd.xlane.f32.xlu0 %v3394
    %v3396 = vpop.xlane.xlu0 %3395
    %v3397 = vsel %vm94, %v3249, 0.0
    %3398 = vadd.xlane.f32.xlu0 %v3397
    %v3399 = vpop.xlane.xlu0 %3398
    %v3400 = vsel %vm94, %v3250, 0.0
    %3401 = vadd.xlane.f32.xlu0 %v3400
    %v3402 = vpop.xlane.xlu0 %3401
    %v3403 = vsel %vm94, %v3251, 0.0
    %3404 = vadd.xlane.f32.xlu0 %v3403
    %v3405 = vpop.xlane.xlu0 %3404
    %v3406 = vsel %vm94, %v3252, 0.0
    %3407 = vadd.xlane.f32.xlu0 %v3406
    %v3408 = vpop.xlane.xlu0 %3407
    %v3409 = vsel %vm94, %v3253, 0.0
    %3410 = vadd.xlane.f32.xlu0 %v3409
    %v3411 = vpop.xlane.xlu0 %3410
    %v3412 = vsel %vm94, %v3254, 0.0
    %3413 = vadd.xlane.f32.xlu0 %v3412
    %v3414 = vpop.xlane.xlu0 %3413
    %v3415 = vsel %vm94, %v3255, 0.0
    %3416 = vadd.xlane.f32.xlu0 %v3415
    %v3417 = vpop.xlane.xlu0 %3416
    %v3418 = vsel %vm94, %v3256, 0.0
    %3419 = vadd.xlane.f32.xlu0 %v3418
    %v3420 = vpop.xlane.xlu0 %3419
    %v3421 = vsel %vm94, %v3257, 0.0
    %3422 = vadd.xlane.f32.xlu0 %v3421
    %v3423 = vpop.xlane.xlu0 %3422
    %v3424 = vsel %vm94, %v3258, 0.0
    %3425 = vadd.xlane.f32.xlu0 %v3424
    %v3426 = vpop.xlane.xlu0 %3425
    %v3427 = vsel %vm94, %v3259, 0.0
    %3428 = vadd.xlane.f32.xlu0 %v3427
    %v3429 = vpop.xlane.xlu0 %3428
    %v3430 = vsel %vm94, %v3260, 0.0
    %3431 = vadd.xlane.f32.xlu0 %v3430
    %v3432 = vpop.xlane.xlu0 %3431
    %v3433 = vsel %vm94, %v3261, 0.0
    %3434 = vadd.xlane.f32.xlu0 %v3433
    %v3435 = vpop.xlane.xlu0 %3434
    %v3436 = vsel %vm94, %v3262, 0.0
    %3437 = vadd.xlane.f32.xlu0 %v3436
    %v3438 = vpop.xlane.xlu0 %3437
    %v3439 = vsel %vm94, %v3263, 0.0
    %3440 = vadd.xlane.f32.xlu0 %v3439
    %v3441 = vpop.xlane.xlu0 %3440
    %v3442 = vsel %vm94, %v3264, 0.0
    %3443 = vadd.xlane.f32.xlu0 %v3442
    %v3444 = vpop.xlane.xlu0 %3443
    %v3445 = vsel %vm94, %v3265, 0.0
    %3446 = vadd.xlane.f32.xlu0 %v3445
    %v3447 = vpop.xlane.xlu0 %3446
    %v3448 = vsel %vm94, %v3266, 0.0
    %3449 = vadd.xlane.f32.xlu0 %v3448
    %v3450 = vpop.xlane.xlu0 %3449
    %v3451 = vsel %vm94, %v3267, 0.0
    %3452 = vadd.xlane.f32.xlu0 %v3451
    %v3453 = vpop.xlane.xlu0 %3452
    %v3454 = vsel %vm94, %v3268, 0.0
    %3455 = vadd.xlane.f32.xlu0 %v3454
    %v3456 = vpop.xlane.xlu0 %3455
    %v3457 = vsel %vm94, %v3269, 0.0
    %3458 = vadd.xlane.f32.xlu0 %v3457
    %v3459 = vpop.xlane.xlu0 %3458
    %v3460 = vsel %vm94, %v3270, 0.0
    %3461 = vadd.xlane.f32.xlu0 %v3460
    %v3462 = vpop.xlane.xlu0 %3461
    %v3463 = vrcp.pop 16.0
    %v3464 = vmul.f32 %v3273, %v3463
    %v3465 = vmul.f32 %v3276, %v3463
    %v3466 = vmul.f32 %v3279, %v3463
    %v3467 = vmul.f32 %v3282, %v3463
    %v3468 = vmul.f32 %v3285, %v3463
    %v3469 = vmul.f32 %v3288, %v3463
    %v3470 = vmul.f32 %v3291, %v3463
    %v3471 = vmul.f32 %v3294, %v3463
    %v3472 = vmul.f32 %v3297, %v3463
    %v3473 = vmul.f32 %v3300, %v3463
    %v3474 = vmul.f32 %v3303, %v3463
    %v3475 = vmul.f32 %v3306, %v3463
    %v3476 = vmul.f32 %v3309, %v3463
    %v3477 = vmul.f32 %v3312, %v3463
    %v3478 = vmul.f32 %v3315, %v3463
    %v3479 = vmul.f32 %v3318, %v3463
    %v3480 = vmul.f32 %v3321, %v3463
    %v3481 = vmul.f32 %v3324, %v3463
    %v3482 = vmul.f32 %v3327, %v3463
    %v3483 = vmul.f32 %v3330, %v3463
    %v3484 = vmul.f32 %v3333, %v3463
    %v3485 = vmul.f32 %v3336, %v3463
    %v3486 = vmul.f32 %v3339, %v3463
    %v3487 = vmul.f32 %v3342, %v3463
    %v3488 = vmul.f32 %v3345, %v3463
    %v3489 = vmul.f32 %v3348, %v3463
    %v3490 = vmul.f32 %v3351, %v3463
    %v3491 = vmul.f32 %v3354, %v3463
    %v3492 = vmul.f32 %v3357, %v3463
    %v3493 = vmul.f32 %v3360, %v3463
    %v3494 = vmul.f32 %v3363, %v3463
    %v3495 = vmul.f32 %v3366, %v3463
    %v3496 = vmul.f32 %v3369, %v3463
    %v3497 = vmul.f32 %v3372, %v3463
    %v3498 = vmul.f32 %v3375, %v3463
    %v3499 = vmul.f32 %v3378, %v3463
    %v3500 = vmul.f32 %v3381, %v3463
    %v3501 = vmul.f32 %v3384, %v3463
    %v3502 = vmul.f32 %v3387, %v3463
    %v3503 = vmul.f32 %v3390, %v3463
    %v3504 = vmul.f32 %v3393, %v3463
    %v3505 = vmul.f32 %v3396, %v3463
    %v3506 = vmul.f32 %v3399, %v3463
    %v3507 = vmul.f32 %v3402, %v3463
    %v3508 = vmul.f32 %v3405, %v3463
    %v3509 = vmul.f32 %v3408, %v3463
    %v3510 = vmul.f32 %v3411, %v3463
    %v3511 = vmul.f32 %v3414, %v3463
    %v3512 = vmul.f32 %v3417, %v3463
    %v3513 = vmul.f32 %v3420, %v3463
    %v3514 = vmul.f32 %v3423, %v3463
    %v3515 = vmul.f32 %v3426, %v3463
    %v3516 = vmul.f32 %v3429, %v3463
    %v3517 = vmul.f32 %v3432, %v3463
    %v3518 = vmul.f32 %v3435, %v3463
    %v3519 = vmul.f32 %v3438, %v3463
    %v3520 = vmul.f32 %v3441, %v3463
    %v3521 = vmul.f32 %v3444, %v3463
    %v3522 = vmul.f32 %v3447, %v3463
    %v3523 = vmul.f32 %v3450, %v3463
    %v3524 = vmul.f32 %v3453, %v3463
    %v3525 = vmul.f32 %v3456, %v3463
    %v3526 = vmul.f32 %v3459, %v3463
    %v3527 = vmul.f32 %v3462, %v3463
    %v3528 = vld [vmem:[%s5] sm:$0xff]
    %v3529 = vld [vmem:[%s5 + $0x8] sm:$0xff]
    %v3530 = vld [vmem:[%s5 + $0x10] sm:$0xff]
    %v3531 = vld [vmem:[%s5 + $0x18] sm:$0xff]
    %v3532 = vld [vmem:[%s5 + $0x20] sm:$0xff]
    %v3533 = vld [vmem:[%s5 + $0x28] sm:$0xff]
    %v3534 = vld [vmem:[%s5 + $0x30] sm:$0xff]
    %v3535 = vld [vmem:[%s5 + $0x38] sm:$0xff]
    %v3536 = vld [vmem:[%s5 + $0x40] sm:$0x1]
    %v3537 = vlaneseq
    %v3538 = vshrl.u32 %v3537, 7
    %v3539 = vsub.s32 0, %v3538
    %v3540 = vrot.slane %v3536, %v3539
    %v3605 = vlaneseq
    %v3606 = vand.u32 %v3605, 127
    %v3607 = vlaneseq
    %v3608 = vshrl.u32 %v3607, 7
    %v3609 = vsub.s32 %v3606, %v3608
    %v3610 = vrot.slane %v3464, %v3609
    %v3611 = vadd.s32 %v3606, 4294967288
    %v3612 = vlaneseq
    %v3613 = vshrl.u32 %v3612, 7
    %v3614 = vsub.s32 %v3611, %v3613
    %v3615 = vrot.slane %v3465, %v3614
    %vm3616 = vcmask 130112
    %v3617 = vsel %vm3616, %v3615, %v3610
    %v3618 = vadd.s32 %v3606, 4294967280
    %v3619 = vlaneseq
    %v3620 = vshrl.u32 %v3619, 7
    %v3621 = vsub.s32 %v3618, %v3620
    %v3622 = vrot.slane %v3466, %v3621
    %vm3623 = vcmask 195712
    %v3624 = vsel %vm3623, %v3622, %v3617
    %v3625 = vadd.s32 %v3606, 4294967272
    %v3626 = vlaneseq
    %v3627 = vshrl.u32 %v3626, 7
    %v3628 = vsub.s32 %v3625, %v3627
    %v3629 = vrot.slane %v3467, %v3628
    %vm3630 = vcmask 261312
    %v3631 = vsel %vm3630, %v3629, %v3624
    %v3632 = vadd.s32 %v3606, 4294967264
    %v3633 = vlaneseq
    %v3634 = vshrl.u32 %v3633, 7
    %v3635 = vsub.s32 %v3632, %v3634
    %v3636 = vrot.slane %v3468, %v3635
    %vm3637 = vcmask 326912
    %v3638 = vsel %vm3637, %v3636, %v3631
    %v3639 = vadd.s32 %v3606, 4294967256
    %v3640 = vlaneseq
    %v3641 = vshrl.u32 %v3640, 7
    %v3642 = vsub.s32 %v3639, %v3641
    %v3643 = vrot.slane %v3469, %v3642
    %vm3644 = vcmask 392512
    %v3645 = vsel %vm3644, %v3643, %v3638
    %v3646 = vadd.s32 %v3606, 4294967248
    %v3647 = vlaneseq
    %v3648 = vshrl.u32 %v3647, 7
    %v3649 = vsub.s32 %v3646, %v3648
    %v3650 = vrot.slane %v3470, %v3649
    %vm3651 = vcmask 458112
    %v3652 = vsel %vm3651, %v3650, %v3645
    %v3653 = vadd.s32 %v3606, 4294967240
    %v3654 = vlaneseq
    %v3655 = vshrl.u32 %v3654, 7
    %v3656 = vsub.s32 %v3653, %v3655
    %v3657 = vrot.slane %v3471, %v3656
    %vm3658 = vcmask 523712
    %v3659 = vsel %vm3658, %v3657, %v3652
    %v3660 = vlaneseq
    %v3661 = vshrl.u32 %v3660, 7
    %v3662 = vsub.s32 %v3606, %v3661
    %v3663 = vrot.slane %v3472, %v3662
    %v3664 = vlaneseq
    %v3665 = vshrl.u32 %v3664, 7
    %v3666 = vsub.s32 %v3611, %v3665
    %v3667 = vrot.slane %v3473, %v3666
    %v3668 = vsel %vm3616, %v3667, %v3663
    %v3669 = vlaneseq
    %v3670 = vshrl.u32 %v3669, 7
    %v3671 = vsub.s32 %v3618, %v3670
    %v3672 = vrot.slane %v3474, %v3671
    %v3673 = vsel %vm3623, %v3672, %v3668
    %v3674 = vlaneseq
    %v3675 = vshrl.u32 %v3674, 7
    %v3676 = vsub.s32 %v3625, %v3675
    %v3677 = vrot.slane %v3475, %v3676
    %v3678 = vsel %vm3630, %v3677, %v3673
    %v3679 = vlaneseq
    %v3680 = vshrl.u32 %v3679, 7
    %v3681 = vsub.s32 %v3632, %v3680
    %v3682 = vrot.slane %v3476, %v3681
    %v3683 = vsel %vm3637, %v3682, %v3678
    %v3684 = vlaneseq
    %v3685 = vshrl.u32 %v3684, 7
    %v3686 = vsub.s32 %v3639, %v3685
    %v3687 = vrot.slane %v3477, %v3686
    %v3688 = vsel %vm3644, %v3687, %v3683
    %v3689 = vlaneseq
    %v3690 = vshrl.u32 %v3689, 7
    %v3691 = vsub.s32 %v3646, %v3690
    %v3692 = vrot.slane %v3478, %v3691
    %v3693 = vsel %vm3651, %v3692, %v3688
    %v3694 = vlaneseq
    %v3695 = vshrl.u32 %v3694, 7
    %v3696 = vsub.s32 %v3653, %v3695
    %v3697 = vrot.slane %v3479, %v3696
    %v3698 = vsel %vm3658, %v3697, %v3693
    %v3699 = vlaneseq
    %v3700 = vshrl.u32 %v3699, 7
    %v3701 = vsub.s32 %v3606, %v3700
    %v3702 = vrot.slane %v3480, %v3701
    %v3703 = vlaneseq
    %v3704 = vshrl.u32 %v3703, 7
    %v3705 = vsub.s32 %v3611, %v3704
    %v3706 = vrot.slane %v3481, %v3705
    %v3707 = vsel %vm3616, %v3706, %v3702
    %v3708 = vlaneseq
    %v3709 = vshrl.u32 %v3708, 7
    %v3710 = vsub.s32 %v3618, %v3709
    %v3711 = vrot.slane %v3482, %v3710
    %v3712 = vsel %vm3623, %v3711, %v3707
    %v3713 = vlaneseq
    %v3714 = vshrl.u32 %v3713, 7
    %v3715 = vsub.s32 %v3625, %v3714
    %v3716 = vrot.slane %v3483, %v3715
    %v3717 = vsel %vm3630, %v3716, %v3712
    %v3718 = vlaneseq
    %v3719 = vshrl.u32 %v3718, 7
    %v3720 = vsub.s32 %v3632, %v3719
    %v3721 = vrot.slane %v3484, %v3720
    %v3722 = vsel %vm3637, %v3721, %v3717
    %v3723 = vlaneseq
    %v3724 = vshrl.u32 %v3723, 7
    %v3725 = vsub.s32 %v3639, %v3724
    %v3726 = vrot.slane %v3485, %v3725
    %v3727 = vsel %vm3644, %v3726, %v3722
    %v3728 = vlaneseq
    %v3729 = vshrl.u32 %v3728, 7
    %v3730 = vsub.s32 %v3646, %v3729
    %v3731 = vrot.slane %v3486, %v3730
    %v3732 = vsel %vm3651, %v3731, %v3727
    %v3733 = vlaneseq
    %v3734 = vshrl.u32 %v3733, 7
    %v3735 = vsub.s32 %v3653, %v3734
    %v3736 = vrot.slane %v3487, %v3735
    %v3737 = vsel %vm3658, %v3736, %v3732
    %v3738 = vlaneseq
    %v3739 = vshrl.u32 %v3738, 7
    %v3740 = vsub.s32 %v3606, %v3739
    %v3741 = vrot.slane %v3488, %v3740
    %v3742 = vlaneseq
    %v3743 = vshrl.u32 %v3742, 7
    %v3744 = vsub.s32 %v3611, %v3743
    %v3745 = vrot.slane %v3489, %v3744
    %v3746 = vsel %vm3616, %v3745, %v3741
    %v3747 = vlaneseq
    %v3748 = vshrl.u32 %v3747, 7
    %v3749 = vsub.s32 %v3618, %v3748
    %v3750 = vrot.slane %v3490, %v3749
    %v3751 = vsel %vm3623, %v3750, %v3746
    %v3752 = vlaneseq
    %v3753 = vshrl.u32 %v3752, 7
    %v3754 = vsub.s32 %v3625, %v3753
    %v3755 = vrot.slane %v3491, %v3754
    %v3756 = vsel %vm3630, %v3755, %v3751
    %v3757 = vlaneseq
    %v3758 = vshrl.u32 %v3757, 7
    %v3759 = vsub.s32 %v3632, %v3758
    %v3760 = vrot.slane %v3492, %v3759
    %v3761 = vsel %vm3637, %v3760, %v3756
    %v3762 = vlaneseq
    %v3763 = vshrl.u32 %v3762, 7
    %v3764 = vsub.s32 %v3639, %v3763
    %v3765 = vrot.slane %v3493, %v3764
    %v3766 = vsel %vm3644, %v3765, %v3761
    %v3767 = vlaneseq
    %v3768 = vshrl.u32 %v3767, 7
    %v3769 = vsub.s32 %v3646, %v3768
    %v3770 = vrot.slane %v3494, %v3769
    %v3771 = vsel %vm3651, %v3770, %v3766
    %v3772 = vlaneseq
    %v3773 = vshrl.u32 %v3772, 7
    %v3774 = vsub.s32 %v3653, %v3773
    %v3775 = vrot.slane %v3495, %v3774
    %v3776 = vsel %vm3658, %v3775, %v3771
    %v3777 = vlaneseq
    %v3778 = vshrl.u32 %v3777, 7
    %v3779 = vsub.s32 %v3606, %v3778
    %v3780 = vrot.slane %v3496, %v3779
    %v3781 = vlaneseq
    %v3782 = vshrl.u32 %v3781, 7
    %v3783 = vsub.s32 %v3611, %v3782
    %v3784 = vrot.slane %v3497, %v3783
    %v3785 = vsel %vm3616, %v3784, %v3780
    %v3786 = vlaneseq
    %v3787 = vshrl.u32 %v3786, 7
    %v3788 = vsub.s32 %v3618, %v3787
    %v3789 = vrot.slane %v3498, %v3788
    %v3790 = vsel %vm3623, %v3789, %v3785
    %v3791 = vlaneseq
    %v3792 = vshrl.u32 %v3791, 7
    %v3793 = vsub.s32 %v3625, %v3792
    %v3794 = vrot.slane %v3499, %v3793
    %v3795 = vsel %vm3630, %v3794, %v3790
    %v3796 = vlaneseq
    %v3797 = vshrl.u32 %v3796, 7
    %v3798 = vsub.s32 %v3632, %v3797
    %v3799 = vrot.slane %v3500, %v3798
    %v3800 = vsel %vm3637, %v3799, %v3795
    %v3801 = vlaneseq
    %v3802 = vshrl.u32 %v3801, 7
    %v3803 = vsub.s32 %v3639, %v3802
    %v3804 = vrot.slane %v3501, %v3803
    %v3805 = vsel %vm3644, %v3804, %v3800
    %v3806 = vlaneseq
    %v3807 = vshrl.u32 %v3806, 7
    %v3808 = vsub.s32 %v3646, %v3807
    %v3809 = vrot.slane %v3502, %v3808
    %v3810 = vsel %vm3651, %v3809, %v3805
    %v3811 = vlaneseq
    %v3812 = vshrl.u32 %v3811, 7
    %v3813 = vsub.s32 %v3653, %v3812
    %v3814 = vrot.slane %v3503, %v3813
    %v3815 = vsel %vm3658, %v3814, %v3810
    %v3816 = vlaneseq
    %v3817 = vshrl.u32 %v3816, 7
    %v3818 = vsub.s32 %v3606, %v3817
    %v3819 = vrot.slane %v3504, %v3818
    %v3820 = vlaneseq
    %v3821 = vshrl.u32 %v3820, 7
    %v3822 = vsub.s32 %v3611, %v3821
    %v3823 = vrot.slane %v3505, %v3822
    %v3824 = vsel %vm3616, %v3823, %v3819
    %v3825 = vlaneseq
    %v3826 = vshrl.u32 %v3825, 7
    %v3827 = vsub.s32 %v3618, %v3826
    %v3828 = vrot.slane %v3506, %v3827
    %v3829 = vsel %vm3623, %v3828, %v3824
    %v3830 = vlaneseq
    %v3831 = vshrl.u32 %v3830, 7
    %v3832 = vsub.s32 %v3625, %v3831
    %v3833 = vrot.slane %v3507, %v3832
    %v3834 = vsel %vm3630, %v3833, %v3829
    %v3835 = vlaneseq
    %v3836 = vshrl.u32 %v3835, 7
    %v3837 = vsub.s32 %v3632, %v3836
    %v3838 = vrot.slane %v3508, %v3837
    %v3839 = vsel %vm3637, %v3838, %v3834
    %v3840 = vlaneseq
    %v3841 = vshrl.u32 %v3840, 7
    %v3842 = vsub.s32 %v3639, %v3841
    %v3843 = vrot.slane %v3509, %v3842
    %v3844 = vsel %vm3644, %v3843, %v3839
    %v3845 = vlaneseq
    %v3846 = vshrl.u32 %v3845, 7
    %v3847 = vsub.s32 %v3646, %v3846
    %v3848 = vrot.slane %v3510, %v3847
    %v3849 = vsel %vm3651, %v3848, %v3844
    %v3850 = vlaneseq
    %v3851 = vshrl.u32 %v3850, 7
    %v3852 = vsub.s32 %v3653, %v3851
    %v3853 = vrot.slane %v3511, %v3852
    %v3854 = vsel %vm3658, %v3853, %v3849
    %v3855 = vlaneseq
    %v3856 = vshrl.u32 %v3855, 7
    %v3857 = vsub.s32 %v3606, %v3856
    %v3858 = vrot.slane %v3512, %v3857
    %v3859 = vlaneseq
    %v3860 = vshrl.u32 %v3859, 7
    %v3861 = vsub.s32 %v3611, %v3860
    %v3862 = vrot.slane %v3513, %v3861
    %v3863 = vsel %vm3616, %v3862, %v3858
    %v3864 = vlaneseq
    %v3865 = vshrl.u32 %v3864, 7
    %v3866 = vsub.s32 %v3618, %v3865
    %v3867 = vrot.slane %v3514, %v3866
    %v3868 = vsel %vm3623, %v3867, %v3863
    %v3869 = vlaneseq
    %v3870 = vshrl.u32 %v3869, 7
    %v3871 = vsub.s32 %v3625, %v3870
    %v3872 = vrot.slane %v3515, %v3871
    %v3873 = vsel %vm3630, %v3872, %v3868
    %v3874 = vlaneseq
    %v3875 = vshrl.u32 %v3874, 7
    %v3876 = vsub.s32 %v3632, %v3875
    %v3877 = vrot.slane %v3516, %v3876
    %v3878 = vsel %vm3637, %v3877, %v3873
    %v3879 = vlaneseq
    %v3880 = vshrl.u32 %v3879, 7
    %v3881 = vsub.s32 %v3639, %v3880
    %v3882 = vrot.slane %v3517, %v3881
    %v3883 = vsel %vm3644, %v3882, %v3878
    %v3884 = vlaneseq
    %v3885 = vshrl.u32 %v3884, 7
    %v3886 = vsub.s32 %v3646, %v3885
    %v3887 = vrot.slane %v3518, %v3886
    %v3888 = vsel %vm3651, %v3887, %v3883
    %v3889 = vlaneseq
    %v3890 = vshrl.u32 %v3889, 7
    %v3891 = vsub.s32 %v3653, %v3890
    %v3892 = vrot.slane %v3519, %v3891
    %v3893 = vsel %vm3658, %v3892, %v3888
    %v3894 = vlaneseq
    %v3895 = vshrl.u32 %v3894, 7
    %v3896 = vsub.s32 %v3606, %v3895
    %v3897 = vrot.slane %v3520, %v3896
    %v3898 = vlaneseq
    %v3899 = vshrl.u32 %v3898, 7
    %v3900 = vsub.s32 %v3611, %v3899
    %v3901 = vrot.slane %v3521, %v3900
    %v3902 = vsel %vm3616, %v3901, %v3897
    %v3903 = vlaneseq
    %v3904 = vshrl.u32 %v3903, 7
    %v3905 = vsub.s32 %v3618, %v3904
    %v3906 = vrot.slane %v3522, %v3905
    %v3907 = vsel %vm3623, %v3906, %v3902
    %v3908 = vlaneseq
    %v3909 = vshrl.u32 %v3908, 7
    %v3910 = vsub.s32 %v3625, %v3909
    %v3911 = vrot.slane %v3523, %v3910
    %v3912 = vsel %vm3630, %v3911, %v3907
    %v3913 = vlaneseq
    %v3914 = vshrl.u32 %v3913, 7
    %v3915 = vsub.s32 %v3632, %v3914
    %v3916 = vrot.slane %v3524, %v3915
    %v3917 = vsel %vm3637, %v3916, %v3912
    %v3918 = vlaneseq
    %v3919 = vshrl.u32 %v3918, 7
    %v3920 = vsub.s32 %v3639, %v3919
    %v3921 = vrot.slane %v3525, %v3920
    %v3922 = vsel %vm3644, %v3921, %v3917
    %v3923 = vlaneseq
    %v3924 = vshrl.u32 %v3923, 7
    %v3925 = vsub.s32 %v3646, %v3924
    %v3926 = vrot.slane %v3526, %v3925
    %v3927 = vsel %vm3651, %v3926, %v3922
    %v3928 = vlaneseq
    %v3929 = vshrl.u32 %v3928, 7
    %v3930 = vsub.s32 %v3653, %v3929
    %v3931 = vrot.slane %v3527, %v3930
    %v3932 = vsel %vm3658, %v3931, %v3927
    %vm3933 = vcmask 1041409
    %v3934 = vsel %vm3933, %v3698, %v3659
    %vm3935 = vcmask 1042434
    %v3936 = vsel %vm3935, %v3737, %v3934
    %vm3937 = vcmask 1043459
    %v3938 = vsel %vm3937, %v3776, %v3936
    %vm3939 = vcmask 1044484
    %v3940 = vsel %vm3939, %v3815, %v3938
    %vm3941 = vcmask 1045509
    %v3942 = vsel %vm3941, %v3854, %v3940
    %vm3943 = vcmask 1046534
    %v3944 = vsel %vm3943, %v3893, %v3942
    %vm3945 = vcmask 1047559
    %v3946 = vsel %vm3945, %v3932, %v3944
    %vm3947 = vcmask 523264
    %v3948 = vsel %vm3947, %v3946, 0
    %3950 = vmatprep.subr.mxu0 0.0
    %3951 = vmatpush1.msra.mxu0 %v3528
    %3952 = vmatprep.subr.mxu0 0.0
    %3953 = vmatpush1.msra.mxu0 %v3529
    %3954 = vmatprep.subr.mxu0 0.0
    %3955 = vmatpush1.msra.mxu0 %v3530
    %3956 = vmatprep.subr.mxu0 0.0
    %3957 = vmatpush1.msra.mxu0 %v3531
    %3958 = vmatprep.subr.mxu0 0.0
    %3959 = vmatpush1.msra.mxu0 %v3532
    %3960 = vmatprep.subr.mxu0 0.0
    %3961 = vmatpush1.msra.mxu0 %v3533
    %3962 = vmatprep.subr.mxu0 0.0
    %3963 = vmatpush1.msra.mxu0 %v3534
    %3964 = vmatprep.subr.mxu0 0.0
    %3965 = vmatpush1.msra.mxu0 %v3535
    %3966 = vmatprep.subr.mxu0 0.0
    %3967 = vmatpush1.msra.mxu0 0.0
    %3968 = vmatprep.subr.mxu0 0.0
    %3969 = vmatpush1.msra.mxu0 0.0
    %3970 = vmatprep.subr.mxu0 0.0
    %3971 = vmatpush1.msra.mxu0 0.0
    %3972 = vmatprep.subr.mxu0 0.0
    %3973 = vmatpush1.msra.mxu0 0.0
    %3974 = vmatprep.subr.mxu0 0.0
    %3975 = vmatpush1.msra.mxu0 0.0
    %3976 = vmatprep.subr.mxu0 0.0
    %3977 = vmatpush1.msra.mxu0 0.0
    %3978 = vmatprep.subr.mxu0 0.0
    %3979 = vmatpush1.msra.mxu0 0.0
    %3980 = vmatprep.subr.mxu0 0.0
    %3981 = vmatpush1.msra.mxu0 0.0
    %3982 = vmatprep.subr.mxu0 0.0
    %3983 = vmatpush1.msra.mxu0 0.0
    %3984 = vmatprep.subr.mxu0 0.0
    %3985 = vmatpush1.msra.mxu0 0.0
    %3986 = vmatprep.subr.mxu0 0.0
    %3987 = vmatpush1.msra.mxu0 0.0
    %3988 = vmatprep.subr.mxu0 0.0
    %3989 = vmatpush1.msra.mxu0 0.0
    %3990 = vmatprep.subr.mxu0 0.0
    %3991 = vmatpush1.msra.mxu0 0.0
    %3992 = vmatprep.subr.mxu0 0.0
    %3993 = vmatpush1.msra.mxu0 0.0
    %3994 = vmatprep.subr.mxu0 0.0
    %3995 = vmatpush1.msra.mxu0 0.0
    %3996 = vmatprep.subr.mxu0 0.0
    %3997 = vmatpush1.msra.mxu0 0.0
    %3998 = vmatprep.subr.mxu0 0.0
    %3999 = vmatpush1.msra.mxu0 0.0
    %4000 = vmatprep.subr.mxu0 0.0
    %4001 = vmatpush1.msra.mxu0 0.0
    %4002 = vmatprep.subr.mxu0 0.0
    %4003 = vmatpush1.msra.mxu0 0.0
    %4004 = vmatprep.subr.mxu0 0.0
    %4005 = vmatpush1.msra.mxu0 0.0
    %4006 = vmatprep.subr.mxu0 0.0
    %4007 = vmatpush1.msra.mxu0 0.0
    %4008 = vmatprep.subr.mxu0 0.0
    %4009 = vmatpush1.msra.mxu0 0.0
    %4010 = vmatprep.subr.mxu0 0.0
    %4011 = vmatpush1.msra.mxu0 0.0
    %4012 = vmatprep.subr.mxu0 0.0
    %4013 = vmatpush1.msra.mxu0 0.0
    %4014 = vmatprep.mubr.f32.mxu0 0.0
    %4015 = vmatmul.mubr.f32.gmra.mrb[0].mxu0 %v3948
    %v4016 = vpop.f32.mrb[0].mxu0
    %v4017 = vadd.f32 %v3540, %v4016
    %v4018 = vpop.f32.mrb[0].mxu0
    %4019 = vdwg.mxu0
    %v4020 = vxor.u32 %v4017, 2147483648
    %v4021 = vmul.f32 %v4020, 1.442695
    %v4022 = vpow.pop %v4021
    %v4023 = vadd.f32 %v4022, 1.0
    %v4024 = vrcp.pop %v4023
    %v4025 = vmul.f32 1.0, %v4024
    %vm4026 = vcmask 31744
    %v4027 = vsel %vm4026, %v4025, 0.0
    %4028 = vadd.xlane.f32.xlu0 %v4027
    %v4029 = vpop.xlane.xlu0 %4028
    %v4030 = vadd.f32 %v4029, 0.0001
    %v4031 = vrcp.pop %v4030
    %4033 = vrot.lane.b32.xlu0 %v4025, 124
    %v4034 = vpop.permute.xlu0 %4033
    %v4036 = vsel %vm4026, %v4034, 0.0
    %4037 = vadd.xlane.f32.xlu0 %v4036
    %v4038 = vpop.xlane.xlu0 %4037
    %v4039 = vadd.f32 %v4038, 0.0001
    %v4040 = vrcp.pop %v4039
    %vm4041 = vcmp.lt.s32.totalorder %v3606, 4
    %v4042 = vsel %vm4041, 1, 0
    %vm4043 = vcmp.eq.s32.totalorder %v4042, 1
    %v4044 = vsel %vm4043, %v4031, %v4040
    %v4045 = vmul.f32 %v4025, %v4044
    %v4046 = vld [vmem:[#allocation2] sm:$0xff]
    %v4047 = vld [vmem:[#allocation2 + $0x50] sm:$0xff]
    %v4048 = vld [vmem:[#allocation2 + $0xa0] sm:$0xff]
    %v4049 = vld [vmem:[#allocation2 + $0xf0] sm:$0xff]
    %v4050 = vld [vmem:[#allocation2 + $0x140] sm:$0xff]
    %v4051 = vld [vmem:[#allocation2 + $0x190] sm:$0xff]
    %v4052 = vld [vmem:[#allocation2 + $0x1e0] sm:$0xff]
    %v4053 = vld [vmem:[#allocation2 + $0x230] sm:$0xff]
    %v4055 = vcombine.high %v4045, %v4045
    %v4057 = vunpack.c.l.s4 1966171168
    %v4058 = vunpack.c.0.s8 %v4057
    %v4059 = vlaneseq
    %v4060 = vshrl.u32 %v4059, 7
    %v4061 = vsub.s32 %v4058, %v4060
    %v4062 = vrot.slane %v4045, %v4061
    %v4064 = vunpack.c.l.s4 1966171168
    %v4065 = vunpack.c.0.s8 %v4064
    %v4066 = vlaneseq
    %v4067 = vshrl.u32 %v4066, 7
    %v4068 = vsub.s32 %v4065, %v4067
    %v4069 = vrot.slane %v4055, %v4068
    %v4070 = vcombine.high %v4062, %v4062
    %v4071 = vcombine.high %v4069, %v4069
    %v4073 = vunpack.c.l.s4 1966171168
    %v4074 = vunpack.c.0.s8 %v4073
    %v4075 = vlaneseq
    %v4076 = vshrl.u32 %v4075, 7
    %v4077 = vsub.s32 %v4074, %v4076
    %v4078 = vrot.slane %v4062, %v4077
    %v4080 = vunpack.c.l.s4 1966171168
    %v4081 = vunpack.c.0.s8 %v4080
    %v4082 = vlaneseq
    %v4083 = vshrl.u32 %v4082, 7
    %v4084 = vsub.s32 %v4081, %v4083
    %v4085 = vrot.slane %v4069, %v4084
    %v4087 = vunpack.c.l.s4 1966171168
    %v4088 = vunpack.c.0.s8 %v4087
    %v4089 = vlaneseq
    %v4090 = vshrl.u32 %v4089, 7
    %v4091 = vsub.s32 %v4088, %v4090
    %v4092 = vrot.slane %v4070, %v4091
    %v4094 = vunpack.c.l.s4 1966171168
    %v4095 = vunpack.c.0.s8 %v4094
    %v4096 = vlaneseq
    %v4097 = vshrl.u32 %v4096, 7
    %v4098 = vsub.s32 %v4095, %v4097
    %v4099 = vrot.slane %v4071, %v4098
    %v4100 = vcombine.high %v4078, %v4078
    %v4101 = vcombine.high %v4085, %v4085
    %v4102 = vcombine.high %v4092, %v4092
    %v4103 = vcombine.high %v4099, %v4099
    %v4104 = vlaneseq
    %v4105 = vshrl.u32 %v4104, 7
    %v4106 = vsub.s32 0, %v4105
    %v4107 = vrot.slane %v4078, %v4106
    %v4108 = vlaneseq
    %v4109 = vshrl.u32 %v4108, 7
    %v4110 = vsub.s32 0, %v4109
    %v4111 = vrot.slane %v4092, %v4110
    %v4112 = vlaneseq
    %v4113 = vshrl.u32 %v4112, 7
    %v4114 = vsub.s32 0, %v4113
    %v4115 = vrot.slane %v4100, %v4114
    %v4116 = vlaneseq
    %v4117 = vshrl.u32 %v4116, 7
    %v4118 = vsub.s32 0, %v4117
    %v4119 = vrot.slane %v4102, %v4118
    %v4120 = vlaneseq
    %v4121 = vshrl.u32 %v4120, 7
    %v4122 = vsub.s32 0, %v4121
    %v4123 = vrot.slane %v4085, %v4122
    %v4124 = vlaneseq
    %v4125 = vshrl.u32 %v4124, 7
    %v4126 = vsub.s32 0, %v4125
    %v4127 = vrot.slane %v4099, %v4126
    %v4128 = vlaneseq
    %v4129 = vshrl.u32 %v4128, 7
    %v4130 = vsub.s32 0, %v4129
    %v4131 = vrot.slane %v4101, %v4130
    %v4132 = vlaneseq
    %v4133 = vshrl.u32 %v4132, 7
    %v4134 = vsub.s32 0, %v4133
    %v4135 = vrot.slane %v4103, %v4134
    %4136 = vset.pattern.permute.xlu0 0
    %4137 = vperm.xlu0 %4136, %v4107
    %v4138 = vpop.permute.xlu0 %4137
    %4140 = vset.pattern.permute.xlu0 0
    %4141 = vperm.xlu0 %4140, %v4111
    %v4142 = vpop.permute.xlu0 %4141
    %4144 = vset.pattern.permute.xlu0 0
    %4145 = vperm.xlu0 %4144, %v4115
    %v4146 = vpop.permute.xlu0 %4145
    %4148 = vset.pattern.permute.xlu0 0
    %4149 = vperm.xlu0 %4148, %v4119
    %v4150 = vpop.permute.xlu0 %4149
    %4152 = vset.pattern.permute.xlu0 0
    %4153 = vperm.xlu0 %4152, %v4123
    %v4154 = vpop.permute.xlu0 %4153
    %4156 = vset.pattern.permute.xlu0 0
    %4157 = vperm.xlu0 %4156, %v4127
    %v4158 = vpop.permute.xlu0 %4157
    %4160 = vset.pattern.permute.xlu0 0
    %4161 = vperm.xlu0 %4160, %v4131
    %v4162 = vpop.permute.xlu0 %4161
    %4164 = vset.pattern.permute.xlu0 0
    %4165 = vperm.xlu0 %4164, %v4135
    %v4166 = vpop.permute.xlu0 %4165
    %v4168 = vmul.f32 %v4046, %v4138
    %v4169 = vmul.f32 %v4047, %v4142
    %v4170 = vmul.f32 %v4048, %v4146
    %v4171 = vmul.f32 %v4049, %v4150
    %v4172 = vmul.f32 %v4050, %v4154
    %v4173 = vmul.f32 %v4051, %v4158
    %v4174 = vmul.f32 %v4052, %v4162
    %v4175 = vmul.f32 %v4053, %v4166
    %4176 = vst.msk [vmem:[#allocation2] sm:$0xff] %vm94, %v4168
    %4177 = vst.msk [vmem:[#allocation2 + $0x50] sm:$0xff] %vm94, %v4169
    %4178 = vst.msk [vmem:[#allocation2 + $0xa0] sm:$0xff] %vm94, %v4170
    %4179 = vst.msk [vmem:[#allocation2 + $0xf0] sm:$0xff] %vm94, %v4171
    %4180 = vst.msk [vmem:[#allocation2 + $0x140] sm:$0xff] %vm94, %v4172
    %4181 = vst.msk [vmem:[#allocation2 + $0x190] sm:$0xff] %vm94, %v4173
    %4182 = vst.msk [vmem:[#allocation2 + $0x1e0] sm:$0xff] %vm94, %v4174
    %4183 = vst.msk [vmem:[#allocation2 + $0x230] sm:$0xff] %vm94, %v4175
    %v4184 = vld [vmem:[#allocation2 + $0x8] sm:$0xff]
    %v4185 = vld [vmem:[#allocation2 + $0x58] sm:$0xff]
    %v4186 = vld [vmem:[#allocation2 + $0xa8] sm:$0xff]
    %v4187 = vld [vmem:[#allocation2 + $0xf8] sm:$0xff]
    %v4188 = vld [vmem:[#allocation2 + $0x148] sm:$0xff]
    %v4189 = vld [vmem:[#allocation2 + $0x198] sm:$0xff]
    %v4190 = vld [vmem:[#allocation2 + $0x1e8] sm:$0xff]
    %v4191 = vld [vmem:[#allocation2 + $0x238] sm:$0xff]
    %4192 = vset.pattern.permute.xlu0 1
    %4193 = vperm.xlu0 %4192, %v4107
    %v4194 = vpop.permute.xlu0 %4193
    %4196 = vset.pattern.permute.xlu0 1
    %4197 = vperm.xlu0 %4196, %v4111
    %v4198 = vpop.permute.xlu0 %4197
    %4200 = vset.pattern.permute.xlu0 1
    %4201 = vperm.xlu0 %4200, %v4115
    %v4202 = vpop.permute.xlu0 %4201
    %4204 = vset.pattern.permute.xlu0 1
    %4205 = vperm.xlu0 %4204, %v4119
    %v4206 = vpop.permute.xlu0 %4205
    %4208 = vset.pattern.permute.xlu0 1
    %4209 = vperm.xlu0 %4208, %v4123
    %v4210 = vpop.permute.xlu0 %4209
    %4212 = vset.pattern.permute.xlu0 1
    %4213 = vperm.xlu0 %4212, %v4127
    %v4214 = vpop.permute.xlu0 %4213
    %4216 = vset.pattern.permute.xlu0 1
    %4217 = vperm.xlu0 %4216, %v4131
    %v4218 = vpop.permute.xlu0 %4217
    %4220 = vset.pattern.permute.xlu0 1
    %4221 = vperm.xlu0 %4220, %v4135
    %v4222 = vpop.permute.xlu0 %4221
    %v4224 = vmul.f32 %v4184, %v4194
    %v4225 = vmul.f32 %v4185, %v4198
    %v4226 = vmul.f32 %v4186, %v4202
    %v4227 = vmul.f32 %v4187, %v4206
    %v4228 = vmul.f32 %v4188, %v4210
    %v4229 = vmul.f32 %v4189, %v4214
    %v4230 = vmul.f32 %v4190, %v4218
    %v4231 = vmul.f32 %v4191, %v4222
    %4232 = vst.msk [vmem:[#allocation2 + $0x8] sm:$0xff] %vm94, %v4224
    %4233 = vst.msk [vmem:[#allocation2 + $0x58] sm:$0xff] %vm94, %v4225
    %4234 = vst.msk [vmem:[#allocation2 + $0xa8] sm:$0xff] %vm94, %v4226
    %4235 = vst.msk [vmem:[#allocation2 + $0xf8] sm:$0xff] %vm94, %v4227
    %4236 = vst.msk [vmem:[#allocation2 + $0x148] sm:$0xff] %vm94, %v4228
    %4237 = vst.msk [vmem:[#allocation2 + $0x198] sm:$0xff] %vm94, %v4229
    %4238 = vst.msk [vmem:[#allocation2 + $0x1e8] sm:$0xff] %vm94, %v4230
    %4239 = vst.msk [vmem:[#allocation2 + $0x238] sm:$0xff] %vm94, %v4231
    %v4240 = vld [vmem:[#allocation2 + $0x10] sm:$0xff]
    %v4241 = vld [vmem:[#allocation2 + $0x60] sm:$0xff]
    %v4242 = vld [vmem:[#allocation2 + $0xb0] sm:$0xff]
    %v4243 = vld [vmem:[#allocation2 + $0x100] sm:$0xff]
    %v4244 = vld [vmem:[#allocation2 + $0x150] sm:$0xff]
    %v4245 = vld [vmem:[#allocation2 + $0x1a0] sm:$0xff]
    %v4246 = vld [vmem:[#allocation2 + $0x1f0] sm:$0xff]
    %v4247 = vld [vmem:[#allocation2 + $0x240] sm:$0xff]
    %4248 = vset.pattern.permute.xlu0 2
    %4249 = vperm.xlu0 %4248, %v4107
    %v4250 = vpop.permute.xlu0 %4249
    %4252 = vset.pattern.permute.xlu0 2
    %4253 = vperm.xlu0 %4252, %v4111
    %v4254 = vpop.permute.xlu0 %4253
    %4256 = vset.pattern.permute.xlu0 2
    %4257 = vperm.xlu0 %4256, %v4115
    %v4258 = vpop.permute.xlu0 %4257
    %4260 = vset.pattern.permute.xlu0 2
    %4261 = vperm.xlu0 %4260, %v4119
    %v4262 = vpop.permute.xlu0 %4261
    %4264 = vset.pattern.permute.xlu0 2
    %4265 = vperm.xlu0 %4264, %v4123
    %v4266 = vpop.permute.xlu0 %4265
    %4268 = vset.pattern.permute.xlu0 2
    %4269 = vperm.xlu0 %4268, %v4127
    %v4270 = vpop.permute.xlu0 %4269
    %4272 = vset.pattern.permute.xlu0 2
    %4273 = vperm.xlu0 %4272, %v4131
    %v4274 = vpop.permute.xlu0 %4273
    %4276 = vset.pattern.permute.xlu0 2
    %4277 = vperm.xlu0 %4276, %v4135
    %v4278 = vpop.permute.xlu0 %4277
    %v4280 = vmul.f32 %v4240, %v4250
    %v4281 = vmul.f32 %v4241, %v4254
    %v4282 = vmul.f32 %v4242, %v4258
    %v4283 = vmul.f32 %v4243, %v4262
    %v4284 = vmul.f32 %v4244, %v4266
    %v4285 = vmul.f32 %v4245, %v4270
    %v4286 = vmul.f32 %v4246, %v4274
    %v4287 = vmul.f32 %v4247, %v4278
    %4288 = vst.msk [vmem:[#allocation2 + $0x10] sm:$0xff] %vm94, %v4280
    %4289 = vst.msk [vmem:[#allocation2 + $0x60] sm:$0xff] %vm94, %v4281
    %4290 = vst.msk [vmem:[#allocation2 + $0xb0] sm:$0xff] %vm94, %v4282
    %4291 = vst.msk [vmem:[#allocation2 + $0x100] sm:$0xff] %vm94, %v4283
    %4292 = vst.msk [vmem:[#allocation2 + $0x150] sm:$0xff] %vm94, %v4284
    %4293 = vst.msk [vmem:[#allocation2 + $0x1a0] sm:$0xff] %vm94, %v4285
    %4294 = vst.msk [vmem:[#allocation2 + $0x1f0] sm:$0xff] %vm94, %v4286
    %4295 = vst.msk [vmem:[#allocation2 + $0x240] sm:$0xff] %vm94, %v4287
    %v4296 = vld [vmem:[#allocation2 + $0x18] sm:$0xff]
    %v4297 = vld [vmem:[#allocation2 + $0x68] sm:$0xff]
    %v4298 = vld [vmem:[#allocation2 + $0xb8] sm:$0xff]
    %v4299 = vld [vmem:[#allocation2 + $0x108] sm:$0xff]
    %v4300 = vld [vmem:[#allocation2 + $0x158] sm:$0xff]
    %v4301 = vld [vmem:[#allocation2 + $0x1a8] sm:$0xff]
    %v4302 = vld [vmem:[#allocation2 + $0x1f8] sm:$0xff]
    %v4303 = vld [vmem:[#allocation2 + $0x248] sm:$0xff]
    %4304 = vset.pattern.permute.xlu0 3
    %4305 = vperm.xlu0 %4304, %v4107
    %v4306 = vpop.permute.xlu0 %4305
    %4308 = vset.pattern.permute.xlu0 3
    %4309 = vperm.xlu0 %4308, %v4111
    %v4310 = vpop.permute.xlu0 %4309
    %4312 = vset.pattern.permute.xlu0 3
    %4313 = vperm.xlu0 %4312, %v4115
    %v4314 = vpop.permute.xlu0 %4313
    %4316 = vset.pattern.permute.xlu0 3
    %4317 = vperm.xlu0 %4316, %v4119
    %v4318 = vpop.permute.xlu0 %4317
    %4320 = vset.pattern.permute.xlu0 3
    %4321 = vperm.xlu0 %4320, %v4123
    %v4322 = vpop.permute.xlu0 %4321
    %4324 = vset.pattern.permute.xlu0 3
    %4325 = vperm.xlu0 %4324, %v4127
    %v4326 = vpop.permute.xlu0 %4325
    %4328 = vset.pattern.permute.xlu0 3
    %4329 = vperm.xlu0 %4328, %v4131
    %v4330 = vpop.permute.xlu0 %4329
    %4332 = vset.pattern.permute.xlu0 3
    %4333 = vperm.xlu0 %4332, %v4135
    %v4334 = vpop.permute.xlu0 %4333
    %v4336 = vmul.f32 %v4296, %v4306
    %v4337 = vmul.f32 %v4297, %v4310
    %v4338 = vmul.f32 %v4298, %v4314
    %v4339 = vmul.f32 %v4299, %v4318
    %v4340 = vmul.f32 %v4300, %v4322
    %v4341 = vmul.f32 %v4301, %v4326
    %v4342 = vmul.f32 %v4302, %v4330
    %v4343 = vmul.f32 %v4303, %v4334
    %4344 = vst.msk [vmem:[#allocation2 + $0x18] sm:$0xff] %vm94, %v4336
    %4345 = vst.msk [vmem:[#allocation2 + $0x68] sm:$0xff] %vm94, %v4337
    %4346 = vst.msk [vmem:[#allocation2 + $0xb8] sm:$0xff] %vm94, %v4338
    %4347 = vst.msk [vmem:[#allocation2 + $0x108] sm:$0xff] %vm94, %v4339
    %4348 = vst.msk [vmem:[#allocation2 + $0x158] sm:$0xff] %vm94, %v4340
    %4349 = vst.msk [vmem:[#allocation2 + $0x1a8] sm:$0xff] %vm94, %v4341
    %4350 = vst.msk [vmem:[#allocation2 + $0x1f8] sm:$0xff] %vm94, %v4342
    %4351 = vst.msk [vmem:[#allocation2 + $0x248] sm:$0xff] %vm94, %v4343
    %v4352 = vld [vmem:[#allocation2 + $0x20] sm:$0xff]
    %v4353 = vld [vmem:[#allocation2 + $0x70] sm:$0xff]
    %v4354 = vld [vmem:[#allocation2 + $0xc0] sm:$0xff]
    %v4355 = vld [vmem:[#allocation2 + $0x110] sm:$0xff]
    %v4356 = vld [vmem:[#allocation2 + $0x160] sm:$0xff]
    %v4357 = vld [vmem:[#allocation2 + $0x1b0] sm:$0xff]
    %v4358 = vld [vmem:[#allocation2 + $0x200] sm:$0xff]
    %v4359 = vld [vmem:[#allocation2 + $0x250] sm:$0xff]
    %4360 = vset.pattern.permute.xlu0 4
    %4361 = vperm.xlu0 %4360, %v4107
    %v4362 = vpop.permute.xlu0 %4361
    %4364 = vset.pattern.permute.xlu0 4
    %4365 = vperm.xlu0 %4364, %v4111
    %v4366 = vpop.permute.xlu0 %4365
    %4368 = vset.pattern.permute.xlu0 4
    %4369 = vperm.xlu0 %4368, %v4115
    %v4370 = vpop.permute.xlu0 %4369
    %4372 = vset.pattern.permute.xlu0 4
    %4373 = vperm.xlu0 %4372, %v4119
    %v4374 = vpop.permute.xlu0 %4373
    %4376 = vset.pattern.permute.xlu0 4
    %4377 = vperm.xlu0 %4376, %v4123
    %v4378 = vpop.permute.xlu0 %4377
    %4380 = vset.pattern.permute.xlu0 4
    %4381 = vperm.xlu0 %4380, %v4127
    %v4382 = vpop.permute.xlu0 %4381
    %4384 = vset.pattern.permute.xlu0 4
    %4385 = vperm.xlu0 %4384, %v4131
    %v4386 = vpop.permute.xlu0 %4385
    %4388 = vset.pattern.permute.xlu0 4
    %4389 = vperm.xlu0 %4388, %v4135
    %v4390 = vpop.permute.xlu0 %4389
    %v4392 = vmul.f32 %v4352, %v4362
    %v4393 = vmul.f32 %v4353, %v4366
    %v4394 = vmul.f32 %v4354, %v4370
    %v4395 = vmul.f32 %v4355, %v4374
    %v4396 = vmul.f32 %v4356, %v4378
    %v4397 = vmul.f32 %v4357, %v4382
    %v4398 = vmul.f32 %v4358, %v4386
    %v4399 = vmul.f32 %v4359, %v4390
    %4400 = vst.msk [vmem:[#allocation2 + $0x20] sm:$0xff] %vm94, %v4392
    %4401 = vst.msk [vmem:[#allocation2 + $0x70] sm:$0xff] %vm94, %v4393
    %4402 = vst.msk [vmem:[#allocation2 + $0xc0] sm:$0xff] %vm94, %v4394
    %4403 = vst.msk [vmem:[#allocation2 + $0x110] sm:$0xff] %vm94, %v4395
    %4404 = vst.msk [vmem:[#allocation2 + $0x160] sm:$0xff] %vm94, %v4396
    %4405 = vst.msk [vmem:[#allocation2 + $0x1b0] sm:$0xff] %vm94, %v4397
    %4406 = vst.msk [vmem:[#allocation2 + $0x200] sm:$0xff] %vm94, %v4398
    %4407 = vst.msk [vmem:[#allocation2 + $0x250] sm:$0xff] %vm94, %v4399
    %v4408 = vld [vmem:[#allocation2 + $0x28] sm:$0xff]
    %v4409 = vld [vmem:[#allocation2 + $0x78] sm:$0xff]
    %v4410 = vld [vmem:[#allocation2 + $0xc8] sm:$0xff]
    %v4411 = vld [vmem:[#allocation2 + $0x118] sm:$0xff]
    %v4412 = vld [vmem:[#allocation2 + $0x168] sm:$0xff]
    %v4413 = vld [vmem:[#allocation2 + $0x1b8] sm:$0xff]
    %v4414 = vld [vmem:[#allocation2 + $0x208] sm:$0xff]
    %v4415 = vld [vmem:[#allocation2 + $0x258] sm:$0xff]
    %4416 = vset.pattern.permute.xlu0 5
    %4417 = vperm.xlu0 %4416, %v4107
    %v4418 = vpop.permute.xlu0 %4417
    %4420 = vset.pattern.permute.xlu0 5
    %4421 = vperm.xlu0 %4420, %v4111
    %v4422 = vpop.permute.xlu0 %4421
    %4424 = vset.pattern.permute.xlu0 5
    %4425 = vperm.xlu0 %4424, %v4115
    %v4426 = vpop.permute.xlu0 %4425
    %4428 = vset.pattern.permute.xlu0 5
    %4429 = vperm.xlu0 %4428, %v4119
    %v4430 = vpop.permute.xlu0 %4429
    %4432 = vset.pattern.permute.xlu0 5
    %4433 = vperm.xlu0 %4432, %v4123
    %v4434 = vpop.permute.xlu0 %4433
    %4436 = vset.pattern.permute.xlu0 5
    %4437 = vperm.xlu0 %4436, %v4127
    %v4438 = vpop.permute.xlu0 %4437
    %4440 = vset.pattern.permute.xlu0 5
    %4441 = vperm.xlu0 %4440, %v4131
    %v4442 = vpop.permute.xlu0 %4441
    %4444 = vset.pattern.permute.xlu0 5
    %4445 = vperm.xlu0 %4444, %v4135
    %v4446 = vpop.permute.xlu0 %4445
    %v4448 = vmul.f32 %v4408, %v4418
    %v4449 = vmul.f32 %v4409, %v4422
    %v4450 = vmul.f32 %v4410, %v4426
    %v4451 = vmul.f32 %v4411, %v4430
    %v4452 = vmul.f32 %v4412, %v4434
    %v4453 = vmul.f32 %v4413, %v4438
    %v4454 = vmul.f32 %v4414, %v4442
    %v4455 = vmul.f32 %v4415, %v4446
    %4456 = vst.msk [vmem:[#allocation2 + $0x28] sm:$0xff] %vm94, %v4448
    %4457 = vst.msk [vmem:[#allocation2 + $0x78] sm:$0xff] %vm94, %v4449
    %4458 = vst.msk [vmem:[#allocation2 + $0xc8] sm:$0xff] %vm94, %v4450
    %4459 = vst.msk [vmem:[#allocation2 + $0x118] sm:$0xff] %vm94, %v4451
    %4460 = vst.msk [vmem:[#allocation2 + $0x168] sm:$0xff] %vm94, %v4452
    %4461 = vst.msk [vmem:[#allocation2 + $0x1b8] sm:$0xff] %vm94, %v4453
    %4462 = vst.msk [vmem:[#allocation2 + $0x208] sm:$0xff] %vm94, %v4454
    %4463 = vst.msk [vmem:[#allocation2 + $0x258] sm:$0xff] %vm94, %v4455
    %v4464 = vld [vmem:[#allocation2 + $0x30] sm:$0xff]
    %v4465 = vld [vmem:[#allocation2 + $0x80] sm:$0xff]
    %v4466 = vld [vmem:[#allocation2 + $0xd0] sm:$0xff]
    %v4467 = vld [vmem:[#allocation2 + $0x120] sm:$0xff]
    %v4468 = vld [vmem:[#allocation2 + $0x170] sm:$0xff]
    %v4469 = vld [vmem:[#allocation2 + $0x1c0] sm:$0xff]
    %v4470 = vld [vmem:[#allocation2 + $0x210] sm:$0xff]
    %v4471 = vld [vmem:[#allocation2 + $0x260] sm:$0xff]
    %4472 = vset.pattern.permute.xlu0 6
    %4473 = vperm.xlu0 %4472, %v4107
    %v4474 = vpop.permute.xlu0 %4473
    %4476 = vset.pattern.permute.xlu0 6
    %4477 = vperm.xlu0 %4476, %v4111
    %v4478 = vpop.permute.xlu0 %4477
    %4480 = vset.pattern.permute.xlu0 6
    %4481 = vperm.xlu0 %4480, %v4115
    %v4482 = vpop.permute.xlu0 %4481
    %4484 = vset.pattern.permute.xlu0 6
    %4485 = vperm.xlu0 %4484, %v4119
    %v4486 = vpop.permute.xlu0 %4485
    %4488 = vset.pattern.permute.xlu0 6
    %4489 = vperm.xlu0 %4488, %v4123
    %v4490 = vpop.permute.xlu0 %4489
    %4492 = vset.pattern.permute.xlu0 6
    %4493 = vperm.xlu0 %4492, %v4127
    %v4494 = vpop.permute.xlu0 %4493
    %4496 = vset.pattern.permute.xlu0 6
    %4497 = vperm.xlu0 %4496, %v4131
    %v4498 = vpop.permute.xlu0 %4497
    %4500 = vset.pattern.permute.xlu0 6
    %4501 = vperm.xlu0 %4500, %v4135
    %v4502 = vpop.permute.xlu0 %4501
    %v4504 = vmul.f32 %v4464, %v4474
    %v4505 = vmul.f32 %v4465, %v4478
    %v4506 = vmul.f32 %v4466, %v4482
    %v4507 = vmul.f32 %v4467, %v4486
    %v4508 = vmul.f32 %v4468, %v4490
    %v4509 = vmul.f32 %v4469, %v4494
    %v4510 = vmul.f32 %v4470, %v4498
    %v4511 = vmul.f32 %v4471, %v4502
    %4512 = vst.msk [vmem:[#allocation2 + $0x30] sm:$0xff] %vm94, %v4504
    %4513 = vst.msk [vmem:[#allocation2 + $0x80] sm:$0xff] %vm94, %v4505
    %4514 = vst.msk [vmem:[#allocation2 + $0xd0] sm:$0xff] %vm94, %v4506
    %4515 = vst.msk [vmem:[#allocation2 + $0x120] sm:$0xff] %vm94, %v4507
    %4516 = vst.msk [vmem:[#allocation2 + $0x170] sm:$0xff] %vm94, %v4508
    %4517 = vst.msk [vmem:[#allocation2 + $0x1c0] sm:$0xff] %vm94, %v4509
    %4518 = vst.msk [vmem:[#allocation2 + $0x210] sm:$0xff] %vm94, %v4510
    %4519 = vst.msk [vmem:[#allocation2 + $0x260] sm:$0xff] %vm94, %v4511
    %v4520 = vld [vmem:[#allocation2 + $0x38] sm:$0xff]
    %v4521 = vld [vmem:[#allocation2 + $0x88] sm:$0xff]
    %v4522 = vld [vmem:[#allocation2 + $0xd8] sm:$0xff]
    %v4523 = vld [vmem:[#allocation2 + $0x128] sm:$0xff]
    %v4524 = vld [vmem:[#allocation2 + $0x178] sm:$0xff]
    %v4525 = vld [vmem:[#allocation2 + $0x1c8] sm:$0xff]
    %v4526 = vld [vmem:[#allocation2 + $0x218] sm:$0xff]
    %v4527 = vld [vmem:[#allocation2 + $0x268] sm:$0xff]
    %4528 = vset.pattern.permute.xlu0 7
    %4529 = vperm.xlu0 %4528, %v4107
    %v4530 = vpop.permute.xlu0 %4529
    %4532 = vset.pattern.permute.xlu0 7
    %4533 = vperm.xlu0 %4532, %v4111
    %v4534 = vpop.permute.xlu0 %4533
    %4536 = vset.pattern.permute.xlu0 7
    %4537 = vperm.xlu0 %4536, %v4115
    %v4538 = vpop.permute.xlu0 %4537
    %4540 = vset.pattern.permute.xlu0 7
    %4541 = vperm.xlu0 %4540, %v4119
    %v4542 = vpop.permute.xlu0 %4541
    %4544 = vset.pattern.permute.xlu0 7
    %4545 = vperm.xlu0 %4544, %v4123
    %v4546 = vpop.permute.xlu0 %4545
    %4548 = vset.pattern.permute.xlu0 7
    %4549 = vperm.xlu0 %4548, %v4127
    %v4550 = vpop.permute.xlu0 %4549
    %4552 = vset.pattern.permute.xlu0 7
    %4553 = vperm.xlu0 %4552, %v4131
    %v4554 = vpop.permute.xlu0 %4553
    %4556 = vset.pattern.permute.xlu0 7
    %4557 = vperm.xlu0 %4556, %v4135
    %v4558 = vpop.permute.xlu0 %4557
    %v4560 = vmul.f32 %v4520, %v4530
    %v4561 = vmul.f32 %v4521, %v4534
    %v4562 = vmul.f32 %v4522, %v4538
    %v4563 = vmul.f32 %v4523, %v4542
    %v4564 = vmul.f32 %v4524, %v4546
    %v4565 = vmul.f32 %v4525, %v4550
    %v4566 = vmul.f32 %v4526, %v4554
    %v4567 = vmul.f32 %v4527, %v4558
    %4568 = vst.msk [vmem:[#allocation2 + $0x38] sm:$0xff] %vm94, %v4560
    %4569 = vst.msk [vmem:[#allocation2 + $0x88] sm:$0xff] %vm94, %v4561
    %4570 = vst.msk [vmem:[#allocation2 + $0xd8] sm:$0xff] %vm94, %v4562
    %4571 = vst.msk [vmem:[#allocation2 + $0x128] sm:$0xff] %vm94, %v4563
    %4572 = vst.msk [vmem:[#allocation2 + $0x178] sm:$0xff] %vm94, %v4564
    %4573 = vst.msk [vmem:[#allocation2 + $0x1c8] sm:$0xff] %vm94, %v4565
    %4574 = vst.msk [vmem:[#allocation2 + $0x218] sm:$0xff] %vm94, %v4566
    %4575 = vst.msk [vmem:[#allocation2 + $0x268] sm:$0xff] %vm94, %v4567
    %v4576 = vld [vmem:[%s6] sm:$0xff]
    %v4577 = vld [vmem:[%s6 + $0x8] sm:$0xff]
    %v4578 = vld [vmem:[%s6 + $0x10] sm:$0xff]
    %v4579 = vld [vmem:[%s6 + $0x18] sm:$0xff]
    %v4580 = vld [vmem:[#allocation2] sm:$0xff]
    %v4581 = vld [vmem:[#allocation2 + $0x8] sm:$0xff]
    %v4582 = vld [vmem:[#allocation2 + $0x10] sm:$0xff]
    %v4583 = vld [vmem:[#allocation2 + $0x18] sm:$0xff]
    %v4584 = vld [vmem:[#allocation2 + $0x20] sm:$0xff]
    %v4585 = vld [vmem:[#allocation2 + $0x28] sm:$0xff]
    %v4586 = vld [vmem:[#allocation2 + $0x30] sm:$0xff]
    %v4587 = vld [vmem:[#allocation2 + $0x38] sm:$0xff]
    %v4588 = vld [vmem:[#allocation2 + $0x40] sm:$0xff]
    %v4589 = vld [vmem:[#allocation2 + $0x48] sm:$0xff]
    %4591 = vset.pattern.permute.xlu0 80
    %4592 = vperm.xlu0 %4591, %v4576
    %v4593 = vpop.permute.xlu0 %4592
    %4596 = vset.pattern.permute.xlu0 80
    %4597 = vperm.xlu0 %4596, %v4577
    %v4598 = vpop.permute.xlu0 %4597
    %4601 = vset.pattern.permute.xlu0 80
    %4602 = vperm.xlu0 %4601, %v4578
    %v4603 = vpop.permute.xlu0 %4602
    %4606 = vset.pattern.permute.xlu0 80
    %4607 = vperm.xlu0 %4606, %v4579
    %v4608 = vpop.permute.xlu0 %4607
    %vm4610 = vcmask 654336
    %v4611 = vsel %vm4610, %v4576, 0
    %v4613 = vsel %vm4610, %v4577, 0
    %v4615 = vsel %vm4610, %v4578, 0
    %v4617 = vsel %vm4610, %v4579, 0
    %4619 = vmatprep.subr.mxu0 0.0
    %4620 = vmatpush1.msra.mxu0 %v4580
    %4621 = vmatprep.subr.mxu0 0.0
    %4622 = vmatpush1.msra.mxu0 %v4581
    %4623 = vmatprep.subr.mxu0 0.0
    %4624 = vmatpush1.msra.mxu0 %v4582
    %4625 = vmatprep.subr.mxu0 0.0
    %4626 = vmatpush1.msra.mxu0 %v4583
    %4627 = vmatprep.subr.mxu0 0.0
    %4628 = vmatpush1.msra.mxu0 %v4584
    %4629 = vmatprep.subr.mxu0 0.0
    %4630 = vmatpush1.msra.mxu0 %v4585
    %4631 = vmatprep.subr.mxu0 0.0
    %4632 = vmatpush1.msra.mxu0 %v4586
    %4633 = vmatprep.subr.mxu0 0.0
    %4634 = vmatpush1.msra.mxu0 %v4587
    %4635 = vmatprep.subr.mxu0 0.0
    %4636 = vmatpush1.msra.mxu0 %v4588
    %4637 = vmatprep.subr.mxu0 0.0
    %4638 = vmatpush1.msra.mxu0 %v4589
    %4639 = vmatprep.subr.mxu0 0.0
    %4640 = vmatpush1.msra.mxu0 0.0
    %4641 = vmatprep.subr.mxu0 0.0
    %4642 = vmatpush1.msra.mxu0 0.0
    %4643 = vmatprep.subr.mxu0 0.0
    %4644 = vmatpush1.msra.mxu0 0.0
    %4645 = vmatprep.subr.mxu0 0.0
    %4646 = vmatpush1.msra.mxu0 0.0
    %4647 = vmatprep.subr.mxu0 0.0
    %4648 = vmatpush1.msra.mxu0 0.0
    %4649 = vmatprep.subr.mxu0 0.0
    %4650 = vmatpush1.msra.mxu0 0.0
    %4651 = vmatprep.subr.mxu0 0.0
    %4652 = vmatpush1.msra.mxu0 0.0
    %4653 = vmatprep.subr.mxu0 0.0
    %4654 = vmatpush1.msra.mxu0 0.0
    %4655 = vmatprep.subr.mxu0 0.0
    %4656 = vmatpush1.msra.mxu0 0.0
    %4657 = vmatprep.subr.mxu0 0.0
    %4658 = vmatpush1.msra.mxu0 0.0
    %4659 = vmatprep.subr.mxu0 0.0
    %4660 = vmatpush1.msra.mxu0 0.0
    %4661 = vmatprep.subr.mxu0 0.0
    %4662 = vmatpush1.msra.mxu0 0.0
    %4663 = vmatprep.subr.mxu0 0.0
    %4664 = vmatpush1.msra.mxu0 0.0
    %4665 = vmatprep.subr.mxu0 0.0
    %4666 = vmatpush1.msra.mxu0 0.0
    %4667 = vmatprep.subr.mxu0 0.0
    %4668 = vmatpush1.msra.mxu0 0.0
    %4669 = vmatprep.subr.mxu0 0.0
    %4670 = vmatpush1.msra.mxu0 0.0
    %4671 = vmatprep.subr.mxu0 0.0
    %4672 = vmatpush1.msra.mxu0 0.0
    %4673 = vmatprep.subr.mxu0 0.0
    %4674 = vmatpush1.msra.mxu0 0.0
    %4675 = vmatprep.subr.mxu0 0.0
    %4676 = vmatpush1.msra.mxu0 0.0
    %4677 = vmatprep.subr.mxu0 0.0
    %4678 = vmatpush1.msra.mxu0 0.0
    %4679 = vmatprep.subr.mxu0 0.0
    %4680 = vmatpush1.msra.mxu0 0.0
    %4681 = vmatprep.subr.mxu0 0.0
    %4682 = vmatpush1.msra.mxu0 0.0
    %4683 = vmatprep.mubr.f32.mxu0 0.0
    %4684 = vmatmul.mubr.f32.gmra.mrb[0].mxu0 %v4611
    %v4685 = vpop.f32.mrb[0].mxu0
    %v4686 = vadd.f32 %v4593, %v4685
    %v4687 = vpop.f32.mrb[0].mxu0
    %4688 = vmatprep.mubr.f32.mxu0 0.0
    %4689 = vmatmul.mubr.f32.gmra.mrb[0].mxu0 %v4613
    %v4690 = vpop.f32.mrb[0].mxu0
    %v4691 = vadd.f32 %v4598, %v4690
    %v4692 = vpop.f32.mrb[0].mxu0
    %4693 = vmatprep.mubr.f32.mxu0 0.0
    %4694 = vmatmul.mubr.f32.gmra.mrb[0].mxu0 %v4615
    %v4695 = vpop.f32.mrb[0].mxu0
    %v4696 = vadd.f32 %v4603, %v4695
    %v4697 = vpop.f32.mrb[0].mxu0
    %4698 = vmatprep.mubr.f32.mxu0 0.0
    %4699 = vmatmul.mubr.f32.gmra.mrb[0].mxu0 %v4617
    %v4700 = vpop.f32.mrb[0].mxu0
    %v4701 = vadd.f32 %v4608, %v4700
    %v4702 = vpop.f32.mrb[0].mxu0
    %4703 = vdwg.mxu0
    %v4704 = vmax.f32 %v4686, 0.0
    %v4705 = vmax.f32 %v4691, 0.0
    %v4706 = vmax.f32 %v4696, 0.0
    %v4707 = vmax.f32 %v4701, 0.0
    %4708 = vst.msk [vmem:[#allocation3] sm:$0xff] %vm94, %v4704
    %4709 = vst.msk [vmem:[#allocation3 + $0x8] sm:$0xff] %vm94, %v4705
    %4710 = vst.msk [vmem:[#allocation5] sm:$0xff] %vm94, %v4706
    %4711 = vst.msk [vmem:[#allocation5 + $0x8] sm:$0xff] %vm94, %v4707
    %s4712 = scalar_lea.vmem [#allocation2], 80
    %v4713 = vld [vmem:[%s4712] sm:$0xff]
    %v4714 = vld [vmem:[%s4712 + $0x8] sm:$0xff]
    %v4715 = vld [vmem:[%s4712 + $0x10] sm:$0xff]
    %v4716 = vld [vmem:[%s4712 + $0x18] sm:$0xff]
    %v4717 = vld [vmem:[%s4712 + $0x20] sm:$0xff]
    %v4718 = vld [vmem:[%s4712 + $0x28] sm:$0xff]
    %v4719 = vld [vmem:[%s4712 + $0x30] sm:$0xff]
    %v4720 = vld [vmem:[%s4712 + $0x38] sm:$0xff]
    %v4721 = vld [vmem:[%s4712 + $0x40] sm:$0xff]
    %v4722 = vld [vmem:[%s4712 + $0x48] sm:$0xff]
    %4723 = vmatprep.subr.mxu0 0.0
    %4724 = vmatpush1.msra.mxu0 %v4713
    %4725 = vmatprep.subr.mxu0 0.0
    %4726 = vmatpush1.msra.mxu0 %v4714
    %4727 = vmatprep.subr.mxu0 0.0
    %4728 = vmatpush1.msra.mxu0 %v4715
    %4729 = vmatprep.subr.mxu0 0.0
    %4730 = vmatpush1.msra.mxu0 %v4716
    %4731 = vmatprep.subr.mxu0 0.0
    %4732 = vmatpush1.msra.mxu0 %v4717
    %4733 = vmatprep.subr.mxu0 0.0
    %4734 = vmatpush1.msra.mxu0 %v4718
    %4735 = vmatprep.subr.mxu0 0.0
    %4736 = vmatpush1.msra.mxu0 %v4719
    %4737 = vmatprep.subr.mxu0 0.0
    %4738 = vmatpush1.msra.mxu0 %v4720
    %4739 = vmatprep.subr.mxu0 0.0
    %4740 = vmatpush1.msra.mxu0 %v4721
    %4741 = vmatprep.subr.mxu0 0.0
    %4742 = vmatpush1.msra.mxu0 %v4722
    %4743 = vmatprep.subr.mxu0 0.0
    %4744 = vmatpush1.msra.mxu0 0.0
    %4745 = vmatprep.subr.mxu0 0.0
    %4746 = vmatpush1.msra.mxu0 0.0
    %4747 = vmatprep.subr.mxu0 0.0
    %4748 = vmatpush1.msra.mxu0 0.0
    %4749 = vmatprep.subr.mxu0 0.0
    %4750 = vmatpush1.msra.mxu0 0.0
    %4751 = vmatprep.subr.mxu0 0.0
    %4752 = vmatpush1.msra.mxu0 0.0
    %4753 = vmatprep.subr.mxu0 0.0
    %4754 = vmatpush1.msra.mxu0 0.0
    %4755 = vmatprep.subr.mxu0 0.0
    %4756 = vmatpush1.msra.mxu0 0.0
    %4757 = vmatprep.subr.mxu0 0.0
    %4758 = vmatpush1.msra.mxu0 0.0
    %4759 = vmatprep.subr.mxu0 0.0
    %4760 = vmatpush1.msra.mxu0 0.0
    %4761 = vmatprep.subr.mxu0 0.0
    %4762 = vmatpush1.msra.mxu0 0.0
    %4763 = vmatprep.subr.mxu0 0.0
    %4764 = vmatpush1.msra.mxu0 0.0
    %4765 = vmatprep.subr.mxu0 0.0
    %4766 = vmatpush1.msra.mxu0 0.0
    %4767 = vmatprep.subr.mxu0 0.0
    %4768 = vmatpush1.msra.mxu0 0.0
    %4769 = vmatprep.subr.mxu0 0.0
    %4770 = vmatpush1.msra.mxu0 0.0
    %4771 = vmatprep.subr.mxu0 0.0
    %4772 = vmatpush1.msra.mxu0 0.0
    %4773 = vmatprep.subr.mxu0 0.0
    %4774 = vmatpush1.msra.mxu0 0.0
    %4775 = vmatprep.subr.mxu0 0.0
    %4776 = vmatpush1.msra.mxu0 0.0
    %4777 = vmatprep.subr.mxu0 0.0
    %4778 = vmatpush1.msra.mxu0 0.0
    %4779 = vmatprep.subr.mxu0 0.0
    %4780 = vmatpush1.msra.mxu0 0.0
    %4781 = vmatprep.subr.mxu0 0.0
    %4782 = vmatpush1.msra.mxu0 0.0
    %4783 = vmatprep.subr.mxu0 0.0
    %4784 = vmatpush1.msra.mxu0 0.0
    %4785 = vmatprep.subr.mxu0 0.0
    %4786 = vmatpush1.msra.mxu0 0.0
    %4787 = vmatprep.mubr.f32.mxu0 0.0
    %4788 = vmatmul.mubr.f32.gmra.mrb[0].mxu0 %v4611
    %v4789 = vpop.f32.mrb[0].mxu0
    %v4790 = vadd.f32 %v4593, %v4789
    %v4791 = vpop.f32.mrb[0].mxu0
    %4792 = vmatprep.mubr.f32.mxu0 0.0
    %4793 = vmatmul.mubr.f32.gmra.mrb[0].mxu0 %v4613
    %v4794 = vpop.f32.mrb[0].mxu0
    %v4795 = vadd.f32 %v4598, %v4794
    %v4796 = vpop.f32.mrb[0].mxu0
    %4797 = vmatprep.mubr.f32.mxu0 0.0
    %4798 = vmatmul.mubr.f32.gmra.mrb[0].mxu0 %v4615
    %v4799 = vpop.f32.mrb[0].mxu0
    %v4800 = vadd.f32 %v4603, %v4799
    %v4801 = vpop.f32.mrb[0].mxu0
    %4802 = vmatprep.mubr.f32.mxu0 0.0
    %4803 = vmatmul.mubr.f32.gmra.mrb[0].mxu0 %v4617
    %v4804 = vpop.f32.mrb[0].mxu0
    %v4805 = vadd.f32 %v4608, %v4804
    %v4806 = vpop.f32.mrb[0].mxu0
    %4807 = vdwg.mxu0
    %v4808 = vmax.f32 %v4790, 0.0
    %v4809 = vmax.f32 %v4795, 0.0
    %v4810 = vmax.f32 %v4800, 0.0
    %v4811 = vmax.f32 %v4805, 0.0
    %s4812 = scalar_lea.vmem [#allocation3], 16
    %4813 = vst.msk [vmem:[%s4812] sm:$0xff] %vm94, %v4808
    %4814 = vst.msk [vmem:[%s4812 + $0x8] sm:$0xff] %vm94, %v4809
    %s4815 = scalar_lea.vmem [#allocation5], 16
    %4816 = vst.msk [vmem:[%s4815] sm:$0xff] %vm94, %v4810
    %4817 = vst.msk [vmem:[%s4815 + $0x8] sm:$0xff] %vm94, %v4811
    %s4818 = scalar_lea.vmem [#allocation2], 160
    %v4819 = vld [vmem:[%s4818] sm:$0xff]
    %v4820 = vld [vmem:[%s4818 + $0x8] sm:$0xff]
    %v4821 = vld [vmem:[%s4818 + $0x10] sm:$0xff]
    %v4822 = vld [vmem:[%s4818 + $0x18] sm:$0xff]
    %v4823 = vld [vmem:[%s4818 + $0x20] sm:$0xff]
    %v4824 = vld [vmem:[%s4818 + $0x28] sm:$0xff]
    %v4825 = vld [vmem:[%s4818 + $0x30] sm:$0xff]
    %v4826 = vld [vmem:[%s4818 + $0x38] sm:$0xff]
    %v4827 = vld [vmem:[%s4818 + $0x40] sm:$0xff]
    %v4828 = vld [vmem:[%s4818 + $0x48] sm:$0xff]
    %4829 = vmatprep.subr.mxu0 0.0
    %4830 = vmatpush1.msra.mxu0 %v4819
    %4831 = vmatprep.subr.mxu0 0.0
    %4832 = vmatpush1.msra.mxu0 %v4820
    %4833 = vmatprep.subr.mxu0 0.0
    %4834 = vmatpush1.msra.mxu0 %v4821
    %4835 = vmatprep.subr.mxu0 0.0
    %4836 = vmatpush1.msra.mxu0 %v4822
    %4837 = vmatprep.subr.mxu0 0.0
    %4838 = vmatpush1.msra.mxu0 %v4823
    %4839 = vmatprep.subr.mxu0 0.0
    %4840 = vmatpush1.msra.mxu0 %v4824
    %4841 = vmatprep.subr.mxu0 0.0
    %4842 = vmatpush1.msra.mxu0 %v4825
    %4843 = vmatprep.subr.mxu0 0.0
    %4844 = vmatpush1.msra.mxu0 %v4826
    %4845 = vmatprep.subr.mxu0 0.0
    %4846 = vmatpush1.msra.mxu0 %v4827
    %4847 = vmatprep.subr.mxu0 0.0
    %4848 = vmatpush1.msra.mxu0 %v4828
    %4849 = vmatprep.subr.mxu0 0.0
    %4850 = vmatpush1.msra.mxu0 0.0
    %4851 = vmatprep.subr.mxu0 0.0
    %4852 = vmatpush1.msra.mxu0 0.0
    %4853 = vmatprep.subr.mxu0 0.0
    %4854 = vmatpush1.msra.mxu0 0.0
    %4855 = vmatprep.subr.mxu0 0.0
    %4856 = vmatpush1.msra.mxu0 0.0
    %4857 = vmatprep.subr.mxu0 0.0
    %4858 = vmatpush1.msra.mxu0 0.0
    %4859 = vmatprep.subr.mxu0 0.0
    %4860 = vmatpush1.msra.mxu0 0.0
    %4861 = vmatprep.subr.mxu0 0.0
    %4862 = vmatpush1.msra.mxu0 0.0
    %4863 = vmatprep.subr.mxu0 0.0
    %4864 = vmatpush1.msra.mxu0 0.0
    %4865 = vmatprep.subr.mxu0 0.0
    %4866 = vmatpush1.msra.mxu0 0.0
    %4867 = vmatprep.subr.mxu0 0.0
    %4868 = vmatpush1.msra.mxu0 0.0
    %4869 = vmatprep.subr.mxu0 0.0
    %4870 = vmatpush1.msra.mxu0 0.0
    %4871 = vmatprep.subr.mxu0 0.0
    %4872 = vmatpush1.msra.mxu0 0.0
    %4873 = vmatprep.subr.mxu0 0.0
    %4874 = vmatpush1.msra.mxu0 0.0
    %4875 = vmatprep.subr.mxu0 0.0
    %4876 = vmatpush1.msra.mxu0 0.0
    %4877 = vmatprep.subr.mxu0 0.0
    %4878 = vmatpush1.msra.mxu0 0.0
    %4879 = vmatprep.subr.mxu0 0.0
    %4880 = vmatpush1.msra.mxu0 0.0
    %4881 = vmatprep.subr.mxu0 0.0
    %4882 = vmatpush1.msra.mxu0 0.0
    %4883 = vmatprep.subr.mxu0 0.0
    %4884 = vmatpush1.msra.mxu0 0.0
    %4885 = vmatprep.subr.mxu0 0.0
    %4886 = vmatpush1.msra.mxu0 0.0
    %4887 = vmatprep.subr.mxu0 0.0
    %4888 = vmatpush1.msra.mxu0 0.0
    %4889 = vmatprep.subr.mxu0 0.0
    %4890 = vmatpush1.msra.mxu0 0.0
    %4891 = vmatprep.subr.mxu0 0.0
    %4892 = vmatpush1.msra.mxu0 0.0
    %4893 = vmatprep.mubr.f32.mxu0 0.0
    %4894 = vmatmul.mubr.f32.gmra.mrb[0].mxu0 %v4611
    %v4895 = vpop.f32.mrb[0].mxu0
    %v4896 = vadd.f32 %v4593, %v4895
    %v4897 = vpop.f32.mrb[0].mxu0
    %4898 = vmatprep.mubr.f32.mxu0 0.0
    %4899 = vmatmul.mubr.f32.gmra.mrb[0].mxu0 %v4613
    %v4900 = vpop.f32.mrb[0].mxu0
    %v4901 = vadd.f32 %v4598, %v4900
    %v4902 = vpop.f32.mrb[0].mxu0
    %4903 = vmatprep.mubr.f32.mxu0 0.0
    %4904 = vmatmul.mubr.f32.gmra.mrb[0].mxu0 %v4615
    %v4905 = vpop.f32.mrb[0].mxu0
    %v4906 = vadd.f32 %v4603, %v4905
    %v4907 = vpop.f32.mrb[0].mxu0
    %4908 = vmatprep.mubr.f32.mxu0 0.0
    %4909 = vmatmul.mubr.f32.gmra.mrb[0].mxu0 %v4617
    %v4910 = vpop.f32.mrb[0].mxu0
    %v4911 = vadd.f32 %v4608, %v4910
    %v4912 = vpop.f32.mrb[0].mxu0
    %4913 = vdwg.mxu0
    %v4914 = vmax.f32 %v4896, 0.0
    %v4915 = vmax.f32 %v4901, 0.0
    %v4916 = vmax.f32 %v4906, 0.0
    %v4917 = vmax.f32 %v4911, 0.0
    %s4918 = scalar_lea.vmem [#allocation3], 32
    %4919 = vst.msk [vmem:[%s4918] sm:$0xff] %vm94, %v4914
    %4920 = vst.msk [vmem:[%s4918 + $0x8] sm:$0xff] %vm94, %v4915
    %s4921 = scalar_lea.vmem [#allocation5], 32
    %4922 = vst.msk [vmem:[%s4921] sm:$0xff] %vm94, %v4916
    %4923 = vst.msk [vmem:[%s4921 + $0x8] sm:$0xff] %vm94, %v4917
    %s4924 = scalar_lea.vmem [#allocation2], 240
    %v4925 = vld [vmem:[%s4924] sm:$0xff]
    %v4926 = vld [vmem:[%s4924 + $0x8] sm:$0xff]
    %v4927 = vld [vmem:[%s4924 + $0x10] sm:$0xff]
    %v4928 = vld [vmem:[%s4924 + $0x18] sm:$0xff]
    %v4929 = vld [vmem:[%s4924 + $0x20] sm:$0xff]
    %v4930 = vld [vmem:[%s4924 + $0x28] sm:$0xff]
    %v4931 = vld [vmem:[%s4924 + $0x30] sm:$0xff]
    %v4932 = vld [vmem:[%s4924 + $0x38] sm:$0xff]
    %v4933 = vld [vmem:[%s4924 + $0x40] sm:$0xff]
    %v4934 = vld [vmem:[%s4924 + $0x48] sm:$0xff]
    %4935 = vmatprep.subr.mxu0 0.0
    %4936 = vmatpush1.msra.mxu0 %v4925
    %4937 = vmatprep.subr.mxu0 0.0
    %4938 = vmatpush1.msra.mxu0 %v4926
    %4939 = vmatprep.subr.mxu0 0.0
    %4940 = vmatpush1.msra.mxu0 %v4927
    %4941 = vmatprep.subr.mxu0 0.0
    %4942 = vmatpush1.msra.mxu0 %v4928
    %4943 = vmatprep.subr.mxu0 0.0
    %4944 = vmatpush1.msra.mxu0 %v4929
    %4945 = vmatprep.subr.mxu0 0.0
    %4946 = vmatpush1.msra.mxu0 %v4930
    %4947 = vmatprep.subr.mxu0 0.0
    %4948 = vmatpush1.msra.mxu0 %v4931
    %4949 = vmatprep.subr.mxu0 0.0
    %4950 = vmatpush1.msra.mxu0 %v4932
    %4951 = vmatprep.subr.mxu0 0.0
    %4952 = vmatpush1.msra.mxu0 %v4933
    %4953 = vmatprep.subr.mxu0 0.0
    %4954 = vmatpush1.msra.mxu0 %v4934
    %4955 = vmatprep.subr.mxu0 0.0
    %4956 = vmatpush1.msra.mxu0 0.0
    %4957 = vmatprep.subr.mxu0 0.0
    %4958 = vmatpush1.msra.mxu0 0.0
    %4959 = vmatprep.subr.mxu0 0.0
    %4960 = vmatpush1.msra.mxu0 0.0
    %4961 = vmatprep.subr.mxu0 0.0
    %4962 = vmatpush1.msra.mxu0 0.0
    %4963 = vmatprep.subr.mxu0 0.0
    %4964 = vmatpush1.msra.mxu0 0.0
    %4965 = vmatprep.subr.mxu0 0.0
    %4966 = vmatpush1.msra.mxu0 0.0
    %4967 = vmatprep.subr.mxu0 0.0
    %4968 = vmatpush1.msra.mxu0 0.0
    %4969 = vmatprep.subr.mxu0 0.0
    %4970 = vmatpush1.msra.mxu0 0.0
    %4971 = vmatprep.subr.mxu0 0.0
    %4972 = vmatpush1.msra.mxu0 0.0
    %4973 = vmatprep.subr.mxu0 0.0
    %4974 = vmatpush1.msra.mxu0 0.0
    %4975 = vmatprep.subr.mxu0 0.0
    %4976 = vmatpush1.msra.mxu0 0.0
    %4977 = vmatprep.subr.mxu0 0.0
    %4978 = vmatpush1.msra.mxu0 0.0
    %4979 = vmatprep.subr.mxu0 0.0
    %4980 = vmatpush1.msra.mxu0 0.0
    %4981 = vmatprep.subr.mxu0 0.0
    %4982 = vmatpush1.msra.mxu0 0.0
    %4983 = vmatprep.subr.mxu0 0.0
    %4984 = vmatpush1.msra.mxu0 0.0
    %4985 = vmatprep.subr.mxu0 0.0
    %4986 = vmatpush1.msra.mxu0 0.0
    %4987 = vmatprep.subr.mxu0 0.0
    %4988 = vmatpush1.msra.mxu0 0.0
    %4989 = vmatprep.subr.mxu0 0.0
    %4990 = vmatpush1.msra.mxu0 0.0
    %4991 = vmatprep.subr.mxu0 0.0
    %4992 = vmatpush1.msra.mxu0 0.0
    %4993 = vmatprep.subr.mxu0 0.0
    %4994 = vmatpush1.msra.mxu0 0.0
    %4995 = vmatprep.subr.mxu0 0.0
    %4996 = vmatpush1.msra.mxu0 0.0
    %4997 = vmatprep.subr.mxu0 0.0
    %4998 = vmatpush1.msra.mxu0 0.0
    %4999 = vmatprep.mubr.f32.mxu0 0.0
    %5000 = vmatmul.mubr.f32.gmra.mrb[0].mxu0 %v4611
    %v5001 = vpop.f32.mrb[0].mxu0
    %v5002 = vadd.f32 %v4593, %v5001
    %v5003 = vpop.f32.mrb[0].mxu0
    %5004 = vmatprep.mubr.f32.mxu0 0.0
    %5005 = vmatmul.mubr.f32.gmra.mrb[0].mxu0 %v4613
    %v5006 = vpop.f32.mrb[0].mxu0
    %v5007 = vadd.f32 %v4598, %v5006
    %v5008 = vpop.f32.mrb[0].mxu0
    %5009 = vmatprep.mubr.f32.mxu0 0.0
    %5010 = vmatmul.mubr.f32.gmra.mrb[0].mxu0 %v4615
    %v5011 = vpop.f32.mrb[0].mxu0
    %v5012 = vadd.f32 %v4603, %v5011
    %v5013 = vpop.f32.mrb[0].mxu0
    %5014 = vmatprep.mubr.f32.mxu0 0.0
    %5015 = vmatmul.mubr.f32.gmra.mrb[0].mxu0 %v4617
    %v5016 = vpop.f32.mrb[0].mxu0
    %v5017 = vadd.f32 %v4608, %v5016
    %v5018 = vpop.f32.mrb[0].mxu0
    %5019 = vdwg.mxu0
    %v5020 = vmax.f32 %v5002, 0.0
    %v5021 = vmax.f32 %v5007, 0.0
    %v5022 = vmax.f32 %v5012, 0.0
    %v5023 = vmax.f32 %v5017, 0.0
    %s5024 = scalar_lea.vmem [#allocation3], 48
    %5025 = vst.msk [vmem:[%s5024] sm:$0xff] %vm94, %v5020
    %5026 = vst.msk [vmem:[%s5024 + $0x8] sm:$0xff] %vm94, %v5021
    %s5027 = scalar_lea.vmem [#allocation5], 48
    %5028 = vst.msk [vmem:[%s5027] sm:$0xff] %vm94, %v5022
    %5029 = vst.msk [vmem:[%s5027 + $0x8] sm:$0xff] %vm94, %v5023
    %s5030 = scalar_lea.vmem [#allocation2], 320
    %v5031 = vld [vmem:[%s5030] sm:$0xff]
    %v5032 = vld [vmem:[%s5030 + $0x8] sm:$0xff]
    %v5033 = vld [vmem:[%s5030 + $0x10] sm:$0xff]
    %v5034 = vld [vmem:[%s5030 + $0x18] sm:$0xff]
    %v5035 = vld [vmem:[%s5030 + $0x20] sm:$0xff]
    %v5036 = vld [vmem:[%s5030 + $0x28] sm:$0xff]
    %v5037 = vld [vmem:[%s5030 + $0x30] sm:$0xff]
    %v5038 = vld [vmem:[%s5030 + $0x38] sm:$0xff]
    %v5039 = vld [vmem:[%s5030 + $0x40] sm:$0xff]
    %v5040 = vld [vmem:[%s5030 + $0x48] sm:$0xff]
    %5041 = vmatprep.subr.mxu0 0.0
    %5042 = vmatpush1.msra.mxu0 %v5031
    %5043 = vmatprep.subr.mxu0 0.0
    %5044 = vmatpush1.msra.mxu0 %v5032
    %5045 = vmatprep.subr.mxu0 0.0
    %5046 = vmatpush1.msra.mxu0 %v5033
    %5047 = vmatprep.subr.mxu0 0.0
    %5048 = vmatpush1.msra.mxu0 %v5034
    %5049 = vmatprep.subr.mxu0 0.0
    %5050 = vmatpush1.msra.mxu0 %v5035
    %5051 = vmatprep.subr.mxu0 0.0
    %5052 = vmatpush1.msra.mxu0 %v5036
    %5053 = vmatprep.subr.mxu0 0.0
    %5054 = vmatpush1.msra.mxu0 %v5037
    %5055 = vmatprep.subr.mxu0 0.0
    %5056 = vmatpush1.msra.mxu0 %v5038
    %5057 = vmatprep.subr.mxu0 0.0
    %5058 = vmatpush1.msra.mxu0 %v5039
    %5059 = vmatprep.subr.mxu0 0.0
    %5060 = vmatpush1.msra.mxu0 %v5040
    %5061 = vmatprep.subr.mxu0 0.0
    %5062 = vmatpush1.msra.mxu0 0.0
    %5063 = vmatprep.subr.mxu0 0.0
    %5064 = vmatpush1.msra.mxu0 0.0
    %5065 = vmatprep.subr.mxu0 0.0
    %5066 = vmatpush1.msra.mxu0 0.0
    %5067 = vmatprep.subr.mxu0 0.0
    %5068 = vmatpush1.msra.mxu0 0.0
    %5069 = vmatprep.subr.mxu0 0.0
    %5070 = vmatpush1.msra.mxu0 0.0
    %5071 = vmatprep.subr.mxu0 0.0
    %5072 = vmatpush1.msra.mxu0 0.0
    %5073 = vmatprep.subr.mxu0 0.0
    %5074 = vmatpush1.msra.mxu0 0.0
    %5075 = vmatprep.subr.mxu0 0.0
    %5076 = vmatpush1.msra.mxu0 0.0
    %5077 = vmatprep.subr.mxu0 0.0
    %5078 = vmatpush1.msra.mxu0 0.0
    %5079 = vmatprep.subr.mxu0 0.0
    %5080 = vmatpush1.msra.mxu0 0.0
    %5081 = vmatprep.subr.mxu0 0.0
    %5082 = vmatpush1.msra.mxu0 0.0
    %5083 = vmatprep.subr.mxu0 0.0
    %5084 = vmatpush1.msra.mxu0 0.0
    %5085 = vmatprep.subr.mxu0 0.0
    %5086 = vmatpush1.msra.mxu0 0.0
    %5087 = vmatprep.subr.mxu0 0.0
    %5088 = vmatpush1.msra.mxu0 0.0
    %5089 = vmatprep.subr.mxu0 0.0
    %5090 = vmatpush1.msra.mxu0 0.0
    %5091 = vmatprep.subr.mxu0 0.0
    %5092 = vmatpush1.msra.mxu0 0.0
    %5093 = vmatprep.subr.mxu0 0.0
    %5094 = vmatpush1.msra.mxu0 0.0
    %5095 = vmatprep.subr.mxu0 0.0
    %5096 = vmatpush1.msra.mxu0 0.0
    %5097 = vmatprep.subr.mxu0 0.0
    %5098 = vmatpush1.msra.mxu0 0.0
    %5099 = vmatprep.subr.mxu0 0.0
    %5100 = vmatpush1.msra.mxu0 0.0
    %5101 = vmatprep.subr.mxu0 0.0
    %5102 = vmatpush1.msra.mxu0 0.0
    %5103 = vmatprep.subr.mxu0 0.0
    %5104 = vmatpush1.msra.mxu0 0.0
    %5105 = vmatprep.mubr.f32.mxu0 0.0
    %5106 = vmatmul.mubr.f32.gmra.mrb[0].mxu0 %v4611
    %v5107 = vpop.f32.mrb[0].mxu0
    %v5108 = vadd.f32 %v4593, %v5107
    %v5109 = vpop.f32.mrb[0].mxu0
    %5110 = vmatprep.mubr.f32.mxu0 0.0
    %5111 = vmatmul.mubr.f32.gmra.mrb[0].mxu0 %v4613
    %v5112 = vpop.f32.mrb[0].mxu0
    %v5113 = vadd.f32 %v4598, %v5112
    %v5114 = vpop.f32.mrb[0].mxu0
    %5115 = vmatprep.mubr.f32.mxu0 0.0
    %5116 = vmatmul.mubr.f32.gmra.mrb[0].mxu0 %v4615
    %v5117 = vpop.f32.mrb[0].mxu0
    %v5118 = vadd.f32 %v4603, %v5117
    %v5119 = vpop.f32.mrb[0].mxu0
    %5120 = vmatprep.mubr.f32.mxu0 0.0
    %5121 = vmatmul.mubr.f32.gmra.mrb[0].mxu0 %v4617
    %v5122 = vpop.f32.mrb[0].mxu0
    %v5123 = vadd.f32 %v4608, %v5122
    %v5124 = vpop.f32.mrb[0].mxu0
    %5125 = vdwg.mxu0
    %v5126 = vmax.f32 %v5108, 0.0
    %v5127 = vmax.f32 %v5113, 0.0
    %v5128 = vmax.f32 %v5118, 0.0
    %v5129 = vmax.f32 %v5123, 0.0
    %s5130 = scalar_lea.vmem [#allocation3], 64
    %5131 = vst.msk [vmem:[%s5130] sm:$0xff] %vm94, %v5126
    %5132 = vst.msk [vmem:[%s5130 + $0x8] sm:$0xff] %vm94, %v5127
    %s5133 = scalar_lea.vmem [#allocation5], 64
    %5134 = vst.msk [vmem:[%s5133] sm:$0xff] %vm94, %v5128
    %5135 = vst.msk [vmem:[%s5133 + $0x8] sm:$0xff] %vm94, %v5129
    %s5136 = scalar_lea.vmem [#allocation2], 400
    %v5137 = vld [vmem:[%s5136] sm:$0xff]
    %v5138 = vld [vmem:[%s5136 + $0x8] sm:$0xff]
    %v5139 = vld [vmem:[%s5136 + $0x10] sm:$0xff]
    %v5140 = vld [vmem:[%s5136 + $0x18] sm:$0xff]
    %v5141 = vld [vmem:[%s5136 + $0x20] sm:$0xff]
    %v5142 = vld [vmem:[%s5136 + $0x28] sm:$0xff]
    %v5143 = vld [vmem:[%s5136 + $0x30] sm:$0xff]
    %v5144 = vld [vmem:[%s5136 + $0x38] sm:$0xff]
    %v5145 = vld [vmem:[%s5136 + $0x40] sm:$0xff]
    %v5146 = vld [vmem:[%s5136 + $0x48] sm:$0xff]
    %5147 = vmatprep.subr.mxu0 0.0
    %5148 = vmatpush1.msra.mxu0 %v5137
    %5149 = vmatprep.subr.mxu0 0.0
    %5150 = vmatpush1.msra.mxu0 %v5138
    %5151 = vmatprep.subr.mxu0 0.0
    %5152 = vmatpush1.msra.mxu0 %v5139
    %5153 = vmatprep.subr.mxu0 0.0
    %5154 = vmatpush1.msra.mxu0 %v5140
    %5155 = vmatprep.subr.mxu0 0.0
    %5156 = vmatpush1.msra.mxu0 %v5141
    %5157 = vmatprep.subr.mxu0 0.0
    %5158 = vmatpush1.msra.mxu0 %v5142
    %5159 = vmatprep.subr.mxu0 0.0
    %5160 = vmatpush1.msra.mxu0 %v5143
    %5161 = vmatprep.subr.mxu0 0.0
    %5162 = vmatpush1.msra.mxu0 %v5144
    %5163 = vmatprep.subr.mxu0 0.0
    %5164 = vmatpush1.msra.mxu0 %v5145
    %5165 = vmatprep.subr.mxu0 0.0
    %5166 = vmatpush1.msra.mxu0 %v5146
    %5167 = vmatprep.subr.mxu0 0.0
    %5168 = vmatpush1.msra.mxu0 0.0
    %5169 = vmatprep.subr.mxu0 0.0
    %5170 = vmatpush1.msra.mxu0 0.0
    %5171 = vmatprep.subr.mxu0 0.0
    %5172 = vmatpush1.msra.mxu0 0.0
    %5173 = vmatprep.subr.mxu0 0.0
    %5174 = vmatpush1.msra.mxu0 0.0
    %5175 = vmatprep.subr.mxu0 0.0
    %5176 = vmatpush1.msra.mxu0 0.0
    %5177 = vmatprep.subr.mxu0 0.0
    %5178 = vmatpush1.msra.mxu0 0.0
    %5179 = vmatprep.subr.mxu0 0.0
    %5180 = vmatpush1.msra.mxu0 0.0
    %5181 = vmatprep.subr.mxu0 0.0
    %5182 = vmatpush1.msra.mxu0 0.0
    %5183 = vmatprep.subr.mxu0 0.0
    %5184 = vmatpush1.msra.mxu0 0.0
    %5185 = vmatprep.subr.mxu0 0.0
    %5186 = vmatpush1.msra.mxu0 0.0
    %5187 = vmatprep.subr.mxu0 0.0
    %5188 = vmatpush1.msra.mxu0 0.0
    %5189 = vmatprep.subr.mxu0 0.0
    %5190 = vmatpush1.msra.mxu0 0.0
    %5191 = vmatprep.subr.mxu0 0.0
    %5192 = vmatpush1.msra.mxu0 0.0
    %5193 = vmatprep.subr.mxu0 0.0
    %5194 = vmatpush1.msra.mxu0 0.0
    %5195 = vmatprep.subr.mxu0 0.0
    %5196 = vmatpush1.msra.mxu0 0.0
    %5197 = vmatprep.subr.mxu0 0.0
    %5198 = vmatpush1.msra.mxu0 0.0
    %5199 = vmatprep.subr.mxu0 0.0
    %5200 = vmatpush1.msra.mxu0 0.0
    %5201 = vmatprep.subr.mxu0 0.0
    %5202 = vmatpush1.msra.mxu0 0.0
    %5203 = vmatprep.subr.mxu0 0.0
    %5204 = vmatpush1.msra.mxu0 0.0
    %5205 = vmatprep.subr.mxu0 0.0
    %5206 = vmatpush1.msra.mxu0 0.0
    %5207 = vmatprep.subr.mxu0 0.0
    %5208 = vmatpush1.msra.mxu0 0.0
    %5209 = vmatprep.subr.mxu0 0.0
    %5210 = vmatpush1.msra.mxu0 0.0
    %5211 = vmatprep.mubr.f32.mxu0 0.0
    %5212 = vmatmul.mubr.f32.gmra.mrb[0].mxu0 %v4611
    %v5213 = vpop.f32.mrb[0].mxu0
    %v5214 = vadd.f32 %v4593, %v5213
    %v5215 = vpop.f32.mrb[0].mxu0
    %5216 = vmatprep.mubr.f32.mxu0 0.0
    %5217 = vmatmul.mubr.f32.gmra.mrb[0].mxu0 %v4613
    %v5218 = vpop.f32.mrb[0].mxu0
    %v5219 = vadd.f32 %v4598, %v5218
    %v5220 = vpop.f32.mrb[0].mxu0
    %5221 = vmatprep.mubr.f32.mxu0 0.0
    %5222 = vmatmul.mubr.f32.gmra.mrb[0].mxu0 %v4615
    %v5223 = vpop.f32.mrb[0].mxu0
    %v5224 = vadd.f32 %v4603, %v5223
    %v5225 = vpop.f32.mrb[0].mxu0
    %5226 = vmatprep.mubr.f32.mxu0 0.0
    %5227 = vmatmul.mubr.f32.gmra.mrb[0].mxu0 %v4617
    %v5228 = vpop.f32.mrb[0].mxu0
    %v5229 = vadd.f32 %v4608, %v5228
    %v5230 = vpop.f32.mrb[0].mxu0
    %5231 = vdwg.mxu0
    %v5232 = vmax.f32 %v5214, 0.0
    %v5233 = vmax.f32 %v5219, 0.0
    %v5234 = vmax.f32 %v5224, 0.0
    %v5235 = vmax.f32 %v5229, 0.0
    %s5236 = scalar_lea.vmem [#allocation3], 80
    %5237 = vst.msk [vmem:[%s5236] sm:$0xff] %vm94, %v5232
    %5238 = vst.msk [vmem:[%s5236 + $0x8] sm:$0xff] %vm94, %v5233
    %s5239 = scalar_lea.vmem [#allocation5], 80
    %5240 = vst.msk [vmem:[%s5239] sm:$0xff] %vm94, %v5234
    %5241 = vst.msk [vmem:[%s5239 + $0x8] sm:$0xff] %vm94, %v5235
    %s5242 = scalar_lea.vmem [#allocation2], 480
    %v5243 = vld [vmem:[%s5242] sm:$0xff]
    %v5244 = vld [vmem:[%s5242 + $0x8] sm:$0xff]
    %v5245 = vld [vmem:[%s5242 + $0x10] sm:$0xff]
    %v5246 = vld [vmem:[%s5242 + $0x18] sm:$0xff]
    %v5247 = vld [vmem:[%s5242 + $0x20] sm:$0xff]
    %v5248 = vld [vmem:[%s5242 + $0x28] sm:$0xff]
    %v5249 = vld [vmem:[%s5242 + $0x30] sm:$0xff]
    %v5250 = vld [vmem:[%s5242 + $0x38] sm:$0xff]
    %v5251 = vld [vmem:[%s5242 + $0x40] sm:$0xff]
    %v5252 = vld [vmem:[%s5242 + $0x48] sm:$0xff]
    %5253 = vmatprep.subr.mxu0 0.0
    %5254 = vmatpush1.msra.mxu0 %v5243
    %5255 = vmatprep.subr.mxu0 0.0
    %5256 = vmatpush1.msra.mxu0 %v5244
    %5257 = vmatprep.subr.mxu0 0.0
    %5258 = vmatpush1.msra.mxu0 %v5245
    %5259 = vmatprep.subr.mxu0 0.0
    %5260 = vmatpush1.msra.mxu0 %v5246
    %5261 = vmatprep.subr.mxu0 0.0
    %5262 = vmatpush1.msra.mxu0 %v5247
    %5263 = vmatprep.subr.mxu0 0.0
    %5264 = vmatpush1.msra.mxu0 %v5248
    %5265 = vmatprep.subr.mxu0 0.0
    %5266 = vmatpush1.msra.mxu0 %v5249
    %5267 = vmatprep.subr.mxu0 0.0
    %5268 = vmatpush1.msra.mxu0 %v5250
    %5269 = vmatprep.subr.mxu0 0.0
    %5270 = vmatpush1.msra.mxu0 %v5251
    %5271 = vmatprep.subr.mxu0 0.0
    %5272 = vmatpush1.msra.mxu0 %v5252
    %5273 = vmatprep.subr.mxu0 0.0
    %5274 = vmatpush1.msra.mxu0 0.0
    %5275 = vmatprep.subr.mxu0 0.0
    %5276 = vmatpush1.msra.mxu0 0.0
    %5277 = vmatprep.subr.mxu0 0.0
    %5278 = vmatpush1.msra.mxu0 0.0
    %5279 = vmatprep.subr.mxu0 0.0
    %5280 = vmatpush1.msra.mxu0 0.0
    %5281 = vmatprep.subr.mxu0 0.0
    %5282 = vmatpush1.msra.mxu0 0.0
    %5283 = vmatprep.subr.mxu0 0.0
    %5284 = vmatpush1.msra.mxu0 0.0
    %5285 = vmatprep.subr.mxu0 0.0
    %5286 = vmatpush1.msra.mxu0 0.0
    %5287 = vmatprep.subr.mxu0 0.0
    %5288 = vmatpush1.msra.mxu0 0.0
    %5289 = vmatprep.subr.mxu0 0.0
    %5290 = vmatpush1.msra.mxu0 0.0
    %5291 = vmatprep.subr.mxu0 0.0
    %5292 = vmatpush1.msra.mxu0 0.0
    %5293 = vmatprep.subr.mxu0 0.0
    %5294 = vmatpush1.msra.mxu0 0.0
    %5295 = vmatprep.subr.mxu0 0.0
    %5296 = vmatpush1.msra.mxu0 0.0
    %5297 = vmatprep.subr.mxu0 0.0
    %5298 = vmatpush1.msra.mxu0 0.0
    %5299 = vmatprep.subr.mxu0 0.0
    %5300 = vmatpush1.msra.mxu0 0.0
    %5301 = vmatprep.subr.mxu0 0.0
    %5302 = vmatpush1.msra.mxu0 0.0
    %5303 = vmatprep.subr.mxu0 0.0
    %5304 = vmatpush1.msra.mxu0 0.0
    %5305 = vmatprep.subr.mxu0 0.0
    %5306 = vmatpush1.msra.mxu0 0.0
    %5307 = vmatprep.subr.mxu0 0.0
    %5308 = vmatpush1.msra.mxu0 0.0
    %5309 = vmatprep.subr.mxu0 0.0
    %5310 = vmatpush1.msra.mxu0 0.0
    %5311 = vmatprep.subr.mxu0 0.0
    %5312 = vmatpush1.msra.mxu0 0.0
    %5313 = vmatprep.subr.mxu0 0.0
    %5314 = vmatpush1.msra.mxu0 0.0
    %5315 = vmatprep.subr.mxu0 0.0
    %5316 = vmatpush1.msra.mxu0 0.0
    %5317 = vmatprep.mubr.f32.mxu0 0.0
    %5318 = vmatmul.mubr.f32.gmra.mrb[0].mxu0 %v4611
    %v5319 = vpop.f32.mrb[0].mxu0
    %v5320 = vadd.f32 %v4593, %v5319
    %v5321 = vpop.f32.mrb[0].mxu0
    %5322 = vmatprep.mubr.f32.mxu0 0.0
    %5323 = vmatmul.mubr.f32.gmra.mrb[0].mxu0 %v4613
    %v5324 = vpop.f32.mrb[0].mxu0
    %v5325 = vadd.f32 %v4598, %v5324
    %v5326 = vpop.f32.mrb[0].mxu0
    %5327 = vmatprep.mubr.f32.mxu0 0.0
    %5328 = vmatmul.mubr.f32.gmra.mrb[0].mxu0 %v4615
    %v5329 = vpop.f32.mrb[0].mxu0
    %v5330 = vadd.f32 %v4603, %v5329
    %v5331 = vpop.f32.mrb[0].mxu0
    %5332 = vmatprep.mubr.f32.mxu0 0.0
    %5333 = vmatmul.mubr.f32.gmra.mrb[0].mxu0 %v4617
    %v5334 = vpop.f32.mrb[0].mxu0
    %v5335 = vadd.f32 %v4608, %v5334
    %v5336 = vpop.f32.mrb[0].mxu0
    %5337 = vdwg.mxu0
    %v5338 = vmax.f32 %v5320, 0.0
    %v5339 = vmax.f32 %v5325, 0.0
    %v5340 = vmax.f32 %v5330, 0.0
    %v5341 = vmax.f32 %v5335, 0.0
    %s5342 = scalar_lea.vmem [#allocation3], 96
    %5343 = vst.msk [vmem:[%s5342] sm:$0xff] %vm94, %v5338
    %5344 = vst.msk [vmem:[%s5342 + $0x8] sm:$0xff] %vm94, %v5339
    %s5345 = scalar_lea.vmem [#allocation5], 96
    %5346 = vst.msk [vmem:[%s5345] sm:$0xff] %vm94, %v5340
    %5347 = vst.msk [vmem:[%s5345 + $0x8] sm:$0xff] %vm94, %v5341
    %s5348 = scalar_lea.vmem [#allocation2], 560
    %v5349 = vld [vmem:[%s5348] sm:$0xff]
    %v5350 = vld [vmem:[%s5348 + $0x8] sm:$0xff]
    %v5351 = vld [vmem:[%s5348 + $0x10] sm:$0xff]
    %v5352 = vld [vmem:[%s5348 + $0x18] sm:$0xff]
    %v5353 = vld [vmem:[%s5348 + $0x20] sm:$0xff]
    %v5354 = vld [vmem:[%s5348 + $0x28] sm:$0xff]
    %v5355 = vld [vmem:[%s5348 + $0x30] sm:$0xff]
    %v5356 = vld [vmem:[%s5348 + $0x38] sm:$0xff]
    %v5357 = vld [vmem:[%s5348 + $0x40] sm:$0xff]
    %v5358 = vld [vmem:[%s5348 + $0x48] sm:$0xff]
    %5359 = vmatprep.subr.mxu0 0.0
    %5360 = vmatpush1.msra.mxu0 %v5349
    %5361 = vmatprep.subr.mxu0 0.0
    %5362 = vmatpush1.msra.mxu0 %v5350
    %5363 = vmatprep.subr.mxu0 0.0
    %5364 = vmatpush1.msra.mxu0 %v5351
    %5365 = vmatprep.subr.mxu0 0.0
    %5366 = vmatpush1.msra.mxu0 %v5352
    %5367 = vmatprep.subr.mxu0 0.0
    %5368 = vmatpush1.msra.mxu0 %v5353
    %5369 = vmatprep.subr.mxu0 0.0
    %5370 = vmatpush1.msra.mxu0 %v5354
    %5371 = vmatprep.subr.mxu0 0.0
    %5372 = vmatpush1.msra.mxu0 %v5355
    %5373 = vmatprep.subr.mxu0 0.0
    %5374 = vmatpush1.msra.mxu0 %v5356
    %5375 = vmatprep.subr.mxu0 0.0
    %5376 = vmatpush1.msra.mxu0 %v5357
    %5377 = vmatprep.subr.mxu0 0.0
    %5378 = vmatpush1.msra.mxu0 %v5358
    %5379 = vmatprep.subr.mxu0 0.0
    %5380 = vmatpush1.msra.mxu0 0.0
    %5381 = vmatprep.subr.mxu0 0.0
    %5382 = vmatpush1.msra.mxu0 0.0
    %5383 = vmatprep.subr.mxu0 0.0
    %5384 = vmatpush1.msra.mxu0 0.0
    %5385 = vmatprep.subr.mxu0 0.0
    %5386 = vmatpush1.msra.mxu0 0.0
    %5387 = vmatprep.subr.mxu0 0.0
    %5388 = vmatpush1.msra.mxu0 0.0
    %5389 = vmatprep.subr.mxu0 0.0
    %5390 = vmatpush1.msra.mxu0 0.0
    %5391 = vmatprep.subr.mxu0 0.0
    %5392 = vmatpush1.msra.mxu0 0.0
    %5393 = vmatprep.subr.mxu0 0.0
    %5394 = vmatpush1.msra.mxu0 0.0
    %5395 = vmatprep.subr.mxu0 0.0
    %5396 = vmatpush1.msra.mxu0 0.0
    %5397 = vmatprep.subr.mxu0 0.0
    %5398 = vmatpush1.msra.mxu0 0.0
    %5399 = vmatprep.subr.mxu0 0.0
    %5400 = vmatpush1.msra.mxu0 0.0
    %5401 = vmatprep.subr.mxu0 0.0
    %5402 = vmatpush1.msra.mxu0 0.0
    %5403 = vmatprep.subr.mxu0 0.0
    %5404 = vmatpush1.msra.mxu0 0.0
    %5405 = vmatprep.subr.mxu0 0.0
    %5406 = vmatpush1.msra.mxu0 0.0
    %5407 = vmatprep.subr.mxu0 0.0
    %5408 = vmatpush1.msra.mxu0 0.0
    %5409 = vmatprep.subr.mxu0 0.0
    %5410 = vmatpush1.msra.mxu0 0.0
    %5411 = vmatprep.subr.mxu0 0.0
    %5412 = vmatpush1.msra.mxu0 0.0
    %5413 = vmatprep.subr.mxu0 0.0
    %5414 = vmatpush1.msra.mxu0 0.0
    %5415 = vmatprep.subr.mxu0 0.0
    %5416 = vmatpush1.msra.mxu0 0.0
    %5417 = vmatprep.subr.mxu0 0.0
    %5418 = vmatpush1.msra.mxu0 0.0
    %5419 = vmatprep.subr.mxu0 0.0
    %5420 = vmatpush1.msra.mxu0 0.0
    %5421 = vmatprep.subr.mxu0 0.0
    %5422 = vmatpush1.msra.mxu0 0.0
    %5423 = vmatprep.mubr.f32.mxu0 0.0
    %5424 = vmatmul.mubr.f32.gmra.mrb[0].mxu0 %v4611
    %v5425 = vpop.f32.mrb[0].mxu0
    %v5426 = vadd.f32 %v4593, %v5425
    %v5427 = vpop.f32.mrb[0].mxu0
    %5428 = vmatprep.mubr.f32.mxu0 0.0
    %5429 = vmatmul.mubr.f32.gmra.mrb[0].mxu0 %v4613
    %v5430 = vpop.f32.mrb[0].mxu0
    %v5431 = vadd.f32 %v4598, %v5430
    %v5432 = vpop.f32.mrb[0].mxu0
    %5433 = vmatprep.mubr.f32.mxu0 0.0
    %5434 = vmatmul.mubr.f32.gmra.mrb[0].mxu0 %v4615
    %v5435 = vpop.f32.mrb[0].mxu0
    %v5436 = vadd.f32 %v4603, %v5435
    %v5437 = vpop.f32.mrb[0].mxu0
    %5438 = vmatprep.mubr.f32.mxu0 0.0
    %5439 = vmatmul.mubr.f32.gmra.mrb[0].mxu0 %v4617
    %v5440 = vpop.f32.mrb[0].mxu0
    %v5441 = vadd.f32 %v4608, %v5440
    %v5442 = vpop.f32.mrb[0].mxu0
    %5443 = vdwg.mxu0
    %v5444 = vmax.f32 %v5426, 0.0
    %v5445 = vmax.f32 %v5431, 0.0
    %v5446 = vmax.f32 %v5436, 0.0
    %v5447 = vmax.f32 %v5441, 0.0
    %s5448 = scalar_lea.vmem [#allocation3], 112
    %5449 = vst.msk [vmem:[%s5448] sm:$0xff] %vm94, %v5444
    %5450 = vst.msk [vmem:[%s5448 + $0x8] sm:$0xff] %vm94, %v5445
    %s5451 = scalar_lea.vmem [#allocation5], 112
    %5452 = vst.msk [vmem:[%s5451] sm:$0xff] %vm94, %v5446
    %5453 = vst.msk [vmem:[%s5451 + $0x8] sm:$0xff] %vm94, %v5447
    // Predicated region
    $region30: #{tpu_custom_call.1} parent=1 // pred_check
      _
    $region31: #{tpu_custom_call.1} parent=1 // pred_check_branch
      %5455 = sbr.rel (0) target = $region33
    $region32: #{tpu_custom_call.1} parent=1 // pred_region
      %s5457 = ssub.s32 2048, 2048
      %5458 = vsyncadd [#allocation4], %s5457
      %s5459 = sshll.u32 [#allocation3], 4
      %s5460 = int_to_ptr.vmem [resolvable:$true] %s5459
      %5465 = dma.vmem_to_hbm [thread:$0]  %s5460, 2048, %s7, [#allocation4], 128, 128, 8
    $region33: #{tpu_custom_call.1} parent=1 // pred_fallthru
      _
    // Predicated region
    $region34: #{tpu_custom_call.1} parent=1 // pred_check
      _
    $region35: #{tpu_custom_call.1} parent=1 // pred_check_branch
      %5467 = sbr.rel (0) target = $region37
    $region36: #{tpu_custom_call.1} parent=1 // pred_region
      %s5469 = ssub.s32 2048, 2048
      %5470 = vsyncadd [#allocation6], %s5469
      %s5471 = sshll.u32 [#allocation5], 4
      %s5472 = int_to_ptr.vmem [resolvable:$true] %s5471
      %5477 = dma.vmem_to_hbm [thread:$0]  %s5472, 2048, %s8, [#allocation6], 128, 128, 8
    $region37: #{tpu_custom_call.1} parent=1 // pred_fallthru
      _
    // Predicated region
    $region38: #{tpu_custom_call.1} parent=1 // pred_check
      _
    $region39: #{tpu_custom_call.1} parent=1 // pred_check_branch
      %5479 = sbr.rel (0) target = $region41
    $region40: #{tpu_custom_call.1} parent=1 // pred_region
      %5480 = dma.done [#allocation4], 2048
    $region41: #{tpu_custom_call.1} parent=1 // pred_fallthru
      _
    // Predicated region
    $region42: #{tpu_custom_call.1} parent=1 // pred_check
      _
    $region43: #{tpu_custom_call.1} parent=1 // pred_check_branch
      %5482 = sbr.rel (0) target = $region45
    $region44: #{tpu_custom_call.1} parent=1 // pred_region
      %5483 = dma.done [#allocation6], 2048
    $region45: #{tpu_custom_call.1} parent=1 // pred_fallthru
      _
    %5484 = vsyncpa [#allocation4], 1
    %5485 = vsyncpa [#allocation6], 1

</llo_original>
